<compile_context>
chip_gen: v7x
topology: tpu7x:2x2x1
jax: 0.10.0
libtpu: 0.0.40
codegen_flags: <defaults>
</compile_context>

<pallas_src>
import functools
import math

import numpy as np
import jax
import jax.numpy as jnp
from jax.experimental import pallas as pl
from jax.experimental.pallas import tpu as pltpu


@functools.lru_cache(maxsize=32)
def _constants(H, W, num_pos_feats, temperature, normalize):
    """Data-independent constants, built once and kept on device."""
    HW = H * W
    F = num_pos_feats

    # Flattened row-major pixel index p = h*W + w  ->  (h(p), w(p)).
    hq = np.repeat(np.arange(H), W)
    wq = np.tile(np.arange(W), H)
    same_col = wq[:, None] == wq[None, :]
    same_row = hq[:, None] == hq[None, :]

    # Inclusive prefix-sum matrices acting on the flattened not_mask: flat @ K.
    ky = (same_col & (hq[:, None] <= hq[None, :])).astype(np.float32)  # cumsum over H
    kx = (same_row & (wq[:, None] <= wq[None, :])).astype(np.float32)  # cumsum over W
    k_main = np.concatenate([ky, kx], axis=1)                          # (HW, 2*HW)

    # Per-channel reciprocal of dim_t and sin/cos phase (0 or pi/2).
    i = np.arange(F, dtype=np.float32)
    dim_t = np.float32(temperature) ** (2.0 * np.floor(i / 2.0) / np.float32(F))
    inv_col = (np.float32(1.0) / dim_t).astype(np.float32).reshape(F, 1)
    ph_col = np.where((np.arange(F) % 2) == 1,
                      np.float32(np.pi / 2.0), np.float32(0.0)).astype(np.float32)
    ph_col = ph_col.reshape(F, 1)

    consts = {
        # 0/1 values are exact in bf16; accumulation happens in f32 on the MXU.
        "k_main": jnp.asarray(k_main, dtype=jnp.bfloat16),
        "inv_col": jnp.asarray(inv_col),
        "ph_col": jnp.asarray(ph_col),
    }

    if normalize:
        # D1: nm @ D1 -> [per-column totals (W) | per-row totals (H)].
        sy = np.tile(np.eye(W, dtype=np.float32), (H, 1))                        # (HW, W)
        sx = np.kron(np.eye(H, dtype=np.float32), np.ones((W, 1), np.float32))   # (HW, H)
        d1 = np.concatenate([sy, sx], axis=1)                                    # (HW, W+H)
        # D2: broadcast those totals back to per-pixel denominators [y_den | x_den].
        ty = np.tile(np.eye(W, dtype=np.float32), (1, H))                        # (W, HW)
        tx = np.kron(np.eye(H, dtype=np.float32), np.ones((1, W), np.float32))   # (H, HW)
        d2 = np.zeros((W + H, 2 * HW), np.float32)
        d2[:W, :HW] = ty
        d2[W:, HW:] = tx
        consts["d1"] = jnp.asarray(d1, dtype=jnp.bfloat16)
        consts["d2"] = jnp.asarray(d2, dtype=jnp.bfloat16)
    return consts


def position_embedding_sine(mask, num_pos_feats=64, temperature=10000,
                            normalize=False, scale=None, flatten_hw=False):
    """mask: bool array (B, H, W). Returns float32 (B, 2*num_pos_feats, H, W)."""
    if scale is not None and normalize is False:
        raise ValueError("normalize should be True if scale is passed")
    if scale is None:
        scale = 2 * math.pi
    scale = float(scale)

    B, H, W = mask.shape
    HW = H * W
    F = num_pos_feats
    C = 2 * F

    consts = _constants(H, W, F, int(temperature), bool(normalize))

    # int8 mask flattened to (B, HW): all pixels on the lane axis, 4x smaller DMA.
    mask_flat = mask.astype(jnp.int8).reshape(B, HW)

    def kernel(*refs):
        if normalize:
            m_ref, kmain_ref, d1_ref, d2_ref, inv_ref, ph_ref, out_ref = refs
        else:
            m_ref, kmain_ref, inv_ref, ph_ref, out_ref = refs

        # not_mask, bf16 operand (exact 0/1) for the single-pass MXU matmul.
        nm = (1.0 - m_ref[...].astype(jnp.float32)).astype(jnp.bfloat16)   # (B, HW)

        # Both inclusive cumsums in ONE MXU dot against the concatenated constant.
        yx = jnp.dot(nm, kmain_ref[...], preferred_element_type=jnp.float32)  # (B, 2*HW)
        y = yx[:, :HW]      # cumsum over H
        x = yx[:, HW:]      # cumsum over W

        if normalize:
            eps = 1e-6
            # Column / row totals of not_mask, then broadcast back per pixel.
            # Counts are small integers (<= max(H, W)), exact in bf16.
            tot = jnp.dot(nm, d1_ref[...], preferred_element_type=jnp.float32)   # (B, W+H)
            den = jnp.dot(tot.astype(jnp.bfloat16), d2_ref[...],
                          preferred_element_type=jnp.float32)                    # (B, 2*HW)
            y = y / (den[:, :HW] + eps) * scale     # exact division (f32, VPU)
            x = x / (den[:, HW:] + eps) * scale

        # angle[b, c, p] = embed[b, p] * inv_dim[c] + (0 or pi/2); one sin per output.
        inv = inv_ref[...][None, :, :]     # (1, F, 1)
        ph = ph_ref[...][None, :, :]       # (1, F, 1)
        out_ref[:, :F, :] = jnp.sin(y[:, None, :] * inv + ph)   # y-half channels
        out_ref[:, F:, :] = jnp.sin(x[:, None, :] * inv + ph)   # x-half channels

    def const_spec(shape):
        n = len(shape)
        return pl.BlockSpec(shape, lambda i, _n=n: (0,) * _n)

    in_specs = [pl.BlockSpec((B, HW), lambda i: (0, 0)),
                const_spec((HW, 2 * HW))]
    inputs = [mask_flat, consts["k_main"]]
    if normalize:
        in_specs += [const_spec((HW, W + H)), const_spec((W + H, 2 * HW))]
        inputs += [consts["d1"], consts["d2"]]
    in_specs += [const_spec((F, 1)), const_spec((F, 1))]
    inputs += [consts["inv_col"], consts["ph_col"]]

    # Whole batch handled in a single grid step (M = B in the MXU matmul):
    # no per-step pipeline overhead, constants DMA'd exactly once.
    out_cf = pl.pallas_call(
        kernel,
        out_shape=jax.ShapeDtypeStruct((B, C, HW), jnp.float32),
        grid=(1,),
        in_specs=in_specs,
        out_specs=pl.BlockSpec((B, C, HW), lambda i: (0, 0, 0)),
        compiler_params=pltpu.CompilerParams(dimension_semantics=("arbitrary",)),
    )(*inputs)

    if flatten_hw:
        return out_cf                      # lane-dense (B, C, H*W) slab
    return out_cf.reshape(B, C, H, W)      # PyTorch NCHW contract


def ref_position_embedding_sine(mask, num_pos_feats=64, temperature=10000,
                                normalize=False, scale=None):
    """Pure-JAX reference mirroring the PyTorch forward exactly."""
    if scale is None:
        scale = 2 * math.pi
    not_mask = (~mask).astype(jnp.float32)
    y_embed = jnp.cumsum(not_mask, axis=1)
    x_embed = jnp.cumsum(not_mask, axis=2)
    if normalize:
        eps = 1e-6
        y_embed = y_embed / (y_embed[:, -1:, :] + eps) * scale
        x_embed = x_embed / (x_embed[:, :, -1:] + eps) * scale
    i = jnp.arange(num_pos_feats, dtype=jnp.float32)
    dim_t = jnp.float32(temperature) ** (2.0 * jnp.floor(i / 2.0) / num_pos_feats)
    pos_x = x_embed[:, :, :, None] / dim_t
    pos_y = y_embed[:, :, :, None] / dim_t
    B, H, W = mask.shape
    pos_x = jnp.stack([jnp.sin(pos_x[..., 0::2]), jnp.cos(pos_x[..., 1::2])],
                      axis=4).reshape(B, H, W, -1)
    pos_y = jnp.stack([jnp.sin(pos_y[..., 0::2]), jnp.cos(pos_y[..., 1::2])],
                      axis=4).reshape(B, H, W, -1)
    pos = jnp.concatenate([pos_y, pos_x], axis=3)
    return jnp.transpose(pos, (0, 3, 1, 2))


if __name__ == "__main__":
    B, H, W = 2, 16, 16
    num_pos_feats = 64  # -> 128 output channels

    key = jax.random.PRNGKey(0)
    mask = jax.random.bernoulli(key, p=0.3, shape=(B, H, W))  # bool padding mask

    # default config (normalize=False), as in the module's defaults
    pos = position_embedding_sine(mask, num_pos_feats=num_pos_feats)
    pos = jax.block_until_ready(pos)
    ref = ref_position_embedding_sine(mask, num_pos_feats=num_pos_feats)
    assert pos.shape == (B, 2 * num_pos_feats, H, W)
    np.testing.assert_allclose(np.asarray(pos), np.asarray(ref), rtol=2e-5, atol=2e-5)

    # normalize=True branch as well
    pos_n = position_embedding_sine(mask, num_pos_feats=num_pos_feats, normalize=True)
    pos_n = jax.block_until_ready(pos_n)
    ref_n = ref_position_embedding_sine(mask, num_pos_feats=num_pos_feats, normalize=True)
    np.testing.assert_allclose(np.asarray(pos_n), np.asarray(ref_n), rtol=2e-5, atol=2e-5)

    print("KERNEL_OK")
</pallas_src>

<mosaic_0001>
module attributes {stable_mosaic.version = 11 : i64} {
  func.func @kernel(%arg0: i32, %arg1: memref<2x256xi8, #tpu.memory_space<vmem>>, %arg2: memref<256x512xbf16, #tpu.memory_space<vmem>>, %arg3: memref<64x1xf32, #tpu.memory_space<vmem>>, %arg4: memref<64x1xf32, #tpu.memory_space<vmem>>, %arg5: memref<2x128x256xf32, #tpu.memory_space<vmem>>) attributes {dimension_semantics = [#tpu.dimension_semantics<arbitrary>], iteration_bounds = array<i64: 1>, scalar_prefetch = 0 : i64, scratch_operands = 0 : i64, tpu.core_type = #tpu.core_type<tc>, window_params = [{pipeline_mode = #tpu.pipeline_mode<synchronous>, transform_indices = @transform_0, window_bounds = array<i64: 2, 256>}, {pipeline_mode = #tpu.pipeline_mode<synchronous>, transform_indices = @transform_1, window_bounds = array<i64: 256, 512>}, {pipeline_mode = #tpu.pipeline_mode<synchronous>, transform_indices = @transform_2, window_bounds = array<i64: 64, 1>}, {pipeline_mode = #tpu.pipeline_mode<synchronous>, transform_indices = @transform_3, window_bounds = array<i64: 64, 1>}, {pipeline_mode = #tpu.pipeline_mode<synchronous>, transform_indices = @transform_4, window_bounds = array<i64: 2, 128, 256>}]} {
    %c0 = arith.constant 0 : index
    %c0_0 = arith.constant 0 : index
    %0 = vector.load %arg1[%c0, %c0_0] : memref<2x256xi8, #tpu.memory_space<vmem>>, vector<2x256xi8>
    %1 = arith.sitofp %0 : vector<2x256xi8> to vector<2x256xf32>
    %cst = arith.constant 1.000000e+00 : f32
    %2 = vector.broadcast %cst : f32 to vector<2x256xf32>
    %3 = arith.subf %2, %1 : vector<2x256xf32>
    %4 = arith.truncf %3 : vector<2x256xf32> to vector<2x256xbf16>
    %c0_1 = arith.constant 0 : index
    %c0_2 = arith.constant 0 : index
    %5 = vector.load %arg2[%c0_1, %c0_2] : memref<256x512xbf16, #tpu.memory_space<vmem>>, vector<256x512xbf16>
    %cst_3 = arith.constant dense<0.000000e+00> : vector<2x512xf32>
    %6 = tpu.matmul %4, %5, %cst_3 {dimension_numbers = #tpu.dot_dimension_numbers<[1], [0], [0], [1], [0, 0, 1, 1], [], []>} : vector<2x256xbf16>, vector<256x512xbf16>, vector<2x512xf32> -> vector<2x512xf32>
    %7 = vector.extract_strided_slice %6 {offsets = [0, 0], sizes = [2, 256], strides = [1, 1]} : vector<2x512xf32> to vector<2x256xf32>
    %8 = vector.extract_strided_slice %6 {offsets = [0, 256], sizes = [2, 256], strides = [1, 1]} : vector<2x512xf32> to vector<2x256xf32>
    %c0_4 = arith.constant 0 : index
    %c0_5 = arith.constant 0 : index
    %9 = vector.load %arg3[%c0_4, %c0_5] : memref<64x1xf32, #tpu.memory_space<vmem>>, vector<64x1xf32>
    %10 = vector.shape_cast %9 : vector<64x1xf32> to vector<1x64x1xf32>
    %c0_6 = arith.constant 0 : index
    %c0_7 = arith.constant 0 : index
    %11 = vector.load %arg4[%c0_6, %c0_7] : memref<64x1xf32, #tpu.memory_space<vmem>>, vector<64x1xf32>
    %12 = vector.shape_cast %11 : vector<64x1xf32> to vector<1x64x1xf32>
    %13 = vector.shape_cast %7 : vector<2x256xf32> to vector<2x1x256xf32>
    %14 = vector.broadcast %13 : vector<2x1x256xf32> to vector<2x64x256xf32>
    %15 = vector.broadcast %10 : vector<1x64x1xf32> to vector<2x64x256xf32>
    %16 = arith.mulf %14, %15 : vector<2x64x256xf32>
    %17 = vector.broadcast %12 : vector<1x64x1xf32> to vector<2x64x256xf32>
    %18 = arith.addf %16, %17 : vector<2x64x256xf32>
    %19 = math.sin %18 : vector<2x64x256xf32>
    %c0_8 = arith.constant 0 : index
    %c0_9 = arith.constant 0 : index
    %c0_10 = arith.constant 0 : index
    %20 = vector.load %arg5[%c0_8, %c0_9, %c0_10] : memref<2x128x256xf32, #tpu.memory_space<vmem>>, vector<2x64x256xf32>
    tpu.vector_store %arg5[%c0_8, %c0_9, %c0_10], %19 {strides = array<i32>} : memref<2x128x256xf32, #tpu.memory_space<vmem>>, vector<2x64x256xf32>,
    %21 = vector.shape_cast %8 : vector<2x256xf32> to vector<2x1x256xf32>
    %22 = vector.broadcast %21 : vector<2x1x256xf32> to vector<2x64x256xf32>
    %23 = vector.broadcast %10 : vector<1x64x1xf32> to vector<2x64x256xf32>
    %24 = arith.mulf %22, %23 : vector<2x64x256xf32>
    %25 = vector.broadcast %12 : vector<1x64x1xf32> to vector<2x64x256xf32>
    %26 = arith.addf %24, %25 : vector<2x64x256xf32>
    %27 = math.sin %26 : vector<2x64x256xf32>
    %c0_11 = arith.constant 0 : index
    %c64 = arith.constant 64 : index
    %c0_12 = arith.constant 0 : index
    %28 = vector.load %arg5[%c0_11, %c64, %c0_12] : memref<2x128x256xf32, #tpu.memory_space<vmem>>, vector<2x64x256xf32>
    tpu.vector_store %arg5[%c0_11, %c64, %c0_12], %27 {strides = array<i32>} : memref<2x128x256xf32, #tpu.memory_space<vmem>>, vector<2x64x256xf32>,
    return
  }
  func.func @transform_0(%arg0: i32) -> (i32, i32) {
    %c0_i32 = arith.constant 0 : i32
    %c0_i32_0 = arith.constant 0 : i32
    %c0_i32_1 = arith.constant 0 : i32
    return %c0_i32, %c0_i32_0 : i32, i32
  }
  func.func @transform_1(%arg0: i32) -> (i32, i32) {
    %c0_i32 = arith.constant 0 : i32
    %c0_i32_0 = arith.constant 0 : i32
    %c0_i32_1 = arith.constant 0 : i32
    return %c0_i32, %c0_i32_0 : i32, i32
  }
  func.func @transform_2(%arg0: i32) -> (i32, i32) {
    %c0_i32 = arith.constant 0 : i32
    %c0_i32_0 = arith.constant 0 : i32
    %c0_i32_1 = arith.constant 0 : i32
    return %c0_i32, %c0_i32_0 : i32, i32
  }
  func.func @transform_3(%arg0: i32) -> (i32, i32) {
    %c0_i32 = arith.constant 0 : i32
    %c0_i32_0 = arith.constant 0 : i32
    %c0_i32_1 = arith.constant 0 : i32
    return %c0_i32, %c0_i32_0 : i32, i32
  }
  func.func @transform_4(%arg0: i32) -> (i32, i32, i32) {
    %c0_i32 = arith.constant 0 : i32
    %c0_i32_0 = arith.constant 0 : i32
    %c0_i32_1 = arith.constant 0 : i32
    %c0_i32_2 = arith.constant 0 : i32
    return %c0_i32, %c0_i32_0, %c0_i32_1 : i32, i32, i32
  }
}

</mosaic_0001>

<llo_original>
// kernel: tpu_custom_call.1
$region0: #{tpu_custom_call.1}
  #allocation0 [shape = 'u32[]', space=smem, size = 0x4, offset = 0x4, fixed_abs, tag = 'smem constant byte address 0x4 - core index']
  #allocation1 [shape = 'u32[144,128]{1,0:T(1,128)}', space=vmem, size = 0x12000, scoped, tag = 'internal scratch']
  %s0 = inlined_call_operand.vmem [shape: s8[2,256], index: 0, kind: input, shape index: {}]
  %s1 = inlined_call_operand.hbm [shape: bf16[256,512], index: 1, kind: input, shape index: {}]
  %s2 = inlined_call_operand.vmem [shape: f32[64,1], index: 2, kind: input, shape index: {}]
  %s3 = inlined_call_operand.vmem [shape: f32[64,1], index: 3, kind: input, shape index: {}]
  %s4 = inlined_call_operand.hbm [shape: f32[2,128,256], index: 4, kind: output, shape index: {}]
  %s5 = sld [smem:[#allocation0]]
  $region30: #{tpu_custom_call.1} parent=0
    _
  %s7 = ssub.s32 1, %s5
  %s8 = scalar_select 0, %s7, %s5
  $region1: #{tpu_custom_call.1} parent=0
    #allocation2 [shape = 'u8[262144]{0}', space=vmem, size = 0x40000, scoped, tag = 'input window, operand 1, single buffered']
    #allocation3 [shape = 's32[1]{0}', space=sflag, size = 0x4, scoped, tag = 'scoped memory for tpu_custom_call.1']
    #allocation4 [shape = 's32[1]{0}', space=sflag, size = 0x4, scoped, tag = 'scoped memory for tpu_custom_call.1']
    #allocation5 [shape = 'u8[262144]{0}', space=vmem, size = 0x40000, scoped, tag = 'output window, operand 0, single buffered']
    %9 = vsyncpa [#allocation3], 0
    %10 = vsyncpa [#allocation4], 0
    // Predicated region
    $region2: #{tpu_custom_call.1} parent=1 // pred_check
      _
    $region3: #{tpu_custom_call.1} parent=1 // pred_check_branch
      %12 = sbr.rel (0) target = $region5
    $region4: #{tpu_custom_call.1} parent=1 // pred_region
      _
    $region5: #{tpu_custom_call.1} parent=1 // pred_fallthru
      _
    // Predicated region
    $region6: #{tpu_custom_call.1} parent=1 // pred_check
      _
    $region7: #{tpu_custom_call.1} parent=1 // pred_check_branch
      %14 = sbr.rel (0) target = $region9
    $region8: #{tpu_custom_call.1} parent=1 // pred_region
      %s16 = ssub.s32 8192, 8192
      %17 = vsyncadd [#allocation3], %s16
      %s18 = sshll.u32 [#allocation2], 4
      %s19 = int_to_ptr.vmem [resolvable:$true] %s18
      %24 = dma.hbm_to_vmem [thread:$0]  %s1, 8192, %s19, [#allocation3], 256, 256, 16
    $region9: #{tpu_custom_call.1} parent=1 // pred_fallthru
      _
    // Predicated region
    $region10: #{tpu_custom_call.1} parent=1 // pred_check
      _
    $region11: #{tpu_custom_call.1} parent=1 // pred_check_branch
      %26 = sbr.rel (0) target = $region13
    $region12: #{tpu_custom_call.1} parent=1 // pred_region
      _
    $region13: #{tpu_custom_call.1} parent=1 // pred_fallthru
      _
    // Predicated region
    $region14: #{tpu_custom_call.1} parent=1 // pred_check
      _
    $region15: #{tpu_custom_call.1} parent=1 // pred_check_branch
      %28 = sbr.rel (0) target = $region17
    $region16: #{tpu_custom_call.1} parent=1 // pred_region
      _
    $region17: #{tpu_custom_call.1} parent=1 // pred_fallthru
      _
    // Predicated region
    $region18: #{tpu_custom_call.1} parent=1 // pred_check
      _
    $region19: #{tpu_custom_call.1} parent=1 // pred_check_branch
      %30 = sbr.rel (0) target = $region21
    $region20: #{tpu_custom_call.1} parent=1 // pred_region
      %31 = dma.done [#allocation3], 8192
    $region21: #{tpu_custom_call.1} parent=1 // pred_fallthru
      _
    %v32 = vld [vmem:[%s0] sm:$0x3]
    %v33 = vunpack.c.0.s8 %v32
    %v34 = vcvt.s32.f32 %v33
    %v35 = vsub.f32 1.0, %v34
    %v37 = vcombine.high %v35, %v35
    %v39 = vpack.c.bf16 %v35, %v35
    %v40 = vpack.c.bf16 %v37, %v37
    %v41 = vld [vmem:[#allocation2] sm:$0xff]
    %v42 = vld [vmem:[#allocation2 + $0x8] sm:$0xff]
    %v43 = vld [vmem:[#allocation2 + $0x10] sm:$0xff]
    %v44 = vld [vmem:[#allocation2 + $0x18] sm:$0xff]
    %v45 = vld [vmem:[#allocation2 + $0x20] sm:$0xff]
    %v46 = vld [vmem:[#allocation2 + $0x28] sm:$0xff]
    %v47 = vld [vmem:[#allocation2 + $0x30] sm:$0xff]
    %v48 = vld [vmem:[#allocation2 + $0x38] sm:$0xff]
    %v49 = vld [vmem:[#allocation2 + $0x40] sm:$0xff]
    %v50 = vld [vmem:[#allocation2 + $0x48] sm:$0xff]
    %v51 = vld [vmem:[#allocation2 + $0x50] sm:$0xff]
    %v52 = vld [vmem:[#allocation2 + $0x58] sm:$0xff]
    %v53 = vld [vmem:[#allocation2 + $0x60] sm:$0xff]
    %v54 = vld [vmem:[#allocation2 + $0x68] sm:$0xff]
    %v55 = vld [vmem:[#allocation2 + $0x70] sm:$0xff]
    %v56 = vld [vmem:[#allocation2 + $0x78] sm:$0xff]
    %v57 = vld [vmem:[#allocation2 + $0x80] sm:$0xff]
    %v58 = vld [vmem:[#allocation2 + $0x88] sm:$0xff]
    %v59 = vld [vmem:[#allocation2 + $0x90] sm:$0xff]
    %v60 = vld [vmem:[#allocation2 + $0x98] sm:$0xff]
    %v61 = vld [vmem:[#allocation2 + $0xa0] sm:$0xff]
    %v62 = vld [vmem:[#allocation2 + $0xa8] sm:$0xff]
    %v63 = vld [vmem:[#allocation2 + $0xb0] sm:$0xff]
    %v64 = vld [vmem:[#allocation2 + $0xb8] sm:$0xff]
    %v65 = vld [vmem:[#allocation2 + $0xc0] sm:$0xff]
    %v66 = vld [vmem:[#allocation2 + $0xc8] sm:$0xff]
    %v67 = vld [vmem:[#allocation2 + $0xd0] sm:$0xff]
    %v68 = vld [vmem:[#allocation2 + $0xd8] sm:$0xff]
    %v69 = vld [vmem:[#allocation2 + $0xe0] sm:$0xff]
    %v70 = vld [vmem:[#allocation2 + $0xe8] sm:$0xff]
    %v71 = vld [vmem:[#allocation2 + $0xf0] sm:$0xff]
    %v72 = vld [vmem:[#allocation2 + $0xf8] sm:$0xff]
    %v73 = vld [vmem:[#allocation2 + $0x100] sm:$0xff]
    %v74 = vld [vmem:[#allocation2 + $0x108] sm:$0xff]
    %v75 = vld [vmem:[#allocation2 + $0x110] sm:$0xff]
    %v76 = vld [vmem:[#allocation2 + $0x118] sm:$0xff]
    %v77 = vld [vmem:[#allocation2 + $0x120] sm:$0xff]
    %v78 = vld [vmem:[#allocation2 + $0x128] sm:$0xff]
    %v79 = vld [vmem:[#allocation2 + $0x130] sm:$0xff]
    %v80 = vld [vmem:[#allocation2 + $0x138] sm:$0xff]
    %v81 = vld [vmem:[#allocation2 + $0x140] sm:$0xff]
    %v82 = vld [vmem:[#allocation2 + $0x148] sm:$0xff]
    %v83 = vld [vmem:[#allocation2 + $0x150] sm:$0xff]
    %v84 = vld [vmem:[#allocation2 + $0x158] sm:$0xff]
    %v85 = vld [vmem:[#allocation2 + $0x160] sm:$0xff]
    %v86 = vld [vmem:[#allocation2 + $0x168] sm:$0xff]
    %v87 = vld [vmem:[#allocation2 + $0x170] sm:$0xff]
    %v88 = vld [vmem:[#allocation2 + $0x178] sm:$0xff]
    %v89 = vld [vmem:[#allocation2 + $0x180] sm:$0xff]
    %v90 = vld [vmem:[#allocation2 + $0x188] sm:$0xff]
    %v91 = vld [vmem:[#allocation2 + $0x190] sm:$0xff]
    %v92 = vld [vmem:[#allocation2 + $0x198] sm:$0xff]
    %v93 = vld [vmem:[#allocation2 + $0x1a0] sm:$0xff]
    %v94 = vld [vmem:[#allocation2 + $0x1a8] sm:$0xff]
    %v95 = vld [vmem:[#allocation2 + $0x1b0] sm:$0xff]
    %v96 = vld [vmem:[#allocation2 + $0x1b8] sm:$0xff]
    %v97 = vld [vmem:[#allocation2 + $0x1c0] sm:$0xff]
    %v98 = vld [vmem:[#allocation2 + $0x1c8] sm:$0xff]
    %v99 = vld [vmem:[#allocation2 + $0x1d0] sm:$0xff]
    %v100 = vld [vmem:[#allocation2 + $0x1d8] sm:$0xff]
    %v101 = vld [vmem:[#allocation2 + $0x1e0] sm:$0xff]
    %v102 = vld [vmem:[#allocation2 + $0x1e8] sm:$0xff]
    %v103 = vld [vmem:[#allocation2 + $0x1f0] sm:$0xff]
    %v104 = vld [vmem:[#allocation2 + $0x1f8] sm:$0xff]
    %v169 = vunpack.c.l.b16 %v41
    %v170 = vunpack.c.h.b16 %v41
    %v171 = vunpack.c.l.b16 %v42
    %v172 = vunpack.c.h.b16 %v42
    %v173 = vunpack.c.l.b16 %v43
    %v174 = vunpack.c.h.b16 %v43
    %v175 = vunpack.c.l.b16 %v44
    %v176 = vunpack.c.h.b16 %v44
    %v177 = vunpack.c.l.b16 %v45
    %v178 = vunpack.c.h.b16 %v45
    %v179 = vunpack.c.l.b16 %v46
    %v180 = vunpack.c.h.b16 %v46
    %v181 = vunpack.c.l.b16 %v47
    %v182 = vunpack.c.h.b16 %v47
    %v183 = vunpack.c.l.b16 %v48
    %v184 = vunpack.c.h.b16 %v48
    %v185 = vunpack.c.l.b16 %v49
    %v186 = vunpack.c.h.b16 %v49
    %v187 = vunpack.c.l.b16 %v50
    %v188 = vunpack.c.h.b16 %v50
    %v189 = vunpack.c.l.b16 %v51
    %v190 = vunpack.c.h.b16 %v51
    %v191 = vunpack.c.l.b16 %v52
    %v192 = vunpack.c.h.b16 %v52
    %v193 = vunpack.c.l.b16 %v53
    %v194 = vunpack.c.h.b16 %v53
    %v195 = vunpack.c.l.b16 %v54
    %v196 = vunpack.c.h.b16 %v54
    %v197 = vunpack.c.l.b16 %v55
    %v198 = vunpack.c.h.b16 %v55
    %v199 = vunpack.c.l.b16 %v56
    %v200 = vunpack.c.h.b16 %v56
    %v201 = vunpack.c.l.b16 %v57
    %v202 = vunpack.c.h.b16 %v57
    %v203 = vunpack.c.l.b16 %v58
    %v204 = vunpack.c.h.b16 %v58
    %v205 = vunpack.c.l.b16 %v59
    %v206 = vunpack.c.h.b16 %v59
    %v207 = vunpack.c.l.b16 %v60
    %v208 = vunpack.c.h.b16 %v60
    %v209 = vunpack.c.l.b16 %v61
    %v210 = vunpack.c.h.b16 %v61
    %v211 = vunpack.c.l.b16 %v62
    %v212 = vunpack.c.h.b16 %v62
    %v213 = vunpack.c.l.b16 %v63
    %v214 = vunpack.c.h.b16 %v63
    %v215 = vunpack.c.l.b16 %v64
    %v216 = vunpack.c.h.b16 %v64
    %v217 = vunpack.c.l.b16 %v65
    %v218 = vunpack.c.h.b16 %v65
    %v219 = vunpack.c.l.b16 %v66
    %v220 = vunpack.c.h.b16 %v66
    %v221 = vunpack.c.l.b16 %v67
    %v222 = vunpack.c.h.b16 %v67
    %v223 = vunpack.c.l.b16 %v68
    %v224 = vunpack.c.h.b16 %v68
    %v225 = vunpack.c.l.b16 %v69
    %v226 = vunpack.c.h.b16 %v69
    %v227 = vunpack.c.l.b16 %v70
    %v228 = vunpack.c.h.b16 %v70
    %v229 = vunpack.c.l.b16 %v71
    %v230 = vunpack.c.h.b16 %v71
    %v231 = vunpack.c.l.b16 %v72
    %v232 = vunpack.c.h.b16 %v72
    %v233 = vunpack.c.l.b16 %v73
    %v234 = vunpack.c.h.b16 %v73
    %v235 = vunpack.c.l.b16 %v74
    %v236 = vunpack.c.h.b16 %v74
    %v237 = vunpack.c.l.b16 %v75
    %v238 = vunpack.c.h.b16 %v75
    %v239 = vunpack.c.l.b16 %v76
    %v240 = vunpack.c.h.b16 %v76
    %v241 = vunpack.c.l.b16 %v77
    %v242 = vunpack.c.h.b16 %v77
    %v243 = vunpack.c.l.b16 %v78
    %v244 = vunpack.c.h.b16 %v78
    %v245 = vunpack.c.l.b16 %v79
    %v246 = vunpack.c.h.b16 %v79
    %v247 = vunpack.c.l.b16 %v80
    %v248 = vunpack.c.h.b16 %v80
    %v249 = vunpack.c.l.b16 %v81
    %v250 = vunpack.c.h.b16 %v81
    %v251 = vunpack.c.l.b16 %v82
    %v252 = vunpack.c.h.b16 %v82
    %v253 = vunpack.c.l.b16 %v83
    %v254 = vunpack.c.h.b16 %v83
    %v255 = vunpack.c.l.b16 %v84
    %v256 = vunpack.c.h.b16 %v84
    %v257 = vunpack.c.l.b16 %v85
    %v258 = vunpack.c.h.b16 %v85
    %v259 = vunpack.c.l.b16 %v86
    %v260 = vunpack.c.h.b16 %v86
    %v261 = vunpack.c.l.b16 %v87
    %v262 = vunpack.c.h.b16 %v87
    %v263 = vunpack.c.l.b16 %v88
    %v264 = vunpack.c.h.b16 %v88
    %v265 = vunpack.c.l.b16 %v89
    %v266 = vunpack.c.h.b16 %v89
    %v267 = vunpack.c.l.b16 %v90
    %v268 = vunpack.c.h.b16 %v90
    %v269 = vunpack.c.l.b16 %v91
    %v270 = vunpack.c.h.b16 %v91
    %v271 = vunpack.c.l.b16 %v92
    %v272 = vunpack.c.h.b16 %v92
    %v273 = vunpack.c.l.b16 %v93
    %v274 = vunpack.c.h.b16 %v93
    %v275 = vunpack.c.l.b16 %v94
    %v276 = vunpack.c.h.b16 %v94
    %v277 = vunpack.c.l.b16 %v95
    %v278 = vunpack.c.h.b16 %v95
    %v279 = vunpack.c.l.b16 %v96
    %v280 = vunpack.c.h.b16 %v96
    %v281 = vunpack.c.l.b16 %v97
    %v282 = vunpack.c.h.b16 %v97
    %v283 = vunpack.c.l.b16 %v98
    %v284 = vunpack.c.h.b16 %v98
    %v285 = vunpack.c.l.b16 %v99
    %v286 = vunpack.c.h.b16 %v99
    %v287 = vunpack.c.l.b16 %v100
    %v288 = vunpack.c.h.b16 %v100
    %v289 = vunpack.c.l.b16 %v101
    %v290 = vunpack.c.h.b16 %v101
    %v291 = vunpack.c.l.b16 %v102
    %v292 = vunpack.c.h.b16 %v102
    %v293 = vunpack.c.l.b16 %v103
    %v294 = vunpack.c.h.b16 %v103
    %v295 = vunpack.c.l.b16 %v104
    %v296 = vunpack.c.h.b16 %v104
    %v297 = vpack.c.b16 %v173, %v169
    %v298 = vpack.c.b16 %v174, %v170
    %v299 = vpack.c.b16 %v175, %v171
    %v300 = vpack.c.b16 %v176, %v172
    %v301 = vpack.c.b16 %v181, %v177
    %v302 = vpack.c.b16 %v182, %v178
    %v303 = vpack.c.b16 %v183, %v179
    %v304 = vpack.c.b16 %v184, %v180
    %v305 = vpack.c.b16 %v189, %v185
    %v306 = vpack.c.b16 %v190, %v186
    %v307 = vpack.c.b16 %v191, %v187
    %v308 = vpack.c.b16 %v192, %v188
    %v309 = vpack.c.b16 %v197, %v193
    %v310 = vpack.c.b16 %v198, %v194
    %v311 = vpack.c.b16 %v199, %v195
    %v312 = vpack.c.b16 %v200, %v196
    %v313 = vpack.c.b16 %v205, %v201
    %v314 = vpack.c.b16 %v206, %v202
    %v315 = vpack.c.b16 %v207, %v203
    %v316 = vpack.c.b16 %v208, %v204
    %v317 = vpack.c.b16 %v213, %v209
    %v318 = vpack.c.b16 %v214, %v210
    %v319 = vpack.c.b16 %v215, %v211
    %v320 = vpack.c.b16 %v216, %v212
    %v321 = vpack.c.b16 %v221, %v217
    %v322 = vpack.c.b16 %v222, %v218
    %v323 = vpack.c.b16 %v223, %v219
    %v324 = vpack.c.b16 %v224, %v220
    %v325 = vpack.c.b16 %v229, %v225
    %v326 = vpack.c.b16 %v230, %v226
    %v327 = vpack.c.b16 %v231, %v227
    %v328 = vpack.c.b16 %v232, %v228
    %v329 = vpack.c.b16 %v237, %v233
    %v330 = vpack.c.b16 %v238, %v234
    %v331 = vpack.c.b16 %v239, %v235
    %v332 = vpack.c.b16 %v240, %v236
    %v333 = vpack.c.b16 %v245, %v241
    %v334 = vpack.c.b16 %v246, %v242
    %v335 = vpack.c.b16 %v247, %v243
    %v336 = vpack.c.b16 %v248, %v244
    %v337 = vpack.c.b16 %v253, %v249
    %v338 = vpack.c.b16 %v254, %v250
    %v339 = vpack.c.b16 %v255, %v251
    %v340 = vpack.c.b16 %v256, %v252
    %v341 = vpack.c.b16 %v261, %v257
    %v342 = vpack.c.b16 %v262, %v258
    %v343 = vpack.c.b16 %v263, %v259
    %v344 = vpack.c.b16 %v264, %v260
    %v345 = vpack.c.b16 %v269, %v265
    %v346 = vpack.c.b16 %v270, %v266
    %v347 = vpack.c.b16 %v271, %v267
    %v348 = vpack.c.b16 %v272, %v268
    %v349 = vpack.c.b16 %v277, %v273
    %v350 = vpack.c.b16 %v278, %v274
    %v351 = vpack.c.b16 %v279, %v275
    %v352 = vpack.c.b16 %v280, %v276
    %v353 = vpack.c.b16 %v285, %v281
    %v354 = vpack.c.b16 %v286, %v282
    %v355 = vpack.c.b16 %v287, %v283
    %v356 = vpack.c.b16 %v288, %v284
    %v357 = vpack.c.b16 %v293, %v289
    %v358 = vpack.c.b16 %v294, %v290
    %v359 = vpack.c.b16 %v295, %v291
    %v360 = vpack.c.b16 %v296, %v292
    %425 = vmatprep.subr.bf16.mxu0 %v298
    %426 = vmatpush1.bf16.msra.mxu0 %v297
    %427 = vmatprep.subr.bf16.mxu0 %v302
    %428 = vmatpush1.bf16.msra.mxu0 %v301
    %429 = vmatprep.subr.bf16.mxu0 %v306
    %430 = vmatpush1.bf16.msra.mxu0 %v305
    %431 = vmatprep.subr.bf16.mxu0 %v310
    %432 = vmatpush1.bf16.msra.mxu0 %v309
    %433 = vmatprep.subr.bf16.mxu0 %v314
    %434 = vmatpush1.bf16.msra.mxu0 %v313
    %435 = vmatprep.subr.bf16.mxu0 %v318
    %436 = vmatpush1.bf16.msra.mxu0 %v317
    %437 = vmatprep.subr.bf16.mxu0 %v322
    %438 = vmatpush1.bf16.msra.mxu0 %v321
    %439 = vmatprep.subr.bf16.mxu0 %v326
    %440 = vmatpush1.bf16.msra.mxu0 %v325
    %441 = vmatprep.subr.bf16.mxu0 %v330
    %442 = vmatpush1.bf16.msra.mxu0 %v329
    %443 = vmatprep.subr.bf16.mxu0 %v334
    %444 = vmatpush1.bf16.msra.mxu0 %v333
    %445 = vmatprep.subr.bf16.mxu0 %v338
    %446 = vmatpush1.bf16.msra.mxu0 %v337
    %447 = vmatprep.subr.bf16.mxu0 %v342
    %448 = vmatpush1.bf16.msra.mxu0 %v341
    %449 = vmatprep.subr.bf16.mxu0 %v346
    %450 = vmatpush1.bf16.msra.mxu0 %v345
    %451 = vmatprep.subr.bf16.mxu0 %v350
    %452 = vmatpush1.bf16.msra.mxu0 %v349
    %453 = vmatprep.subr.bf16.mxu0 %v354
    %454 = vmatpush1.bf16.msra.mxu0 %v353
    %455 = vmatprep.subr.bf16.mxu0 %v358
    %456 = vmatpush1.bf16.msra.mxu0 %v357
    %457 = vmatprep.mubr.bf16.mxu0 %v40
    %458 = vmatmul.mubr.bf16.gmra.mrb[0].mxu0 %v39
    %v459 = vpop.f32.mrb[0].mxu0
    %v460 = vadd.f32 0.0, %v459
    %v461 = vpop.f32.mrb[0].mxu0
    %v462 = vadd.f32 0.0, %v461
    %v463 = vpop.f32.mrb[0].mxu0
    %v464 = vpop.f32.mrb[0].mxu0
    %465 = vdwg.mxu0
    %466 = vmatprep.subr.bf16.mxu0 %v300
    %467 = vmatpush1.bf16.msra.mxu0 %v299
    %468 = vmatprep.subr.bf16.mxu0 %v304
    %469 = vmatpush1.bf16.msra.mxu0 %v303
    %470 = vmatprep.subr.bf16.mxu0 %v308
    %471 = vmatpush1.bf16.msra.mxu0 %v307
    %472 = vmatprep.subr.bf16.mxu0 %v312
    %473 = vmatpush1.bf16.msra.mxu0 %v311
    %474 = vmatprep.subr.bf16.mxu0 %v316
    %475 = vmatpush1.bf16.msra.mxu0 %v315
    %476 = vmatprep.subr.bf16.mxu0 %v320
    %477 = vmatpush1.bf16.msra.mxu0 %v319
    %478 = vmatprep.subr.bf16.mxu0 %v324
    %479 = vmatpush1.bf16.msra.mxu0 %v323
    %480 = vmatprep.subr.bf16.mxu0 %v328
    %481 = vmatpush1.bf16.msra.mxu0 %v327
    %482 = vmatprep.subr.bf16.mxu0 %v332
    %483 = vmatpush1.bf16.msra.mxu0 %v331
    %484 = vmatprep.subr.bf16.mxu0 %v336
    %485 = vmatpush1.bf16.msra.mxu0 %v335
    %486 = vmatprep.subr.bf16.mxu0 %v340
    %487 = vmatpush1.bf16.msra.mxu0 %v339
    %488 = vmatprep.subr.bf16.mxu0 %v344
    %489 = vmatpush1.bf16.msra.mxu0 %v343
    %490 = vmatprep.subr.bf16.mxu0 %v348
    %491 = vmatpush1.bf16.msra.mxu0 %v347
    %492 = vmatprep.subr.bf16.mxu0 %v352
    %493 = vmatpush1.bf16.msra.mxu0 %v351
    %494 = vmatprep.subr.bf16.mxu0 %v356
    %495 = vmatpush1.bf16.msra.mxu0 %v355
    %496 = vmatprep.subr.bf16.mxu0 %v360
    %497 = vmatpush1.bf16.msra.mxu0 %v359
    %498 = vmatprep.mubr.bf16.mxu0 %v40
    %499 = vmatmul.mubr.bf16.gmra.mrb[0].mxu0 %v39
    %v500 = vpop.f32.mrb[0].mxu0
    %v501 = vadd.f32 0.0, %v500
    %v502 = vpop.f32.mrb[0].mxu0
    %v503 = vadd.f32 0.0, %v502
    %v504 = vpop.f32.mrb[0].mxu0
    %v505 = vpop.f32.mrb[0].mxu0
    %506 = vdwg.mxu0
    %v507 = vld [vmem:[%s2] sm:$0xff]
    %v508 = vld [vmem:[%s2 + $0x8] sm:$0xff]
    %v509 = vld [vmem:[%s2 + $0x10] sm:$0xff]
    %v510 = vld [vmem:[%s2 + $0x18] sm:$0xff]
    %v511 = vld [vmem:[%s2 + $0x20] sm:$0xff]
    %v512 = vld [vmem:[%s2 + $0x28] sm:$0xff]
    %v513 = vld [vmem:[%s2 + $0x30] sm:$0xff]
    %v514 = vld [vmem:[%s2 + $0x38] sm:$0xff]
    %v515 = vld [vmem:[%s3] sm:$0xff]
    %v516 = vld [vmem:[%s3 + $0x8] sm:$0xff]
    %v517 = vld [vmem:[%s3 + $0x10] sm:$0xff]
    %v518 = vld [vmem:[%s3 + $0x18] sm:$0xff]
    %v519 = vld [vmem:[%s3 + $0x20] sm:$0xff]
    %v520 = vld [vmem:[%s3 + $0x28] sm:$0xff]
    %v521 = vld [vmem:[%s3 + $0x30] sm:$0xff]
    %v522 = vld [vmem:[%s3 + $0x38] sm:$0xff]
    %v525 = vcombine.low %v460, %v462
    %v527 = vunpack.c.l.s4 1966171168
    %v528 = vunpack.c.0.s8 %v527
    %v529 = vlaneseq
    %v530 = vshrl.u32 %v529, 7
    %v531 = vsub.s32 %v528, %v530
    %v532 = vrot.slane %v525, %v531
    %v533 = vcombine.high %v532, %v532
    %v535 = vunpack.c.l.s4 1966171168
    %v536 = vunpack.c.0.s8 %v535
    %v537 = vlaneseq
    %v538 = vshrl.u32 %v537, 7
    %v539 = vsub.s32 %v536, %v538
    %v540 = vrot.slane %v532, %v539
    %v542 = vunpack.c.l.s4 1966171168
    %v543 = vunpack.c.0.s8 %v542
    %v544 = vlaneseq
    %v545 = vshrl.u32 %v544, 7
    %v546 = vsub.s32 %v543, %v545
    %v547 = vrot.slane %v533, %v546
    %v548 = vlaneseq
    %v549 = vshrl.u32 %v548, 7
    %v550 = vsub.s32 0, %v549
    %v551 = vrot.slane %v540, %v550
    %v552 = vlaneseq
    %v553 = vshrl.u32 %v552, 7
    %v554 = vsub.s32 1, %v553
    %v555 = vrot.slane %v540, %v554
    %v556 = vlaneseq
    %v557 = vshrl.u32 %v556, 7
    %v558 = vsub.s32 0, %v557
    %v559 = vrot.slane %v547, %v558
    %v560 = vlaneseq
    %v561 = vshrl.u32 %v560, 7
    %v562 = vsub.s32 1, %v561
    %v563 = vrot.slane %v547, %v562
    %569 = vset.pattern.permute.xlu0 0
    %570 = vperm.xlu0 %569, %v507
    %v571 = vpop.permute.xlu0 %570
    %574 = vset.pattern.permute.xlu0 0
    %575 = vperm.xlu0 %574, %v508
    %v576 = vpop.permute.xlu0 %575
    %579 = vset.pattern.permute.xlu0 0
    %580 = vperm.xlu0 %579, %v509
    %v581 = vpop.permute.xlu0 %580
    %584 = vset.pattern.permute.xlu0 0
    %585 = vperm.xlu0 %584, %v510
    %v586 = vpop.permute.xlu0 %585
    %589 = vset.pattern.permute.xlu0 0
    %590 = vperm.xlu0 %589, %v511
    %v591 = vpop.permute.xlu0 %590
    %594 = vset.pattern.permute.xlu0 0
    %595 = vperm.xlu0 %594, %v512
    %v596 = vpop.permute.xlu0 %595
    %599 = vset.pattern.permute.xlu0 0
    %600 = vperm.xlu0 %599, %v513
    %v601 = vpop.permute.xlu0 %600
    %604 = vset.pattern.permute.xlu0 0
    %605 = vperm.xlu0 %604, %v514
    %v606 = vpop.permute.xlu0 %605
    %v608 = vmul.f32 %v551, %v571
    %v609 = vmul.f32 %v555, %v571
    %v610 = vmul.f32 %v551, %v576
    %v611 = vmul.f32 %v555, %v576
    %v612 = vmul.f32 %v551, %v581
    %v613 = vmul.f32 %v555, %v581
    %v614 = vmul.f32 %v551, %v586
    %v615 = vmul.f32 %v555, %v586
    %v616 = vmul.f32 %v551, %v591
    %v617 = vmul.f32 %v555, %v591
    %v618 = vmul.f32 %v551, %v596
    %v619 = vmul.f32 %v555, %v596
    %v620 = vmul.f32 %v551, %v601
    %v621 = vmul.f32 %v555, %v601
    %v622 = vmul.f32 %v551, %v606
    %v623 = vmul.f32 %v555, %v606
    %v624 = vmul.f32 %v559, %v571
    %v625 = vmul.f32 %v563, %v571
    %v626 = vmul.f32 %v559, %v576
    %v627 = vmul.f32 %v563, %v576
    %v628 = vmul.f32 %v559, %v581
    %v629 = vmul.f32 %v563, %v581
    %v630 = vmul.f32 %v559, %v586
    %v631 = vmul.f32 %v563, %v586
    %v632 = vmul.f32 %v559, %v591
    %v633 = vmul.f32 %v563, %v591
    %v634 = vmul.f32 %v559, %v596
    %v635 = vmul.f32 %v563, %v596
    %v636 = vmul.f32 %v559, %v601
    %v637 = vmul.f32 %v563, %v601
    %v638 = vmul.f32 %v559, %v606
    %v639 = vmul.f32 %v563, %v606
    %641 = vset.pattern.permute.xlu0 0
    %642 = vperm.xlu0 %641, %v515
    %v643 = vpop.permute.xlu0 %642
    %646 = vset.pattern.permute.xlu0 0
    %647 = vperm.xlu0 %646, %v516
    %v648 = vpop.permute.xlu0 %647
    %651 = vset.pattern.permute.xlu0 0
    %652 = vperm.xlu0 %651, %v517
    %v653 = vpop.permute.xlu0 %652
    %656 = vset.pattern.permute.xlu0 0
    %657 = vperm.xlu0 %656, %v518
    %v658 = vpop.permute.xlu0 %657
    %661 = vset.pattern.permute.xlu0 0
    %662 = vperm.xlu0 %661, %v519
    %v663 = vpop.permute.xlu0 %662
    %666 = vset.pattern.permute.xlu0 0
    %667 = vperm.xlu0 %666, %v520
    %v668 = vpop.permute.xlu0 %667
    %671 = vset.pattern.permute.xlu0 0
    %672 = vperm.xlu0 %671, %v521
    %v673 = vpop.permute.xlu0 %672
    %676 = vset.pattern.permute.xlu0 0
    %677 = vperm.xlu0 %676, %v522
    %v678 = vpop.permute.xlu0 %677
    %v680 = vadd.f32 %v608, %v643
    %v681 = vadd.f32 %v609, %v643
    %v682 = vadd.f32 %v610, %v648
    %v683 = vadd.f32 %v611, %v648
    %v684 = vadd.f32 %v612, %v653
    %v685 = vadd.f32 %v613, %v653
    %v686 = vadd.f32 %v614, %v658
    %v687 = vadd.f32 %v615, %v658
    %v688 = vadd.f32 %v616, %v663
    %v689 = vadd.f32 %v617, %v663
    %v690 = vadd.f32 %v618, %v668
    %v691 = vadd.f32 %v619, %v668
    %v692 = vadd.f32 %v620, %v673
    %v693 = vadd.f32 %v621, %v673
    %v694 = vadd.f32 %v622, %v678
    %v695 = vadd.f32 %v623, %v678
    %v696 = vadd.f32 %v624, %v643
    %v697 = vadd.f32 %v625, %v643
    %v698 = vadd.f32 %v626, %v648
    %v699 = vadd.f32 %v627, %v648
    %v700 = vadd.f32 %v628, %v653
    %v701 = vadd.f32 %v629, %v653
    %v702 = vadd.f32 %v630, %v658
    %v703 = vadd.f32 %v631, %v658
    %v704 = vadd.f32 %v632, %v663
    %v705 = vadd.f32 %v633, %v663
    %v706 = vadd.f32 %v634, %v668
    %v707 = vadd.f32 %v635, %v668
    %v708 = vadd.f32 %v636, %v673
    %v709 = vadd.f32 %v637, %v673
    %v710 = vadd.f32 %v638, %v678
    %v711 = vadd.f32 %v639, %v678
    %v712 = vand.u32 2147483647, %v680
    %vm713 = vcmp.le.f32.partialorder %v712, 0.7853982
    %vm714 = vcmp.lt.s32.totalorder %v680, 0
    %v715 = vand.u32 %v680, 2139095040
    %v716 = vshrl.u32 %v715, 23
    %v717 = vsub.s32 %v716, 127
    %v718 = vand.u32 2147483647, %v680
    %v719 = vand.u32 %v718, 8388607
    %v720 = vor.u32 %v719, 8388608
    %v721 = vsub.s32 0, %v720
    %v722 = vadd.s32 %v717, 1
    %vm723 = vcmp.gt.s32.totalorder %v722, 0
    %v724 = vsel %vm723, %v722, 0
    %v725 = vshrl.u32 %v724, 5
    %v726 = vand.u32 %v724, 31
    %v727 = vsub.s32 32, %v726
    %v728 = vshrl.u32 683565275, %v727
    %v729 = vshll.u32 683565275, %v726
    %v730 = vshrl.u32 2475754826, %v727
    %v731 = vor.u32 %v729, %v730
    %v732 = vshll.u32 2475754826, %v726
    %v733 = vshrl.u32 2131351028, %v727
    %v734 = vor.u32 %v732, %v733
    %v735 = vshll.u32 2131351028, %v726
    %v736 = vshrl.u32 2102212464, %v727
    %v737 = vor.u32 %v735, %v736
    %v738 = vshll.u32 2102212464, %v726
    %v739 = vshrl.u32 920167782, %v727
    %v740 = vor.u32 %v738, %v739
    %v741 = vshll.u32 920167782, %v726
    %v742 = vshrl.u32 1326507024, %v727
    %v743 = vor.u32 %v741, %v742
    %vm744 = vcmp.lt.s32.totalorder %v725, 1
    %vm745 = vcmp.lt.s32.totalorder %v725, 2
    %vm746 = vcmp.lt.s32.totalorder %v725, 3
    %vm747 = vcmp.lt.s32.totalorder %v725, 4
    %v748 = vsel %vm744, %v728, %v731
    %v749 = vsel %vm747, %v737, 2102212464
    %v750 = vsel %vm746, %v734, %v749
    %v751 = vsel %vm745, %v748, %v750
    %v752 = vsel %vm744, %v731, %v734
    %v753 = vsel %vm747, %v740, 920167782
    %v754 = vsel %vm746, %v737, %v753
    %v755 = vsel %vm745, %v752, %v754
    %v756 = vsel %vm744, %v734, %v737
    %v757 = vsel %vm747, %v743, 1326507024
    %v758 = vsel %vm746, %v740, %v757
    %v759 = vsel %vm745, %v756, %v758
    %v760 = vshll.u32 %v720, 8
    %v761 = vmul.u32.u64.compose %v760, %v759
    %v762 = vextract.low.u32 %v761
    %v763 = vextract.high.u32 %v761
    %v764 = vmul.u32.u64.compose %v760, %v755
    %v765 = vextract.low.u32 %v764
    %v766 = vextract.high.u32 %v764
    %v767 = vmul.u32 %v760, %v751
    %v768 = vadd.s32 %v763, %v765
    %vm769 = vc.u32 %v763, %v765
    %v770 = vadd.s32 %v766, 1
    %v771 = vsel %vm769, %v770, %v766
    %v772 = vadd.s32 %v767, %v771
    %v773 = vadd.s32 %v772, 536870912
    %v774 = vshrl.u32 %v773, 30
    %v775 = vshll.u32 %v774, 30
    %v776 = vsub.s32 %v772, %v775
    %vm777 = vcmp.lt.s32.totalorder %v776, 0
    %v778 = vsub.s32 0, %v776
    %v779 = vsel %vm777, %v778, %v776
    %v780 = vclz %v779
    %v781 = vsub.s32 %v780, 2
    %vm782 = vcmp.gt.s32.totalorder 0, %v781
    %v783 = vsel %vm782, 0, %v781
    %v784 = vsub.s32 32, %v783
    %v785 = vshll.u32 %v776, %v783
    %v786 = vshrl.u32 %v768, %v784
    %v787 = vor.u32 %v785, %v786
    %v788 = vsub.s32 4294967266, %v783
    %v789 = vadd.s32 %v788, 127
    %v790 = vshll.u32 %v789, 23
    %v791 = vor.u32 4788187, %v790
    %v792 = vand.u32 2147483647, %v791
    %v794 = vcvt.s32.f32 %v787
    %v795 = vmul.f32 %v794, %v792
    %v796 = vxor.u32 %v795, 2147483648
    %v797 = vsel %vm714, %v796, %v795
    %v798 = vsub.s32 4, %v774
    %v799 = vsel %vm714, %v798, %v774
    %v800 = vsel %vm713, %v680, %v797
    %v801 = vsel %vm713, 0, %v799
    %v802 = vcosq.f32.pop %v800
    %v803 = vsinq.f32.pop %v800
    %vm804 = vweird.f32 %v680
    %v805 = vadd.s32 %v801, 3
    %v806 = vand.u32 %v805, 3
    %vm807 = vcmp.lt.s32.totalorder %v806, 2
    %vm808 = vcmp.eq.s32.totalorder %v806, 0
    %v809 = vxor.u32 %v803, 2147483648
    %v810 = vsel %vm808, %v802, %v809
    %vm811 = vcmp.eq.s32.totalorder %v806, 2
    %v812 = vxor.u32 %v802, 2147483648
    %v813 = vsel %vm811, %v812, %v803
    %v814 = vsel %vm807, %v810, %v813
    %v815 = vsel %vm804, nan, %v814
    %v816 = vand.u32 2147483647, %v681
    %vm817 = vcmp.le.f32.partialorder %v816, 0.7853982
    %vm818 = vcmp.lt.s32.totalorder %v681, 0
    %v819 = vand.u32 %v681, 2139095040
    %v820 = vshrl.u32 %v819, 23
    %v821 = vsub.s32 %v820, 127
    %v822 = vand.u32 2147483647, %v681
    %v823 = vand.u32 %v822, 8388607
    %v824 = vor.u32 %v823, 8388608
    %v825 = vsub.s32 0, %v824
    %v826 = vadd.s32 %v821, 1
    %vm827 = vcmp.gt.s32.totalorder %v826, 0
    %v828 = vsel %vm827, %v826, 0
    %v829 = vshrl.u32 %v828, 5
    %v830 = vand.u32 %v828, 31
    %v831 = vsub.s32 32, %v830
    %v832 = vshrl.u32 683565275, %v831
    %v833 = vshll.u32 683565275, %v830
    %v834 = vshrl.u32 2475754826, %v831
    %v835 = vor.u32 %v833, %v834
    %v836 = vshll.u32 2475754826, %v830
    %v837 = vshrl.u32 2131351028, %v831
    %v838 = vor.u32 %v836, %v837
    %v839 = vshll.u32 2131351028, %v830
    %v840 = vshrl.u32 2102212464, %v831
    %v841 = vor.u32 %v839, %v840
    %v842 = vshll.u32 2102212464, %v830
    %v843 = vshrl.u32 920167782, %v831
    %v844 = vor.u32 %v842, %v843
    %v845 = vshll.u32 920167782, %v830
    %v846 = vshrl.u32 1326507024, %v831
    %v847 = vor.u32 %v845, %v846
    %vm848 = vcmp.lt.s32.totalorder %v829, 1
    %vm849 = vcmp.lt.s32.totalorder %v829, 2
    %vm850 = vcmp.lt.s32.totalorder %v829, 3
    %vm851 = vcmp.lt.s32.totalorder %v829, 4
    %v852 = vsel %vm848, %v832, %v835
    %v853 = vsel %vm851, %v841, 2102212464
    %v854 = vsel %vm850, %v838, %v853
    %v855 = vsel %vm849, %v852, %v854
    %v856 = vsel %vm848, %v835, %v838
    %v857 = vsel %vm851, %v844, 920167782
    %v858 = vsel %vm850, %v841, %v857
    %v859 = vsel %vm849, %v856, %v858
    %v860 = vsel %vm848, %v838, %v841
    %v861 = vsel %vm851, %v847, 1326507024
    %v862 = vsel %vm850, %v844, %v861
    %v863 = vsel %vm849, %v860, %v862
    %v864 = vshll.u32 %v824, 8
    %v865 = vmul.u32.u64.compose %v864, %v863
    %v866 = vextract.low.u32 %v865
    %v867 = vextract.high.u32 %v865
    %v868 = vmul.u32.u64.compose %v864, %v859
    %v869 = vextract.low.u32 %v868
    %v870 = vextract.high.u32 %v868
    %v871 = vmul.u32 %v864, %v855
    %v872 = vadd.s32 %v867, %v869
    %vm873 = vc.u32 %v867, %v869
    %v874 = vadd.s32 %v870, 1
    %v875 = vsel %vm873, %v874, %v870
    %v876 = vadd.s32 %v871, %v875
    %v877 = vadd.s32 %v876, 536870912
    %v878 = vshrl.u32 %v877, 30
    %v879 = vshll.u32 %v878, 30
    %v880 = vsub.s32 %v876, %v879
    %vm881 = vcmp.lt.s32.totalorder %v880, 0
    %v882 = vsub.s32 0, %v880
    %v883 = vsel %vm881, %v882, %v880
    %v884 = vclz %v883
    %v885 = vsub.s32 %v884, 2
    %vm886 = vcmp.gt.s32.totalorder 0, %v885
    %v887 = vsel %vm886, 0, %v885
    %v888 = vsub.s32 32, %v887
    %v889 = vshll.u32 %v880, %v887
    %v890 = vshrl.u32 %v872, %v888
    %v891 = vor.u32 %v889, %v890
    %v892 = vsub.s32 4294967266, %v887
    %v893 = vadd.s32 %v892, 127
    %v894 = vshll.u32 %v893, 23
    %v895 = vor.u32 4788187, %v894
    %v896 = vand.u32 2147483647, %v895
    %v898 = vcvt.s32.f32 %v891
    %v899 = vmul.f32 %v898, %v896
    %v900 = vxor.u32 %v899, 2147483648
    %v901 = vsel %vm818, %v900, %v899
    %v902 = vsub.s32 4, %v878
    %v903 = vsel %vm818, %v902, %v878
    %v904 = vsel %vm817, %v681, %v901
    %v905 = vsel %vm817, 0, %v903
    %v906 = vcosq.f32.pop %v904
    %v907 = vsinq.f32.pop %v904
    %vm908 = vweird.f32 %v681
    %v909 = vadd.s32 %v905, 3
    %v910 = vand.u32 %v909, 3
    %vm911 = vcmp.lt.s32.totalorder %v910, 2
    %vm912 = vcmp.eq.s32.totalorder %v910, 0
    %v913 = vxor.u32 %v907, 2147483648
    %v914 = vsel %vm912, %v906, %v913
    %vm915 = vcmp.eq.s32.totalorder %v910, 2
    %v916 = vxor.u32 %v906, 2147483648
    %v917 = vsel %vm915, %v916, %v907
    %v918 = vsel %vm911, %v914, %v917
    %v919 = vsel %vm908, nan, %v918
    %v920 = vand.u32 2147483647, %v682
    %vm921 = vcmp.le.f32.partialorder %v920, 0.7853982
    %vm922 = vcmp.lt.s32.totalorder %v682, 0
    %v923 = vand.u32 %v682, 2139095040
    %v924 = vshrl.u32 %v923, 23
    %v925 = vsub.s32 %v924, 127
    %v926 = vand.u32 2147483647, %v682
    %v927 = vand.u32 %v926, 8388607
    %v928 = vor.u32 %v927, 8388608
    %v929 = vsub.s32 0, %v928
    %v930 = vadd.s32 %v925, 1
    %vm931 = vcmp.gt.s32.totalorder %v930, 0
    %v932 = vsel %vm931, %v930, 0
    %v933 = vshrl.u32 %v932, 5
    %v934 = vand.u32 %v932, 31
    %v935 = vsub.s32 32, %v934
    %v936 = vshrl.u32 683565275, %v935
    %v937 = vshll.u32 683565275, %v934
    %v938 = vshrl.u32 2475754826, %v935
    %v939 = vor.u32 %v937, %v938
    %v940 = vshll.u32 2475754826, %v934
    %v941 = vshrl.u32 2131351028, %v935
    %v942 = vor.u32 %v940, %v941
    %v943 = vshll.u32 2131351028, %v934
    %v944 = vshrl.u32 2102212464, %v935
    %v945 = vor.u32 %v943, %v944
    %v946 = vshll.u32 2102212464, %v934
    %v947 = vshrl.u32 920167782, %v935
    %v948 = vor.u32 %v946, %v947
    %v949 = vshll.u32 920167782, %v934
    %v950 = vshrl.u32 1326507024, %v935
    %v951 = vor.u32 %v949, %v950
    %vm952 = vcmp.lt.s32.totalorder %v933, 1
    %vm953 = vcmp.lt.s32.totalorder %v933, 2
    %vm954 = vcmp.lt.s32.totalorder %v933, 3
    %vm955 = vcmp.lt.s32.totalorder %v933, 4
    %v956 = vsel %vm952, %v936, %v939
    %v957 = vsel %vm955, %v945, 2102212464
    %v958 = vsel %vm954, %v942, %v957
    %v959 = vsel %vm953, %v956, %v958
    %v960 = vsel %vm952, %v939, %v942
    %v961 = vsel %vm955, %v948, 920167782
    %v962 = vsel %vm954, %v945, %v961
    %v963 = vsel %vm953, %v960, %v962
    %v964 = vsel %vm952, %v942, %v945
    %v965 = vsel %vm955, %v951, 1326507024
    %v966 = vsel %vm954, %v948, %v965
    %v967 = vsel %vm953, %v964, %v966
    %v968 = vshll.u32 %v928, 8
    %v969 = vmul.u32.u64.compose %v968, %v967
    %v970 = vextract.low.u32 %v969
    %v971 = vextract.high.u32 %v969
    %v972 = vmul.u32.u64.compose %v968, %v963
    %v973 = vextract.low.u32 %v972
    %v974 = vextract.high.u32 %v972
    %v975 = vmul.u32 %v968, %v959
    %v976 = vadd.s32 %v971, %v973
    %vm977 = vc.u32 %v971, %v973
    %v978 = vadd.s32 %v974, 1
    %v979 = vsel %vm977, %v978, %v974
    %v980 = vadd.s32 %v975, %v979
    %v981 = vadd.s32 %v980, 536870912
    %v982 = vshrl.u32 %v981, 30
    %v983 = vshll.u32 %v982, 30
    %v984 = vsub.s32 %v980, %v983
    %vm985 = vcmp.lt.s32.totalorder %v984, 0
    %v986 = vsub.s32 0, %v984
    %v987 = vsel %vm985, %v986, %v984
    %v988 = vclz %v987
    %v989 = vsub.s32 %v988, 2
    %vm990 = vcmp.gt.s32.totalorder 0, %v989
    %v991 = vsel %vm990, 0, %v989
    %v992 = vsub.s32 32, %v991
    %v993 = vshll.u32 %v984, %v991
    %v994 = vshrl.u32 %v976, %v992
    %v995 = vor.u32 %v993, %v994
    %v996 = vsub.s32 4294967266, %v991
    %v997 = vadd.s32 %v996, 127
    %v998 = vshll.u32 %v997, 23
    %v999 = vor.u32 4788187, %v998
    %v1000 = vand.u32 2147483647, %v999
    %v1002 = vcvt.s32.f32 %v995
    %v1003 = vmul.f32 %v1002, %v1000
    %v1004 = vxor.u32 %v1003, 2147483648
    %v1005 = vsel %vm922, %v1004, %v1003
    %v1006 = vsub.s32 4, %v982
    %v1007 = vsel %vm922, %v1006, %v982
    %v1008 = vsel %vm921, %v682, %v1005
    %v1009 = vsel %vm921, 0, %v1007
    %v1010 = vcosq.f32.pop %v1008
    %v1011 = vsinq.f32.pop %v1008
    %vm1012 = vweird.f32 %v682
    %v1013 = vadd.s32 %v1009, 3
    %v1014 = vand.u32 %v1013, 3
    %vm1015 = vcmp.lt.s32.totalorder %v1014, 2
    %vm1016 = vcmp.eq.s32.totalorder %v1014, 0
    %v1017 = vxor.u32 %v1011, 2147483648
    %v1018 = vsel %vm1016, %v1010, %v1017
    %vm1019 = vcmp.eq.s32.totalorder %v1014, 2
    %v1020 = vxor.u32 %v1010, 2147483648
    %v1021 = vsel %vm1019, %v1020, %v1011
    %v1022 = vsel %vm1015, %v1018, %v1021
    %v1023 = vsel %vm1012, nan, %v1022
    %v1024 = vand.u32 2147483647, %v683
    %vm1025 = vcmp.le.f32.partialorder %v1024, 0.7853982
    %vm1026 = vcmp.lt.s32.totalorder %v683, 0
    %v1027 = vand.u32 %v683, 2139095040
    %v1028 = vshrl.u32 %v1027, 23
    %v1029 = vsub.s32 %v1028, 127
    %v1030 = vand.u32 2147483647, %v683
    %v1031 = vand.u32 %v1030, 8388607
    %v1032 = vor.u32 %v1031, 8388608
    %v1033 = vsub.s32 0, %v1032
    %v1034 = vadd.s32 %v1029, 1
    %vm1035 = vcmp.gt.s32.totalorder %v1034, 0
    %v1036 = vsel %vm1035, %v1034, 0
    %v1037 = vshrl.u32 %v1036, 5
    %v1038 = vand.u32 %v1036, 31
    %v1039 = vsub.s32 32, %v1038
    %v1040 = vshrl.u32 683565275, %v1039
    %v1041 = vshll.u32 683565275, %v1038
    %v1042 = vshrl.u32 2475754826, %v1039
    %v1043 = vor.u32 %v1041, %v1042
    %v1044 = vshll.u32 2475754826, %v1038
    %v1045 = vshrl.u32 2131351028, %v1039
    %v1046 = vor.u32 %v1044, %v1045
    %v1047 = vshll.u32 2131351028, %v1038
    %v1048 = vshrl.u32 2102212464, %v1039
    %v1049 = vor.u32 %v1047, %v1048
    %v1050 = vshll.u32 2102212464, %v1038
    %v1051 = vshrl.u32 920167782, %v1039
    %v1052 = vor.u32 %v1050, %v1051
    %v1053 = vshll.u32 920167782, %v1038
    %v1054 = vshrl.u32 1326507024, %v1039
    %v1055 = vor.u32 %v1053, %v1054
    %vm1056 = vcmp.lt.s32.totalorder %v1037, 1
    %vm1057 = vcmp.lt.s32.totalorder %v1037, 2
    %vm1058 = vcmp.lt.s32.totalorder %v1037, 3
    %vm1059 = vcmp.lt.s32.totalorder %v1037, 4
    %v1060 = vsel %vm1056, %v1040, %v1043
    %v1061 = vsel %vm1059, %v1049, 2102212464
    %v1062 = vsel %vm1058, %v1046, %v1061
    %v1063 = vsel %vm1057, %v1060, %v1062
    %v1064 = vsel %vm1056, %v1043, %v1046
    %v1065 = vsel %vm1059, %v1052, 920167782
    %v1066 = vsel %vm1058, %v1049, %v1065
    %v1067 = vsel %vm1057, %v1064, %v1066
    %v1068 = vsel %vm1056, %v1046, %v1049
    %v1069 = vsel %vm1059, %v1055, 1326507024
    %v1070 = vsel %vm1058, %v1052, %v1069
    %v1071 = vsel %vm1057, %v1068, %v1070
    %v1072 = vshll.u32 %v1032, 8
    %v1073 = vmul.u32.u64.compose %v1072, %v1071
    %v1074 = vextract.low.u32 %v1073
    %v1075 = vextract.high.u32 %v1073
    %v1076 = vmul.u32.u64.compose %v1072, %v1067
    %v1077 = vextract.low.u32 %v1076
    %v1078 = vextract.high.u32 %v1076
    %v1079 = vmul.u32 %v1072, %v1063
    %v1080 = vadd.s32 %v1075, %v1077
    %vm1081 = vc.u32 %v1075, %v1077
    %v1082 = vadd.s32 %v1078, 1
    %v1083 = vsel %vm1081, %v1082, %v1078
    %v1084 = vadd.s32 %v1079, %v1083
    %v1085 = vadd.s32 %v1084, 536870912
    %v1086 = vshrl.u32 %v1085, 30
    %v1087 = vshll.u32 %v1086, 30
    %v1088 = vsub.s32 %v1084, %v1087
    %vm1089 = vcmp.lt.s32.totalorder %v1088, 0
    %v1090 = vsub.s32 0, %v1088
    %v1091 = vsel %vm1089, %v1090, %v1088
    %v1092 = vclz %v1091
    %v1093 = vsub.s32 %v1092, 2
    %vm1094 = vcmp.gt.s32.totalorder 0, %v1093
    %v1095 = vsel %vm1094, 0, %v1093
    %v1096 = vsub.s32 32, %v1095
    %v1097 = vshll.u32 %v1088, %v1095
    %v1098 = vshrl.u32 %v1080, %v1096
    %v1099 = vor.u32 %v1097, %v1098
    %v1100 = vsub.s32 4294967266, %v1095
    %v1101 = vadd.s32 %v1100, 127
    %v1102 = vshll.u32 %v1101, 23
    %v1103 = vor.u32 4788187, %v1102
    %v1104 = vand.u32 2147483647, %v1103
    %v1106 = vcvt.s32.f32 %v1099
    %v1107 = vmul.f32 %v1106, %v1104
    %v1108 = vxor.u32 %v1107, 2147483648
    %v1109 = vsel %vm1026, %v1108, %v1107
    %v1110 = vsub.s32 4, %v1086
    %v1111 = vsel %vm1026, %v1110, %v1086
    %v1112 = vsel %vm1025, %v683, %v1109
    %v1113 = vsel %vm1025, 0, %v1111
    %v1114 = vcosq.f32.pop %v1112
    %v1115 = vsinq.f32.pop %v1112
    %vm1116 = vweird.f32 %v683
    %v1117 = vadd.s32 %v1113, 3
    %v1118 = vand.u32 %v1117, 3
    %vm1119 = vcmp.lt.s32.totalorder %v1118, 2
    %vm1120 = vcmp.eq.s32.totalorder %v1118, 0
    %v1121 = vxor.u32 %v1115, 2147483648
    %v1122 = vsel %vm1120, %v1114, %v1121
    %vm1123 = vcmp.eq.s32.totalorder %v1118, 2
    %v1124 = vxor.u32 %v1114, 2147483648
    %v1125 = vsel %vm1123, %v1124, %v1115
    %v1126 = vsel %vm1119, %v1122, %v1125
    %v1127 = vsel %vm1116, nan, %v1126
    %v1128 = vand.u32 2147483647, %v684
    %vm1129 = vcmp.le.f32.partialorder %v1128, 0.7853982
    %vm1130 = vcmp.lt.s32.totalorder %v684, 0
    %v1131 = vand.u32 %v684, 2139095040
    %v1132 = vshrl.u32 %v1131, 23
    %v1133 = vsub.s32 %v1132, 127
    %v1134 = vand.u32 2147483647, %v684
    %v1135 = vand.u32 %v1134, 8388607
    %v1136 = vor.u32 %v1135, 8388608
    %v1137 = vsub.s32 0, %v1136
    %v1138 = vadd.s32 %v1133, 1
    %vm1139 = vcmp.gt.s32.totalorder %v1138, 0
    %v1140 = vsel %vm1139, %v1138, 0
    %v1141 = vshrl.u32 %v1140, 5
    %v1142 = vand.u32 %v1140, 31
    %v1143 = vsub.s32 32, %v1142
    %v1144 = vshrl.u32 683565275, %v1143
    %v1145 = vshll.u32 683565275, %v1142
    %v1146 = vshrl.u32 2475754826, %v1143
    %v1147 = vor.u32 %v1145, %v1146
    %v1148 = vshll.u32 2475754826, %v1142
    %v1149 = vshrl.u32 2131351028, %v1143
    %v1150 = vor.u32 %v1148, %v1149
    %v1151 = vshll.u32 2131351028, %v1142
    %v1152 = vshrl.u32 2102212464, %v1143
    %v1153 = vor.u32 %v1151, %v1152
    %v1154 = vshll.u32 2102212464, %v1142
    %v1155 = vshrl.u32 920167782, %v1143
    %v1156 = vor.u32 %v1154, %v1155
    %v1157 = vshll.u32 920167782, %v1142
    %v1158 = vshrl.u32 1326507024, %v1143
    %v1159 = vor.u32 %v1157, %v1158
    %vm1160 = vcmp.lt.s32.totalorder %v1141, 1
    %vm1161 = vcmp.lt.s32.totalorder %v1141, 2
    %vm1162 = vcmp.lt.s32.totalorder %v1141, 3
    %vm1163 = vcmp.lt.s32.totalorder %v1141, 4
    %v1164 = vsel %vm1160, %v1144, %v1147
    %v1165 = vsel %vm1163, %v1153, 2102212464
    %v1166 = vsel %vm1162, %v1150, %v1165
    %v1167 = vsel %vm1161, %v1164, %v1166
    %v1168 = vsel %vm1160, %v1147, %v1150
    %v1169 = vsel %vm1163, %v1156, 920167782
    %v1170 = vsel %vm1162, %v1153, %v1169
    %v1171 = vsel %vm1161, %v1168, %v1170
    %v1172 = vsel %vm1160, %v1150, %v1153
    %v1173 = vsel %vm1163, %v1159, 1326507024
    %v1174 = vsel %vm1162, %v1156, %v1173
    %v1175 = vsel %vm1161, %v1172, %v1174
    %v1176 = vshll.u32 %v1136, 8
    %v1177 = vmul.u32.u64.compose %v1176, %v1175
    %v1178 = vextract.low.u32 %v1177
    %v1179 = vextract.high.u32 %v1177
    %v1180 = vmul.u32.u64.compose %v1176, %v1171
    %v1181 = vextract.low.u32 %v1180
    %v1182 = vextract.high.u32 %v1180
    %v1183 = vmul.u32 %v1176, %v1167
    %v1184 = vadd.s32 %v1179, %v1181
    %vm1185 = vc.u32 %v1179, %v1181
    %v1186 = vadd.s32 %v1182, 1
    %v1187 = vsel %vm1185, %v1186, %v1182
    %v1188 = vadd.s32 %v1183, %v1187
    %v1189 = vadd.s32 %v1188, 536870912
    %v1190 = vshrl.u32 %v1189, 30
    %v1191 = vshll.u32 %v1190, 30
    %v1192 = vsub.s32 %v1188, %v1191
    %vm1193 = vcmp.lt.s32.totalorder %v1192, 0
    %v1194 = vsub.s32 0, %v1192
    %v1195 = vsel %vm1193, %v1194, %v1192
    %v1196 = vclz %v1195
    %v1197 = vsub.s32 %v1196, 2
    %vm1198 = vcmp.gt.s32.totalorder 0, %v1197
    %v1199 = vsel %vm1198, 0, %v1197
    %v1200 = vsub.s32 32, %v1199
    %v1201 = vshll.u32 %v1192, %v1199
    %v1202 = vshrl.u32 %v1184, %v1200
    %v1203 = vor.u32 %v1201, %v1202
    %v1204 = vsub.s32 4294967266, %v1199
    %v1205 = vadd.s32 %v1204, 127
    %v1206 = vshll.u32 %v1205, 23
    %v1207 = vor.u32 4788187, %v1206
    %v1208 = vand.u32 2147483647, %v1207
    %v1210 = vcvt.s32.f32 %v1203
    %v1211 = vmul.f32 %v1210, %v1208
    %v1212 = vxor.u32 %v1211, 2147483648
    %v1213 = vsel %vm1130, %v1212, %v1211
    %v1214 = vsub.s32 4, %v1190
    %v1215 = vsel %vm1130, %v1214, %v1190
    %v1216 = vsel %vm1129, %v684, %v1213
    %v1217 = vsel %vm1129, 0, %v1215
    %v1218 = vcosq.f32.pop %v1216
    %v1219 = vsinq.f32.pop %v1216
    %vm1220 = vweird.f32 %v684
    %v1221 = vadd.s32 %v1217, 3
    %v1222 = vand.u32 %v1221, 3
    %vm1223 = vcmp.lt.s32.totalorder %v1222, 2
    %vm1224 = vcmp.eq.s32.totalorder %v1222, 0
    %v1225 = vxor.u32 %v1219, 2147483648
    %v1226 = vsel %vm1224, %v1218, %v1225
    %vm1227 = vcmp.eq.s32.totalorder %v1222, 2
    %v1228 = vxor.u32 %v1218, 2147483648
    %v1229 = vsel %vm1227, %v1228, %v1219
    %v1230 = vsel %vm1223, %v1226, %v1229
    %v1231 = vsel %vm1220, nan, %v1230
    %v1232 = vand.u32 2147483647, %v685
    %vm1233 = vcmp.le.f32.partialorder %v1232, 0.7853982
    %vm1234 = vcmp.lt.s32.totalorder %v685, 0
    %v1235 = vand.u32 %v685, 2139095040
    %v1236 = vshrl.u32 %v1235, 23
    %v1237 = vsub.s32 %v1236, 127
    %v1238 = vand.u32 2147483647, %v685
    %v1239 = vand.u32 %v1238, 8388607
    %v1240 = vor.u32 %v1239, 8388608
    %v1241 = vsub.s32 0, %v1240
    %v1242 = vadd.s32 %v1237, 1
    %vm1243 = vcmp.gt.s32.totalorder %v1242, 0
    %v1244 = vsel %vm1243, %v1242, 0
    %v1245 = vshrl.u32 %v1244, 5
    %v1246 = vand.u32 %v1244, 31
    %v1247 = vsub.s32 32, %v1246
    %v1248 = vshrl.u32 683565275, %v1247
    %v1249 = vshll.u32 683565275, %v1246
    %v1250 = vshrl.u32 2475754826, %v1247
    %v1251 = vor.u32 %v1249, %v1250
    %v1252 = vshll.u32 2475754826, %v1246
    %v1253 = vshrl.u32 2131351028, %v1247
    %v1254 = vor.u32 %v1252, %v1253
    %v1255 = vshll.u32 2131351028, %v1246
    %v1256 = vshrl.u32 2102212464, %v1247
    %v1257 = vor.u32 %v1255, %v1256
    %v1258 = vshll.u32 2102212464, %v1246
    %v1259 = vshrl.u32 920167782, %v1247
    %v1260 = vor.u32 %v1258, %v1259
    %v1261 = vshll.u32 920167782, %v1246
    %v1262 = vshrl.u32 1326507024, %v1247
    %v1263 = vor.u32 %v1261, %v1262
    %vm1264 = vcmp.lt.s32.totalorder %v1245, 1
    %vm1265 = vcmp.lt.s32.totalorder %v1245, 2
    %vm1266 = vcmp.lt.s32.totalorder %v1245, 3
    %vm1267 = vcmp.lt.s32.totalorder %v1245, 4
    %v1268 = vsel %vm1264, %v1248, %v1251
    %v1269 = vsel %vm1267, %v1257, 2102212464
    %v1270 = vsel %vm1266, %v1254, %v1269
    %v1271 = vsel %vm1265, %v1268, %v1270
    %v1272 = vsel %vm1264, %v1251, %v1254
    %v1273 = vsel %vm1267, %v1260, 920167782
    %v1274 = vsel %vm1266, %v1257, %v1273
    %v1275 = vsel %vm1265, %v1272, %v1274
    %v1276 = vsel %vm1264, %v1254, %v1257
    %v1277 = vsel %vm1267, %v1263, 1326507024
    %v1278 = vsel %vm1266, %v1260, %v1277
    %v1279 = vsel %vm1265, %v1276, %v1278
    %v1280 = vshll.u32 %v1240, 8
    %v1281 = vmul.u32.u64.compose %v1280, %v1279
    %v1282 = vextract.low.u32 %v1281
    %v1283 = vextract.high.u32 %v1281
    %v1284 = vmul.u32.u64.compose %v1280, %v1275
    %v1285 = vextract.low.u32 %v1284
    %v1286 = vextract.high.u32 %v1284
    %v1287 = vmul.u32 %v1280, %v1271
    %v1288 = vadd.s32 %v1283, %v1285
    %vm1289 = vc.u32 %v1283, %v1285
    %v1290 = vadd.s32 %v1286, 1
    %v1291 = vsel %vm1289, %v1290, %v1286
    %v1292 = vadd.s32 %v1287, %v1291
    %v1293 = vadd.s32 %v1292, 536870912
    %v1294 = vshrl.u32 %v1293, 30
    %v1295 = vshll.u32 %v1294, 30
    %v1296 = vsub.s32 %v1292, %v1295
    %vm1297 = vcmp.lt.s32.totalorder %v1296, 0
    %v1298 = vsub.s32 0, %v1296
    %v1299 = vsel %vm1297, %v1298, %v1296
    %v1300 = vclz %v1299
    %v1301 = vsub.s32 %v1300, 2
    %vm1302 = vcmp.gt.s32.totalorder 0, %v1301
    %v1303 = vsel %vm1302, 0, %v1301
    %v1304 = vsub.s32 32, %v1303
    %v1305 = vshll.u32 %v1296, %v1303
    %v1306 = vshrl.u32 %v1288, %v1304
    %v1307 = vor.u32 %v1305, %v1306
    %v1308 = vsub.s32 4294967266, %v1303
    %v1309 = vadd.s32 %v1308, 127
    %v1310 = vshll.u32 %v1309, 23
    %v1311 = vor.u32 4788187, %v1310
    %v1312 = vand.u32 2147483647, %v1311
    %v1314 = vcvt.s32.f32 %v1307
    %v1315 = vmul.f32 %v1314, %v1312
    %v1316 = vxor.u32 %v1315, 2147483648
    %v1317 = vsel %vm1234, %v1316, %v1315
    %v1318 = vsub.s32 4, %v1294
    %v1319 = vsel %vm1234, %v1318, %v1294
    %v1320 = vsel %vm1233, %v685, %v1317
    %v1321 = vsel %vm1233, 0, %v1319
    %v1322 = vcosq.f32.pop %v1320
    %v1323 = vsinq.f32.pop %v1320
    %vm1324 = vweird.f32 %v685
    %v1325 = vadd.s32 %v1321, 3
    %v1326 = vand.u32 %v1325, 3
    %vm1327 = vcmp.lt.s32.totalorder %v1326, 2
    %vm1328 = vcmp.eq.s32.totalorder %v1326, 0
    %v1329 = vxor.u32 %v1323, 2147483648
    %v1330 = vsel %vm1328, %v1322, %v1329
    %vm1331 = vcmp.eq.s32.totalorder %v1326, 2
    %v1332 = vxor.u32 %v1322, 2147483648
    %v1333 = vsel %vm1331, %v1332, %v1323
    %v1334 = vsel %vm1327, %v1330, %v1333
    %v1335 = vsel %vm1324, nan, %v1334
    %v1336 = vand.u32 2147483647, %v686
    %vm1337 = vcmp.le.f32.partialorder %v1336, 0.7853982
    %vm1338 = vcmp.lt.s32.totalorder %v686, 0
    %v1339 = vand.u32 %v686, 2139095040
    %v1340 = vshrl.u32 %v1339, 23
    %v1341 = vsub.s32 %v1340, 127
    %v1342 = vand.u32 2147483647, %v686
    %v1343 = vand.u32 %v1342, 8388607
    %v1344 = vor.u32 %v1343, 8388608
    %v1345 = vsub.s32 0, %v1344
    %v1346 = vadd.s32 %v1341, 1
    %vm1347 = vcmp.gt.s32.totalorder %v1346, 0
    %v1348 = vsel %vm1347, %v1346, 0
    %v1349 = vshrl.u32 %v1348, 5
    %v1350 = vand.u32 %v1348, 31
    %v1351 = vsub.s32 32, %v1350
    %v1352 = vshrl.u32 683565275, %v1351
    %v1353 = vshll.u32 683565275, %v1350
    %v1354 = vshrl.u32 2475754826, %v1351
    %v1355 = vor.u32 %v1353, %v1354
    %v1356 = vshll.u32 2475754826, %v1350
    %v1357 = vshrl.u32 2131351028, %v1351
    %v1358 = vor.u32 %v1356, %v1357
    %v1359 = vshll.u32 2131351028, %v1350
    %v1360 = vshrl.u32 2102212464, %v1351
    %v1361 = vor.u32 %v1359, %v1360
    %v1362 = vshll.u32 2102212464, %v1350
    %v1363 = vshrl.u32 920167782, %v1351
    %v1364 = vor.u32 %v1362, %v1363
    %v1365 = vshll.u32 920167782, %v1350
    %v1366 = vshrl.u32 1326507024, %v1351
    %v1367 = vor.u32 %v1365, %v1366
    %vm1368 = vcmp.lt.s32.totalorder %v1349, 1
    %vm1369 = vcmp.lt.s32.totalorder %v1349, 2
    %vm1370 = vcmp.lt.s32.totalorder %v1349, 3
    %vm1371 = vcmp.lt.s32.totalorder %v1349, 4
    %v1372 = vsel %vm1368, %v1352, %v1355
    %v1373 = vsel %vm1371, %v1361, 2102212464
    %v1374 = vsel %vm1370, %v1358, %v1373
    %v1375 = vsel %vm1369, %v1372, %v1374
    %v1376 = vsel %vm1368, %v1355, %v1358
    %v1377 = vsel %vm1371, %v1364, 920167782
    %v1378 = vsel %vm1370, %v1361, %v1377
    %v1379 = vsel %vm1369, %v1376, %v1378
    %v1380 = vsel %vm1368, %v1358, %v1361
    %v1381 = vsel %vm1371, %v1367, 1326507024
    %v1382 = vsel %vm1370, %v1364, %v1381
    %v1383 = vsel %vm1369, %v1380, %v1382
    %v1384 = vshll.u32 %v1344, 8
    %v1385 = vmul.u32.u64.compose %v1384, %v1383
    %v1386 = vextract.low.u32 %v1385
    %v1387 = vextract.high.u32 %v1385
    %v1388 = vmul.u32.u64.compose %v1384, %v1379
    %v1389 = vextract.low.u32 %v1388
    %v1390 = vextract.high.u32 %v1388
    %v1391 = vmul.u32 %v1384, %v1375
    %v1392 = vadd.s32 %v1387, %v1389
    %vm1393 = vc.u32 %v1387, %v1389
    %v1394 = vadd.s32 %v1390, 1
    %v1395 = vsel %vm1393, %v1394, %v1390
    %v1396 = vadd.s32 %v1391, %v1395
    %v1397 = vadd.s32 %v1396, 536870912
    %v1398 = vshrl.u32 %v1397, 30
    %v1399 = vshll.u32 %v1398, 30
    %v1400 = vsub.s32 %v1396, %v1399
    %vm1401 = vcmp.lt.s32.totalorder %v1400, 0
    %v1402 = vsub.s32 0, %v1400
    %v1403 = vsel %vm1401, %v1402, %v1400
    %v1404 = vclz %v1403
    %v1405 = vsub.s32 %v1404, 2
    %vm1406 = vcmp.gt.s32.totalorder 0, %v1405
    %v1407 = vsel %vm1406, 0, %v1405
    %v1408 = vsub.s32 32, %v1407
    %v1409 = vshll.u32 %v1400, %v1407
    %v1410 = vshrl.u32 %v1392, %v1408
    %v1411 = vor.u32 %v1409, %v1410
    %v1412 = vsub.s32 4294967266, %v1407
    %v1413 = vadd.s32 %v1412, 127
    %v1414 = vshll.u32 %v1413, 23
    %v1415 = vor.u32 4788187, %v1414
    %v1416 = vand.u32 2147483647, %v1415
    %v1418 = vcvt.s32.f32 %v1411
    %v1419 = vmul.f32 %v1418, %v1416
    %v1420 = vxor.u32 %v1419, 2147483648
    %v1421 = vsel %vm1338, %v1420, %v1419
    %v1422 = vsub.s32 4, %v1398
    %v1423 = vsel %vm1338, %v1422, %v1398
    %v1424 = vsel %vm1337, %v686, %v1421
    %v1425 = vsel %vm1337, 0, %v1423
    %v1426 = vcosq.f32.pop %v1424
    %v1427 = vsinq.f32.pop %v1424
    %vm1428 = vweird.f32 %v686
    %v1429 = vadd.s32 %v1425, 3
    %v1430 = vand.u32 %v1429, 3
    %vm1431 = vcmp.lt.s32.totalorder %v1430, 2
    %vm1432 = vcmp.eq.s32.totalorder %v1430, 0
    %v1433 = vxor.u32 %v1427, 2147483648
    %v1434 = vsel %vm1432, %v1426, %v1433
    %vm1435 = vcmp.eq.s32.totalorder %v1430, 2
    %v1436 = vxor.u32 %v1426, 2147483648
    %v1437 = vsel %vm1435, %v1436, %v1427
    %v1438 = vsel %vm1431, %v1434, %v1437
    %v1439 = vsel %vm1428, nan, %v1438
    %v1440 = vand.u32 2147483647, %v687
    %vm1441 = vcmp.le.f32.partialorder %v1440, 0.7853982
    %vm1442 = vcmp.lt.s32.totalorder %v687, 0
    %v1443 = vand.u32 %v687, 2139095040
    %v1444 = vshrl.u32 %v1443, 23
    %v1445 = vsub.s32 %v1444, 127
    %v1446 = vand.u32 2147483647, %v687
    %v1447 = vand.u32 %v1446, 8388607
    %v1448 = vor.u32 %v1447, 8388608
    %v1449 = vsub.s32 0, %v1448
    %v1450 = vadd.s32 %v1445, 1
    %vm1451 = vcmp.gt.s32.totalorder %v1450, 0
    %v1452 = vsel %vm1451, %v1450, 0
    %v1453 = vshrl.u32 %v1452, 5
    %v1454 = vand.u32 %v1452, 31
    %v1455 = vsub.s32 32, %v1454
    %v1456 = vshrl.u32 683565275, %v1455
    %v1457 = vshll.u32 683565275, %v1454
    %v1458 = vshrl.u32 2475754826, %v1455
    %v1459 = vor.u32 %v1457, %v1458
    %v1460 = vshll.u32 2475754826, %v1454
    %v1461 = vshrl.u32 2131351028, %v1455
    %v1462 = vor.u32 %v1460, %v1461
    %v1463 = vshll.u32 2131351028, %v1454
    %v1464 = vshrl.u32 2102212464, %v1455
    %v1465 = vor.u32 %v1463, %v1464
    %v1466 = vshll.u32 2102212464, %v1454
    %v1467 = vshrl.u32 920167782, %v1455
    %v1468 = vor.u32 %v1466, %v1467
    %v1469 = vshll.u32 920167782, %v1454
    %v1470 = vshrl.u32 1326507024, %v1455
    %v1471 = vor.u32 %v1469, %v1470
    %vm1472 = vcmp.lt.s32.totalorder %v1453, 1
    %vm1473 = vcmp.lt.s32.totalorder %v1453, 2
    %vm1474 = vcmp.lt.s32.totalorder %v1453, 3
    %vm1475 = vcmp.lt.s32.totalorder %v1453, 4
    %v1476 = vsel %vm1472, %v1456, %v1459
    %v1477 = vsel %vm1475, %v1465, 2102212464
    %v1478 = vsel %vm1474, %v1462, %v1477
    %v1479 = vsel %vm1473, %v1476, %v1478
    %v1480 = vsel %vm1472, %v1459, %v1462
    %v1481 = vsel %vm1475, %v1468, 920167782
    %v1482 = vsel %vm1474, %v1465, %v1481
    %v1483 = vsel %vm1473, %v1480, %v1482
    %v1484 = vsel %vm1472, %v1462, %v1465
    %v1485 = vsel %vm1475, %v1471, 1326507024
    %v1486 = vsel %vm1474, %v1468, %v1485
    %v1487 = vsel %vm1473, %v1484, %v1486
    %v1488 = vshll.u32 %v1448, 8
    %v1489 = vmul.u32.u64.compose %v1488, %v1487
    %v1490 = vextract.low.u32 %v1489
    %v1491 = vextract.high.u32 %v1489
    %v1492 = vmul.u32.u64.compose %v1488, %v1483
    %v1493 = vextract.low.u32 %v1492
    %v1494 = vextract.high.u32 %v1492
    %v1495 = vmul.u32 %v1488, %v1479
    %v1496 = vadd.s32 %v1491, %v1493
    %vm1497 = vc.u32 %v1491, %v1493
    %v1498 = vadd.s32 %v1494, 1
    %v1499 = vsel %vm1497, %v1498, %v1494
    %v1500 = vadd.s32 %v1495, %v1499
    %v1501 = vadd.s32 %v1500, 536870912
    %v1502 = vshrl.u32 %v1501, 30
    %v1503 = vshll.u32 %v1502, 30
    %v1504 = vsub.s32 %v1500, %v1503
    %vm1505 = vcmp.lt.s32.totalorder %v1504, 0
    %v1506 = vsub.s32 0, %v1504
    %v1507 = vsel %vm1505, %v1506, %v1504
    %v1508 = vclz %v1507
    %v1509 = vsub.s32 %v1508, 2
    %vm1510 = vcmp.gt.s32.totalorder 0, %v1509
    %v1511 = vsel %vm1510, 0, %v1509
    %v1512 = vsub.s32 32, %v1511
    %v1513 = vshll.u32 %v1504, %v1511
    %v1514 = vshrl.u32 %v1496, %v1512
    %v1515 = vor.u32 %v1513, %v1514
    %v1516 = vsub.s32 4294967266, %v1511
    %v1517 = vadd.s32 %v1516, 127
    %v1518 = vshll.u32 %v1517, 23
    %v1519 = vor.u32 4788187, %v1518
    %v1520 = vand.u32 2147483647, %v1519
    %v1522 = vcvt.s32.f32 %v1515
    %v1523 = vmul.f32 %v1522, %v1520
    %v1524 = vxor.u32 %v1523, 2147483648
    %v1525 = vsel %vm1442, %v1524, %v1523
    %v1526 = vsub.s32 4, %v1502
    %v1527 = vsel %vm1442, %v1526, %v1502
    %v1528 = vsel %vm1441, %v687, %v1525
    %v1529 = vsel %vm1441, 0, %v1527
    %v1530 = vcosq.f32.pop %v1528
    %v1531 = vsinq.f32.pop %v1528
    %vm1532 = vweird.f32 %v687
    %v1533 = vadd.s32 %v1529, 3
    %v1534 = vand.u32 %v1533, 3
    %vm1535 = vcmp.lt.s32.totalorder %v1534, 2
    %vm1536 = vcmp.eq.s32.totalorder %v1534, 0
    %v1537 = vxor.u32 %v1531, 2147483648
    %v1538 = vsel %vm1536, %v1530, %v1537
    %vm1539 = vcmp.eq.s32.totalorder %v1534, 2
    %v1540 = vxor.u32 %v1530, 2147483648
    %v1541 = vsel %vm1539, %v1540, %v1531
    %v1542 = vsel %vm1535, %v1538, %v1541
    %v1543 = vsel %vm1532, nan, %v1542
    %v1544 = vand.u32 2147483647, %v688
    %vm1545 = vcmp.le.f32.partialorder %v1544, 0.7853982
    %vm1546 = vcmp.lt.s32.totalorder %v688, 0
    %v1547 = vand.u32 %v688, 2139095040
    %v1548 = vshrl.u32 %v1547, 23
    %v1549 = vsub.s32 %v1548, 127
    %v1550 = vand.u32 2147483647, %v688
    %v1551 = vand.u32 %v1550, 8388607
    %v1552 = vor.u32 %v1551, 8388608
    %v1553 = vsub.s32 0, %v1552
    %v1554 = vadd.s32 %v1549, 1
    %vm1555 = vcmp.gt.s32.totalorder %v1554, 0
    %v1556 = vsel %vm1555, %v1554, 0
    %v1557 = vshrl.u32 %v1556, 5
    %v1558 = vand.u32 %v1556, 31
    %v1559 = vsub.s32 32, %v1558
    %v1560 = vshrl.u32 683565275, %v1559
    %v1561 = vshll.u32 683565275, %v1558
    %v1562 = vshrl.u32 2475754826, %v1559
    %v1563 = vor.u32 %v1561, %v1562
    %v1564 = vshll.u32 2475754826, %v1558
    %v1565 = vshrl.u32 2131351028, %v1559
    %v1566 = vor.u32 %v1564, %v1565
    %v1567 = vshll.u32 2131351028, %v1558
    %v1568 = vshrl.u32 2102212464, %v1559
    %v1569 = vor.u32 %v1567, %v1568
    %v1570 = vshll.u32 2102212464, %v1558
    %v1571 = vshrl.u32 920167782, %v1559
    %v1572 = vor.u32 %v1570, %v1571
    %v1573 = vshll.u32 920167782, %v1558
    %v1574 = vshrl.u32 1326507024, %v1559
    %v1575 = vor.u32 %v1573, %v1574
    %vm1576 = vcmp.lt.s32.totalorder %v1557, 1
    %vm1577 = vcmp.lt.s32.totalorder %v1557, 2
    %vm1578 = vcmp.lt.s32.totalorder %v1557, 3
    %vm1579 = vcmp.lt.s32.totalorder %v1557, 4
    %v1580 = vsel %vm1576, %v1560, %v1563
    %v1581 = vsel %vm1579, %v1569, 2102212464
    %v1582 = vsel %vm1578, %v1566, %v1581
    %v1583 = vsel %vm1577, %v1580, %v1582
    %v1584 = vsel %vm1576, %v1563, %v1566
    %v1585 = vsel %vm1579, %v1572, 920167782
    %v1586 = vsel %vm1578, %v1569, %v1585
    %v1587 = vsel %vm1577, %v1584, %v1586
    %v1588 = vsel %vm1576, %v1566, %v1569
    %v1589 = vsel %vm1579, %v1575, 1326507024
    %v1590 = vsel %vm1578, %v1572, %v1589
    %v1591 = vsel %vm1577, %v1588, %v1590
    %v1592 = vshll.u32 %v1552, 8
    %v1593 = vmul.u32.u64.compose %v1592, %v1591
    %v1594 = vextract.low.u32 %v1593
    %v1595 = vextract.high.u32 %v1593
    %v1596 = vmul.u32.u64.compose %v1592, %v1587
    %v1597 = vextract.low.u32 %v1596
    %v1598 = vextract.high.u32 %v1596
    %v1599 = vmul.u32 %v1592, %v1583
    %v1600 = vadd.s32 %v1595, %v1597
    %vm1601 = vc.u32 %v1595, %v1597
    %v1602 = vadd.s32 %v1598, 1
    %v1603 = vsel %vm1601, %v1602, %v1598
    %v1604 = vadd.s32 %v1599, %v1603
    %v1605 = vadd.s32 %v1604, 536870912
    %v1606 = vshrl.u32 %v1605, 30
    %v1607 = vshll.u32 %v1606, 30
    %v1608 = vsub.s32 %v1604, %v1607
    %vm1609 = vcmp.lt.s32.totalorder %v1608, 0
    %v1610 = vsub.s32 0, %v1608
    %v1611 = vsel %vm1609, %v1610, %v1608
    %v1612 = vclz %v1611
    %v1613 = vsub.s32 %v1612, 2
    %vm1614 = vcmp.gt.s32.totalorder 0, %v1613
    %v1615 = vsel %vm1614, 0, %v1613
    %v1616 = vsub.s32 32, %v1615
    %v1617 = vshll.u32 %v1608, %v1615
    %v1618 = vshrl.u32 %v1600, %v1616
    %v1619 = vor.u32 %v1617, %v1618
    %v1620 = vsub.s32 4294967266, %v1615
    %v1621 = vadd.s32 %v1620, 127
    %v1622 = vshll.u32 %v1621, 23
    %v1623 = vor.u32 4788187, %v1622
    %v1624 = vand.u32 2147483647, %v1623
    %v1626 = vcvt.s32.f32 %v1619
    %v1627 = vmul.f32 %v1626, %v1624
    %v1628 = vxor.u32 %v1627, 2147483648
    %v1629 = vsel %vm1546, %v1628, %v1627
    %v1630 = vsub.s32 4, %v1606
    %v1631 = vsel %vm1546, %v1630, %v1606
    %v1632 = vsel %vm1545, %v688, %v1629
    %v1633 = vsel %vm1545, 0, %v1631
    %v1634 = vcosq.f32.pop %v1632
    %v1635 = vsinq.f32.pop %v1632
    %vm1636 = vweird.f32 %v688
    %v1637 = vadd.s32 %v1633, 3
    %v1638 = vand.u32 %v1637, 3
    %vm1639 = vcmp.lt.s32.totalorder %v1638, 2
    %vm1640 = vcmp.eq.s32.totalorder %v1638, 0
    %v1641 = vxor.u32 %v1635, 2147483648
    %v1642 = vsel %vm1640, %v1634, %v1641
    %vm1643 = vcmp.eq.s32.totalorder %v1638, 2
    %v1644 = vxor.u32 %v1634, 2147483648
    %v1645 = vsel %vm1643, %v1644, %v1635
    %v1646 = vsel %vm1639, %v1642, %v1645
    %v1647 = vsel %vm1636, nan, %v1646
    %v1648 = vand.u32 2147483647, %v689
    %vm1649 = vcmp.le.f32.partialorder %v1648, 0.7853982
    %vm1650 = vcmp.lt.s32.totalorder %v689, 0
    %v1651 = vand.u32 %v689, 2139095040
    %v1652 = vshrl.u32 %v1651, 23
    %v1653 = vsub.s32 %v1652, 127
    %v1654 = vand.u32 2147483647, %v689
    %v1655 = vand.u32 %v1654, 8388607
    %v1656 = vor.u32 %v1655, 8388608
    %v1657 = vsub.s32 0, %v1656
    %v1658 = vadd.s32 %v1653, 1
    %vm1659 = vcmp.gt.s32.totalorder %v1658, 0
    %v1660 = vsel %vm1659, %v1658, 0
    %v1661 = vshrl.u32 %v1660, 5
    %v1662 = vand.u32 %v1660, 31
    %v1663 = vsub.s32 32, %v1662
    %v1664 = vshrl.u32 683565275, %v1663
    %v1665 = vshll.u32 683565275, %v1662
    %v1666 = vshrl.u32 2475754826, %v1663
    %v1667 = vor.u32 %v1665, %v1666
    %v1668 = vshll.u32 2475754826, %v1662
    %v1669 = vshrl.u32 2131351028, %v1663
    %v1670 = vor.u32 %v1668, %v1669
    %v1671 = vshll.u32 2131351028, %v1662
    %v1672 = vshrl.u32 2102212464, %v1663
    %v1673 = vor.u32 %v1671, %v1672
    %v1674 = vshll.u32 2102212464, %v1662
    %v1675 = vshrl.u32 920167782, %v1663
    %v1676 = vor.u32 %v1674, %v1675
    %v1677 = vshll.u32 920167782, %v1662
    %v1678 = vshrl.u32 1326507024, %v1663
    %v1679 = vor.u32 %v1677, %v1678
    %vm1680 = vcmp.lt.s32.totalorder %v1661, 1
    %vm1681 = vcmp.lt.s32.totalorder %v1661, 2
    %vm1682 = vcmp.lt.s32.totalorder %v1661, 3
    %vm1683 = vcmp.lt.s32.totalorder %v1661, 4
    %v1684 = vsel %vm1680, %v1664, %v1667
    %v1685 = vsel %vm1683, %v1673, 2102212464
    %v1686 = vsel %vm1682, %v1670, %v1685
    %v1687 = vsel %vm1681, %v1684, %v1686
    %v1688 = vsel %vm1680, %v1667, %v1670
    %v1689 = vsel %vm1683, %v1676, 920167782
    %v1690 = vsel %vm1682, %v1673, %v1689
    %v1691 = vsel %vm1681, %v1688, %v1690
    %v1692 = vsel %vm1680, %v1670, %v1673
    %v1693 = vsel %vm1683, %v1679, 1326507024
    %v1694 = vsel %vm1682, %v1676, %v1693
    %v1695 = vsel %vm1681, %v1692, %v1694
    %v1696 = vshll.u32 %v1656, 8
    %v1697 = vmul.u32.u64.compose %v1696, %v1695
    %v1698 = vextract.low.u32 %v1697
    %v1699 = vextract.high.u32 %v1697
    %v1700 = vmul.u32.u64.compose %v1696, %v1691
    %v1701 = vextract.low.u32 %v1700
    %v1702 = vextract.high.u32 %v1700
    %v1703 = vmul.u32 %v1696, %v1687
    %v1704 = vadd.s32 %v1699, %v1701
    %vm1705 = vc.u32 %v1699, %v1701
    %v1706 = vadd.s32 %v1702, 1
    %v1707 = vsel %vm1705, %v1706, %v1702
    %v1708 = vadd.s32 %v1703, %v1707
    %v1709 = vadd.s32 %v1708, 536870912
    %v1710 = vshrl.u32 %v1709, 30
    %v1711 = vshll.u32 %v1710, 30
    %v1712 = vsub.s32 %v1708, %v1711
    %vm1713 = vcmp.lt.s32.totalorder %v1712, 0
    %v1714 = vsub.s32 0, %v1712
    %v1715 = vsel %vm1713, %v1714, %v1712
    %v1716 = vclz %v1715
    %v1717 = vsub.s32 %v1716, 2
    %vm1718 = vcmp.gt.s32.totalorder 0, %v1717
    %v1719 = vsel %vm1718, 0, %v1717
    %v1720 = vsub.s32 32, %v1719
    %v1721 = vshll.u32 %v1712, %v1719
    %v1722 = vshrl.u32 %v1704, %v1720
    %v1723 = vor.u32 %v1721, %v1722
    %v1724 = vsub.s32 4294967266, %v1719
    %v1725 = vadd.s32 %v1724, 127
    %v1726 = vshll.u32 %v1725, 23
    %v1727 = vor.u32 4788187, %v1726
    %v1728 = vand.u32 2147483647, %v1727
    %v1730 = vcvt.s32.f32 %v1723
    %v1731 = vmul.f32 %v1730, %v1728
    %v1732 = vxor.u32 %v1731, 2147483648
    %v1733 = vsel %vm1650, %v1732, %v1731
    %v1734 = vsub.s32 4, %v1710
    %v1735 = vsel %vm1650, %v1734, %v1710
    %v1736 = vsel %vm1649, %v689, %v1733
    %v1737 = vsel %vm1649, 0, %v1735
    %v1738 = vcosq.f32.pop %v1736
    %v1739 = vsinq.f32.pop %v1736
    %vm1740 = vweird.f32 %v689
    %v1741 = vadd.s32 %v1737, 3
    %v1742 = vand.u32 %v1741, 3
    %vm1743 = vcmp.lt.s32.totalorder %v1742, 2
    %vm1744 = vcmp.eq.s32.totalorder %v1742, 0
    %v1745 = vxor.u32 %v1739, 2147483648
    %v1746 = vsel %vm1744, %v1738, %v1745
    %vm1747 = vcmp.eq.s32.totalorder %v1742, 2
    %v1748 = vxor.u32 %v1738, 2147483648
    %v1749 = vsel %vm1747, %v1748, %v1739
    %v1750 = vsel %vm1743, %v1746, %v1749
    %v1751 = vsel %vm1740, nan, %v1750
    %v1752 = vand.u32 2147483647, %v690
    %vm1753 = vcmp.le.f32.partialorder %v1752, 0.7853982
    %vm1754 = vcmp.lt.s32.totalorder %v690, 0
    %v1755 = vand.u32 %v690, 2139095040
    %v1756 = vshrl.u32 %v1755, 23
    %v1757 = vsub.s32 %v1756, 127
    %v1758 = vand.u32 2147483647, %v690
    %v1759 = vand.u32 %v1758, 8388607
    %v1760 = vor.u32 %v1759, 8388608
    %v1761 = vsub.s32 0, %v1760
    %v1762 = vadd.s32 %v1757, 1
    %vm1763 = vcmp.gt.s32.totalorder %v1762, 0
    %v1764 = vsel %vm1763, %v1762, 0
    %v1765 = vshrl.u32 %v1764, 5
    %v1766 = vand.u32 %v1764, 31
    %v1767 = vsub.s32 32, %v1766
    %v1768 = vshrl.u32 683565275, %v1767
    %v1769 = vshll.u32 683565275, %v1766
    %v1770 = vshrl.u32 2475754826, %v1767
    %v1771 = vor.u32 %v1769, %v1770
    %v1772 = vshll.u32 2475754826, %v1766
    %v1773 = vshrl.u32 2131351028, %v1767
    %v1774 = vor.u32 %v1772, %v1773
    %v1775 = vshll.u32 2131351028, %v1766
    %v1776 = vshrl.u32 2102212464, %v1767
    %v1777 = vor.u32 %v1775, %v1776
    %v1778 = vshll.u32 2102212464, %v1766
    %v1779 = vshrl.u32 920167782, %v1767
    %v1780 = vor.u32 %v1778, %v1779
    %v1781 = vshll.u32 920167782, %v1766
    %v1782 = vshrl.u32 1326507024, %v1767
    %v1783 = vor.u32 %v1781, %v1782
    %vm1784 = vcmp.lt.s32.totalorder %v1765, 1
    %vm1785 = vcmp.lt.s32.totalorder %v1765, 2
    %vm1786 = vcmp.lt.s32.totalorder %v1765, 3
    %vm1787 = vcmp.lt.s32.totalorder %v1765, 4
    %v1788 = vsel %vm1784, %v1768, %v1771
    %v1789 = vsel %vm1787, %v1777, 2102212464
    %v1790 = vsel %vm1786, %v1774, %v1789
    %v1791 = vsel %vm1785, %v1788, %v1790
    %v1792 = vsel %vm1784, %v1771, %v1774
    %v1793 = vsel %vm1787, %v1780, 920167782
    %v1794 = vsel %vm1786, %v1777, %v1793
    %v1795 = vsel %vm1785, %v1792, %v1794
    %v1796 = vsel %vm1784, %v1774, %v1777
    %v1797 = vsel %vm1787, %v1783, 1326507024
    %v1798 = vsel %vm1786, %v1780, %v1797
    %v1799 = vsel %vm1785, %v1796, %v1798
    %v1800 = vshll.u32 %v1760, 8
    %v1801 = vmul.u32.u64.compose %v1800, %v1799
    %v1802 = vextract.low.u32 %v1801
    %v1803 = vextract.high.u32 %v1801
    %v1804 = vmul.u32.u64.compose %v1800, %v1795
    %v1805 = vextract.low.u32 %v1804
    %v1806 = vextract.high.u32 %v1804
    %v1807 = vmul.u32 %v1800, %v1791
    %v1808 = vadd.s32 %v1803, %v1805
    %vm1809 = vc.u32 %v1803, %v1805
    %v1810 = vadd.s32 %v1806, 1
    %v1811 = vsel %vm1809, %v1810, %v1806
    %v1812 = vadd.s32 %v1807, %v1811
    %v1813 = vadd.s32 %v1812, 536870912
    %v1814 = vshrl.u32 %v1813, 30
    %v1815 = vshll.u32 %v1814, 30
    %v1816 = vsub.s32 %v1812, %v1815
    %vm1817 = vcmp.lt.s32.totalorder %v1816, 0
    %v1818 = vsub.s32 0, %v1816
    %v1819 = vsel %vm1817, %v1818, %v1816
    %v1820 = vclz %v1819
    %v1821 = vsub.s32 %v1820, 2
    %vm1822 = vcmp.gt.s32.totalorder 0, %v1821
    %v1823 = vsel %vm1822, 0, %v1821
    %v1824 = vsub.s32 32, %v1823
    %v1825 = vshll.u32 %v1816, %v1823
    %v1826 = vshrl.u32 %v1808, %v1824
    %v1827 = vor.u32 %v1825, %v1826
    %v1828 = vsub.s32 4294967266, %v1823
    %v1829 = vadd.s32 %v1828, 127
    %v1830 = vshll.u32 %v1829, 23
    %v1831 = vor.u32 4788187, %v1830
    %v1832 = vand.u32 2147483647, %v1831
    %v1834 = vcvt.s32.f32 %v1827
    %v1835 = vmul.f32 %v1834, %v1832
    %v1836 = vxor.u32 %v1835, 2147483648
    %v1837 = vsel %vm1754, %v1836, %v1835
    %v1838 = vsub.s32 4, %v1814
    %v1839 = vsel %vm1754, %v1838, %v1814
    %v1840 = vsel %vm1753, %v690, %v1837
    %v1841 = vsel %vm1753, 0, %v1839
    %v1842 = vcosq.f32.pop %v1840
    %v1843 = vsinq.f32.pop %v1840
    %vm1844 = vweird.f32 %v690
    %v1845 = vadd.s32 %v1841, 3
    %v1846 = vand.u32 %v1845, 3
    %vm1847 = vcmp.lt.s32.totalorder %v1846, 2
    %vm1848 = vcmp.eq.s32.totalorder %v1846, 0
    %v1849 = vxor.u32 %v1843, 2147483648
    %v1850 = vsel %vm1848, %v1842, %v1849
    %vm1851 = vcmp.eq.s32.totalorder %v1846, 2
    %v1852 = vxor.u32 %v1842, 2147483648
    %v1853 = vsel %vm1851, %v1852, %v1843
    %v1854 = vsel %vm1847, %v1850, %v1853
    %v1855 = vsel %vm1844, nan, %v1854
    %v1856 = vand.u32 2147483647, %v691
    %vm1857 = vcmp.le.f32.partialorder %v1856, 0.7853982
    %vm1858 = vcmp.lt.s32.totalorder %v691, 0
    %v1859 = vand.u32 %v691, 2139095040
    %v1860 = vshrl.u32 %v1859, 23
    %v1861 = vsub.s32 %v1860, 127
    %v1862 = vand.u32 2147483647, %v691
    %v1863 = vand.u32 %v1862, 8388607
    %v1864 = vor.u32 %v1863, 8388608
    %v1865 = vsub.s32 0, %v1864
    %v1866 = vadd.s32 %v1861, 1
    %vm1867 = vcmp.gt.s32.totalorder %v1866, 0
    %v1868 = vsel %vm1867, %v1866, 0
    %v1869 = vshrl.u32 %v1868, 5
    %v1870 = vand.u32 %v1868, 31
    %v1871 = vsub.s32 32, %v1870
    %v1872 = vshrl.u32 683565275, %v1871
    %v1873 = vshll.u32 683565275, %v1870
    %v1874 = vshrl.u32 2475754826, %v1871
    %v1875 = vor.u32 %v1873, %v1874
    %v1876 = vshll.u32 2475754826, %v1870
    %v1877 = vshrl.u32 2131351028, %v1871
    %v1878 = vor.u32 %v1876, %v1877
    %v1879 = vshll.u32 2131351028, %v1870
    %v1880 = vshrl.u32 2102212464, %v1871
    %v1881 = vor.u32 %v1879, %v1880
    %v1882 = vshll.u32 2102212464, %v1870
    %v1883 = vshrl.u32 920167782, %v1871
    %v1884 = vor.u32 %v1882, %v1883
    %v1885 = vshll.u32 920167782, %v1870
    %v1886 = vshrl.u32 1326507024, %v1871
    %v1887 = vor.u32 %v1885, %v1886
    %vm1888 = vcmp.lt.s32.totalorder %v1869, 1
    %vm1889 = vcmp.lt.s32.totalorder %v1869, 2
    %vm1890 = vcmp.lt.s32.totalorder %v1869, 3
    %vm1891 = vcmp.lt.s32.totalorder %v1869, 4
    %v1892 = vsel %vm1888, %v1872, %v1875
    %v1893 = vsel %vm1891, %v1881, 2102212464
    %v1894 = vsel %vm1890, %v1878, %v1893
    %v1895 = vsel %vm1889, %v1892, %v1894
    %v1896 = vsel %vm1888, %v1875, %v1878
    %v1897 = vsel %vm1891, %v1884, 920167782
    %v1898 = vsel %vm1890, %v1881, %v1897
    %v1899 = vsel %vm1889, %v1896, %v1898
    %v1900 = vsel %vm1888, %v1878, %v1881
    %v1901 = vsel %vm1891, %v1887, 1326507024
    %v1902 = vsel %vm1890, %v1884, %v1901
    %v1903 = vsel %vm1889, %v1900, %v1902
    %v1904 = vshll.u32 %v1864, 8
    %v1905 = vmul.u32.u64.compose %v1904, %v1903
    %v1906 = vextract.low.u32 %v1905
    %v1907 = vextract.high.u32 %v1905
    %v1908 = vmul.u32.u64.compose %v1904, %v1899
    %v1909 = vextract.low.u32 %v1908
    %v1910 = vextract.high.u32 %v1908
    %v1911 = vmul.u32 %v1904, %v1895
    %v1912 = vadd.s32 %v1907, %v1909
    %vm1913 = vc.u32 %v1907, %v1909
    %v1914 = vadd.s32 %v1910, 1
    %v1915 = vsel %vm1913, %v1914, %v1910
    %v1916 = vadd.s32 %v1911, %v1915
    %v1917 = vadd.s32 %v1916, 536870912
    %v1918 = vshrl.u32 %v1917, 30
    %v1919 = vshll.u32 %v1918, 30
    %v1920 = vsub.s32 %v1916, %v1919
    %vm1921 = vcmp.lt.s32.totalorder %v1920, 0
    %v1922 = vsub.s32 0, %v1920
    %v1923 = vsel %vm1921, %v1922, %v1920
    %v1924 = vclz %v1923
    %v1925 = vsub.s32 %v1924, 2
    %vm1926 = vcmp.gt.s32.totalorder 0, %v1925
    %v1927 = vsel %vm1926, 0, %v1925
    %v1928 = vsub.s32 32, %v1927
    %v1929 = vshll.u32 %v1920, %v1927
    %v1930 = vshrl.u32 %v1912, %v1928
    %v1931 = vor.u32 %v1929, %v1930
    %v1932 = vsub.s32 4294967266, %v1927
    %v1933 = vadd.s32 %v1932, 127
    %v1934 = vshll.u32 %v1933, 23
    %v1935 = vor.u32 4788187, %v1934
    %v1936 = vand.u32 2147483647, %v1935
    %v1938 = vcvt.s32.f32 %v1931
    %v1939 = vmul.f32 %v1938, %v1936
    %v1940 = vxor.u32 %v1939, 2147483648
    %v1941 = vsel %vm1858, %v1940, %v1939
    %v1942 = vsub.s32 4, %v1918
    %v1943 = vsel %vm1858, %v1942, %v1918
    %v1944 = vsel %vm1857, %v691, %v1941
    %v1945 = vsel %vm1857, 0, %v1943
    %v1946 = vcosq.f32.pop %v1944
    %v1947 = vsinq.f32.pop %v1944
    %vm1948 = vweird.f32 %v691
    %v1949 = vadd.s32 %v1945, 3
    %v1950 = vand.u32 %v1949, 3
    %vm1951 = vcmp.lt.s32.totalorder %v1950, 2
    %vm1952 = vcmp.eq.s32.totalorder %v1950, 0
    %v1953 = vxor.u32 %v1947, 2147483648
    %v1954 = vsel %vm1952, %v1946, %v1953
    %vm1955 = vcmp.eq.s32.totalorder %v1950, 2
    %v1956 = vxor.u32 %v1946, 2147483648
    %v1957 = vsel %vm1955, %v1956, %v1947
    %v1958 = vsel %vm1951, %v1954, %v1957
    %v1959 = vsel %vm1948, nan, %v1958
    %v1960 = vand.u32 2147483647, %v692
    %vm1961 = vcmp.le.f32.partialorder %v1960, 0.7853982
    %vm1962 = vcmp.lt.s32.totalorder %v692, 0
    %v1963 = vand.u32 %v692, 2139095040
    %v1964 = vshrl.u32 %v1963, 23
    %v1965 = vsub.s32 %v1964, 127
    %v1966 = vand.u32 2147483647, %v692
    %v1967 = vand.u32 %v1966, 8388607
    %v1968 = vor.u32 %v1967, 8388608
    %v1969 = vsub.s32 0, %v1968
    %v1970 = vadd.s32 %v1965, 1
    %vm1971 = vcmp.gt.s32.totalorder %v1970, 0
    %v1972 = vsel %vm1971, %v1970, 0
    %v1973 = vshrl.u32 %v1972, 5
    %v1974 = vand.u32 %v1972, 31
    %v1975 = vsub.s32 32, %v1974
    %v1976 = vshrl.u32 683565275, %v1975
    %v1977 = vshll.u32 683565275, %v1974
    %v1978 = vshrl.u32 2475754826, %v1975
    %v1979 = vor.u32 %v1977, %v1978
    %v1980 = vshll.u32 2475754826, %v1974
    %v1981 = vshrl.u32 2131351028, %v1975
    %v1982 = vor.u32 %v1980, %v1981
    %v1983 = vshll.u32 2131351028, %v1974
    %v1984 = vshrl.u32 2102212464, %v1975
    %v1985 = vor.u32 %v1983, %v1984
    %v1986 = vshll.u32 2102212464, %v1974
    %v1987 = vshrl.u32 920167782, %v1975
    %v1988 = vor.u32 %v1986, %v1987
    %v1989 = vshll.u32 920167782, %v1974
    %v1990 = vshrl.u32 1326507024, %v1975
    %v1991 = vor.u32 %v1989, %v1990
    %vm1992 = vcmp.lt.s32.totalorder %v1973, 1
    %vm1993 = vcmp.lt.s32.totalorder %v1973, 2
    %vm1994 = vcmp.lt.s32.totalorder %v1973, 3
    %vm1995 = vcmp.lt.s32.totalorder %v1973, 4
    %v1996 = vsel %vm1992, %v1976, %v1979
    %v1997 = vsel %vm1995, %v1985, 2102212464
    %v1998 = vsel %vm1994, %v1982, %v1997
    %v1999 = vsel %vm1993, %v1996, %v1998
    %v2000 = vsel %vm1992, %v1979, %v1982
    %v2001 = vsel %vm1995, %v1988, 920167782
    %v2002 = vsel %vm1994, %v1985, %v2001
    %v2003 = vsel %vm1993, %v2000, %v2002
    %v2004 = vsel %vm1992, %v1982, %v1985
    %v2005 = vsel %vm1995, %v1991, 1326507024
    %v2006 = vsel %vm1994, %v1988, %v2005
    %v2007 = vsel %vm1993, %v2004, %v2006
    %v2008 = vshll.u32 %v1968, 8
    %v2009 = vmul.u32.u64.compose %v2008, %v2007
    %v2010 = vextract.low.u32 %v2009
    %v2011 = vextract.high.u32 %v2009
    %v2012 = vmul.u32.u64.compose %v2008, %v2003
    %v2013 = vextract.low.u32 %v2012
    %v2014 = vextract.high.u32 %v2012
    %v2015 = vmul.u32 %v2008, %v1999
    %v2016 = vadd.s32 %v2011, %v2013
    %vm2017 = vc.u32 %v2011, %v2013
    %v2018 = vadd.s32 %v2014, 1
    %v2019 = vsel %vm2017, %v2018, %v2014
    %v2020 = vadd.s32 %v2015, %v2019
    %v2021 = vadd.s32 %v2020, 536870912
    %v2022 = vshrl.u32 %v2021, 30
    %v2023 = vshll.u32 %v2022, 30
    %v2024 = vsub.s32 %v2020, %v2023
    %vm2025 = vcmp.lt.s32.totalorder %v2024, 0
    %v2026 = vsub.s32 0, %v2024
    %v2027 = vsel %vm2025, %v2026, %v2024
    %v2028 = vclz %v2027
    %v2029 = vsub.s32 %v2028, 2
    %vm2030 = vcmp.gt.s32.totalorder 0, %v2029
    %v2031 = vsel %vm2030, 0, %v2029
    %v2032 = vsub.s32 32, %v2031
    %v2033 = vshll.u32 %v2024, %v2031
    %v2034 = vshrl.u32 %v2016, %v2032
    %v2035 = vor.u32 %v2033, %v2034
    %v2036 = vsub.s32 4294967266, %v2031
    %v2037 = vadd.s32 %v2036, 127
    %v2038 = vshll.u32 %v2037, 23
    %v2039 = vor.u32 4788187, %v2038
    %v2040 = vand.u32 2147483647, %v2039
    %v2042 = vcvt.s32.f32 %v2035
    %v2043 = vmul.f32 %v2042, %v2040
    %v2044 = vxor.u32 %v2043, 2147483648
    %v2045 = vsel %vm1962, %v2044, %v2043
    %v2046 = vsub.s32 4, %v2022
    %v2047 = vsel %vm1962, %v2046, %v2022
    %v2048 = vsel %vm1961, %v692, %v2045
    %v2049 = vsel %vm1961, 0, %v2047
    %v2050 = vcosq.f32.pop %v2048
    %v2051 = vsinq.f32.pop %v2048
    %vm2052 = vweird.f32 %v692
    %v2053 = vadd.s32 %v2049, 3
    %v2054 = vand.u32 %v2053, 3
    %vm2055 = vcmp.lt.s32.totalorder %v2054, 2
    %vm2056 = vcmp.eq.s32.totalorder %v2054, 0
    %v2057 = vxor.u32 %v2051, 2147483648
    %v2058 = vsel %vm2056, %v2050, %v2057
    %vm2059 = vcmp.eq.s32.totalorder %v2054, 2
    %v2060 = vxor.u32 %v2050, 2147483648
    %v2061 = vsel %vm2059, %v2060, %v2051
    %v2062 = vsel %vm2055, %v2058, %v2061
    %v2063 = vsel %vm2052, nan, %v2062
    %v2064 = vand.u32 2147483647, %v693
    %vm2065 = vcmp.le.f32.partialorder %v2064, 0.7853982
    %vm2066 = vcmp.lt.s32.totalorder %v693, 0
    %v2067 = vand.u32 %v693, 2139095040
    %v2068 = vshrl.u32 %v2067, 23
    %v2069 = vsub.s32 %v2068, 127
    %v2070 = vand.u32 2147483647, %v693
    %v2071 = vand.u32 %v2070, 8388607
    %v2072 = vor.u32 %v2071, 8388608
    %v2073 = vsub.s32 0, %v2072
    %v2074 = vadd.s32 %v2069, 1
    %vm2075 = vcmp.gt.s32.totalorder %v2074, 0
    %v2076 = vsel %vm2075, %v2074, 0
    %v2077 = vshrl.u32 %v2076, 5
    %v2078 = vand.u32 %v2076, 31
    %v2079 = vsub.s32 32, %v2078
    %v2080 = vshrl.u32 683565275, %v2079
    %v2081 = vshll.u32 683565275, %v2078
    %v2082 = vshrl.u32 2475754826, %v2079
    %v2083 = vor.u32 %v2081, %v2082
    %v2084 = vshll.u32 2475754826, %v2078
    %v2085 = vshrl.u32 2131351028, %v2079
    %v2086 = vor.u32 %v2084, %v2085
    %v2087 = vshll.u32 2131351028, %v2078
    %v2088 = vshrl.u32 2102212464, %v2079
    %v2089 = vor.u32 %v2087, %v2088
    %v2090 = vshll.u32 2102212464, %v2078
    %v2091 = vshrl.u32 920167782, %v2079
    %v2092 = vor.u32 %v2090, %v2091
    %v2093 = vshll.u32 920167782, %v2078
    %v2094 = vshrl.u32 1326507024, %v2079
    %v2095 = vor.u32 %v2093, %v2094
    %vm2096 = vcmp.lt.s32.totalorder %v2077, 1
    %vm2097 = vcmp.lt.s32.totalorder %v2077, 2
    %vm2098 = vcmp.lt.s32.totalorder %v2077, 3
    %vm2099 = vcmp.lt.s32.totalorder %v2077, 4
    %v2100 = vsel %vm2096, %v2080, %v2083
    %v2101 = vsel %vm2099, %v2089, 2102212464
    %v2102 = vsel %vm2098, %v2086, %v2101
    %v2103 = vsel %vm2097, %v2100, %v2102
    %v2104 = vsel %vm2096, %v2083, %v2086
    %v2105 = vsel %vm2099, %v2092, 920167782
    %v2106 = vsel %vm2098, %v2089, %v2105
    %v2107 = vsel %vm2097, %v2104, %v2106
    %v2108 = vsel %vm2096, %v2086, %v2089
    %v2109 = vsel %vm2099, %v2095, 1326507024
    %v2110 = vsel %vm2098, %v2092, %v2109
    %v2111 = vsel %vm2097, %v2108, %v2110
    %v2112 = vshll.u32 %v2072, 8
    %v2113 = vmul.u32.u64.compose %v2112, %v2111
    %v2114 = vextract.low.u32 %v2113
    %v2115 = vextract.high.u32 %v2113
    %v2116 = vmul.u32.u64.compose %v2112, %v2107
    %v2117 = vextract.low.u32 %v2116
    %v2118 = vextract.high.u32 %v2116
    %v2119 = vmul.u32 %v2112, %v2103
    %v2120 = vadd.s32 %v2115, %v2117
    %vm2121 = vc.u32 %v2115, %v2117
    %v2122 = vadd.s32 %v2118, 1
    %v2123 = vsel %vm2121, %v2122, %v2118
    %v2124 = vadd.s32 %v2119, %v2123
    %v2125 = vadd.s32 %v2124, 536870912
    %v2126 = vshrl.u32 %v2125, 30
    %v2127 = vshll.u32 %v2126, 30
    %v2128 = vsub.s32 %v2124, %v2127
    %vm2129 = vcmp.lt.s32.totalorder %v2128, 0
    %v2130 = vsub.s32 0, %v2128
    %v2131 = vsel %vm2129, %v2130, %v2128
    %v2132 = vclz %v2131
    %v2133 = vsub.s32 %v2132, 2
    %vm2134 = vcmp.gt.s32.totalorder 0, %v2133
    %v2135 = vsel %vm2134, 0, %v2133
    %v2136 = vsub.s32 32, %v2135
    %v2137 = vshll.u32 %v2128, %v2135
    %v2138 = vshrl.u32 %v2120, %v2136
    %v2139 = vor.u32 %v2137, %v2138
    %v2140 = vsub.s32 4294967266, %v2135
    %v2141 = vadd.s32 %v2140, 127
    %v2142 = vshll.u32 %v2141, 23
    %v2143 = vor.u32 4788187, %v2142
    %v2144 = vand.u32 2147483647, %v2143
    %v2146 = vcvt.s32.f32 %v2139
    %v2147 = vmul.f32 %v2146, %v2144
    %v2148 = vxor.u32 %v2147, 2147483648
    %v2149 = vsel %vm2066, %v2148, %v2147
    %v2150 = vsub.s32 4, %v2126
    %v2151 = vsel %vm2066, %v2150, %v2126
    %v2152 = vsel %vm2065, %v693, %v2149
    %v2153 = vsel %vm2065, 0, %v2151
    %v2154 = vcosq.f32.pop %v2152
    %v2155 = vsinq.f32.pop %v2152
    %vm2156 = vweird.f32 %v693
    %v2157 = vadd.s32 %v2153, 3
    %v2158 = vand.u32 %v2157, 3
    %vm2159 = vcmp.lt.s32.totalorder %v2158, 2
    %vm2160 = vcmp.eq.s32.totalorder %v2158, 0
    %v2161 = vxor.u32 %v2155, 2147483648
    %v2162 = vsel %vm2160, %v2154, %v2161
    %vm2163 = vcmp.eq.s32.totalorder %v2158, 2
    %v2164 = vxor.u32 %v2154, 2147483648
    %v2165 = vsel %vm2163, %v2164, %v2155
    %v2166 = vsel %vm2159, %v2162, %v2165
    %v2167 = vsel %vm2156, nan, %v2166
    %v2168 = vand.u32 2147483647, %v694
    %vm2169 = vcmp.le.f32.partialorder %v2168, 0.7853982
    %vm2170 = vcmp.lt.s32.totalorder %v694, 0
    %v2171 = vand.u32 %v694, 2139095040
    %v2172 = vshrl.u32 %v2171, 23
    %v2173 = vsub.s32 %v2172, 127
    %v2174 = vand.u32 2147483647, %v694
    %v2175 = vand.u32 %v2174, 8388607
    %v2176 = vor.u32 %v2175, 8388608
    %v2177 = vsub.s32 0, %v2176
    %v2178 = vadd.s32 %v2173, 1
    %vm2179 = vcmp.gt.s32.totalorder %v2178, 0
    %v2180 = vsel %vm2179, %v2178, 0
    %v2181 = vshrl.u32 %v2180, 5
    %v2182 = vand.u32 %v2180, 31
    %v2183 = vsub.s32 32, %v2182
    %v2184 = vshrl.u32 683565275, %v2183
    %v2185 = vshll.u32 683565275, %v2182
    %v2186 = vshrl.u32 2475754826, %v2183
    %v2187 = vor.u32 %v2185, %v2186
    %v2188 = vshll.u32 2475754826, %v2182
    %v2189 = vshrl.u32 2131351028, %v2183
    %v2190 = vor.u32 %v2188, %v2189
    %v2191 = vshll.u32 2131351028, %v2182
    %v2192 = vshrl.u32 2102212464, %v2183
    %v2193 = vor.u32 %v2191, %v2192
    %v2194 = vshll.u32 2102212464, %v2182
    %v2195 = vshrl.u32 920167782, %v2183
    %v2196 = vor.u32 %v2194, %v2195
    %v2197 = vshll.u32 920167782, %v2182
    %v2198 = vshrl.u32 1326507024, %v2183
    %v2199 = vor.u32 %v2197, %v2198
    %vm2200 = vcmp.lt.s32.totalorder %v2181, 1
    %vm2201 = vcmp.lt.s32.totalorder %v2181, 2
    %vm2202 = vcmp.lt.s32.totalorder %v2181, 3
    %vm2203 = vcmp.lt.s32.totalorder %v2181, 4
    %v2204 = vsel %vm2200, %v2184, %v2187
    %v2205 = vsel %vm2203, %v2193, 2102212464
    %v2206 = vsel %vm2202, %v2190, %v2205
    %v2207 = vsel %vm2201, %v2204, %v2206
    %v2208 = vsel %vm2200, %v2187, %v2190
    %v2209 = vsel %vm2203, %v2196, 920167782
    %v2210 = vsel %vm2202, %v2193, %v2209
    %v2211 = vsel %vm2201, %v2208, %v2210
    %v2212 = vsel %vm2200, %v2190, %v2193
    %v2213 = vsel %vm2203, %v2199, 1326507024
    %v2214 = vsel %vm2202, %v2196, %v2213
    %v2215 = vsel %vm2201, %v2212, %v2214
    %v2216 = vshll.u32 %v2176, 8
    %v2217 = vmul.u32.u64.compose %v2216, %v2215
    %v2218 = vextract.low.u32 %v2217
    %v2219 = vextract.high.u32 %v2217
    %v2220 = vmul.u32.u64.compose %v2216, %v2211
    %v2221 = vextract.low.u32 %v2220
    %v2222 = vextract.high.u32 %v2220
    %v2223 = vmul.u32 %v2216, %v2207
    %v2224 = vadd.s32 %v2219, %v2221
    %vm2225 = vc.u32 %v2219, %v2221
    %v2226 = vadd.s32 %v2222, 1
    %v2227 = vsel %vm2225, %v2226, %v2222
    %v2228 = vadd.s32 %v2223, %v2227
    %v2229 = vadd.s32 %v2228, 536870912
    %v2230 = vshrl.u32 %v2229, 30
    %v2231 = vshll.u32 %v2230, 30
    %v2232 = vsub.s32 %v2228, %v2231
    %vm2233 = vcmp.lt.s32.totalorder %v2232, 0
    %v2234 = vsub.s32 0, %v2232
    %v2235 = vsel %vm2233, %v2234, %v2232
    %v2236 = vclz %v2235
    %v2237 = vsub.s32 %v2236, 2
    %vm2238 = vcmp.gt.s32.totalorder 0, %v2237
    %v2239 = vsel %vm2238, 0, %v2237
    %v2240 = vsub.s32 32, %v2239
    %v2241 = vshll.u32 %v2232, %v2239
    %v2242 = vshrl.u32 %v2224, %v2240
    %v2243 = vor.u32 %v2241, %v2242
    %v2244 = vsub.s32 4294967266, %v2239
    %v2245 = vadd.s32 %v2244, 127
    %v2246 = vshll.u32 %v2245, 23
    %v2247 = vor.u32 4788187, %v2246
    %v2248 = vand.u32 2147483647, %v2247
    %v2250 = vcvt.s32.f32 %v2243
    %v2251 = vmul.f32 %v2250, %v2248
    %v2252 = vxor.u32 %v2251, 2147483648
    %v2253 = vsel %vm2170, %v2252, %v2251
    %v2254 = vsub.s32 4, %v2230
    %v2255 = vsel %vm2170, %v2254, %v2230
    %v2256 = vsel %vm2169, %v694, %v2253
    %v2257 = vsel %vm2169, 0, %v2255
    %v2258 = vcosq.f32.pop %v2256
    %v2259 = vsinq.f32.pop %v2256
    %vm2260 = vweird.f32 %v694
    %v2261 = vadd.s32 %v2257, 3
    %v2262 = vand.u32 %v2261, 3
    %vm2263 = vcmp.lt.s32.totalorder %v2262, 2
    %vm2264 = vcmp.eq.s32.totalorder %v2262, 0
    %v2265 = vxor.u32 %v2259, 2147483648
    %v2266 = vsel %vm2264, %v2258, %v2265
    %vm2267 = vcmp.eq.s32.totalorder %v2262, 2
    %v2268 = vxor.u32 %v2258, 2147483648
    %v2269 = vsel %vm2267, %v2268, %v2259
    %v2270 = vsel %vm2263, %v2266, %v2269
    %v2271 = vsel %vm2260, nan, %v2270
    %v2272 = vand.u32 2147483647, %v695
    %vm2273 = vcmp.le.f32.partialorder %v2272, 0.7853982
    %vm2274 = vcmp.lt.s32.totalorder %v695, 0
    %v2275 = vand.u32 %v695, 2139095040
    %v2276 = vshrl.u32 %v2275, 23
    %v2277 = vsub.s32 %v2276, 127
    %v2278 = vand.u32 2147483647, %v695
    %v2279 = vand.u32 %v2278, 8388607
    %v2280 = vor.u32 %v2279, 8388608
    %v2281 = vsub.s32 0, %v2280
    %v2282 = vadd.s32 %v2277, 1
    %vm2283 = vcmp.gt.s32.totalorder %v2282, 0
    %v2284 = vsel %vm2283, %v2282, 0
    %v2285 = vshrl.u32 %v2284, 5
    %v2286 = vand.u32 %v2284, 31
    %v2287 = vsub.s32 32, %v2286
    %v2288 = vshrl.u32 683565275, %v2287
    %v2289 = vshll.u32 683565275, %v2286
    %v2290 = vshrl.u32 2475754826, %v2287
    %v2291 = vor.u32 %v2289, %v2290
    %v2292 = vshll.u32 2475754826, %v2286
    %v2293 = vshrl.u32 2131351028, %v2287
    %v2294 = vor.u32 %v2292, %v2293
    %v2295 = vshll.u32 2131351028, %v2286
    %v2296 = vshrl.u32 2102212464, %v2287
    %v2297 = vor.u32 %v2295, %v2296
    %v2298 = vshll.u32 2102212464, %v2286
    %v2299 = vshrl.u32 920167782, %v2287
    %v2300 = vor.u32 %v2298, %v2299
    %v2301 = vshll.u32 920167782, %v2286
    %v2302 = vshrl.u32 1326507024, %v2287
    %v2303 = vor.u32 %v2301, %v2302
    %vm2304 = vcmp.lt.s32.totalorder %v2285, 1
    %vm2305 = vcmp.lt.s32.totalorder %v2285, 2
    %vm2306 = vcmp.lt.s32.totalorder %v2285, 3
    %vm2307 = vcmp.lt.s32.totalorder %v2285, 4
    %v2308 = vsel %vm2304, %v2288, %v2291
    %v2309 = vsel %vm2307, %v2297, 2102212464
    %v2310 = vsel %vm2306, %v2294, %v2309
    %v2311 = vsel %vm2305, %v2308, %v2310
    %v2312 = vsel %vm2304, %v2291, %v2294
    %v2313 = vsel %vm2307, %v2300, 920167782
    %v2314 = vsel %vm2306, %v2297, %v2313
    %v2315 = vsel %vm2305, %v2312, %v2314
    %v2316 = vsel %vm2304, %v2294, %v2297
    %v2317 = vsel %vm2307, %v2303, 1326507024
    %v2318 = vsel %vm2306, %v2300, %v2317
    %v2319 = vsel %vm2305, %v2316, %v2318
    %v2320 = vshll.u32 %v2280, 8
    %v2321 = vmul.u32.u64.compose %v2320, %v2319
    %v2322 = vextract.low.u32 %v2321
    %v2323 = vextract.high.u32 %v2321
    %v2324 = vmul.u32.u64.compose %v2320, %v2315
    %v2325 = vextract.low.u32 %v2324
    %v2326 = vextract.high.u32 %v2324
    %v2327 = vmul.u32 %v2320, %v2311
    %v2328 = vadd.s32 %v2323, %v2325
    %vm2329 = vc.u32 %v2323, %v2325
    %v2330 = vadd.s32 %v2326, 1
    %v2331 = vsel %vm2329, %v2330, %v2326
    %v2332 = vadd.s32 %v2327, %v2331
    %v2333 = vadd.s32 %v2332, 536870912
    %v2334 = vshrl.u32 %v2333, 30
    %v2335 = vshll.u32 %v2334, 30
    %v2336 = vsub.s32 %v2332, %v2335
    %vm2337 = vcmp.lt.s32.totalorder %v2336, 0
    %v2338 = vsub.s32 0, %v2336
    %v2339 = vsel %vm2337, %v2338, %v2336
    %v2340 = vclz %v2339
    %v2341 = vsub.s32 %v2340, 2
    %vm2342 = vcmp.gt.s32.totalorder 0, %v2341
    %v2343 = vsel %vm2342, 0, %v2341
    %v2344 = vsub.s32 32, %v2343
    %v2345 = vshll.u32 %v2336, %v2343
    %v2346 = vshrl.u32 %v2328, %v2344
    %v2347 = vor.u32 %v2345, %v2346
    %v2348 = vsub.s32 4294967266, %v2343
    %v2349 = vadd.s32 %v2348, 127
    %v2350 = vshll.u32 %v2349, 23
    %v2351 = vor.u32 4788187, %v2350
    %v2352 = vand.u32 2147483647, %v2351
    %v2354 = vcvt.s32.f32 %v2347
    %v2355 = vmul.f32 %v2354, %v2352
    %v2356 = vxor.u32 %v2355, 2147483648
    %v2357 = vsel %vm2274, %v2356, %v2355
    %v2358 = vsub.s32 4, %v2334
    %v2359 = vsel %vm2274, %v2358, %v2334
    %v2360 = vsel %vm2273, %v695, %v2357
    %v2361 = vsel %vm2273, 0, %v2359
    %v2362 = vcosq.f32.pop %v2360
    %v2363 = vsinq.f32.pop %v2360
    %vm2364 = vweird.f32 %v695
    %v2365 = vadd.s32 %v2361, 3
    %v2366 = vand.u32 %v2365, 3
    %vm2367 = vcmp.lt.s32.totalorder %v2366, 2
    %vm2368 = vcmp.eq.s32.totalorder %v2366, 0
    %v2369 = vxor.u32 %v2363, 2147483648
    %v2370 = vsel %vm2368, %v2362, %v2369
    %vm2371 = vcmp.eq.s32.totalorder %v2366, 2
    %v2372 = vxor.u32 %v2362, 2147483648
    %v2373 = vsel %vm2371, %v2372, %v2363
    %v2374 = vsel %vm2367, %v2370, %v2373
    %v2375 = vsel %vm2364, nan, %v2374
    %v2376 = vand.u32 2147483647, %v696
    %vm2377 = vcmp.le.f32.partialorder %v2376, 0.7853982
    %vm2378 = vcmp.lt.s32.totalorder %v696, 0
    %v2379 = vand.u32 %v696, 2139095040
    %v2380 = vshrl.u32 %v2379, 23
    %v2381 = vsub.s32 %v2380, 127
    %v2382 = vand.u32 2147483647, %v696
    %v2383 = vand.u32 %v2382, 8388607
    %v2384 = vor.u32 %v2383, 8388608
    %v2385 = vsub.s32 0, %v2384
    %v2386 = vadd.s32 %v2381, 1
    %vm2387 = vcmp.gt.s32.totalorder %v2386, 0
    %v2388 = vsel %vm2387, %v2386, 0
    %v2389 = vshrl.u32 %v2388, 5
    %v2390 = vand.u32 %v2388, 31
    %v2391 = vsub.s32 32, %v2390
    %v2392 = vshrl.u32 683565275, %v2391
    %v2393 = vshll.u32 683565275, %v2390
    %v2394 = vshrl.u32 2475754826, %v2391
    %v2395 = vor.u32 %v2393, %v2394
    %v2396 = vshll.u32 2475754826, %v2390
    %v2397 = vshrl.u32 2131351028, %v2391
    %v2398 = vor.u32 %v2396, %v2397
    %v2399 = vshll.u32 2131351028, %v2390
    %v2400 = vshrl.u32 2102212464, %v2391
    %v2401 = vor.u32 %v2399, %v2400
    %v2402 = vshll.u32 2102212464, %v2390
    %v2403 = vshrl.u32 920167782, %v2391
    %v2404 = vor.u32 %v2402, %v2403
    %v2405 = vshll.u32 920167782, %v2390
    %v2406 = vshrl.u32 1326507024, %v2391
    %v2407 = vor.u32 %v2405, %v2406
    %vm2408 = vcmp.lt.s32.totalorder %v2389, 1
    %vm2409 = vcmp.lt.s32.totalorder %v2389, 2
    %vm2410 = vcmp.lt.s32.totalorder %v2389, 3
    %vm2411 = vcmp.lt.s32.totalorder %v2389, 4
    %v2412 = vsel %vm2408, %v2392, %v2395
    %v2413 = vsel %vm2411, %v2401, 2102212464
    %v2414 = vsel %vm2410, %v2398, %v2413
    %v2415 = vsel %vm2409, %v2412, %v2414
    %v2416 = vsel %vm2408, %v2395, %v2398
    %v2417 = vsel %vm2411, %v2404, 920167782
    %v2418 = vsel %vm2410, %v2401, %v2417
    %v2419 = vsel %vm2409, %v2416, %v2418
    %v2420 = vsel %vm2408, %v2398, %v2401
    %v2421 = vsel %vm2411, %v2407, 1326507024
    %v2422 = vsel %vm2410, %v2404, %v2421
    %v2423 = vsel %vm2409, %v2420, %v2422
    %v2424 = vshll.u32 %v2384, 8
    %v2425 = vmul.u32.u64.compose %v2424, %v2423
    %v2426 = vextract.low.u32 %v2425
    %v2427 = vextract.high.u32 %v2425
    %v2428 = vmul.u32.u64.compose %v2424, %v2419
    %v2429 = vextract.low.u32 %v2428
    %v2430 = vextract.high.u32 %v2428
    %v2431 = vmul.u32 %v2424, %v2415
    %v2432 = vadd.s32 %v2427, %v2429
    %vm2433 = vc.u32 %v2427, %v2429
    %v2434 = vadd.s32 %v2430, 1
    %v2435 = vsel %vm2433, %v2434, %v2430
    %v2436 = vadd.s32 %v2431, %v2435
    %v2437 = vadd.s32 %v2436, 536870912
    %v2438 = vshrl.u32 %v2437, 30
    %v2439 = vshll.u32 %v2438, 30
    %v2440 = vsub.s32 %v2436, %v2439
    %vm2441 = vcmp.lt.s32.totalorder %v2440, 0
    %v2442 = vsub.s32 0, %v2440
    %v2443 = vsel %vm2441, %v2442, %v2440
    %v2444 = vclz %v2443
    %v2445 = vsub.s32 %v2444, 2
    %vm2446 = vcmp.gt.s32.totalorder 0, %v2445
    %v2447 = vsel %vm2446, 0, %v2445
    %v2448 = vsub.s32 32, %v2447
    %v2449 = vshll.u32 %v2440, %v2447
    %v2450 = vshrl.u32 %v2432, %v2448
    %v2451 = vor.u32 %v2449, %v2450
    %v2452 = vsub.s32 4294967266, %v2447
    %v2453 = vadd.s32 %v2452, 127
    %v2454 = vshll.u32 %v2453, 23
    %v2455 = vor.u32 4788187, %v2454
    %v2456 = vand.u32 2147483647, %v2455
    %v2458 = vcvt.s32.f32 %v2451
    %v2459 = vmul.f32 %v2458, %v2456
    %v2460 = vxor.u32 %v2459, 2147483648
    %v2461 = vsel %vm2378, %v2460, %v2459
    %v2462 = vsub.s32 4, %v2438
    %v2463 = vsel %vm2378, %v2462, %v2438
    %v2464 = vsel %vm2377, %v696, %v2461
    %v2465 = vsel %vm2377, 0, %v2463
    %v2466 = vcosq.f32.pop %v2464
    %v2467 = vsinq.f32.pop %v2464
    %vm2468 = vweird.f32 %v696
    %v2469 = vadd.s32 %v2465, 3
    %v2470 = vand.u32 %v2469, 3
    %vm2471 = vcmp.lt.s32.totalorder %v2470, 2
    %vm2472 = vcmp.eq.s32.totalorder %v2470, 0
    %v2473 = vxor.u32 %v2467, 2147483648
    %v2474 = vsel %vm2472, %v2466, %v2473
    %vm2475 = vcmp.eq.s32.totalorder %v2470, 2
    %v2476 = vxor.u32 %v2466, 2147483648
    %v2477 = vsel %vm2475, %v2476, %v2467
    %v2478 = vsel %vm2471, %v2474, %v2477
    %v2479 = vsel %vm2468, nan, %v2478
    %v2480 = vand.u32 2147483647, %v697
    %vm2481 = vcmp.le.f32.partialorder %v2480, 0.7853982
    %vm2482 = vcmp.lt.s32.totalorder %v697, 0
    %v2483 = vand.u32 %v697, 2139095040
    %v2484 = vshrl.u32 %v2483, 23
    %v2485 = vsub.s32 %v2484, 127
    %v2486 = vand.u32 2147483647, %v697
    %v2487 = vand.u32 %v2486, 8388607
    %v2488 = vor.u32 %v2487, 8388608
    %v2489 = vsub.s32 0, %v2488
    %v2490 = vadd.s32 %v2485, 1
    %vm2491 = vcmp.gt.s32.totalorder %v2490, 0
    %v2492 = vsel %vm2491, %v2490, 0
    %v2493 = vshrl.u32 %v2492, 5
    %v2494 = vand.u32 %v2492, 31
    %v2495 = vsub.s32 32, %v2494
    %v2496 = vshrl.u32 683565275, %v2495
    %v2497 = vshll.u32 683565275, %v2494
    %v2498 = vshrl.u32 2475754826, %v2495
    %v2499 = vor.u32 %v2497, %v2498
    %v2500 = vshll.u32 2475754826, %v2494
    %v2501 = vshrl.u32 2131351028, %v2495
    %v2502 = vor.u32 %v2500, %v2501
    %v2503 = vshll.u32 2131351028, %v2494
    %v2504 = vshrl.u32 2102212464, %v2495
    %v2505 = vor.u32 %v2503, %v2504
    %v2506 = vshll.u32 2102212464, %v2494
    %v2507 = vshrl.u32 920167782, %v2495
    %v2508 = vor.u32 %v2506, %v2507
    %v2509 = vshll.u32 920167782, %v2494
    %v2510 = vshrl.u32 1326507024, %v2495
    %v2511 = vor.u32 %v2509, %v2510
    %vm2512 = vcmp.lt.s32.totalorder %v2493, 1
    %vm2513 = vcmp.lt.s32.totalorder %v2493, 2
    %vm2514 = vcmp.lt.s32.totalorder %v2493, 3
    %vm2515 = vcmp.lt.s32.totalorder %v2493, 4
    %v2516 = vsel %vm2512, %v2496, %v2499
    %v2517 = vsel %vm2515, %v2505, 2102212464
    %v2518 = vsel %vm2514, %v2502, %v2517
    %v2519 = vsel %vm2513, %v2516, %v2518
    %v2520 = vsel %vm2512, %v2499, %v2502
    %v2521 = vsel %vm2515, %v2508, 920167782
    %v2522 = vsel %vm2514, %v2505, %v2521
    %v2523 = vsel %vm2513, %v2520, %v2522
    %v2524 = vsel %vm2512, %v2502, %v2505
    %v2525 = vsel %vm2515, %v2511, 1326507024
    %v2526 = vsel %vm2514, %v2508, %v2525
    %v2527 = vsel %vm2513, %v2524, %v2526
    %v2528 = vshll.u32 %v2488, 8
    %v2529 = vmul.u32.u64.compose %v2528, %v2527
    %v2530 = vextract.low.u32 %v2529
    %v2531 = vextract.high.u32 %v2529
    %v2532 = vmul.u32.u64.compose %v2528, %v2523
    %v2533 = vextract.low.u32 %v2532
    %v2534 = vextract.high.u32 %v2532
    %v2535 = vmul.u32 %v2528, %v2519
    %v2536 = vadd.s32 %v2531, %v2533
    %vm2537 = vc.u32 %v2531, %v2533
    %v2538 = vadd.s32 %v2534, 1
    %v2539 = vsel %vm2537, %v2538, %v2534
    %v2540 = vadd.s32 %v2535, %v2539
    %v2541 = vadd.s32 %v2540, 536870912
    %v2542 = vshrl.u32 %v2541, 30
    %v2543 = vshll.u32 %v2542, 30
    %v2544 = vsub.s32 %v2540, %v2543
    %vm2545 = vcmp.lt.s32.totalorder %v2544, 0
    %v2546 = vsub.s32 0, %v2544
    %v2547 = vsel %vm2545, %v2546, %v2544
    %v2548 = vclz %v2547
    %v2549 = vsub.s32 %v2548, 2
    %vm2550 = vcmp.gt.s32.totalorder 0, %v2549
    %v2551 = vsel %vm2550, 0, %v2549
    %v2552 = vsub.s32 32, %v2551
    %v2553 = vshll.u32 %v2544, %v2551
    %v2554 = vshrl.u32 %v2536, %v2552
    %v2555 = vor.u32 %v2553, %v2554
    %v2556 = vsub.s32 4294967266, %v2551
    %v2557 = vadd.s32 %v2556, 127
    %v2558 = vshll.u32 %v2557, 23
    %v2559 = vor.u32 4788187, %v2558
    %v2560 = vand.u32 2147483647, %v2559
    %v2562 = vcvt.s32.f32 %v2555
    %v2563 = vmul.f32 %v2562, %v2560
    %v2564 = vxor.u32 %v2563, 2147483648
    %v2565 = vsel %vm2482, %v2564, %v2563
    %v2566 = vsub.s32 4, %v2542
    %v2567 = vsel %vm2482, %v2566, %v2542
    %v2568 = vsel %vm2481, %v697, %v2565
    %v2569 = vsel %vm2481, 0, %v2567
    %v2570 = vcosq.f32.pop %v2568
    %v2571 = vsinq.f32.pop %v2568
    %vm2572 = vweird.f32 %v697
    %v2573 = vadd.s32 %v2569, 3
    %v2574 = vand.u32 %v2573, 3
    %vm2575 = vcmp.lt.s32.totalorder %v2574, 2
    %vm2576 = vcmp.eq.s32.totalorder %v2574, 0
    %v2577 = vxor.u32 %v2571, 2147483648
    %v2578 = vsel %vm2576, %v2570, %v2577
    %vm2579 = vcmp.eq.s32.totalorder %v2574, 2
    %v2580 = vxor.u32 %v2570, 2147483648
    %v2581 = vsel %vm2579, %v2580, %v2571
    %v2582 = vsel %vm2575, %v2578, %v2581
    %v2583 = vsel %vm2572, nan, %v2582
    %v2584 = vand.u32 2147483647, %v698
    %vm2585 = vcmp.le.f32.partialorder %v2584, 0.7853982
    %vm2586 = vcmp.lt.s32.totalorder %v698, 0
    %v2587 = vand.u32 %v698, 2139095040
    %v2588 = vshrl.u32 %v2587, 23
    %v2589 = vsub.s32 %v2588, 127
    %v2590 = vand.u32 2147483647, %v698
    %v2591 = vand.u32 %v2590, 8388607
    %v2592 = vor.u32 %v2591, 8388608
    %v2593 = vsub.s32 0, %v2592
    %v2594 = vadd.s32 %v2589, 1
    %vm2595 = vcmp.gt.s32.totalorder %v2594, 0
    %v2596 = vsel %vm2595, %v2594, 0
    %v2597 = vshrl.u32 %v2596, 5
    %v2598 = vand.u32 %v2596, 31
    %v2599 = vsub.s32 32, %v2598
    %v2600 = vshrl.u32 683565275, %v2599
    %v2601 = vshll.u32 683565275, %v2598
    %v2602 = vshrl.u32 2475754826, %v2599
    %v2603 = vor.u32 %v2601, %v2602
    %v2604 = vshll.u32 2475754826, %v2598
    %v2605 = vshrl.u32 2131351028, %v2599
    %v2606 = vor.u32 %v2604, %v2605
    %v2607 = vshll.u32 2131351028, %v2598
    %v2608 = vshrl.u32 2102212464, %v2599
    %v2609 = vor.u32 %v2607, %v2608
    %v2610 = vshll.u32 2102212464, %v2598
    %v2611 = vshrl.u32 920167782, %v2599
    %v2612 = vor.u32 %v2610, %v2611
    %v2613 = vshll.u32 920167782, %v2598
    %v2614 = vshrl.u32 1326507024, %v2599
    %v2615 = vor.u32 %v2613, %v2614
    %vm2616 = vcmp.lt.s32.totalorder %v2597, 1
    %vm2617 = vcmp.lt.s32.totalorder %v2597, 2
    %vm2618 = vcmp.lt.s32.totalorder %v2597, 3
    %vm2619 = vcmp.lt.s32.totalorder %v2597, 4
    %v2620 = vsel %vm2616, %v2600, %v2603
    %v2621 = vsel %vm2619, %v2609, 2102212464
    %v2622 = vsel %vm2618, %v2606, %v2621
    %v2623 = vsel %vm2617, %v2620, %v2622
    %v2624 = vsel %vm2616, %v2603, %v2606
    %v2625 = vsel %vm2619, %v2612, 920167782
    %v2626 = vsel %vm2618, %v2609, %v2625
    %v2627 = vsel %vm2617, %v2624, %v2626
    %v2628 = vsel %vm2616, %v2606, %v2609
    %v2629 = vsel %vm2619, %v2615, 1326507024
    %v2630 = vsel %vm2618, %v2612, %v2629
    %v2631 = vsel %vm2617, %v2628, %v2630
    %v2632 = vshll.u32 %v2592, 8
    %v2633 = vmul.u32.u64.compose %v2632, %v2631
    %v2634 = vextract.low.u32 %v2633
    %v2635 = vextract.high.u32 %v2633
    %v2636 = vmul.u32.u64.compose %v2632, %v2627
    %v2637 = vextract.low.u32 %v2636
    %v2638 = vextract.high.u32 %v2636
    %v2639 = vmul.u32 %v2632, %v2623
    %v2640 = vadd.s32 %v2635, %v2637
    %vm2641 = vc.u32 %v2635, %v2637
    %v2642 = vadd.s32 %v2638, 1
    %v2643 = vsel %vm2641, %v2642, %v2638
    %v2644 = vadd.s32 %v2639, %v2643
    %v2645 = vadd.s32 %v2644, 536870912
    %v2646 = vshrl.u32 %v2645, 30
    %v2647 = vshll.u32 %v2646, 30
    %v2648 = vsub.s32 %v2644, %v2647
    %vm2649 = vcmp.lt.s32.totalorder %v2648, 0
    %v2650 = vsub.s32 0, %v2648
    %v2651 = vsel %vm2649, %v2650, %v2648
    %v2652 = vclz %v2651
    %v2653 = vsub.s32 %v2652, 2
    %vm2654 = vcmp.gt.s32.totalorder 0, %v2653
    %v2655 = vsel %vm2654, 0, %v2653
    %v2656 = vsub.s32 32, %v2655
    %v2657 = vshll.u32 %v2648, %v2655
    %v2658 = vshrl.u32 %v2640, %v2656
    %v2659 = vor.u32 %v2657, %v2658
    %v2660 = vsub.s32 4294967266, %v2655
    %v2661 = vadd.s32 %v2660, 127
    %v2662 = vshll.u32 %v2661, 23
    %v2663 = vor.u32 4788187, %v2662
    %v2664 = vand.u32 2147483647, %v2663
    %v2666 = vcvt.s32.f32 %v2659
    %v2667 = vmul.f32 %v2666, %v2664
    %v2668 = vxor.u32 %v2667, 2147483648
    %v2669 = vsel %vm2586, %v2668, %v2667
    %v2670 = vsub.s32 4, %v2646
    %v2671 = vsel %vm2586, %v2670, %v2646
    %v2672 = vsel %vm2585, %v698, %v2669
    %v2673 = vsel %vm2585, 0, %v2671
    %v2674 = vcosq.f32.pop %v2672
    %v2675 = vsinq.f32.pop %v2672
    %vm2676 = vweird.f32 %v698
    %v2677 = vadd.s32 %v2673, 3
    %v2678 = vand.u32 %v2677, 3
    %vm2679 = vcmp.lt.s32.totalorder %v2678, 2
    %vm2680 = vcmp.eq.s32.totalorder %v2678, 0
    %v2681 = vxor.u32 %v2675, 2147483648
    %v2682 = vsel %vm2680, %v2674, %v2681
    %vm2683 = vcmp.eq.s32.totalorder %v2678, 2
    %v2684 = vxor.u32 %v2674, 2147483648
    %v2685 = vsel %vm2683, %v2684, %v2675
    %v2686 = vsel %vm2679, %v2682, %v2685
    %v2687 = vsel %vm2676, nan, %v2686
    %v2688 = vand.u32 2147483647, %v699
    %vm2689 = vcmp.le.f32.partialorder %v2688, 0.7853982
    %vm2690 = vcmp.lt.s32.totalorder %v699, 0
    %v2691 = vand.u32 %v699, 2139095040
    %v2692 = vshrl.u32 %v2691, 23
    %v2693 = vsub.s32 %v2692, 127
    %v2694 = vand.u32 2147483647, %v699
    %v2695 = vand.u32 %v2694, 8388607
    %v2696 = vor.u32 %v2695, 8388608
    %v2697 = vsub.s32 0, %v2696
    %v2698 = vadd.s32 %v2693, 1
    %vm2699 = vcmp.gt.s32.totalorder %v2698, 0
    %v2700 = vsel %vm2699, %v2698, 0
    %v2701 = vshrl.u32 %v2700, 5
    %v2702 = vand.u32 %v2700, 31
    %v2703 = vsub.s32 32, %v2702
    %v2704 = vshrl.u32 683565275, %v2703
    %v2705 = vshll.u32 683565275, %v2702
    %v2706 = vshrl.u32 2475754826, %v2703
    %v2707 = vor.u32 %v2705, %v2706
    %v2708 = vshll.u32 2475754826, %v2702
    %v2709 = vshrl.u32 2131351028, %v2703
    %v2710 = vor.u32 %v2708, %v2709
    %v2711 = vshll.u32 2131351028, %v2702
    %v2712 = vshrl.u32 2102212464, %v2703
    %v2713 = vor.u32 %v2711, %v2712
    %v2714 = vshll.u32 2102212464, %v2702
    %v2715 = vshrl.u32 920167782, %v2703
    %v2716 = vor.u32 %v2714, %v2715
    %v2717 = vshll.u32 920167782, %v2702
    %v2718 = vshrl.u32 1326507024, %v2703
    %v2719 = vor.u32 %v2717, %v2718
    %vm2720 = vcmp.lt.s32.totalorder %v2701, 1
    %vm2721 = vcmp.lt.s32.totalorder %v2701, 2
    %vm2722 = vcmp.lt.s32.totalorder %v2701, 3
    %vm2723 = vcmp.lt.s32.totalorder %v2701, 4
    %v2724 = vsel %vm2720, %v2704, %v2707
    %v2725 = vsel %vm2723, %v2713, 2102212464
    %v2726 = vsel %vm2722, %v2710, %v2725
    %v2727 = vsel %vm2721, %v2724, %v2726
    %v2728 = vsel %vm2720, %v2707, %v2710
    %v2729 = vsel %vm2723, %v2716, 920167782
    %v2730 = vsel %vm2722, %v2713, %v2729
    %v2731 = vsel %vm2721, %v2728, %v2730
    %v2732 = vsel %vm2720, %v2710, %v2713
    %v2733 = vsel %vm2723, %v2719, 1326507024
    %v2734 = vsel %vm2722, %v2716, %v2733
    %v2735 = vsel %vm2721, %v2732, %v2734
    %v2736 = vshll.u32 %v2696, 8
    %v2737 = vmul.u32.u64.compose %v2736, %v2735
    %v2738 = vextract.low.u32 %v2737
    %v2739 = vextract.high.u32 %v2737
    %v2740 = vmul.u32.u64.compose %v2736, %v2731
    %v2741 = vextract.low.u32 %v2740
    %v2742 = vextract.high.u32 %v2740
    %v2743 = vmul.u32 %v2736, %v2727
    %v2744 = vadd.s32 %v2739, %v2741
    %vm2745 = vc.u32 %v2739, %v2741
    %v2746 = vadd.s32 %v2742, 1
    %v2747 = vsel %vm2745, %v2746, %v2742
    %v2748 = vadd.s32 %v2743, %v2747
    %v2749 = vadd.s32 %v2748, 536870912
    %v2750 = vshrl.u32 %v2749, 30
    %v2751 = vshll.u32 %v2750, 30
    %v2752 = vsub.s32 %v2748, %v2751
    %vm2753 = vcmp.lt.s32.totalorder %v2752, 0
    %v2754 = vsub.s32 0, %v2752
    %v2755 = vsel %vm2753, %v2754, %v2752
    %v2756 = vclz %v2755
    %v2757 = vsub.s32 %v2756, 2
    %vm2758 = vcmp.gt.s32.totalorder 0, %v2757
    %v2759 = vsel %vm2758, 0, %v2757
    %v2760 = vsub.s32 32, %v2759
    %v2761 = vshll.u32 %v2752, %v2759
    %v2762 = vshrl.u32 %v2744, %v2760
    %v2763 = vor.u32 %v2761, %v2762
    %v2764 = vsub.s32 4294967266, %v2759
    %v2765 = vadd.s32 %v2764, 127
    %v2766 = vshll.u32 %v2765, 23
    %v2767 = vor.u32 4788187, %v2766
    %v2768 = vand.u32 2147483647, %v2767
    %v2770 = vcvt.s32.f32 %v2763
    %v2771 = vmul.f32 %v2770, %v2768
    %v2772 = vxor.u32 %v2771, 2147483648
    %v2773 = vsel %vm2690, %v2772, %v2771
    %v2774 = vsub.s32 4, %v2750
    %v2775 = vsel %vm2690, %v2774, %v2750
    %v2776 = vsel %vm2689, %v699, %v2773
    %v2777 = vsel %vm2689, 0, %v2775
    %v2778 = vcosq.f32.pop %v2776
    %v2779 = vsinq.f32.pop %v2776
    %vm2780 = vweird.f32 %v699
    %v2781 = vadd.s32 %v2777, 3
    %v2782 = vand.u32 %v2781, 3
    %vm2783 = vcmp.lt.s32.totalorder %v2782, 2
    %vm2784 = vcmp.eq.s32.totalorder %v2782, 0
    %v2785 = vxor.u32 %v2779, 2147483648
    %v2786 = vsel %vm2784, %v2778, %v2785
    %vm2787 = vcmp.eq.s32.totalorder %v2782, 2
    %v2788 = vxor.u32 %v2778, 2147483648
    %v2789 = vsel %vm2787, %v2788, %v2779
    %v2790 = vsel %vm2783, %v2786, %v2789
    %v2791 = vsel %vm2780, nan, %v2790
    %v2792 = vand.u32 2147483647, %v700
    %vm2793 = vcmp.le.f32.partialorder %v2792, 0.7853982
    %vm2794 = vcmp.lt.s32.totalorder %v700, 0
    %v2795 = vand.u32 %v700, 2139095040
    %v2796 = vshrl.u32 %v2795, 23
    %v2797 = vsub.s32 %v2796, 127
    %v2798 = vand.u32 2147483647, %v700
    %v2799 = vand.u32 %v2798, 8388607
    %v2800 = vor.u32 %v2799, 8388608
    %v2801 = vsub.s32 0, %v2800
    %v2802 = vadd.s32 %v2797, 1
    %vm2803 = vcmp.gt.s32.totalorder %v2802, 0
    %v2804 = vsel %vm2803, %v2802, 0
    %v2805 = vshrl.u32 %v2804, 5
    %v2806 = vand.u32 %v2804, 31
    %v2807 = vsub.s32 32, %v2806
    %v2808 = vshrl.u32 683565275, %v2807
    %v2809 = vshll.u32 683565275, %v2806
    %v2810 = vshrl.u32 2475754826, %v2807
    %v2811 = vor.u32 %v2809, %v2810
    %v2812 = vshll.u32 2475754826, %v2806
    %v2813 = vshrl.u32 2131351028, %v2807
    %v2814 = vor.u32 %v2812, %v2813
    %v2815 = vshll.u32 2131351028, %v2806
    %v2816 = vshrl.u32 2102212464, %v2807
    %v2817 = vor.u32 %v2815, %v2816
    %v2818 = vshll.u32 2102212464, %v2806
    %v2819 = vshrl.u32 920167782, %v2807
    %v2820 = vor.u32 %v2818, %v2819
    %v2821 = vshll.u32 920167782, %v2806
    %v2822 = vshrl.u32 1326507024, %v2807
    %v2823 = vor.u32 %v2821, %v2822
    %vm2824 = vcmp.lt.s32.totalorder %v2805, 1
    %vm2825 = vcmp.lt.s32.totalorder %v2805, 2
    %vm2826 = vcmp.lt.s32.totalorder %v2805, 3
    %vm2827 = vcmp.lt.s32.totalorder %v2805, 4
    %v2828 = vsel %vm2824, %v2808, %v2811
    %v2829 = vsel %vm2827, %v2817, 2102212464
    %v2830 = vsel %vm2826, %v2814, %v2829
    %v2831 = vsel %vm2825, %v2828, %v2830
    %v2832 = vsel %vm2824, %v2811, %v2814
    %v2833 = vsel %vm2827, %v2820, 920167782
    %v2834 = vsel %vm2826, %v2817, %v2833
    %v2835 = vsel %vm2825, %v2832, %v2834
    %v2836 = vsel %vm2824, %v2814, %v2817
    %v2837 = vsel %vm2827, %v2823, 1326507024
    %v2838 = vsel %vm2826, %v2820, %v2837
    %v2839 = vsel %vm2825, %v2836, %v2838
    %v2840 = vshll.u32 %v2800, 8
    %v2841 = vmul.u32.u64.compose %v2840, %v2839
    %v2842 = vextract.low.u32 %v2841
    %v2843 = vextract.high.u32 %v2841
    %v2844 = vmul.u32.u64.compose %v2840, %v2835
    %v2845 = vextract.low.u32 %v2844
    %v2846 = vextract.high.u32 %v2844
    %v2847 = vmul.u32 %v2840, %v2831
    %v2848 = vadd.s32 %v2843, %v2845
    %vm2849 = vc.u32 %v2843, %v2845
    %v2850 = vadd.s32 %v2846, 1
    %v2851 = vsel %vm2849, %v2850, %v2846
    %v2852 = vadd.s32 %v2847, %v2851
    %v2853 = vadd.s32 %v2852, 536870912
    %v2854 = vshrl.u32 %v2853, 30
    %v2855 = vshll.u32 %v2854, 30
    %v2856 = vsub.s32 %v2852, %v2855
    %vm2857 = vcmp.lt.s32.totalorder %v2856, 0
    %v2858 = vsub.s32 0, %v2856
    %v2859 = vsel %vm2857, %v2858, %v2856
    %v2860 = vclz %v2859
    %v2861 = vsub.s32 %v2860, 2
    %vm2862 = vcmp.gt.s32.totalorder 0, %v2861
    %v2863 = vsel %vm2862, 0, %v2861
    %v2864 = vsub.s32 32, %v2863
    %v2865 = vshll.u32 %v2856, %v2863
    %v2866 = vshrl.u32 %v2848, %v2864
    %v2867 = vor.u32 %v2865, %v2866
    %v2868 = vsub.s32 4294967266, %v2863
    %v2869 = vadd.s32 %v2868, 127
    %v2870 = vshll.u32 %v2869, 23
    %v2871 = vor.u32 4788187, %v2870
    %v2872 = vand.u32 2147483647, %v2871
    %v2874 = vcvt.s32.f32 %v2867
    %v2875 = vmul.f32 %v2874, %v2872
    %v2876 = vxor.u32 %v2875, 2147483648
    %v2877 = vsel %vm2794, %v2876, %v2875
    %v2878 = vsub.s32 4, %v2854
    %v2879 = vsel %vm2794, %v2878, %v2854
    %v2880 = vsel %vm2793, %v700, %v2877
    %v2881 = vsel %vm2793, 0, %v2879
    %v2882 = vcosq.f32.pop %v2880
    %v2883 = vsinq.f32.pop %v2880
    %vm2884 = vweird.f32 %v700
    %v2885 = vadd.s32 %v2881, 3
    %v2886 = vand.u32 %v2885, 3
    %vm2887 = vcmp.lt.s32.totalorder %v2886, 2
    %vm2888 = vcmp.eq.s32.totalorder %v2886, 0
    %v2889 = vxor.u32 %v2883, 2147483648
    %v2890 = vsel %vm2888, %v2882, %v2889
    %vm2891 = vcmp.eq.s32.totalorder %v2886, 2
    %v2892 = vxor.u32 %v2882, 2147483648
    %v2893 = vsel %vm2891, %v2892, %v2883
    %v2894 = vsel %vm2887, %v2890, %v2893
    %v2895 = vsel %vm2884, nan, %v2894
    %v2896 = vand.u32 2147483647, %v701
    %vm2897 = vcmp.le.f32.partialorder %v2896, 0.7853982
    %vm2898 = vcmp.lt.s32.totalorder %v701, 0
    %v2899 = vand.u32 %v701, 2139095040
    %v2900 = vshrl.u32 %v2899, 23
    %v2901 = vsub.s32 %v2900, 127
    %v2902 = vand.u32 2147483647, %v701
    %v2903 = vand.u32 %v2902, 8388607
    %v2904 = vor.u32 %v2903, 8388608
    %v2905 = vsub.s32 0, %v2904
    %v2906 = vadd.s32 %v2901, 1
    %vm2907 = vcmp.gt.s32.totalorder %v2906, 0
    %v2908 = vsel %vm2907, %v2906, 0
    %v2909 = vshrl.u32 %v2908, 5
    %v2910 = vand.u32 %v2908, 31
    %v2911 = vsub.s32 32, %v2910
    %v2912 = vshrl.u32 683565275, %v2911
    %v2913 = vshll.u32 683565275, %v2910
    %v2914 = vshrl.u32 2475754826, %v2911
    %v2915 = vor.u32 %v2913, %v2914
    %v2916 = vshll.u32 2475754826, %v2910
    %v2917 = vshrl.u32 2131351028, %v2911
    %v2918 = vor.u32 %v2916, %v2917
    %v2919 = vshll.u32 2131351028, %v2910
    %v2920 = vshrl.u32 2102212464, %v2911
    %v2921 = vor.u32 %v2919, %v2920
    %v2922 = vshll.u32 2102212464, %v2910
    %v2923 = vshrl.u32 920167782, %v2911
    %v2924 = vor.u32 %v2922, %v2923
    %v2925 = vshll.u32 920167782, %v2910
    %v2926 = vshrl.u32 1326507024, %v2911
    %v2927 = vor.u32 %v2925, %v2926
    %vm2928 = vcmp.lt.s32.totalorder %v2909, 1
    %vm2929 = vcmp.lt.s32.totalorder %v2909, 2
    %vm2930 = vcmp.lt.s32.totalorder %v2909, 3
    %vm2931 = vcmp.lt.s32.totalorder %v2909, 4
    %v2932 = vsel %vm2928, %v2912, %v2915
    %v2933 = vsel %vm2931, %v2921, 2102212464
    %v2934 = vsel %vm2930, %v2918, %v2933
    %v2935 = vsel %vm2929, %v2932, %v2934
    %v2936 = vsel %vm2928, %v2915, %v2918
    %v2937 = vsel %vm2931, %v2924, 920167782
    %v2938 = vsel %vm2930, %v2921, %v2937
    %v2939 = vsel %vm2929, %v2936, %v2938
    %v2940 = vsel %vm2928, %v2918, %v2921
    %v2941 = vsel %vm2931, %v2927, 1326507024
    %v2942 = vsel %vm2930, %v2924, %v2941
    %v2943 = vsel %vm2929, %v2940, %v2942
    %v2944 = vshll.u32 %v2904, 8
    %v2945 = vmul.u32.u64.compose %v2944, %v2943
    %v2946 = vextract.low.u32 %v2945
    %v2947 = vextract.high.u32 %v2945
    %v2948 = vmul.u32.u64.compose %v2944, %v2939
    %v2949 = vextract.low.u32 %v2948
    %v2950 = vextract.high.u32 %v2948
    %v2951 = vmul.u32 %v2944, %v2935
    %v2952 = vadd.s32 %v2947, %v2949
    %vm2953 = vc.u32 %v2947, %v2949
    %v2954 = vadd.s32 %v2950, 1
    %v2955 = vsel %vm2953, %v2954, %v2950
    %v2956 = vadd.s32 %v2951, %v2955
    %v2957 = vadd.s32 %v2956, 536870912
    %v2958 = vshrl.u32 %v2957, 30
    %v2959 = vshll.u32 %v2958, 30
    %v2960 = vsub.s32 %v2956, %v2959
    %vm2961 = vcmp.lt.s32.totalorder %v2960, 0
    %v2962 = vsub.s32 0, %v2960
    %v2963 = vsel %vm2961, %v2962, %v2960
    %v2964 = vclz %v2963
    %v2965 = vsub.s32 %v2964, 2
    %vm2966 = vcmp.gt.s32.totalorder 0, %v2965
    %v2967 = vsel %vm2966, 0, %v2965
    %v2968 = vsub.s32 32, %v2967
    %v2969 = vshll.u32 %v2960, %v2967
    %v2970 = vshrl.u32 %v2952, %v2968
    %v2971 = vor.u32 %v2969, %v2970
    %v2972 = vsub.s32 4294967266, %v2967
    %v2973 = vadd.s32 %v2972, 127
    %v2974 = vshll.u32 %v2973, 23
    %v2975 = vor.u32 4788187, %v2974
    %v2976 = vand.u32 2147483647, %v2975
    %v2978 = vcvt.s32.f32 %v2971
    %v2979 = vmul.f32 %v2978, %v2976
    %v2980 = vxor.u32 %v2979, 2147483648
    %v2981 = vsel %vm2898, %v2980, %v2979
    %v2982 = vsub.s32 4, %v2958
    %v2983 = vsel %vm2898, %v2982, %v2958
    %v2984 = vsel %vm2897, %v701, %v2981
    %v2985 = vsel %vm2897, 0, %v2983
    %v2986 = vcosq.f32.pop %v2984
    %v2987 = vsinq.f32.pop %v2984
    %vm2988 = vweird.f32 %v701
    %v2989 = vadd.s32 %v2985, 3
    %v2990 = vand.u32 %v2989, 3
    %vm2991 = vcmp.lt.s32.totalorder %v2990, 2
    %vm2992 = vcmp.eq.s32.totalorder %v2990, 0
    %v2993 = vxor.u32 %v2987, 2147483648
    %v2994 = vsel %vm2992, %v2986, %v2993
    %vm2995 = vcmp.eq.s32.totalorder %v2990, 2
    %v2996 = vxor.u32 %v2986, 2147483648
    %v2997 = vsel %vm2995, %v2996, %v2987
    %v2998 = vsel %vm2991, %v2994, %v2997
    %v2999 = vsel %vm2988, nan, %v2998
    %v3000 = vand.u32 2147483647, %v702
    %vm3001 = vcmp.le.f32.partialorder %v3000, 0.7853982
    %vm3002 = vcmp.lt.s32.totalorder %v702, 0
    %v3003 = vand.u32 %v702, 2139095040
    %v3004 = vshrl.u32 %v3003, 23
    %v3005 = vsub.s32 %v3004, 127
    %v3006 = vand.u32 2147483647, %v702
    %v3007 = vand.u32 %v3006, 8388607
    %v3008 = vor.u32 %v3007, 8388608
    %v3009 = vsub.s32 0, %v3008
    %v3010 = vadd.s32 %v3005, 1
    %vm3011 = vcmp.gt.s32.totalorder %v3010, 0
    %v3012 = vsel %vm3011, %v3010, 0
    %v3013 = vshrl.u32 %v3012, 5
    %v3014 = vand.u32 %v3012, 31
    %v3015 = vsub.s32 32, %v3014
    %v3016 = vshrl.u32 683565275, %v3015
    %v3017 = vshll.u32 683565275, %v3014
    %v3018 = vshrl.u32 2475754826, %v3015
    %v3019 = vor.u32 %v3017, %v3018
    %v3020 = vshll.u32 2475754826, %v3014
    %v3021 = vshrl.u32 2131351028, %v3015
    %v3022 = vor.u32 %v3020, %v3021
    %v3023 = vshll.u32 2131351028, %v3014
    %v3024 = vshrl.u32 2102212464, %v3015
    %v3025 = vor.u32 %v3023, %v3024
    %v3026 = vshll.u32 2102212464, %v3014
    %v3027 = vshrl.u32 920167782, %v3015
    %v3028 = vor.u32 %v3026, %v3027
    %v3029 = vshll.u32 920167782, %v3014
    %v3030 = vshrl.u32 1326507024, %v3015
    %v3031 = vor.u32 %v3029, %v3030
    %vm3032 = vcmp.lt.s32.totalorder %v3013, 1
    %vm3033 = vcmp.lt.s32.totalorder %v3013, 2
    %vm3034 = vcmp.lt.s32.totalorder %v3013, 3
    %vm3035 = vcmp.lt.s32.totalorder %v3013, 4
    %v3036 = vsel %vm3032, %v3016, %v3019
    %v3037 = vsel %vm3035, %v3025, 2102212464
    %v3038 = vsel %vm3034, %v3022, %v3037
    %v3039 = vsel %vm3033, %v3036, %v3038
    %v3040 = vsel %vm3032, %v3019, %v3022
    %v3041 = vsel %vm3035, %v3028, 920167782
    %v3042 = vsel %vm3034, %v3025, %v3041
    %v3043 = vsel %vm3033, %v3040, %v3042
    %v3044 = vsel %vm3032, %v3022, %v3025
    %v3045 = vsel %vm3035, %v3031, 1326507024
    %v3046 = vsel %vm3034, %v3028, %v3045
    %v3047 = vsel %vm3033, %v3044, %v3046
    %v3048 = vshll.u32 %v3008, 8
    %v3049 = vmul.u32.u64.compose %v3048, %v3047
    %v3050 = vextract.low.u32 %v3049
    %v3051 = vextract.high.u32 %v3049
    %v3052 = vmul.u32.u64.compose %v3048, %v3043
    %v3053 = vextract.low.u32 %v3052
    %v3054 = vextract.high.u32 %v3052
    %v3055 = vmul.u32 %v3048, %v3039
    %v3056 = vadd.s32 %v3051, %v3053
    %vm3057 = vc.u32 %v3051, %v3053
    %v3058 = vadd.s32 %v3054, 1
    %v3059 = vsel %vm3057, %v3058, %v3054
    %v3060 = vadd.s32 %v3055, %v3059
    %v3061 = vadd.s32 %v3060, 536870912
    %v3062 = vshrl.u32 %v3061, 30
    %v3063 = vshll.u32 %v3062, 30
    %v3064 = vsub.s32 %v3060, %v3063
    %vm3065 = vcmp.lt.s32.totalorder %v3064, 0
    %v3066 = vsub.s32 0, %v3064
    %v3067 = vsel %vm3065, %v3066, %v3064
    %v3068 = vclz %v3067
    %v3069 = vsub.s32 %v3068, 2
    %vm3070 = vcmp.gt.s32.totalorder 0, %v3069
    %v3071 = vsel %vm3070, 0, %v3069
    %v3072 = vsub.s32 32, %v3071
    %v3073 = vshll.u32 %v3064, %v3071
    %v3074 = vshrl.u32 %v3056, %v3072
    %v3075 = vor.u32 %v3073, %v3074
    %v3076 = vsub.s32 4294967266, %v3071
    %v3077 = vadd.s32 %v3076, 127
    %v3078 = vshll.u32 %v3077, 23
    %v3079 = vor.u32 4788187, %v3078
    %v3080 = vand.u32 2147483647, %v3079
    %v3082 = vcvt.s32.f32 %v3075
    %v3083 = vmul.f32 %v3082, %v3080
    %v3084 = vxor.u32 %v3083, 2147483648
    %v3085 = vsel %vm3002, %v3084, %v3083
    %v3086 = vsub.s32 4, %v3062
    %v3087 = vsel %vm3002, %v3086, %v3062
    %v3088 = vsel %vm3001, %v702, %v3085
    %v3089 = vsel %vm3001, 0, %v3087
    %v3090 = vcosq.f32.pop %v3088
    %v3091 = vsinq.f32.pop %v3088
    %vm3092 = vweird.f32 %v702
    %v3093 = vadd.s32 %v3089, 3
    %v3094 = vand.u32 %v3093, 3
    %vm3095 = vcmp.lt.s32.totalorder %v3094, 2
    %vm3096 = vcmp.eq.s32.totalorder %v3094, 0
    %v3097 = vxor.u32 %v3091, 2147483648
    %v3098 = vsel %vm3096, %v3090, %v3097
    %vm3099 = vcmp.eq.s32.totalorder %v3094, 2
    %v3100 = vxor.u32 %v3090, 2147483648
    %v3101 = vsel %vm3099, %v3100, %v3091
    %v3102 = vsel %vm3095, %v3098, %v3101
    %v3103 = vsel %vm3092, nan, %v3102
    %v3104 = vand.u32 2147483647, %v703
    %vm3105 = vcmp.le.f32.partialorder %v3104, 0.7853982
    %vm3106 = vcmp.lt.s32.totalorder %v703, 0
    %v3107 = vand.u32 %v703, 2139095040
    %v3108 = vshrl.u32 %v3107, 23
    %v3109 = vsub.s32 %v3108, 127
    %v3110 = vand.u32 2147483647, %v703
    %v3111 = vand.u32 %v3110, 8388607
    %v3112 = vor.u32 %v3111, 8388608
    %v3113 = vsub.s32 0, %v3112
    %v3114 = vadd.s32 %v3109, 1
    %vm3115 = vcmp.gt.s32.totalorder %v3114, 0
    %v3116 = vsel %vm3115, %v3114, 0
    %v3117 = vshrl.u32 %v3116, 5
    %v3118 = vand.u32 %v3116, 31
    %v3119 = vsub.s32 32, %v3118
    %v3120 = vshrl.u32 683565275, %v3119
    %v3121 = vshll.u32 683565275, %v3118
    %v3122 = vshrl.u32 2475754826, %v3119
    %v3123 = vor.u32 %v3121, %v3122
    %v3124 = vshll.u32 2475754826, %v3118
    %v3125 = vshrl.u32 2131351028, %v3119
    %v3126 = vor.u32 %v3124, %v3125
    %v3127 = vshll.u32 2131351028, %v3118
    %v3128 = vshrl.u32 2102212464, %v3119
    %v3129 = vor.u32 %v3127, %v3128
    %v3130 = vshll.u32 2102212464, %v3118
    %v3131 = vshrl.u32 920167782, %v3119
    %v3132 = vor.u32 %v3130, %v3131
    %v3133 = vshll.u32 920167782, %v3118
    %v3134 = vshrl.u32 1326507024, %v3119
    %v3135 = vor.u32 %v3133, %v3134
    %vm3136 = vcmp.lt.s32.totalorder %v3117, 1
    %vm3137 = vcmp.lt.s32.totalorder %v3117, 2
    %vm3138 = vcmp.lt.s32.totalorder %v3117, 3
    %vm3139 = vcmp.lt.s32.totalorder %v3117, 4
    %v3140 = vsel %vm3136, %v3120, %v3123
    %v3141 = vsel %vm3139, %v3129, 2102212464
    %v3142 = vsel %vm3138, %v3126, %v3141
    %v3143 = vsel %vm3137, %v3140, %v3142
    %v3144 = vsel %vm3136, %v3123, %v3126
    %v3145 = vsel %vm3139, %v3132, 920167782
    %v3146 = vsel %vm3138, %v3129, %v3145
    %v3147 = vsel %vm3137, %v3144, %v3146
    %v3148 = vsel %vm3136, %v3126, %v3129
    %v3149 = vsel %vm3139, %v3135, 1326507024
    %v3150 = vsel %vm3138, %v3132, %v3149
    %v3151 = vsel %vm3137, %v3148, %v3150
    %v3152 = vshll.u32 %v3112, 8
    %v3153 = vmul.u32.u64.compose %v3152, %v3151
    %v3154 = vextract.low.u32 %v3153
    %v3155 = vextract.high.u32 %v3153
    %v3156 = vmul.u32.u64.compose %v3152, %v3147
    %v3157 = vextract.low.u32 %v3156
    %v3158 = vextract.high.u32 %v3156
    %v3159 = vmul.u32 %v3152, %v3143
    %v3160 = vadd.s32 %v3155, %v3157
    %vm3161 = vc.u32 %v3155, %v3157
    %v3162 = vadd.s32 %v3158, 1
    %v3163 = vsel %vm3161, %v3162, %v3158
    %v3164 = vadd.s32 %v3159, %v3163
    %v3165 = vadd.s32 %v3164, 536870912
    %v3166 = vshrl.u32 %v3165, 30
    %v3167 = vshll.u32 %v3166, 30
    %v3168 = vsub.s32 %v3164, %v3167
    %vm3169 = vcmp.lt.s32.totalorder %v3168, 0
    %v3170 = vsub.s32 0, %v3168
    %v3171 = vsel %vm3169, %v3170, %v3168
    %v3172 = vclz %v3171
    %v3173 = vsub.s32 %v3172, 2
    %vm3174 = vcmp.gt.s32.totalorder 0, %v3173
    %v3175 = vsel %vm3174, 0, %v3173
    %v3176 = vsub.s32 32, %v3175
    %v3177 = vshll.u32 %v3168, %v3175
    %v3178 = vshrl.u32 %v3160, %v3176
    %v3179 = vor.u32 %v3177, %v3178
    %v3180 = vsub.s32 4294967266, %v3175
    %v3181 = vadd.s32 %v3180, 127
    %v3182 = vshll.u32 %v3181, 23
    %v3183 = vor.u32 4788187, %v3182
    %v3184 = vand.u32 2147483647, %v3183
    %v3186 = vcvt.s32.f32 %v3179
    %v3187 = vmul.f32 %v3186, %v3184
    %v3188 = vxor.u32 %v3187, 2147483648
    %v3189 = vsel %vm3106, %v3188, %v3187
    %v3190 = vsub.s32 4, %v3166
    %v3191 = vsel %vm3106, %v3190, %v3166
    %v3192 = vsel %vm3105, %v703, %v3189
    %v3193 = vsel %vm3105, 0, %v3191
    %v3194 = vcosq.f32.pop %v3192
    %v3195 = vsinq.f32.pop %v3192
    %vm3196 = vweird.f32 %v703
    %v3197 = vadd.s32 %v3193, 3
    %v3198 = vand.u32 %v3197, 3
    %vm3199 = vcmp.lt.s32.totalorder %v3198, 2
    %vm3200 = vcmp.eq.s32.totalorder %v3198, 0
    %v3201 = vxor.u32 %v3195, 2147483648
    %v3202 = vsel %vm3200, %v3194, %v3201
    %vm3203 = vcmp.eq.s32.totalorder %v3198, 2
    %v3204 = vxor.u32 %v3194, 2147483648
    %v3205 = vsel %vm3203, %v3204, %v3195
    %v3206 = vsel %vm3199, %v3202, %v3205
    %v3207 = vsel %vm3196, nan, %v3206
    %v3208 = vand.u32 2147483647, %v704
    %vm3209 = vcmp.le.f32.partialorder %v3208, 0.7853982
    %vm3210 = vcmp.lt.s32.totalorder %v704, 0
    %v3211 = vand.u32 %v704, 2139095040
    %v3212 = vshrl.u32 %v3211, 23
    %v3213 = vsub.s32 %v3212, 127
    %v3214 = vand.u32 2147483647, %v704
    %v3215 = vand.u32 %v3214, 8388607
    %v3216 = vor.u32 %v3215, 8388608
    %v3217 = vsub.s32 0, %v3216
    %v3218 = vadd.s32 %v3213, 1
    %vm3219 = vcmp.gt.s32.totalorder %v3218, 0
    %v3220 = vsel %vm3219, %v3218, 0
    %v3221 = vshrl.u32 %v3220, 5
    %v3222 = vand.u32 %v3220, 31
    %v3223 = vsub.s32 32, %v3222
    %v3224 = vshrl.u32 683565275, %v3223
    %v3225 = vshll.u32 683565275, %v3222
    %v3226 = vshrl.u32 2475754826, %v3223
    %v3227 = vor.u32 %v3225, %v3226
    %v3228 = vshll.u32 2475754826, %v3222
    %v3229 = vshrl.u32 2131351028, %v3223
    %v3230 = vor.u32 %v3228, %v3229
    %v3231 = vshll.u32 2131351028, %v3222
    %v3232 = vshrl.u32 2102212464, %v3223
    %v3233 = vor.u32 %v3231, %v3232
    %v3234 = vshll.u32 2102212464, %v3222
    %v3235 = vshrl.u32 920167782, %v3223
    %v3236 = vor.u32 %v3234, %v3235
    %v3237 = vshll.u32 920167782, %v3222
    %v3238 = vshrl.u32 1326507024, %v3223
    %v3239 = vor.u32 %v3237, %v3238
    %vm3240 = vcmp.lt.s32.totalorder %v3221, 1
    %vm3241 = vcmp.lt.s32.totalorder %v3221, 2
    %vm3242 = vcmp.lt.s32.totalorder %v3221, 3
    %vm3243 = vcmp.lt.s32.totalorder %v3221, 4
    %v3244 = vsel %vm3240, %v3224, %v3227
    %v3245 = vsel %vm3243, %v3233, 2102212464
    %v3246 = vsel %vm3242, %v3230, %v3245
    %v3247 = vsel %vm3241, %v3244, %v3246
    %v3248 = vsel %vm3240, %v3227, %v3230
    %v3249 = vsel %vm3243, %v3236, 920167782
    %v3250 = vsel %vm3242, %v3233, %v3249
    %v3251 = vsel %vm3241, %v3248, %v3250
    %v3252 = vsel %vm3240, %v3230, %v3233
    %v3253 = vsel %vm3243, %v3239, 1326507024
    %v3254 = vsel %vm3242, %v3236, %v3253
    %v3255 = vsel %vm3241, %v3252, %v3254
    %v3256 = vshll.u32 %v3216, 8
    %v3257 = vmul.u32.u64.compose %v3256, %v3255
    %v3258 = vextract.low.u32 %v3257
    %v3259 = vextract.high.u32 %v3257
    %v3260 = vmul.u32.u64.compose %v3256, %v3251
    %v3261 = vextract.low.u32 %v3260
    %v3262 = vextract.high.u32 %v3260
    %v3263 = vmul.u32 %v3256, %v3247
    %v3264 = vadd.s32 %v3259, %v3261
    %vm3265 = vc.u32 %v3259, %v3261
    %v3266 = vadd.s32 %v3262, 1
    %v3267 = vsel %vm3265, %v3266, %v3262
    %v3268 = vadd.s32 %v3263, %v3267
    %v3269 = vadd.s32 %v3268, 536870912
    %v3270 = vshrl.u32 %v3269, 30
    %v3271 = vshll.u32 %v3270, 30
    %v3272 = vsub.s32 %v3268, %v3271
    %vm3273 = vcmp.lt.s32.totalorder %v3272, 0
    %v3274 = vsub.s32 0, %v3272
    %v3275 = vsel %vm3273, %v3274, %v3272
    %v3276 = vclz %v3275
    %v3277 = vsub.s32 %v3276, 2
    %vm3278 = vcmp.gt.s32.totalorder 0, %v3277
    %v3279 = vsel %vm3278, 0, %v3277
    %v3280 = vsub.s32 32, %v3279
    %v3281 = vshll.u32 %v3272, %v3279
    %v3282 = vshrl.u32 %v3264, %v3280
    %v3283 = vor.u32 %v3281, %v3282
    %v3284 = vsub.s32 4294967266, %v3279
    %v3285 = vadd.s32 %v3284, 127
    %v3286 = vshll.u32 %v3285, 23
    %v3287 = vor.u32 4788187, %v3286
    %v3288 = vand.u32 2147483647, %v3287
    %v3290 = vcvt.s32.f32 %v3283
    %v3291 = vmul.f32 %v3290, %v3288
    %v3292 = vxor.u32 %v3291, 2147483648
    %v3293 = vsel %vm3210, %v3292, %v3291
    %v3294 = vsub.s32 4, %v3270
    %v3295 = vsel %vm3210, %v3294, %v3270
    %v3296 = vsel %vm3209, %v704, %v3293
    %v3297 = vsel %vm3209, 0, %v3295
    %v3298 = vcosq.f32.pop %v3296
    %v3299 = vsinq.f32.pop %v3296
    %vm3300 = vweird.f32 %v704
    %v3301 = vadd.s32 %v3297, 3
    %v3302 = vand.u32 %v3301, 3
    %vm3303 = vcmp.lt.s32.totalorder %v3302, 2
    %vm3304 = vcmp.eq.s32.totalorder %v3302, 0
    %v3305 = vxor.u32 %v3299, 2147483648
    %v3306 = vsel %vm3304, %v3298, %v3305
    %vm3307 = vcmp.eq.s32.totalorder %v3302, 2
    %v3308 = vxor.u32 %v3298, 2147483648
    %v3309 = vsel %vm3307, %v3308, %v3299
    %v3310 = vsel %vm3303, %v3306, %v3309
    %v3311 = vsel %vm3300, nan, %v3310
    %v3312 = vand.u32 2147483647, %v705
    %vm3313 = vcmp.le.f32.partialorder %v3312, 0.7853982
    %vm3314 = vcmp.lt.s32.totalorder %v705, 0
    %v3315 = vand.u32 %v705, 2139095040
    %v3316 = vshrl.u32 %v3315, 23
    %v3317 = vsub.s32 %v3316, 127
    %v3318 = vand.u32 2147483647, %v705
    %v3319 = vand.u32 %v3318, 8388607
    %v3320 = vor.u32 %v3319, 8388608
    %v3321 = vsub.s32 0, %v3320
    %v3322 = vadd.s32 %v3317, 1
    %vm3323 = vcmp.gt.s32.totalorder %v3322, 0
    %v3324 = vsel %vm3323, %v3322, 0
    %v3325 = vshrl.u32 %v3324, 5
    %v3326 = vand.u32 %v3324, 31
    %v3327 = vsub.s32 32, %v3326
    %v3328 = vshrl.u32 683565275, %v3327
    %v3329 = vshll.u32 683565275, %v3326
    %v3330 = vshrl.u32 2475754826, %v3327
    %v3331 = vor.u32 %v3329, %v3330
    %v3332 = vshll.u32 2475754826, %v3326
    %v3333 = vshrl.u32 2131351028, %v3327
    %v3334 = vor.u32 %v3332, %v3333
    %v3335 = vshll.u32 2131351028, %v3326
    %v3336 = vshrl.u32 2102212464, %v3327
    %v3337 = vor.u32 %v3335, %v3336
    %v3338 = vshll.u32 2102212464, %v3326
    %v3339 = vshrl.u32 920167782, %v3327
    %v3340 = vor.u32 %v3338, %v3339
    %v3341 = vshll.u32 920167782, %v3326
    %v3342 = vshrl.u32 1326507024, %v3327
    %v3343 = vor.u32 %v3341, %v3342
    %vm3344 = vcmp.lt.s32.totalorder %v3325, 1
    %vm3345 = vcmp.lt.s32.totalorder %v3325, 2
    %vm3346 = vcmp.lt.s32.totalorder %v3325, 3
    %vm3347 = vcmp.lt.s32.totalorder %v3325, 4
    %v3348 = vsel %vm3344, %v3328, %v3331
    %v3349 = vsel %vm3347, %v3337, 2102212464
    %v3350 = vsel %vm3346, %v3334, %v3349
    %v3351 = vsel %vm3345, %v3348, %v3350
    %v3352 = vsel %vm3344, %v3331, %v3334
    %v3353 = vsel %vm3347, %v3340, 920167782
    %v3354 = vsel %vm3346, %v3337, %v3353
    %v3355 = vsel %vm3345, %v3352, %v3354
    %v3356 = vsel %vm3344, %v3334, %v3337
    %v3357 = vsel %vm3347, %v3343, 1326507024
    %v3358 = vsel %vm3346, %v3340, %v3357
    %v3359 = vsel %vm3345, %v3356, %v3358
    %v3360 = vshll.u32 %v3320, 8
    %v3361 = vmul.u32.u64.compose %v3360, %v3359
    %v3362 = vextract.low.u32 %v3361
    %v3363 = vextract.high.u32 %v3361
    %v3364 = vmul.u32.u64.compose %v3360, %v3355
    %v3365 = vextract.low.u32 %v3364
    %v3366 = vextract.high.u32 %v3364
    %v3367 = vmul.u32 %v3360, %v3351
    %v3368 = vadd.s32 %v3363, %v3365
    %vm3369 = vc.u32 %v3363, %v3365
    %v3370 = vadd.s32 %v3366, 1
    %v3371 = vsel %vm3369, %v3370, %v3366
    %v3372 = vadd.s32 %v3367, %v3371
    %v3373 = vadd.s32 %v3372, 536870912
    %v3374 = vshrl.u32 %v3373, 30
    %v3375 = vshll.u32 %v3374, 30
    %v3376 = vsub.s32 %v3372, %v3375
    %vm3377 = vcmp.lt.s32.totalorder %v3376, 0
    %v3378 = vsub.s32 0, %v3376
    %v3379 = vsel %vm3377, %v3378, %v3376
    %v3380 = vclz %v3379
    %v3381 = vsub.s32 %v3380, 2
    %vm3382 = vcmp.gt.s32.totalorder 0, %v3381
    %v3383 = vsel %vm3382, 0, %v3381
    %v3384 = vsub.s32 32, %v3383
    %v3385 = vshll.u32 %v3376, %v3383
    %v3386 = vshrl.u32 %v3368, %v3384
    %v3387 = vor.u32 %v3385, %v3386
    %v3388 = vsub.s32 4294967266, %v3383
    %v3389 = vadd.s32 %v3388, 127
    %v3390 = vshll.u32 %v3389, 23
    %v3391 = vor.u32 4788187, %v3390
    %v3392 = vand.u32 2147483647, %v3391
    %v3394 = vcvt.s32.f32 %v3387
    %v3395 = vmul.f32 %v3394, %v3392
    %v3396 = vxor.u32 %v3395, 2147483648
    %v3397 = vsel %vm3314, %v3396, %v3395
    %v3398 = vsub.s32 4, %v3374
    %v3399 = vsel %vm3314, %v3398, %v3374
    %v3400 = vsel %vm3313, %v705, %v3397
    %v3401 = vsel %vm3313, 0, %v3399
    %v3402 = vcosq.f32.pop %v3400
    %v3403 = vsinq.f32.pop %v3400
    %vm3404 = vweird.f32 %v705
    %v3405 = vadd.s32 %v3401, 3
    %v3406 = vand.u32 %v3405, 3
    %vm3407 = vcmp.lt.s32.totalorder %v3406, 2
    %vm3408 = vcmp.eq.s32.totalorder %v3406, 0
    %v3409 = vxor.u32 %v3403, 2147483648
    %v3410 = vsel %vm3408, %v3402, %v3409
    %vm3411 = vcmp.eq.s32.totalorder %v3406, 2
    %v3412 = vxor.u32 %v3402, 2147483648
    %v3413 = vsel %vm3411, %v3412, %v3403
    %v3414 = vsel %vm3407, %v3410, %v3413
    %v3415 = vsel %vm3404, nan, %v3414
    %v3416 = vand.u32 2147483647, %v706
    %vm3417 = vcmp.le.f32.partialorder %v3416, 0.7853982
    %vm3418 = vcmp.lt.s32.totalorder %v706, 0
    %v3419 = vand.u32 %v706, 2139095040
    %v3420 = vshrl.u32 %v3419, 23
    %v3421 = vsub.s32 %v3420, 127
    %v3422 = vand.u32 2147483647, %v706
    %v3423 = vand.u32 %v3422, 8388607
    %v3424 = vor.u32 %v3423, 8388608
    %v3425 = vsub.s32 0, %v3424
    %v3426 = vadd.s32 %v3421, 1
    %vm3427 = vcmp.gt.s32.totalorder %v3426, 0
    %v3428 = vsel %vm3427, %v3426, 0
    %v3429 = vshrl.u32 %v3428, 5
    %v3430 = vand.u32 %v3428, 31
    %v3431 = vsub.s32 32, %v3430
    %v3432 = vshrl.u32 683565275, %v3431
    %v3433 = vshll.u32 683565275, %v3430
    %v3434 = vshrl.u32 2475754826, %v3431
    %v3435 = vor.u32 %v3433, %v3434
    %v3436 = vshll.u32 2475754826, %v3430
    %v3437 = vshrl.u32 2131351028, %v3431
    %v3438 = vor.u32 %v3436, %v3437
    %v3439 = vshll.u32 2131351028, %v3430
    %v3440 = vshrl.u32 2102212464, %v3431
    %v3441 = vor.u32 %v3439, %v3440
    %v3442 = vshll.u32 2102212464, %v3430
    %v3443 = vshrl.u32 920167782, %v3431
    %v3444 = vor.u32 %v3442, %v3443
    %v3445 = vshll.u32 920167782, %v3430
    %v3446 = vshrl.u32 1326507024, %v3431
    %v3447 = vor.u32 %v3445, %v3446
    %vm3448 = vcmp.lt.s32.totalorder %v3429, 1
    %vm3449 = vcmp.lt.s32.totalorder %v3429, 2
    %vm3450 = vcmp.lt.s32.totalorder %v3429, 3
    %vm3451 = vcmp.lt.s32.totalorder %v3429, 4
    %v3452 = vsel %vm3448, %v3432, %v3435
    %v3453 = vsel %vm3451, %v3441, 2102212464
    %v3454 = vsel %vm3450, %v3438, %v3453
    %v3455 = vsel %vm3449, %v3452, %v3454
    %v3456 = vsel %vm3448, %v3435, %v3438
    %v3457 = vsel %vm3451, %v3444, 920167782
    %v3458 = vsel %vm3450, %v3441, %v3457
    %v3459 = vsel %vm3449, %v3456, %v3458
    %v3460 = vsel %vm3448, %v3438, %v3441
    %v3461 = vsel %vm3451, %v3447, 1326507024
    %v3462 = vsel %vm3450, %v3444, %v3461
    %v3463 = vsel %vm3449, %v3460, %v3462
    %v3464 = vshll.u32 %v3424, 8
    %v3465 = vmul.u32.u64.compose %v3464, %v3463
    %v3466 = vextract.low.u32 %v3465
    %v3467 = vextract.high.u32 %v3465
    %v3468 = vmul.u32.u64.compose %v3464, %v3459
    %v3469 = vextract.low.u32 %v3468
    %v3470 = vextract.high.u32 %v3468
    %v3471 = vmul.u32 %v3464, %v3455
    %v3472 = vadd.s32 %v3467, %v3469
    %vm3473 = vc.u32 %v3467, %v3469
    %v3474 = vadd.s32 %v3470, 1
    %v3475 = vsel %vm3473, %v3474, %v3470
    %v3476 = vadd.s32 %v3471, %v3475
    %v3477 = vadd.s32 %v3476, 536870912
    %v3478 = vshrl.u32 %v3477, 30
    %v3479 = vshll.u32 %v3478, 30
    %v3480 = vsub.s32 %v3476, %v3479
    %vm3481 = vcmp.lt.s32.totalorder %v3480, 0
    %v3482 = vsub.s32 0, %v3480
    %v3483 = vsel %vm3481, %v3482, %v3480
    %v3484 = vclz %v3483
    %v3485 = vsub.s32 %v3484, 2
    %vm3486 = vcmp.gt.s32.totalorder 0, %v3485
    %v3487 = vsel %vm3486, 0, %v3485
    %v3488 = vsub.s32 32, %v3487
    %v3489 = vshll.u32 %v3480, %v3487
    %v3490 = vshrl.u32 %v3472, %v3488
    %v3491 = vor.u32 %v3489, %v3490
    %v3492 = vsub.s32 4294967266, %v3487
    %v3493 = vadd.s32 %v3492, 127
    %v3494 = vshll.u32 %v3493, 23
    %v3495 = vor.u32 4788187, %v3494
    %v3496 = vand.u32 2147483647, %v3495
    %v3498 = vcvt.s32.f32 %v3491
    %v3499 = vmul.f32 %v3498, %v3496
    %v3500 = vxor.u32 %v3499, 2147483648
    %v3501 = vsel %vm3418, %v3500, %v3499
    %v3502 = vsub.s32 4, %v3478
    %v3503 = vsel %vm3418, %v3502, %v3478
    %v3504 = vsel %vm3417, %v706, %v3501
    %v3505 = vsel %vm3417, 0, %v3503
    %v3506 = vcosq.f32.pop %v3504
    %v3507 = vsinq.f32.pop %v3504
    %vm3508 = vweird.f32 %v706
    %v3509 = vadd.s32 %v3505, 3
    %v3510 = vand.u32 %v3509, 3
    %vm3511 = vcmp.lt.s32.totalorder %v3510, 2
    %vm3512 = vcmp.eq.s32.totalorder %v3510, 0
    %v3513 = vxor.u32 %v3507, 2147483648
    %v3514 = vsel %vm3512, %v3506, %v3513
    %vm3515 = vcmp.eq.s32.totalorder %v3510, 2
    %v3516 = vxor.u32 %v3506, 2147483648
    %v3517 = vsel %vm3515, %v3516, %v3507
    %v3518 = vsel %vm3511, %v3514, %v3517
    %v3519 = vsel %vm3508, nan, %v3518
    %v3520 = vand.u32 2147483647, %v707
    %vm3521 = vcmp.le.f32.partialorder %v3520, 0.7853982
    %vm3522 = vcmp.lt.s32.totalorder %v707, 0
    %v3523 = vand.u32 %v707, 2139095040
    %v3524 = vshrl.u32 %v3523, 23
    %v3525 = vsub.s32 %v3524, 127
    %v3526 = vand.u32 2147483647, %v707
    %v3527 = vand.u32 %v3526, 8388607
    %v3528 = vor.u32 %v3527, 8388608
    %v3529 = vsub.s32 0, %v3528
    %v3530 = vadd.s32 %v3525, 1
    %vm3531 = vcmp.gt.s32.totalorder %v3530, 0
    %v3532 = vsel %vm3531, %v3530, 0
    %v3533 = vshrl.u32 %v3532, 5
    %v3534 = vand.u32 %v3532, 31
    %v3535 = vsub.s32 32, %v3534
    %v3536 = vshrl.u32 683565275, %v3535
    %v3537 = vshll.u32 683565275, %v3534
    %v3538 = vshrl.u32 2475754826, %v3535
    %v3539 = vor.u32 %v3537, %v3538
    %v3540 = vshll.u32 2475754826, %v3534
    %v3541 = vshrl.u32 2131351028, %v3535
    %v3542 = vor.u32 %v3540, %v3541
    %v3543 = vshll.u32 2131351028, %v3534
    %v3544 = vshrl.u32 2102212464, %v3535
    %v3545 = vor.u32 %v3543, %v3544
    %v3546 = vshll.u32 2102212464, %v3534
    %v3547 = vshrl.u32 920167782, %v3535
    %v3548 = vor.u32 %v3546, %v3547
    %v3549 = vshll.u32 920167782, %v3534
    %v3550 = vshrl.u32 1326507024, %v3535
    %v3551 = vor.u32 %v3549, %v3550
    %vm3552 = vcmp.lt.s32.totalorder %v3533, 1
    %vm3553 = vcmp.lt.s32.totalorder %v3533, 2
    %vm3554 = vcmp.lt.s32.totalorder %v3533, 3
    %vm3555 = vcmp.lt.s32.totalorder %v3533, 4
    %v3556 = vsel %vm3552, %v3536, %v3539
    %v3557 = vsel %vm3555, %v3545, 2102212464
    %v3558 = vsel %vm3554, %v3542, %v3557
    %v3559 = vsel %vm3553, %v3556, %v3558
    %v3560 = vsel %vm3552, %v3539, %v3542
    %v3561 = vsel %vm3555, %v3548, 920167782
    %v3562 = vsel %vm3554, %v3545, %v3561
    %v3563 = vsel %vm3553, %v3560, %v3562
    %v3564 = vsel %vm3552, %v3542, %v3545
    %v3565 = vsel %vm3555, %v3551, 1326507024
    %v3566 = vsel %vm3554, %v3548, %v3565
    %v3567 = vsel %vm3553, %v3564, %v3566
    %v3568 = vshll.u32 %v3528, 8
    %v3569 = vmul.u32.u64.compose %v3568, %v3567
    %v3570 = vextract.low.u32 %v3569
    %v3571 = vextract.high.u32 %v3569
    %v3572 = vmul.u32.u64.compose %v3568, %v3563
    %v3573 = vextract.low.u32 %v3572
    %v3574 = vextract.high.u32 %v3572
    %v3575 = vmul.u32 %v3568, %v3559
    %v3576 = vadd.s32 %v3571, %v3573
    %vm3577 = vc.u32 %v3571, %v3573
    %v3578 = vadd.s32 %v3574, 1
    %v3579 = vsel %vm3577, %v3578, %v3574
    %v3580 = vadd.s32 %v3575, %v3579
    %v3581 = vadd.s32 %v3580, 536870912
    %v3582 = vshrl.u32 %v3581, 30
    %v3583 = vshll.u32 %v3582, 30
    %v3584 = vsub.s32 %v3580, %v3583
    %vm3585 = vcmp.lt.s32.totalorder %v3584, 0
    %v3586 = vsub.s32 0, %v3584
    %v3587 = vsel %vm3585, %v3586, %v3584
    %v3588 = vclz %v3587
    %v3589 = vsub.s32 %v3588, 2
    %vm3590 = vcmp.gt.s32.totalorder 0, %v3589
    %v3591 = vsel %vm3590, 0, %v3589
    %v3592 = vsub.s32 32, %v3591
    %v3593 = vshll.u32 %v3584, %v3591
    %v3594 = vshrl.u32 %v3576, %v3592
    %v3595 = vor.u32 %v3593, %v3594
    %v3596 = vsub.s32 4294967266, %v3591
    %v3597 = vadd.s32 %v3596, 127
    %v3598 = vshll.u32 %v3597, 23
    %v3599 = vor.u32 4788187, %v3598
    %v3600 = vand.u32 2147483647, %v3599
    %v3602 = vcvt.s32.f32 %v3595
    %v3603 = vmul.f32 %v3602, %v3600
    %v3604 = vxor.u32 %v3603, 2147483648
    %v3605 = vsel %vm3522, %v3604, %v3603
    %v3606 = vsub.s32 4, %v3582
    %v3607 = vsel %vm3522, %v3606, %v3582
    %v3608 = vsel %vm3521, %v707, %v3605
    %v3609 = vsel %vm3521, 0, %v3607
    %v3610 = vcosq.f32.pop %v3608
    %v3611 = vsinq.f32.pop %v3608
    %vm3612 = vweird.f32 %v707
    %v3613 = vadd.s32 %v3609, 3
    %v3614 = vand.u32 %v3613, 3
    %vm3615 = vcmp.lt.s32.totalorder %v3614, 2
    %vm3616 = vcmp.eq.s32.totalorder %v3614, 0
    %v3617 = vxor.u32 %v3611, 2147483648
    %v3618 = vsel %vm3616, %v3610, %v3617
    %vm3619 = vcmp.eq.s32.totalorder %v3614, 2
    %v3620 = vxor.u32 %v3610, 2147483648
    %v3621 = vsel %vm3619, %v3620, %v3611
    %v3622 = vsel %vm3615, %v3618, %v3621
    %v3623 = vsel %vm3612, nan, %v3622
    %v3624 = vand.u32 2147483647, %v708
    %vm3625 = vcmp.le.f32.partialorder %v3624, 0.7853982
    %vm3626 = vcmp.lt.s32.totalorder %v708, 0
    %v3627 = vand.u32 %v708, 2139095040
    %v3628 = vshrl.u32 %v3627, 23
    %v3629 = vsub.s32 %v3628, 127
    %v3630 = vand.u32 2147483647, %v708
    %v3631 = vand.u32 %v3630, 8388607
    %v3632 = vor.u32 %v3631, 8388608
    %v3633 = vsub.s32 0, %v3632
    %v3634 = vadd.s32 %v3629, 1
    %vm3635 = vcmp.gt.s32.totalorder %v3634, 0
    %v3636 = vsel %vm3635, %v3634, 0
    %v3637 = vshrl.u32 %v3636, 5
    %v3638 = vand.u32 %v3636, 31
    %v3639 = vsub.s32 32, %v3638
    %v3640 = vshrl.u32 683565275, %v3639
    %v3641 = vshll.u32 683565275, %v3638
    %v3642 = vshrl.u32 2475754826, %v3639
    %v3643 = vor.u32 %v3641, %v3642
    %v3644 = vshll.u32 2475754826, %v3638
    %v3645 = vshrl.u32 2131351028, %v3639
    %v3646 = vor.u32 %v3644, %v3645
    %v3647 = vshll.u32 2131351028, %v3638
    %v3648 = vshrl.u32 2102212464, %v3639
    %v3649 = vor.u32 %v3647, %v3648
    %v3650 = vshll.u32 2102212464, %v3638
    %v3651 = vshrl.u32 920167782, %v3639
    %v3652 = vor.u32 %v3650, %v3651
    %v3653 = vshll.u32 920167782, %v3638
    %v3654 = vshrl.u32 1326507024, %v3639
    %v3655 = vor.u32 %v3653, %v3654
    %vm3656 = vcmp.lt.s32.totalorder %v3637, 1
    %vm3657 = vcmp.lt.s32.totalorder %v3637, 2
    %vm3658 = vcmp.lt.s32.totalorder %v3637, 3
    %vm3659 = vcmp.lt.s32.totalorder %v3637, 4
    %v3660 = vsel %vm3656, %v3640, %v3643
    %v3661 = vsel %vm3659, %v3649, 2102212464
    %v3662 = vsel %vm3658, %v3646, %v3661
    %v3663 = vsel %vm3657, %v3660, %v3662
    %v3664 = vsel %vm3656, %v3643, %v3646
    %v3665 = vsel %vm3659, %v3652, 920167782
    %v3666 = vsel %vm3658, %v3649, %v3665
    %v3667 = vsel %vm3657, %v3664, %v3666
    %v3668 = vsel %vm3656, %v3646, %v3649
    %v3669 = vsel %vm3659, %v3655, 1326507024
    %v3670 = vsel %vm3658, %v3652, %v3669
    %v3671 = vsel %vm3657, %v3668, %v3670
    %v3672 = vshll.u32 %v3632, 8
    %v3673 = vmul.u32.u64.compose %v3672, %v3671
    %v3674 = vextract.low.u32 %v3673
    %v3675 = vextract.high.u32 %v3673
    %v3676 = vmul.u32.u64.compose %v3672, %v3667
    %v3677 = vextract.low.u32 %v3676
    %v3678 = vextract.high.u32 %v3676
    %v3679 = vmul.u32 %v3672, %v3663
    %v3680 = vadd.s32 %v3675, %v3677
    %vm3681 = vc.u32 %v3675, %v3677
    %v3682 = vadd.s32 %v3678, 1
    %v3683 = vsel %vm3681, %v3682, %v3678
    %v3684 = vadd.s32 %v3679, %v3683
    %v3685 = vadd.s32 %v3684, 536870912
    %v3686 = vshrl.u32 %v3685, 30
    %v3687 = vshll.u32 %v3686, 30
    %v3688 = vsub.s32 %v3684, %v3687
    %vm3689 = vcmp.lt.s32.totalorder %v3688, 0
    %v3690 = vsub.s32 0, %v3688
    %v3691 = vsel %vm3689, %v3690, %v3688
    %v3692 = vclz %v3691
    %v3693 = vsub.s32 %v3692, 2
    %vm3694 = vcmp.gt.s32.totalorder 0, %v3693
    %v3695 = vsel %vm3694, 0, %v3693
    %v3696 = vsub.s32 32, %v3695
    %v3697 = vshll.u32 %v3688, %v3695
    %v3698 = vshrl.u32 %v3680, %v3696
    %v3699 = vor.u32 %v3697, %v3698
    %v3700 = vsub.s32 4294967266, %v3695
    %v3701 = vadd.s32 %v3700, 127
    %v3702 = vshll.u32 %v3701, 23
    %v3703 = vor.u32 4788187, %v3702
    %v3704 = vand.u32 2147483647, %v3703
    %v3706 = vcvt.s32.f32 %v3699
    %v3707 = vmul.f32 %v3706, %v3704
    %v3708 = vxor.u32 %v3707, 2147483648
    %v3709 = vsel %vm3626, %v3708, %v3707
    %v3710 = vsub.s32 4, %v3686
    %v3711 = vsel %vm3626, %v3710, %v3686
    %v3712 = vsel %vm3625, %v708, %v3709
    %v3713 = vsel %vm3625, 0, %v3711
    %v3714 = vcosq.f32.pop %v3712
    %v3715 = vsinq.f32.pop %v3712
    %vm3716 = vweird.f32 %v708
    %v3717 = vadd.s32 %v3713, 3
    %v3718 = vand.u32 %v3717, 3
    %vm3719 = vcmp.lt.s32.totalorder %v3718, 2
    %vm3720 = vcmp.eq.s32.totalorder %v3718, 0
    %v3721 = vxor.u32 %v3715, 2147483648
    %v3722 = vsel %vm3720, %v3714, %v3721
    %vm3723 = vcmp.eq.s32.totalorder %v3718, 2
    %v3724 = vxor.u32 %v3714, 2147483648
    %v3725 = vsel %vm3723, %v3724, %v3715
    %v3726 = vsel %vm3719, %v3722, %v3725
    %v3727 = vsel %vm3716, nan, %v3726
    %v3728 = vand.u32 2147483647, %v709
    %vm3729 = vcmp.le.f32.partialorder %v3728, 0.7853982
    %vm3730 = vcmp.lt.s32.totalorder %v709, 0
    %v3731 = vand.u32 %v709, 2139095040
    %v3732 = vshrl.u32 %v3731, 23
    %v3733 = vsub.s32 %v3732, 127
    %v3734 = vand.u32 2147483647, %v709
    %v3735 = vand.u32 %v3734, 8388607
    %v3736 = vor.u32 %v3735, 8388608
    %v3737 = vsub.s32 0, %v3736
    %v3738 = vadd.s32 %v3733, 1
    %vm3739 = vcmp.gt.s32.totalorder %v3738, 0
    %v3740 = vsel %vm3739, %v3738, 0
    %v3741 = vshrl.u32 %v3740, 5
    %v3742 = vand.u32 %v3740, 31
    %v3743 = vsub.s32 32, %v3742
    %v3744 = vshrl.u32 683565275, %v3743
    %v3745 = vshll.u32 683565275, %v3742
    %v3746 = vshrl.u32 2475754826, %v3743
    %v3747 = vor.u32 %v3745, %v3746
    %v3748 = vshll.u32 2475754826, %v3742
    %v3749 = vshrl.u32 2131351028, %v3743
    %v3750 = vor.u32 %v3748, %v3749
    %v3751 = vshll.u32 2131351028, %v3742
    %v3752 = vshrl.u32 2102212464, %v3743
    %v3753 = vor.u32 %v3751, %v3752
    %v3754 = vshll.u32 2102212464, %v3742
    %v3755 = vshrl.u32 920167782, %v3743
    %v3756 = vor.u32 %v3754, %v3755
    %v3757 = vshll.u32 920167782, %v3742
    %v3758 = vshrl.u32 1326507024, %v3743
    %v3759 = vor.u32 %v3757, %v3758
    %vm3760 = vcmp.lt.s32.totalorder %v3741, 1
    %vm3761 = vcmp.lt.s32.totalorder %v3741, 2
    %vm3762 = vcmp.lt.s32.totalorder %v3741, 3
    %vm3763 = vcmp.lt.s32.totalorder %v3741, 4
    %v3764 = vsel %vm3760, %v3744, %v3747
    %v3765 = vsel %vm3763, %v3753, 2102212464
    %v3766 = vsel %vm3762, %v3750, %v3765
    %v3767 = vsel %vm3761, %v3764, %v3766
    %v3768 = vsel %vm3760, %v3747, %v3750
    %v3769 = vsel %vm3763, %v3756, 920167782
    %v3770 = vsel %vm3762, %v3753, %v3769
    %v3771 = vsel %vm3761, %v3768, %v3770
    %v3772 = vsel %vm3760, %v3750, %v3753
    %v3773 = vsel %vm3763, %v3759, 1326507024
    %v3774 = vsel %vm3762, %v3756, %v3773
    %v3775 = vsel %vm3761, %v3772, %v3774
    %v3776 = vshll.u32 %v3736, 8
    %v3777 = vmul.u32.u64.compose %v3776, %v3775
    %v3778 = vextract.low.u32 %v3777
    %v3779 = vextract.high.u32 %v3777
    %v3780 = vmul.u32.u64.compose %v3776, %v3771
    %v3781 = vextract.low.u32 %v3780
    %v3782 = vextract.high.u32 %v3780
    %v3783 = vmul.u32 %v3776, %v3767
    %v3784 = vadd.s32 %v3779, %v3781
    %vm3785 = vc.u32 %v3779, %v3781
    %v3786 = vadd.s32 %v3782, 1
    %v3787 = vsel %vm3785, %v3786, %v3782
    %v3788 = vadd.s32 %v3783, %v3787
    %v3789 = vadd.s32 %v3788, 536870912
    %v3790 = vshrl.u32 %v3789, 30
    %v3791 = vshll.u32 %v3790, 30
    %v3792 = vsub.s32 %v3788, %v3791
    %vm3793 = vcmp.lt.s32.totalorder %v3792, 0
    %v3794 = vsub.s32 0, %v3792
    %v3795 = vsel %vm3793, %v3794, %v3792
    %v3796 = vclz %v3795
    %v3797 = vsub.s32 %v3796, 2
    %vm3798 = vcmp.gt.s32.totalorder 0, %v3797
    %v3799 = vsel %vm3798, 0, %v3797
    %v3800 = vsub.s32 32, %v3799
    %v3801 = vshll.u32 %v3792, %v3799
    %v3802 = vshrl.u32 %v3784, %v3800
    %v3803 = vor.u32 %v3801, %v3802
    %v3804 = vsub.s32 4294967266, %v3799
    %v3805 = vadd.s32 %v3804, 127
    %v3806 = vshll.u32 %v3805, 23
    %v3807 = vor.u32 4788187, %v3806
    %v3808 = vand.u32 2147483647, %v3807
    %v3810 = vcvt.s32.f32 %v3803
    %v3811 = vmul.f32 %v3810, %v3808
    %v3812 = vxor.u32 %v3811, 2147483648
    %v3813 = vsel %vm3730, %v3812, %v3811
    %v3814 = vsub.s32 4, %v3790
    %v3815 = vsel %vm3730, %v3814, %v3790
    %v3816 = vsel %vm3729, %v709, %v3813
    %v3817 = vsel %vm3729, 0, %v3815
    %v3818 = vcosq.f32.pop %v3816
    %v3819 = vsinq.f32.pop %v3816
    %vm3820 = vweird.f32 %v709
    %v3821 = vadd.s32 %v3817, 3
    %v3822 = vand.u32 %v3821, 3
    %vm3823 = vcmp.lt.s32.totalorder %v3822, 2
    %vm3824 = vcmp.eq.s32.totalorder %v3822, 0
    %v3825 = vxor.u32 %v3819, 2147483648
    %v3826 = vsel %vm3824, %v3818, %v3825
    %vm3827 = vcmp.eq.s32.totalorder %v3822, 2
    %v3828 = vxor.u32 %v3818, 2147483648
    %v3829 = vsel %vm3827, %v3828, %v3819
    %v3830 = vsel %vm3823, %v3826, %v3829
    %v3831 = vsel %vm3820, nan, %v3830
    %v3832 = vand.u32 2147483647, %v710
    %vm3833 = vcmp.le.f32.partialorder %v3832, 0.7853982
    %vm3834 = vcmp.lt.s32.totalorder %v710, 0
    %v3835 = vand.u32 %v710, 2139095040
    %v3836 = vshrl.u32 %v3835, 23
    %v3837 = vsub.s32 %v3836, 127
    %v3838 = vand.u32 2147483647, %v710
    %v3839 = vand.u32 %v3838, 8388607
    %v3840 = vor.u32 %v3839, 8388608
    %v3841 = vsub.s32 0, %v3840
    %v3842 = vadd.s32 %v3837, 1
    %vm3843 = vcmp.gt.s32.totalorder %v3842, 0
    %v3844 = vsel %vm3843, %v3842, 0
    %v3845 = vshrl.u32 %v3844, 5
    %v3846 = vand.u32 %v3844, 31
    %v3847 = vsub.s32 32, %v3846
    %v3848 = vshrl.u32 683565275, %v3847
    %v3849 = vshll.u32 683565275, %v3846
    %v3850 = vshrl.u32 2475754826, %v3847
    %v3851 = vor.u32 %v3849, %v3850
    %v3852 = vshll.u32 2475754826, %v3846
    %v3853 = vshrl.u32 2131351028, %v3847
    %v3854 = vor.u32 %v3852, %v3853
    %v3855 = vshll.u32 2131351028, %v3846
    %v3856 = vshrl.u32 2102212464, %v3847
    %v3857 = vor.u32 %v3855, %v3856
    %v3858 = vshll.u32 2102212464, %v3846
    %v3859 = vshrl.u32 920167782, %v3847
    %v3860 = vor.u32 %v3858, %v3859
    %v3861 = vshll.u32 920167782, %v3846
    %v3862 = vshrl.u32 1326507024, %v3847
    %v3863 = vor.u32 %v3861, %v3862
    %vm3864 = vcmp.lt.s32.totalorder %v3845, 1
    %vm3865 = vcmp.lt.s32.totalorder %v3845, 2
    %vm3866 = vcmp.lt.s32.totalorder %v3845, 3
    %vm3867 = vcmp.lt.s32.totalorder %v3845, 4
    %v3868 = vsel %vm3864, %v3848, %v3851
    %v3869 = vsel %vm3867, %v3857, 2102212464
    %v3870 = vsel %vm3866, %v3854, %v3869
    %v3871 = vsel %vm3865, %v3868, %v3870
    %v3872 = vsel %vm3864, %v3851, %v3854
    %v3873 = vsel %vm3867, %v3860, 920167782
    %v3874 = vsel %vm3866, %v3857, %v3873
    %v3875 = vsel %vm3865, %v3872, %v3874
    %v3876 = vsel %vm3864, %v3854, %v3857
    %v3877 = vsel %vm3867, %v3863, 1326507024
    %v3878 = vsel %vm3866, %v3860, %v3877
    %v3879 = vsel %vm3865, %v3876, %v3878
    %v3880 = vshll.u32 %v3840, 8
    %v3881 = vmul.u32.u64.compose %v3880, %v3879
    %v3882 = vextract.low.u32 %v3881
    %v3883 = vextract.high.u32 %v3881
    %v3884 = vmul.u32.u64.compose %v3880, %v3875
    %v3885 = vextract.low.u32 %v3884
    %v3886 = vextract.high.u32 %v3884
    %v3887 = vmul.u32 %v3880, %v3871
    %v3888 = vadd.s32 %v3883, %v3885
    %vm3889 = vc.u32 %v3883, %v3885
    %v3890 = vadd.s32 %v3886, 1
    %v3891 = vsel %vm3889, %v3890, %v3886
    %v3892 = vadd.s32 %v3887, %v3891
    %v3893 = vadd.s32 %v3892, 536870912
    %v3894 = vshrl.u32 %v3893, 30
    %v3895 = vshll.u32 %v3894, 30
    %v3896 = vsub.s32 %v3892, %v3895
    %vm3897 = vcmp.lt.s32.totalorder %v3896, 0
    %v3898 = vsub.s32 0, %v3896
    %v3899 = vsel %vm3897, %v3898, %v3896
    %v3900 = vclz %v3899
    %v3901 = vsub.s32 %v3900, 2
    %vm3902 = vcmp.gt.s32.totalorder 0, %v3901
    %v3903 = vsel %vm3902, 0, %v3901
    %v3904 = vsub.s32 32, %v3903
    %v3905 = vshll.u32 %v3896, %v3903
    %v3906 = vshrl.u32 %v3888, %v3904
    %v3907 = vor.u32 %v3905, %v3906
    %v3908 = vsub.s32 4294967266, %v3903
    %v3909 = vadd.s32 %v3908, 127
    %v3910 = vshll.u32 %v3909, 23
    %v3911 = vor.u32 4788187, %v3910
    %v3912 = vand.u32 2147483647, %v3911
    %v3914 = vcvt.s32.f32 %v3907
    %v3915 = vmul.f32 %v3914, %v3912
    %v3916 = vxor.u32 %v3915, 2147483648
    %v3917 = vsel %vm3834, %v3916, %v3915
    %v3918 = vsub.s32 4, %v3894
    %v3919 = vsel %vm3834, %v3918, %v3894
    %v3920 = vsel %vm3833, %v710, %v3917
    %v3921 = vsel %vm3833, 0, %v3919
    %v3922 = vcosq.f32.pop %v3920
    %v3923 = vsinq.f32.pop %v3920
    %vm3924 = vweird.f32 %v710
    %v3925 = vadd.s32 %v3921, 3
    %v3926 = vand.u32 %v3925, 3
    %vm3927 = vcmp.lt.s32.totalorder %v3926, 2
    %vm3928 = vcmp.eq.s32.totalorder %v3926, 0
    %v3929 = vxor.u32 %v3923, 2147483648
    %v3930 = vsel %vm3928, %v3922, %v3929
    %vm3931 = vcmp.eq.s32.totalorder %v3926, 2
    %v3932 = vxor.u32 %v3922, 2147483648
    %v3933 = vsel %vm3931, %v3932, %v3923
    %v3934 = vsel %vm3927, %v3930, %v3933
    %v3935 = vsel %vm3924, nan, %v3934
    %v3936 = vand.u32 2147483647, %v711
    %vm3937 = vcmp.le.f32.partialorder %v3936, 0.7853982
    %vm3938 = vcmp.lt.s32.totalorder %v711, 0
    %v3939 = vand.u32 %v711, 2139095040
    %v3940 = vshrl.u32 %v3939, 23
    %v3941 = vsub.s32 %v3940, 127
    %v3942 = vand.u32 2147483647, %v711
    %v3943 = vand.u32 %v3942, 8388607
    %v3944 = vor.u32 %v3943, 8388608
    %v3945 = vsub.s32 0, %v3944
    %v3946 = vadd.s32 %v3941, 1
    %vm3947 = vcmp.gt.s32.totalorder %v3946, 0
    %v3948 = vsel %vm3947, %v3946, 0
    %v3949 = vshrl.u32 %v3948, 5
    %v3950 = vand.u32 %v3948, 31
    %v3951 = vsub.s32 32, %v3950
    %v3952 = vshrl.u32 683565275, %v3951
    %v3953 = vshll.u32 683565275, %v3950
    %v3954 = vshrl.u32 2475754826, %v3951
    %v3955 = vor.u32 %v3953, %v3954
    %v3956 = vshll.u32 2475754826, %v3950
    %v3957 = vshrl.u32 2131351028, %v3951
    %v3958 = vor.u32 %v3956, %v3957
    %v3959 = vshll.u32 2131351028, %v3950
    %v3960 = vshrl.u32 2102212464, %v3951
    %v3961 = vor.u32 %v3959, %v3960
    %v3962 = vshll.u32 2102212464, %v3950
    %v3963 = vshrl.u32 920167782, %v3951
    %v3964 = vor.u32 %v3962, %v3963
    %v3965 = vshll.u32 920167782, %v3950
    %v3966 = vshrl.u32 1326507024, %v3951
    %v3967 = vor.u32 %v3965, %v3966
    %vm3968 = vcmp.lt.s32.totalorder %v3949, 1
    %vm3969 = vcmp.lt.s32.totalorder %v3949, 2
    %vm3970 = vcmp.lt.s32.totalorder %v3949, 3
    %vm3971 = vcmp.lt.s32.totalorder %v3949, 4
    %v3972 = vsel %vm3968, %v3952, %v3955
    %v3973 = vsel %vm3971, %v3961, 2102212464
    %v3974 = vsel %vm3970, %v3958, %v3973
    %v3975 = vsel %vm3969, %v3972, %v3974
    %v3976 = vsel %vm3968, %v3955, %v3958
    %v3977 = vsel %vm3971, %v3964, 920167782
    %v3978 = vsel %vm3970, %v3961, %v3977
    %v3979 = vsel %vm3969, %v3976, %v3978
    %v3980 = vsel %vm3968, %v3958, %v3961
    %v3981 = vsel %vm3971, %v3967, 1326507024
    %v3982 = vsel %vm3970, %v3964, %v3981
    %v3983 = vsel %vm3969, %v3980, %v3982
    %v3984 = vshll.u32 %v3944, 8
    %v3985 = vmul.u32.u64.compose %v3984, %v3983
    %v3986 = vextract.low.u32 %v3985
    %v3987 = vextract.high.u32 %v3985
    %v3988 = vmul.u32.u64.compose %v3984, %v3979
    %v3989 = vextract.low.u32 %v3988
    %v3990 = vextract.high.u32 %v3988
    %v3991 = vmul.u32 %v3984, %v3975
    %v3992 = vadd.s32 %v3987, %v3989
    %vm3993 = vc.u32 %v3987, %v3989
    %v3994 = vadd.s32 %v3990, 1
    %v3995 = vsel %vm3993, %v3994, %v3990
    %v3996 = vadd.s32 %v3991, %v3995
    %v3997 = vadd.s32 %v3996, 536870912
    %v3998 = vshrl.u32 %v3997, 30
    %v3999 = vshll.u32 %v3998, 30
    %v4000 = vsub.s32 %v3996, %v3999
    %vm4001 = vcmp.lt.s32.totalorder %v4000, 0
    %v4002 = vsub.s32 0, %v4000
    %v4003 = vsel %vm4001, %v4002, %v4000
    %v4004 = vclz %v4003
    %v4005 = vsub.s32 %v4004, 2
    %vm4006 = vcmp.gt.s32.totalorder 0, %v4005
    %v4007 = vsel %vm4006, 0, %v4005
    %v4008 = vsub.s32 32, %v4007
    %v4009 = vshll.u32 %v4000, %v4007
    %v4010 = vshrl.u32 %v3992, %v4008
    %v4011 = vor.u32 %v4009, %v4010
    %v4012 = vsub.s32 4294967266, %v4007
    %v4013 = vadd.s32 %v4012, 127
    %v4014 = vshll.u32 %v4013, 23
    %v4015 = vor.u32 4788187, %v4014
    %v4016 = vand.u32 2147483647, %v4015
    %v4018 = vcvt.s32.f32 %v4011
    %v4019 = vmul.f32 %v4018, %v4016
    %v4020 = vxor.u32 %v4019, 2147483648
    %v4021 = vsel %vm3938, %v4020, %v4019
    %v4022 = vsub.s32 4, %v3998
    %v4023 = vsel %vm3938, %v4022, %v3998
    %v4024 = vsel %vm3937, %v711, %v4021
    %v4025 = vsel %vm3937, 0, %v4023
    %v4026 = vcosq.f32.pop %v4024
    %v4027 = vsinq.f32.pop %v4024
    %vm4028 = vweird.f32 %v711
    %v4029 = vadd.s32 %v4025, 3
    %v4030 = vand.u32 %v4029, 3
    %vm4031 = vcmp.lt.s32.totalorder %v4030, 2
    %vm4032 = vcmp.eq.s32.totalorder %v4030, 0
    %v4033 = vxor.u32 %v4027, 2147483648
    %v4034 = vsel %vm4032, %v4026, %v4033
    %vm4035 = vcmp.eq.s32.totalorder %v4030, 2
    %v4036 = vxor.u32 %v4026, 2147483648
    %v4037 = vsel %vm4035, %v4036, %v4027
    %v4038 = vsel %vm4031, %v4034, %v4037
    %v4039 = vsel %vm4028, nan, %v4038
    %4040 = vst [vmem:[#allocation5] sm:$0xff] %v815
    %4041 = vst [vmem:[#allocation5 + $0x8] sm:$0xff] %v919
    %4042 = vst [vmem:[#allocation5 + $0x10] sm:$0xff] %v1023
    %4043 = vst [vmem:[#allocation5 + $0x18] sm:$0xff] %v1127
    %4044 = vst [vmem:[#allocation5 + $0x20] sm:$0xff] %v1231
    %4045 = vst [vmem:[#allocation5 + $0x28] sm:$0xff] %v1335
    %4046 = vst [vmem:[#allocation5 + $0x30] sm:$0xff] %v1439
    %4047 = vst [vmem:[#allocation5 + $0x38] sm:$0xff] %v1543
    %4048 = vst [vmem:[#allocation5 + $0x40] sm:$0xff] %v1647
    %4049 = vst [vmem:[#allocation5 + $0x48] sm:$0xff] %v1751
    %4050 = vst [vmem:[#allocation5 + $0x50] sm:$0xff] %v1855
    %4051 = vst [vmem:[#allocation5 + $0x58] sm:$0xff] %v1959
    %4052 = vst [vmem:[#allocation5 + $0x60] sm:$0xff] %v2063
    %4053 = vst [vmem:[#allocation5 + $0x68] sm:$0xff] %v2167
    %4054 = vst [vmem:[#allocation5 + $0x70] sm:$0xff] %v2271
    %4055 = vst [vmem:[#allocation5 + $0x78] sm:$0xff] %v2375
    %4056 = vst [vmem:[#allocation5 + $0x100] sm:$0xff] %v2479
    %4057 = vst [vmem:[#allocation5 + $0x108] sm:$0xff] %v2583
    %4058 = vst [vmem:[#allocation5 + $0x110] sm:$0xff] %v2687
    %4059 = vst [vmem:[#allocation5 + $0x118] sm:$0xff] %v2791
    %4060 = vst [vmem:[#allocation5 + $0x120] sm:$0xff] %v2895
    %4061 = vst [vmem:[#allocation5 + $0x128] sm:$0xff] %v2999
    %4062 = vst [vmem:[#allocation5 + $0x130] sm:$0xff] %v3103
    %4063 = vst [vmem:[#allocation5 + $0x138] sm:$0xff] %v3207
    %4064 = vst [vmem:[#allocation5 + $0x140] sm:$0xff] %v3311
    %4065 = vst [vmem:[#allocation5 + $0x148] sm:$0xff] %v3415
    %4066 = vst [vmem:[#allocation5 + $0x150] sm:$0xff] %v3519
    %4067 = vst [vmem:[#allocation5 + $0x158] sm:$0xff] %v3623
    %4068 = vst [vmem:[#allocation5 + $0x160] sm:$0xff] %v3727
    %4069 = vst [vmem:[#allocation5 + $0x168] sm:$0xff] %v3831
    %4070 = vst [vmem:[#allocation5 + $0x170] sm:$0xff] %v3935
    %4071 = vst [vmem:[#allocation5 + $0x178] sm:$0xff] %v4039
    %v4074 = vcombine.low %v501, %v503
    %v4076 = vunpack.c.l.s4 1966171168
    %v4077 = vunpack.c.0.s8 %v4076
    %v4078 = vlaneseq
    %v4079 = vshrl.u32 %v4078, 7
    %v4080 = vsub.s32 %v4077, %v4079
    %v4081 = vrot.slane %v4074, %v4080
    %v4082 = vcombine.high %v4081, %v4081
    %v4084 = vunpack.c.l.s4 1966171168
    %v4085 = vunpack.c.0.s8 %v4084
    %v4086 = vlaneseq
    %v4087 = vshrl.u32 %v4086, 7
    %v4088 = vsub.s32 %v4085, %v4087
    %v4089 = vrot.slane %v4081, %v4088
    %v4091 = vunpack.c.l.s4 1966171168
    %v4092 = vunpack.c.0.s8 %v4091
    %v4093 = vlaneseq
    %v4094 = vshrl.u32 %v4093, 7
    %v4095 = vsub.s32 %v4092, %v4094
    %v4096 = vrot.slane %v4082, %v4095
    %v4097 = vlaneseq
    %v4098 = vshrl.u32 %v4097, 7
    %v4099 = vsub.s32 0, %v4098
    %v4100 = vrot.slane %v4089, %v4099
    %v4101 = vlaneseq
    %v4102 = vshrl.u32 %v4101, 7
    %v4103 = vsub.s32 1, %v4102
    %v4104 = vrot.slane %v4089, %v4103
    %v4105 = vlaneseq
    %v4106 = vshrl.u32 %v4105, 7
    %v4107 = vsub.s32 0, %v4106
    %v4108 = vrot.slane %v4096, %v4107
    %v4109 = vlaneseq
    %v4110 = vshrl.u32 %v4109, 7
    %v4111 = vsub.s32 1, %v4110
    %v4112 = vrot.slane %v4096, %v4111
    %v4117 = vmul.f32 %v4100, %v571
    %v4118 = vmul.f32 %v4104, %v571
    %v4119 = vmul.f32 %v4100, %v576
    %v4120 = vmul.f32 %v4104, %v576
    %v4121 = vmul.f32 %v4100, %v581
    %v4122 = vmul.f32 %v4104, %v581
    %v4123 = vmul.f32 %v4100, %v586
    %v4124 = vmul.f32 %v4104, %v586
    %v4125 = vmul.f32 %v4100, %v591
    %v4126 = vmul.f32 %v4104, %v591
    %v4127 = vmul.f32 %v4100, %v596
    %v4128 = vmul.f32 %v4104, %v596
    %v4129 = vmul.f32 %v4100, %v601
    %v4130 = vmul.f32 %v4104, %v601
    %v4131 = vmul.f32 %v4100, %v606
    %v4132 = vmul.f32 %v4104, %v606
    %v4133 = vmul.f32 %v4108, %v571
    %v4134 = vmul.f32 %v4112, %v571
    %v4135 = vmul.f32 %v4108, %v576
    %v4136 = vmul.f32 %v4112, %v576
    %v4137 = vmul.f32 %v4108, %v581
    %v4138 = vmul.f32 %v4112, %v581
    %v4139 = vmul.f32 %v4108, %v586
    %v4140 = vmul.f32 %v4112, %v586
    %v4141 = vmul.f32 %v4108, %v591
    %v4142 = vmul.f32 %v4112, %v591
    %v4143 = vmul.f32 %v4108, %v596
    %v4144 = vmul.f32 %v4112, %v596
    %v4145 = vmul.f32 %v4108, %v601
    %v4146 = vmul.f32 %v4112, %v601
    %v4147 = vmul.f32 %v4108, %v606
    %v4148 = vmul.f32 %v4112, %v606
    %v4149 = vadd.f32 %v4117, %v643
    %v4150 = vadd.f32 %v4118, %v643
    %v4151 = vadd.f32 %v4119, %v648
    %v4152 = vadd.f32 %v4120, %v648
    %v4153 = vadd.f32 %v4121, %v653
    %v4154 = vadd.f32 %v4122, %v653
    %v4155 = vadd.f32 %v4123, %v658
    %v4156 = vadd.f32 %v4124, %v658
    %v4157 = vadd.f32 %v4125, %v663
    %v4158 = vadd.f32 %v4126, %v663
    %v4159 = vadd.f32 %v4127, %v668
    %v4160 = vadd.f32 %v4128, %v668
    %v4161 = vadd.f32 %v4129, %v673
    %v4162 = vadd.f32 %v4130, %v673
    %v4163 = vadd.f32 %v4131, %v678
    %v4164 = vadd.f32 %v4132, %v678
    %v4165 = vadd.f32 %v4133, %v643
    %v4166 = vadd.f32 %v4134, %v643
    %v4167 = vadd.f32 %v4135, %v648
    %v4168 = vadd.f32 %v4136, %v648
    %v4169 = vadd.f32 %v4137, %v653
    %v4170 = vadd.f32 %v4138, %v653
    %v4171 = vadd.f32 %v4139, %v658
    %v4172 = vadd.f32 %v4140, %v658
    %v4173 = vadd.f32 %v4141, %v663
    %v4174 = vadd.f32 %v4142, %v663
    %v4175 = vadd.f32 %v4143, %v668
    %v4176 = vadd.f32 %v4144, %v668
    %v4177 = vadd.f32 %v4145, %v673
    %v4178 = vadd.f32 %v4146, %v673
    %v4179 = vadd.f32 %v4147, %v678
    %v4180 = vadd.f32 %v4148, %v678
    %v4181 = vand.u32 2147483647, %v4149
    %vm4182 = vcmp.le.f32.partialorder %v4181, 0.7853982
    %vm4183 = vcmp.lt.s32.totalorder %v4149, 0
    %v4184 = vand.u32 %v4149, 2139095040
    %v4185 = vshrl.u32 %v4184, 23
    %v4186 = vsub.s32 %v4185, 127
    %v4187 = vand.u32 2147483647, %v4149
    %v4188 = vand.u32 %v4187, 8388607
    %v4189 = vor.u32 %v4188, 8388608
    %v4190 = vsub.s32 0, %v4189
    %v4191 = vadd.s32 %v4186, 1
    %vm4192 = vcmp.gt.s32.totalorder %v4191, 0
    %v4193 = vsel %vm4192, %v4191, 0
    %v4194 = vshrl.u32 %v4193, 5
    %v4195 = vand.u32 %v4193, 31
    %v4196 = vsub.s32 32, %v4195
    %v4197 = vshrl.u32 683565275, %v4196
    %v4198 = vshll.u32 683565275, %v4195
    %v4199 = vshrl.u32 2475754826, %v4196
    %v4200 = vor.u32 %v4198, %v4199
    %v4201 = vshll.u32 2475754826, %v4195
    %v4202 = vshrl.u32 2131351028, %v4196
    %v4203 = vor.u32 %v4201, %v4202
    %v4204 = vshll.u32 2131351028, %v4195
    %v4205 = vshrl.u32 2102212464, %v4196
    %v4206 = vor.u32 %v4204, %v4205
    %v4207 = vshll.u32 2102212464, %v4195
    %v4208 = vshrl.u32 920167782, %v4196
    %v4209 = vor.u32 %v4207, %v4208
    %v4210 = vshll.u32 920167782, %v4195
    %v4211 = vshrl.u32 1326507024, %v4196
    %v4212 = vor.u32 %v4210, %v4211
    %vm4213 = vcmp.lt.s32.totalorder %v4194, 1
    %vm4214 = vcmp.lt.s32.totalorder %v4194, 2
    %vm4215 = vcmp.lt.s32.totalorder %v4194, 3
    %vm4216 = vcmp.lt.s32.totalorder %v4194, 4
    %v4217 = vsel %vm4213, %v4197, %v4200
    %v4218 = vsel %vm4216, %v4206, 2102212464
    %v4219 = vsel %vm4215, %v4203, %v4218
    %v4220 = vsel %vm4214, %v4217, %v4219
    %v4221 = vsel %vm4213, %v4200, %v4203
    %v4222 = vsel %vm4216, %v4209, 920167782
    %v4223 = vsel %vm4215, %v4206, %v4222
    %v4224 = vsel %vm4214, %v4221, %v4223
    %v4225 = vsel %vm4213, %v4203, %v4206
    %v4226 = vsel %vm4216, %v4212, 1326507024
    %v4227 = vsel %vm4215, %v4209, %v4226
    %v4228 = vsel %vm4214, %v4225, %v4227
    %v4229 = vshll.u32 %v4189, 8
    %v4230 = vmul.u32.u64.compose %v4229, %v4228
    %v4231 = vextract.low.u32 %v4230
    %v4232 = vextract.high.u32 %v4230
    %v4233 = vmul.u32.u64.compose %v4229, %v4224
    %v4234 = vextract.low.u32 %v4233
    %v4235 = vextract.high.u32 %v4233
    %v4236 = vmul.u32 %v4229, %v4220
    %v4237 = vadd.s32 %v4232, %v4234
    %vm4238 = vc.u32 %v4232, %v4234
    %v4239 = vadd.s32 %v4235, 1
    %v4240 = vsel %vm4238, %v4239, %v4235
    %v4241 = vadd.s32 %v4236, %v4240
    %v4242 = vadd.s32 %v4241, 536870912
    %v4243 = vshrl.u32 %v4242, 30
    %v4244 = vshll.u32 %v4243, 30
    %v4245 = vsub.s32 %v4241, %v4244
    %vm4246 = vcmp.lt.s32.totalorder %v4245, 0
    %v4247 = vsub.s32 0, %v4245
    %v4248 = vsel %vm4246, %v4247, %v4245
    %v4249 = vclz %v4248
    %v4250 = vsub.s32 %v4249, 2
    %vm4251 = vcmp.gt.s32.totalorder 0, %v4250
    %v4252 = vsel %vm4251, 0, %v4250
    %v4253 = vsub.s32 32, %v4252
    %v4254 = vshll.u32 %v4245, %v4252
    %v4255 = vshrl.u32 %v4237, %v4253
    %v4256 = vor.u32 %v4254, %v4255
    %v4257 = vsub.s32 4294967266, %v4252
    %v4258 = vadd.s32 %v4257, 127
    %v4259 = vshll.u32 %v4258, 23
    %v4260 = vor.u32 4788187, %v4259
    %v4261 = vand.u32 2147483647, %v4260
    %v4263 = vcvt.s32.f32 %v4256
    %v4264 = vmul.f32 %v4263, %v4261
    %v4265 = vxor.u32 %v4264, 2147483648
    %v4266 = vsel %vm4183, %v4265, %v4264
    %v4267 = vsub.s32 4, %v4243
    %v4268 = vsel %vm4183, %v4267, %v4243
    %v4269 = vsel %vm4182, %v4149, %v4266
    %v4270 = vsel %vm4182, 0, %v4268
    %v4271 = vcosq.f32.pop %v4269
    %v4272 = vsinq.f32.pop %v4269
    %vm4273 = vweird.f32 %v4149
    %v4274 = vadd.s32 %v4270, 3
    %v4275 = vand.u32 %v4274, 3
    %vm4276 = vcmp.lt.s32.totalorder %v4275, 2
    %vm4277 = vcmp.eq.s32.totalorder %v4275, 0
    %v4278 = vxor.u32 %v4272, 2147483648
    %v4279 = vsel %vm4277, %v4271, %v4278
    %vm4280 = vcmp.eq.s32.totalorder %v4275, 2
    %v4281 = vxor.u32 %v4271, 2147483648
    %v4282 = vsel %vm4280, %v4281, %v4272
    %v4283 = vsel %vm4276, %v4279, %v4282
    %v4284 = vsel %vm4273, nan, %v4283
    %v4285 = vand.u32 2147483647, %v4150
    %vm4286 = vcmp.le.f32.partialorder %v4285, 0.7853982
    %vm4287 = vcmp.lt.s32.totalorder %v4150, 0
    %v4288 = vand.u32 %v4150, 2139095040
    %v4289 = vshrl.u32 %v4288, 23
    %v4290 = vsub.s32 %v4289, 127
    %v4291 = vand.u32 2147483647, %v4150
    %v4292 = vand.u32 %v4291, 8388607
    %v4293 = vor.u32 %v4292, 8388608
    %v4294 = vsub.s32 0, %v4293
    %v4295 = vadd.s32 %v4290, 1
    %vm4296 = vcmp.gt.s32.totalorder %v4295, 0
    %v4297 = vsel %vm4296, %v4295, 0
    %v4298 = vshrl.u32 %v4297, 5
    %v4299 = vand.u32 %v4297, 31
    %v4300 = vsub.s32 32, %v4299
    %v4301 = vshrl.u32 683565275, %v4300
    %v4302 = vshll.u32 683565275, %v4299
    %v4303 = vshrl.u32 2475754826, %v4300
    %v4304 = vor.u32 %v4302, %v4303
    %v4305 = vshll.u32 2475754826, %v4299
    %v4306 = vshrl.u32 2131351028, %v4300
    %v4307 = vor.u32 %v4305, %v4306
    %v4308 = vshll.u32 2131351028, %v4299
    %v4309 = vshrl.u32 2102212464, %v4300
    %v4310 = vor.u32 %v4308, %v4309
    %v4311 = vshll.u32 2102212464, %v4299
    %v4312 = vshrl.u32 920167782, %v4300
    %v4313 = vor.u32 %v4311, %v4312
    %v4314 = vshll.u32 920167782, %v4299
    %v4315 = vshrl.u32 1326507024, %v4300
    %v4316 = vor.u32 %v4314, %v4315
    %vm4317 = vcmp.lt.s32.totalorder %v4298, 1
    %vm4318 = vcmp.lt.s32.totalorder %v4298, 2
    %vm4319 = vcmp.lt.s32.totalorder %v4298, 3
    %vm4320 = vcmp.lt.s32.totalorder %v4298, 4
    %v4321 = vsel %vm4317, %v4301, %v4304
    %v4322 = vsel %vm4320, %v4310, 2102212464
    %v4323 = vsel %vm4319, %v4307, %v4322
    %v4324 = vsel %vm4318, %v4321, %v4323
    %v4325 = vsel %vm4317, %v4304, %v4307
    %v4326 = vsel %vm4320, %v4313, 920167782
    %v4327 = vsel %vm4319, %v4310, %v4326
    %v4328 = vsel %vm4318, %v4325, %v4327
    %v4329 = vsel %vm4317, %v4307, %v4310
    %v4330 = vsel %vm4320, %v4316, 1326507024
    %v4331 = vsel %vm4319, %v4313, %v4330
    %v4332 = vsel %vm4318, %v4329, %v4331
    %v4333 = vshll.u32 %v4293, 8
    %v4334 = vmul.u32.u64.compose %v4333, %v4332
    %v4335 = vextract.low.u32 %v4334
    %v4336 = vextract.high.u32 %v4334
    %v4337 = vmul.u32.u64.compose %v4333, %v4328
    %v4338 = vextract.low.u32 %v4337
    %v4339 = vextract.high.u32 %v4337
    %v4340 = vmul.u32 %v4333, %v4324
    %v4341 = vadd.s32 %v4336, %v4338
    %vm4342 = vc.u32 %v4336, %v4338
    %v4343 = vadd.s32 %v4339, 1
    %v4344 = vsel %vm4342, %v4343, %v4339
    %v4345 = vadd.s32 %v4340, %v4344
    %v4346 = vadd.s32 %v4345, 536870912
    %v4347 = vshrl.u32 %v4346, 30
    %v4348 = vshll.u32 %v4347, 30
    %v4349 = vsub.s32 %v4345, %v4348
    %vm4350 = vcmp.lt.s32.totalorder %v4349, 0
    %v4351 = vsub.s32 0, %v4349
    %v4352 = vsel %vm4350, %v4351, %v4349
    %v4353 = vclz %v4352
    %v4354 = vsub.s32 %v4353, 2
    %vm4355 = vcmp.gt.s32.totalorder 0, %v4354
    %v4356 = vsel %vm4355, 0, %v4354
    %v4357 = vsub.s32 32, %v4356
    %v4358 = vshll.u32 %v4349, %v4356
    %v4359 = vshrl.u32 %v4341, %v4357
    %v4360 = vor.u32 %v4358, %v4359
    %v4361 = vsub.s32 4294967266, %v4356
    %v4362 = vadd.s32 %v4361, 127
    %v4363 = vshll.u32 %v4362, 23
    %v4364 = vor.u32 4788187, %v4363
    %v4365 = vand.u32 2147483647, %v4364
    %v4367 = vcvt.s32.f32 %v4360
    %v4368 = vmul.f32 %v4367, %v4365
    %v4369 = vxor.u32 %v4368, 2147483648
    %v4370 = vsel %vm4287, %v4369, %v4368
    %v4371 = vsub.s32 4, %v4347
    %v4372 = vsel %vm4287, %v4371, %v4347
    %v4373 = vsel %vm4286, %v4150, %v4370
    %v4374 = vsel %vm4286, 0, %v4372
    %v4375 = vcosq.f32.pop %v4373
    %v4376 = vsinq.f32.pop %v4373
    %vm4377 = vweird.f32 %v4150
    %v4378 = vadd.s32 %v4374, 3
    %v4379 = vand.u32 %v4378, 3
    %vm4380 = vcmp.lt.s32.totalorder %v4379, 2
    %vm4381 = vcmp.eq.s32.totalorder %v4379, 0
    %v4382 = vxor.u32 %v4376, 2147483648
    %v4383 = vsel %vm4381, %v4375, %v4382
    %vm4384 = vcmp.eq.s32.totalorder %v4379, 2
    %v4385 = vxor.u32 %v4375, 2147483648
    %v4386 = vsel %vm4384, %v4385, %v4376
    %v4387 = vsel %vm4380, %v4383, %v4386
    %v4388 = vsel %vm4377, nan, %v4387
    %v4389 = vand.u32 2147483647, %v4151
    %vm4390 = vcmp.le.f32.partialorder %v4389, 0.7853982
    %vm4391 = vcmp.lt.s32.totalorder %v4151, 0
    %v4392 = vand.u32 %v4151, 2139095040
    %v4393 = vshrl.u32 %v4392, 23
    %v4394 = vsub.s32 %v4393, 127
    %v4395 = vand.u32 2147483647, %v4151
    %v4396 = vand.u32 %v4395, 8388607
    %v4397 = vor.u32 %v4396, 8388608
    %v4398 = vsub.s32 0, %v4397
    %v4399 = vadd.s32 %v4394, 1
    %vm4400 = vcmp.gt.s32.totalorder %v4399, 0
    %v4401 = vsel %vm4400, %v4399, 0
    %v4402 = vshrl.u32 %v4401, 5
    %v4403 = vand.u32 %v4401, 31
    %v4404 = vsub.s32 32, %v4403
    %v4405 = vshrl.u32 683565275, %v4404
    %v4406 = vshll.u32 683565275, %v4403
    %v4407 = vshrl.u32 2475754826, %v4404
    %v4408 = vor.u32 %v4406, %v4407
    %v4409 = vshll.u32 2475754826, %v4403
    %v4410 = vshrl.u32 2131351028, %v4404
    %v4411 = vor.u32 %v4409, %v4410
    %v4412 = vshll.u32 2131351028, %v4403
    %v4413 = vshrl.u32 2102212464, %v4404
    %v4414 = vor.u32 %v4412, %v4413
    %v4415 = vshll.u32 2102212464, %v4403
    %v4416 = vshrl.u32 920167782, %v4404
    %v4417 = vor.u32 %v4415, %v4416
    %v4418 = vshll.u32 920167782, %v4403
    %v4419 = vshrl.u32 1326507024, %v4404
    %v4420 = vor.u32 %v4418, %v4419
    %vm4421 = vcmp.lt.s32.totalorder %v4402, 1
    %vm4422 = vcmp.lt.s32.totalorder %v4402, 2
    %vm4423 = vcmp.lt.s32.totalorder %v4402, 3
    %vm4424 = vcmp.lt.s32.totalorder %v4402, 4
    %v4425 = vsel %vm4421, %v4405, %v4408
    %v4426 = vsel %vm4424, %v4414, 2102212464
    %v4427 = vsel %vm4423, %v4411, %v4426
    %v4428 = vsel %vm4422, %v4425, %v4427
    %v4429 = vsel %vm4421, %v4408, %v4411
    %v4430 = vsel %vm4424, %v4417, 920167782
    %v4431 = vsel %vm4423, %v4414, %v4430
    %v4432 = vsel %vm4422, %v4429, %v4431
    %v4433 = vsel %vm4421, %v4411, %v4414
    %v4434 = vsel %vm4424, %v4420, 1326507024
    %v4435 = vsel %vm4423, %v4417, %v4434
    %v4436 = vsel %vm4422, %v4433, %v4435
    %v4437 = vshll.u32 %v4397, 8
    %v4438 = vmul.u32.u64.compose %v4437, %v4436
    %v4439 = vextract.low.u32 %v4438
    %v4440 = vextract.high.u32 %v4438
    %v4441 = vmul.u32.u64.compose %v4437, %v4432
    %v4442 = vextract.low.u32 %v4441
    %v4443 = vextract.high.u32 %v4441
    %v4444 = vmul.u32 %v4437, %v4428
    %v4445 = vadd.s32 %v4440, %v4442
    %vm4446 = vc.u32 %v4440, %v4442
    %v4447 = vadd.s32 %v4443, 1
    %v4448 = vsel %vm4446, %v4447, %v4443
    %v4449 = vadd.s32 %v4444, %v4448
    %v4450 = vadd.s32 %v4449, 536870912
    %v4451 = vshrl.u32 %v4450, 30
    %v4452 = vshll.u32 %v4451, 30
    %v4453 = vsub.s32 %v4449, %v4452
    %vm4454 = vcmp.lt.s32.totalorder %v4453, 0
    %v4455 = vsub.s32 0, %v4453
    %v4456 = vsel %vm4454, %v4455, %v4453
    %v4457 = vclz %v4456
    %v4458 = vsub.s32 %v4457, 2
    %vm4459 = vcmp.gt.s32.totalorder 0, %v4458
    %v4460 = vsel %vm4459, 0, %v4458
    %v4461 = vsub.s32 32, %v4460
    %v4462 = vshll.u32 %v4453, %v4460
    %v4463 = vshrl.u32 %v4445, %v4461
    %v4464 = vor.u32 %v4462, %v4463
    %v4465 = vsub.s32 4294967266, %v4460
    %v4466 = vadd.s32 %v4465, 127
    %v4467 = vshll.u32 %v4466, 23
    %v4468 = vor.u32 4788187, %v4467
    %v4469 = vand.u32 2147483647, %v4468
    %v4471 = vcvt.s32.f32 %v4464
    %v4472 = vmul.f32 %v4471, %v4469
    %v4473 = vxor.u32 %v4472, 2147483648
    %v4474 = vsel %vm4391, %v4473, %v4472
    %v4475 = vsub.s32 4, %v4451
    %v4476 = vsel %vm4391, %v4475, %v4451
    %v4477 = vsel %vm4390, %v4151, %v4474
    %v4478 = vsel %vm4390, 0, %v4476
    %v4479 = vcosq.f32.pop %v4477
    %v4480 = vsinq.f32.pop %v4477
    %vm4481 = vweird.f32 %v4151
    %v4482 = vadd.s32 %v4478, 3
    %v4483 = vand.u32 %v4482, 3
    %vm4484 = vcmp.lt.s32.totalorder %v4483, 2
    %vm4485 = vcmp.eq.s32.totalorder %v4483, 0
    %v4486 = vxor.u32 %v4480, 2147483648
    %v4487 = vsel %vm4485, %v4479, %v4486
    %vm4488 = vcmp.eq.s32.totalorder %v4483, 2
    %v4489 = vxor.u32 %v4479, 2147483648
    %v4490 = vsel %vm4488, %v4489, %v4480
    %v4491 = vsel %vm4484, %v4487, %v4490
    %v4492 = vsel %vm4481, nan, %v4491
    %v4493 = vand.u32 2147483647, %v4152
    %vm4494 = vcmp.le.f32.partialorder %v4493, 0.7853982
    %vm4495 = vcmp.lt.s32.totalorder %v4152, 0
    %v4496 = vand.u32 %v4152, 2139095040
    %v4497 = vshrl.u32 %v4496, 23
    %v4498 = vsub.s32 %v4497, 127
    %v4499 = vand.u32 2147483647, %v4152
    %v4500 = vand.u32 %v4499, 8388607
    %v4501 = vor.u32 %v4500, 8388608
    %v4502 = vsub.s32 0, %v4501
    %v4503 = vadd.s32 %v4498, 1
    %vm4504 = vcmp.gt.s32.totalorder %v4503, 0
    %v4505 = vsel %vm4504, %v4503, 0
    %v4506 = vshrl.u32 %v4505, 5
    %v4507 = vand.u32 %v4505, 31
    %v4508 = vsub.s32 32, %v4507
    %v4509 = vshrl.u32 683565275, %v4508
    %v4510 = vshll.u32 683565275, %v4507
    %v4511 = vshrl.u32 2475754826, %v4508
    %v4512 = vor.u32 %v4510, %v4511
    %v4513 = vshll.u32 2475754826, %v4507
    %v4514 = vshrl.u32 2131351028, %v4508
    %v4515 = vor.u32 %v4513, %v4514
    %v4516 = vshll.u32 2131351028, %v4507
    %v4517 = vshrl.u32 2102212464, %v4508
    %v4518 = vor.u32 %v4516, %v4517
    %v4519 = vshll.u32 2102212464, %v4507
    %v4520 = vshrl.u32 920167782, %v4508
    %v4521 = vor.u32 %v4519, %v4520
    %v4522 = vshll.u32 920167782, %v4507
    %v4523 = vshrl.u32 1326507024, %v4508
    %v4524 = vor.u32 %v4522, %v4523
    %vm4525 = vcmp.lt.s32.totalorder %v4506, 1
    %vm4526 = vcmp.lt.s32.totalorder %v4506, 2
    %vm4527 = vcmp.lt.s32.totalorder %v4506, 3
    %vm4528 = vcmp.lt.s32.totalorder %v4506, 4
    %v4529 = vsel %vm4525, %v4509, %v4512
    %v4530 = vsel %vm4528, %v4518, 2102212464
    %v4531 = vsel %vm4527, %v4515, %v4530
    %v4532 = vsel %vm4526, %v4529, %v4531
    %v4533 = vsel %vm4525, %v4512, %v4515
    %v4534 = vsel %vm4528, %v4521, 920167782
    %v4535 = vsel %vm4527, %v4518, %v4534
    %v4536 = vsel %vm4526, %v4533, %v4535
    %v4537 = vsel %vm4525, %v4515, %v4518
    %v4538 = vsel %vm4528, %v4524, 1326507024
    %v4539 = vsel %vm4527, %v4521, %v4538
    %v4540 = vsel %vm4526, %v4537, %v4539
    %v4541 = vshll.u32 %v4501, 8
    %v4542 = vmul.u32.u64.compose %v4541, %v4540
    %v4543 = vextract.low.u32 %v4542
    %v4544 = vextract.high.u32 %v4542
    %v4545 = vmul.u32.u64.compose %v4541, %v4536
    %v4546 = vextract.low.u32 %v4545
    %v4547 = vextract.high.u32 %v4545
    %v4548 = vmul.u32 %v4541, %v4532
    %v4549 = vadd.s32 %v4544, %v4546
    %vm4550 = vc.u32 %v4544, %v4546
    %v4551 = vadd.s32 %v4547, 1
    %v4552 = vsel %vm4550, %v4551, %v4547
    %v4553 = vadd.s32 %v4548, %v4552
    %v4554 = vadd.s32 %v4553, 536870912
    %v4555 = vshrl.u32 %v4554, 30
    %v4556 = vshll.u32 %v4555, 30
    %v4557 = vsub.s32 %v4553, %v4556
    %vm4558 = vcmp.lt.s32.totalorder %v4557, 0
    %v4559 = vsub.s32 0, %v4557
    %v4560 = vsel %vm4558, %v4559, %v4557
    %v4561 = vclz %v4560
    %v4562 = vsub.s32 %v4561, 2
    %vm4563 = vcmp.gt.s32.totalorder 0, %v4562
    %v4564 = vsel %vm4563, 0, %v4562
    %v4565 = vsub.s32 32, %v4564
    %v4566 = vshll.u32 %v4557, %v4564
    %v4567 = vshrl.u32 %v4549, %v4565
    %v4568 = vor.u32 %v4566, %v4567
    %v4569 = vsub.s32 4294967266, %v4564
    %v4570 = vadd.s32 %v4569, 127
    %v4571 = vshll.u32 %v4570, 23
    %v4572 = vor.u32 4788187, %v4571
    %v4573 = vand.u32 2147483647, %v4572
    %v4575 = vcvt.s32.f32 %v4568
    %v4576 = vmul.f32 %v4575, %v4573
    %v4577 = vxor.u32 %v4576, 2147483648
    %v4578 = vsel %vm4495, %v4577, %v4576
    %v4579 = vsub.s32 4, %v4555
    %v4580 = vsel %vm4495, %v4579, %v4555
    %v4581 = vsel %vm4494, %v4152, %v4578
    %v4582 = vsel %vm4494, 0, %v4580
    %v4583 = vcosq.f32.pop %v4581
    %v4584 = vsinq.f32.pop %v4581
    %vm4585 = vweird.f32 %v4152
    %v4586 = vadd.s32 %v4582, 3
    %v4587 = vand.u32 %v4586, 3
    %vm4588 = vcmp.lt.s32.totalorder %v4587, 2
    %vm4589 = vcmp.eq.s32.totalorder %v4587, 0
    %v4590 = vxor.u32 %v4584, 2147483648
    %v4591 = vsel %vm4589, %v4583, %v4590
    %vm4592 = vcmp.eq.s32.totalorder %v4587, 2
    %v4593 = vxor.u32 %v4583, 2147483648
    %v4594 = vsel %vm4592, %v4593, %v4584
    %v4595 = vsel %vm4588, %v4591, %v4594
    %v4596 = vsel %vm4585, nan, %v4595
    %v4597 = vand.u32 2147483647, %v4153
    %vm4598 = vcmp.le.f32.partialorder %v4597, 0.7853982
    %vm4599 = vcmp.lt.s32.totalorder %v4153, 0
    %v4600 = vand.u32 %v4153, 2139095040
    %v4601 = vshrl.u32 %v4600, 23
    %v4602 = vsub.s32 %v4601, 127
    %v4603 = vand.u32 2147483647, %v4153
    %v4604 = vand.u32 %v4603, 8388607
    %v4605 = vor.u32 %v4604, 8388608
    %v4606 = vsub.s32 0, %v4605
    %v4607 = vadd.s32 %v4602, 1
    %vm4608 = vcmp.gt.s32.totalorder %v4607, 0
    %v4609 = vsel %vm4608, %v4607, 0
    %v4610 = vshrl.u32 %v4609, 5
    %v4611 = vand.u32 %v4609, 31
    %v4612 = vsub.s32 32, %v4611
    %v4613 = vshrl.u32 683565275, %v4612
    %v4614 = vshll.u32 683565275, %v4611
    %v4615 = vshrl.u32 2475754826, %v4612
    %v4616 = vor.u32 %v4614, %v4615
    %v4617 = vshll.u32 2475754826, %v4611
    %v4618 = vshrl.u32 2131351028, %v4612
    %v4619 = vor.u32 %v4617, %v4618
    %v4620 = vshll.u32 2131351028, %v4611
    %v4621 = vshrl.u32 2102212464, %v4612
    %v4622 = vor.u32 %v4620, %v4621
    %v4623 = vshll.u32 2102212464, %v4611
    %v4624 = vshrl.u32 920167782, %v4612
    %v4625 = vor.u32 %v4623, %v4624
    %v4626 = vshll.u32 920167782, %v4611
    %v4627 = vshrl.u32 1326507024, %v4612
    %v4628 = vor.u32 %v4626, %v4627
    %vm4629 = vcmp.lt.s32.totalorder %v4610, 1
    %vm4630 = vcmp.lt.s32.totalorder %v4610, 2
    %vm4631 = vcmp.lt.s32.totalorder %v4610, 3
    %vm4632 = vcmp.lt.s32.totalorder %v4610, 4
    %v4633 = vsel %vm4629, %v4613, %v4616
    %v4634 = vsel %vm4632, %v4622, 2102212464
    %v4635 = vsel %vm4631, %v4619, %v4634
    %v4636 = vsel %vm4630, %v4633, %v4635
    %v4637 = vsel %vm4629, %v4616, %v4619
    %v4638 = vsel %vm4632, %v4625, 920167782
    %v4639 = vsel %vm4631, %v4622, %v4638
    %v4640 = vsel %vm4630, %v4637, %v4639
    %v4641 = vsel %vm4629, %v4619, %v4622
    %v4642 = vsel %vm4632, %v4628, 1326507024
    %v4643 = vsel %vm4631, %v4625, %v4642
    %v4644 = vsel %vm4630, %v4641, %v4643
    %v4645 = vshll.u32 %v4605, 8
    %v4646 = vmul.u32.u64.compose %v4645, %v4644
    %v4647 = vextract.low.u32 %v4646
    %v4648 = vextract.high.u32 %v4646
    %v4649 = vmul.u32.u64.compose %v4645, %v4640
    %v4650 = vextract.low.u32 %v4649
    %v4651 = vextract.high.u32 %v4649
    %v4652 = vmul.u32 %v4645, %v4636
    %v4653 = vadd.s32 %v4648, %v4650
    %vm4654 = vc.u32 %v4648, %v4650
    %v4655 = vadd.s32 %v4651, 1
    %v4656 = vsel %vm4654, %v4655, %v4651
    %v4657 = vadd.s32 %v4652, %v4656
    %v4658 = vadd.s32 %v4657, 536870912
    %v4659 = vshrl.u32 %v4658, 30
    %v4660 = vshll.u32 %v4659, 30
    %v4661 = vsub.s32 %v4657, %v4660
    %vm4662 = vcmp.lt.s32.totalorder %v4661, 0
    %v4663 = vsub.s32 0, %v4661
    %v4664 = vsel %vm4662, %v4663, %v4661
    %v4665 = vclz %v4664
    %v4666 = vsub.s32 %v4665, 2
    %vm4667 = vcmp.gt.s32.totalorder 0, %v4666
    %v4668 = vsel %vm4667, 0, %v4666
    %v4669 = vsub.s32 32, %v4668
    %v4670 = vshll.u32 %v4661, %v4668
    %v4671 = vshrl.u32 %v4653, %v4669
    %v4672 = vor.u32 %v4670, %v4671
    %v4673 = vsub.s32 4294967266, %v4668
    %v4674 = vadd.s32 %v4673, 127
    %v4675 = vshll.u32 %v4674, 23
    %v4676 = vor.u32 4788187, %v4675
    %v4677 = vand.u32 2147483647, %v4676
    %v4679 = vcvt.s32.f32 %v4672
    %v4680 = vmul.f32 %v4679, %v4677
    %v4681 = vxor.u32 %v4680, 2147483648
    %v4682 = vsel %vm4599, %v4681, %v4680
    %v4683 = vsub.s32 4, %v4659
    %v4684 = vsel %vm4599, %v4683, %v4659
    %v4685 = vsel %vm4598, %v4153, %v4682
    %v4686 = vsel %vm4598, 0, %v4684
    %v4687 = vcosq.f32.pop %v4685
    %v4688 = vsinq.f32.pop %v4685
    %vm4689 = vweird.f32 %v4153
    %v4690 = vadd.s32 %v4686, 3
    %v4691 = vand.u32 %v4690, 3
    %vm4692 = vcmp.lt.s32.totalorder %v4691, 2
    %vm4693 = vcmp.eq.s32.totalorder %v4691, 0
    %v4694 = vxor.u32 %v4688, 2147483648
    %v4695 = vsel %vm4693, %v4687, %v4694
    %vm4696 = vcmp.eq.s32.totalorder %v4691, 2
    %v4697 = vxor.u32 %v4687, 2147483648
    %v4698 = vsel %vm4696, %v4697, %v4688
    %v4699 = vsel %vm4692, %v4695, %v4698
    %v4700 = vsel %vm4689, nan, %v4699
    %v4701 = vand.u32 2147483647, %v4154
    %vm4702 = vcmp.le.f32.partialorder %v4701, 0.7853982
    %vm4703 = vcmp.lt.s32.totalorder %v4154, 0
    %v4704 = vand.u32 %v4154, 2139095040
    %v4705 = vshrl.u32 %v4704, 23
    %v4706 = vsub.s32 %v4705, 127
    %v4707 = vand.u32 2147483647, %v4154
    %v4708 = vand.u32 %v4707, 8388607
    %v4709 = vor.u32 %v4708, 8388608
    %v4710 = vsub.s32 0, %v4709
    %v4711 = vadd.s32 %v4706, 1
    %vm4712 = vcmp.gt.s32.totalorder %v4711, 0
    %v4713 = vsel %vm4712, %v4711, 0
    %v4714 = vshrl.u32 %v4713, 5
    %v4715 = vand.u32 %v4713, 31
    %v4716 = vsub.s32 32, %v4715
    %v4717 = vshrl.u32 683565275, %v4716
    %v4718 = vshll.u32 683565275, %v4715
    %v4719 = vshrl.u32 2475754826, %v4716
    %v4720 = vor.u32 %v4718, %v4719
    %v4721 = vshll.u32 2475754826, %v4715
    %v4722 = vshrl.u32 2131351028, %v4716
    %v4723 = vor.u32 %v4721, %v4722
    %v4724 = vshll.u32 2131351028, %v4715
    %v4725 = vshrl.u32 2102212464, %v4716
    %v4726 = vor.u32 %v4724, %v4725
    %v4727 = vshll.u32 2102212464, %v4715
    %v4728 = vshrl.u32 920167782, %v4716
    %v4729 = vor.u32 %v4727, %v4728
    %v4730 = vshll.u32 920167782, %v4715
    %v4731 = vshrl.u32 1326507024, %v4716
    %v4732 = vor.u32 %v4730, %v4731
    %vm4733 = vcmp.lt.s32.totalorder %v4714, 1
    %vm4734 = vcmp.lt.s32.totalorder %v4714, 2
    %vm4735 = vcmp.lt.s32.totalorder %v4714, 3
    %vm4736 = vcmp.lt.s32.totalorder %v4714, 4
    %v4737 = vsel %vm4733, %v4717, %v4720
    %v4738 = vsel %vm4736, %v4726, 2102212464
    %v4739 = vsel %vm4735, %v4723, %v4738
    %v4740 = vsel %vm4734, %v4737, %v4739
    %v4741 = vsel %vm4733, %v4720, %v4723
    %v4742 = vsel %vm4736, %v4729, 920167782
    %v4743 = vsel %vm4735, %v4726, %v4742
    %v4744 = vsel %vm4734, %v4741, %v4743
    %v4745 = vsel %vm4733, %v4723, %v4726
    %v4746 = vsel %vm4736, %v4732, 1326507024
    %v4747 = vsel %vm4735, %v4729, %v4746
    %v4748 = vsel %vm4734, %v4745, %v4747
    %v4749 = vshll.u32 %v4709, 8
    %v4750 = vmul.u32.u64.compose %v4749, %v4748
    %v4751 = vextract.low.u32 %v4750
    %v4752 = vextract.high.u32 %v4750
    %v4753 = vmul.u32.u64.compose %v4749, %v4744
    %v4754 = vextract.low.u32 %v4753
    %v4755 = vextract.high.u32 %v4753
    %v4756 = vmul.u32 %v4749, %v4740
    %v4757 = vadd.s32 %v4752, %v4754
    %vm4758 = vc.u32 %v4752, %v4754
    %v4759 = vadd.s32 %v4755, 1
    %v4760 = vsel %vm4758, %v4759, %v4755
    %v4761 = vadd.s32 %v4756, %v4760
    %v4762 = vadd.s32 %v4761, 536870912
    %v4763 = vshrl.u32 %v4762, 30
    %v4764 = vshll.u32 %v4763, 30
    %v4765 = vsub.s32 %v4761, %v4764
    %vm4766 = vcmp.lt.s32.totalorder %v4765, 0
    %v4767 = vsub.s32 0, %v4765
    %v4768 = vsel %vm4766, %v4767, %v4765
    %v4769 = vclz %v4768
    %v4770 = vsub.s32 %v4769, 2
    %vm4771 = vcmp.gt.s32.totalorder 0, %v4770
    %v4772 = vsel %vm4771, 0, %v4770
    %v4773 = vsub.s32 32, %v4772
    %v4774 = vshll.u32 %v4765, %v4772
    %v4775 = vshrl.u32 %v4757, %v4773
    %v4776 = vor.u32 %v4774, %v4775
    %v4777 = vsub.s32 4294967266, %v4772
    %v4778 = vadd.s32 %v4777, 127
    %v4779 = vshll.u32 %v4778, 23
    %v4780 = vor.u32 4788187, %v4779
    %v4781 = vand.u32 2147483647, %v4780
    %v4783 = vcvt.s32.f32 %v4776
    %v4784 = vmul.f32 %v4783, %v4781
    %v4785 = vxor.u32 %v4784, 2147483648
    %v4786 = vsel %vm4703, %v4785, %v4784
    %v4787 = vsub.s32 4, %v4763
    %v4788 = vsel %vm4703, %v4787, %v4763
    %v4789 = vsel %vm4702, %v4154, %v4786
    %v4790 = vsel %vm4702, 0, %v4788
    %v4791 = vcosq.f32.pop %v4789
    %v4792 = vsinq.f32.pop %v4789
    %vm4793 = vweird.f32 %v4154
    %v4794 = vadd.s32 %v4790, 3
    %v4795 = vand.u32 %v4794, 3
    %vm4796 = vcmp.lt.s32.totalorder %v4795, 2
    %vm4797 = vcmp.eq.s32.totalorder %v4795, 0
    %v4798 = vxor.u32 %v4792, 2147483648
    %v4799 = vsel %vm4797, %v4791, %v4798
    %vm4800 = vcmp.eq.s32.totalorder %v4795, 2
    %v4801 = vxor.u32 %v4791, 2147483648
    %v4802 = vsel %vm4800, %v4801, %v4792
    %v4803 = vsel %vm4796, %v4799, %v4802
    %v4804 = vsel %vm4793, nan, %v4803
    %v4805 = vand.u32 2147483647, %v4155
    %vm4806 = vcmp.le.f32.partialorder %v4805, 0.7853982
    %vm4807 = vcmp.lt.s32.totalorder %v4155, 0
    %v4808 = vand.u32 %v4155, 2139095040
    %v4809 = vshrl.u32 %v4808, 23
    %v4810 = vsub.s32 %v4809, 127
    %v4811 = vand.u32 2147483647, %v4155
    %v4812 = vand.u32 %v4811, 8388607
    %v4813 = vor.u32 %v4812, 8388608
    %v4814 = vsub.s32 0, %v4813
    %v4815 = vadd.s32 %v4810, 1
    %vm4816 = vcmp.gt.s32.totalorder %v4815, 0
    %v4817 = vsel %vm4816, %v4815, 0
    %v4818 = vshrl.u32 %v4817, 5
    %v4819 = vand.u32 %v4817, 31
    %v4820 = vsub.s32 32, %v4819
    %v4821 = vshrl.u32 683565275, %v4820
    %v4822 = vshll.u32 683565275, %v4819
    %v4823 = vshrl.u32 2475754826, %v4820
    %v4824 = vor.u32 %v4822, %v4823
    %v4825 = vshll.u32 2475754826, %v4819
    %v4826 = vshrl.u32 2131351028, %v4820
    %v4827 = vor.u32 %v4825, %v4826
    %v4828 = vshll.u32 2131351028, %v4819
    %v4829 = vshrl.u32 2102212464, %v4820
    %v4830 = vor.u32 %v4828, %v4829
    %v4831 = vshll.u32 2102212464, %v4819
    %v4832 = vshrl.u32 920167782, %v4820
    %v4833 = vor.u32 %v4831, %v4832
    %v4834 = vshll.u32 920167782, %v4819
    %v4835 = vshrl.u32 1326507024, %v4820
    %v4836 = vor.u32 %v4834, %v4835
    %vm4837 = vcmp.lt.s32.totalorder %v4818, 1
    %vm4838 = vcmp.lt.s32.totalorder %v4818, 2
    %vm4839 = vcmp.lt.s32.totalorder %v4818, 3
    %vm4840 = vcmp.lt.s32.totalorder %v4818, 4
    %v4841 = vsel %vm4837, %v4821, %v4824
    %v4842 = vsel %vm4840, %v4830, 2102212464
    %v4843 = vsel %vm4839, %v4827, %v4842
    %v4844 = vsel %vm4838, %v4841, %v4843
    %v4845 = vsel %vm4837, %v4824, %v4827
    %v4846 = vsel %vm4840, %v4833, 920167782
    %v4847 = vsel %vm4839, %v4830, %v4846
    %v4848 = vsel %vm4838, %v4845, %v4847
    %v4849 = vsel %vm4837, %v4827, %v4830
    %v4850 = vsel %vm4840, %v4836, 1326507024
    %v4851 = vsel %vm4839, %v4833, %v4850
    %v4852 = vsel %vm4838, %v4849, %v4851
    %v4853 = vshll.u32 %v4813, 8
    %v4854 = vmul.u32.u64.compose %v4853, %v4852
    %v4855 = vextract.low.u32 %v4854
    %v4856 = vextract.high.u32 %v4854
    %v4857 = vmul.u32.u64.compose %v4853, %v4848
    %v4858 = vextract.low.u32 %v4857
    %v4859 = vextract.high.u32 %v4857
    %v4860 = vmul.u32 %v4853, %v4844
    %v4861 = vadd.s32 %v4856, %v4858
    %vm4862 = vc.u32 %v4856, %v4858
    %v4863 = vadd.s32 %v4859, 1
    %v4864 = vsel %vm4862, %v4863, %v4859
    %v4865 = vadd.s32 %v4860, %v4864
    %v4866 = vadd.s32 %v4865, 536870912
    %v4867 = vshrl.u32 %v4866, 30
    %v4868 = vshll.u32 %v4867, 30
    %v4869 = vsub.s32 %v4865, %v4868
    %vm4870 = vcmp.lt.s32.totalorder %v4869, 0
    %v4871 = vsub.s32 0, %v4869
    %v4872 = vsel %vm4870, %v4871, %v4869
    %v4873 = vclz %v4872
    %v4874 = vsub.s32 %v4873, 2
    %vm4875 = vcmp.gt.s32.totalorder 0, %v4874
    %v4876 = vsel %vm4875, 0, %v4874
    %v4877 = vsub.s32 32, %v4876
    %v4878 = vshll.u32 %v4869, %v4876
    %v4879 = vshrl.u32 %v4861, %v4877
    %v4880 = vor.u32 %v4878, %v4879
    %v4881 = vsub.s32 4294967266, %v4876
    %v4882 = vadd.s32 %v4881, 127
    %v4883 = vshll.u32 %v4882, 23
    %v4884 = vor.u32 4788187, %v4883
    %v4885 = vand.u32 2147483647, %v4884
    %v4887 = vcvt.s32.f32 %v4880
    %v4888 = vmul.f32 %v4887, %v4885
    %v4889 = vxor.u32 %v4888, 2147483648
    %v4890 = vsel %vm4807, %v4889, %v4888
    %v4891 = vsub.s32 4, %v4867
    %v4892 = vsel %vm4807, %v4891, %v4867
    %v4893 = vsel %vm4806, %v4155, %v4890
    %v4894 = vsel %vm4806, 0, %v4892
    %v4895 = vcosq.f32.pop %v4893
    %v4896 = vsinq.f32.pop %v4893
    %vm4897 = vweird.f32 %v4155
    %v4898 = vadd.s32 %v4894, 3
    %v4899 = vand.u32 %v4898, 3
    %vm4900 = vcmp.lt.s32.totalorder %v4899, 2
    %vm4901 = vcmp.eq.s32.totalorder %v4899, 0
    %v4902 = vxor.u32 %v4896, 2147483648
    %v4903 = vsel %vm4901, %v4895, %v4902
    %vm4904 = vcmp.eq.s32.totalorder %v4899, 2
    %v4905 = vxor.u32 %v4895, 2147483648
    %v4906 = vsel %vm4904, %v4905, %v4896
    %v4907 = vsel %vm4900, %v4903, %v4906
    %v4908 = vsel %vm4897, nan, %v4907
    %v4909 = vand.u32 2147483647, %v4156
    %vm4910 = vcmp.le.f32.partialorder %v4909, 0.7853982
    %vm4911 = vcmp.lt.s32.totalorder %v4156, 0
    %v4912 = vand.u32 %v4156, 2139095040
    %v4913 = vshrl.u32 %v4912, 23
    %v4914 = vsub.s32 %v4913, 127
    %v4915 = vand.u32 2147483647, %v4156
    %v4916 = vand.u32 %v4915, 8388607
    %v4917 = vor.u32 %v4916, 8388608
    %v4918 = vsub.s32 0, %v4917
    %v4919 = vadd.s32 %v4914, 1
    %vm4920 = vcmp.gt.s32.totalorder %v4919, 0
    %v4921 = vsel %vm4920, %v4919, 0
    %v4922 = vshrl.u32 %v4921, 5
    %v4923 = vand.u32 %v4921, 31
    %v4924 = vsub.s32 32, %v4923
    %v4925 = vshrl.u32 683565275, %v4924
    %v4926 = vshll.u32 683565275, %v4923
    %v4927 = vshrl.u32 2475754826, %v4924
    %v4928 = vor.u32 %v4926, %v4927
    %v4929 = vshll.u32 2475754826, %v4923
    %v4930 = vshrl.u32 2131351028, %v4924
    %v4931 = vor.u32 %v4929, %v4930
    %v4932 = vshll.u32 2131351028, %v4923
    %v4933 = vshrl.u32 2102212464, %v4924
    %v4934 = vor.u32 %v4932, %v4933
    %v4935 = vshll.u32 2102212464, %v4923
    %v4936 = vshrl.u32 920167782, %v4924
    %v4937 = vor.u32 %v4935, %v4936
    %v4938 = vshll.u32 920167782, %v4923
    %v4939 = vshrl.u32 1326507024, %v4924
    %v4940 = vor.u32 %v4938, %v4939
    %vm4941 = vcmp.lt.s32.totalorder %v4922, 1
    %vm4942 = vcmp.lt.s32.totalorder %v4922, 2
    %vm4943 = vcmp.lt.s32.totalorder %v4922, 3
    %vm4944 = vcmp.lt.s32.totalorder %v4922, 4
    %v4945 = vsel %vm4941, %v4925, %v4928
    %v4946 = vsel %vm4944, %v4934, 2102212464
    %v4947 = vsel %vm4943, %v4931, %v4946
    %v4948 = vsel %vm4942, %v4945, %v4947
    %v4949 = vsel %vm4941, %v4928, %v4931
    %v4950 = vsel %vm4944, %v4937, 920167782
    %v4951 = vsel %vm4943, %v4934, %v4950
    %v4952 = vsel %vm4942, %v4949, %v4951
    %v4953 = vsel %vm4941, %v4931, %v4934
    %v4954 = vsel %vm4944, %v4940, 1326507024
    %v4955 = vsel %vm4943, %v4937, %v4954
    %v4956 = vsel %vm4942, %v4953, %v4955
    %v4957 = vshll.u32 %v4917, 8
    %v4958 = vmul.u32.u64.compose %v4957, %v4956
    %v4959 = vextract.low.u32 %v4958
    %v4960 = vextract.high.u32 %v4958
    %v4961 = vmul.u32.u64.compose %v4957, %v4952
    %v4962 = vextract.low.u32 %v4961
    %v4963 = vextract.high.u32 %v4961
    %v4964 = vmul.u32 %v4957, %v4948
    %v4965 = vadd.s32 %v4960, %v4962
    %vm4966 = vc.u32 %v4960, %v4962
    %v4967 = vadd.s32 %v4963, 1
    %v4968 = vsel %vm4966, %v4967, %v4963
    %v4969 = vadd.s32 %v4964, %v4968
    %v4970 = vadd.s32 %v4969, 536870912
    %v4971 = vshrl.u32 %v4970, 30
    %v4972 = vshll.u32 %v4971, 30
    %v4973 = vsub.s32 %v4969, %v4972
    %vm4974 = vcmp.lt.s32.totalorder %v4973, 0
    %v4975 = vsub.s32 0, %v4973
    %v4976 = vsel %vm4974, %v4975, %v4973
    %v4977 = vclz %v4976
    %v4978 = vsub.s32 %v4977, 2
    %vm4979 = vcmp.gt.s32.totalorder 0, %v4978
    %v4980 = vsel %vm4979, 0, %v4978
    %v4981 = vsub.s32 32, %v4980
    %v4982 = vshll.u32 %v4973, %v4980
    %v4983 = vshrl.u32 %v4965, %v4981
    %v4984 = vor.u32 %v4982, %v4983
    %v4985 = vsub.s32 4294967266, %v4980
    %v4986 = vadd.s32 %v4985, 127
    %v4987 = vshll.u32 %v4986, 23
    %v4988 = vor.u32 4788187, %v4987
    %v4989 = vand.u32 2147483647, %v4988
    %v4991 = vcvt.s32.f32 %v4984
    %v4992 = vmul.f32 %v4991, %v4989
    %v4993 = vxor.u32 %v4992, 2147483648
    %v4994 = vsel %vm4911, %v4993, %v4992
    %v4995 = vsub.s32 4, %v4971
    %v4996 = vsel %vm4911, %v4995, %v4971
    %v4997 = vsel %vm4910, %v4156, %v4994
    %v4998 = vsel %vm4910, 0, %v4996
    %v4999 = vcosq.f32.pop %v4997
    %v5000 = vsinq.f32.pop %v4997
    %vm5001 = vweird.f32 %v4156
    %v5002 = vadd.s32 %v4998, 3
    %v5003 = vand.u32 %v5002, 3
    %vm5004 = vcmp.lt.s32.totalorder %v5003, 2
    %vm5005 = vcmp.eq.s32.totalorder %v5003, 0
    %v5006 = vxor.u32 %v5000, 2147483648
    %v5007 = vsel %vm5005, %v4999, %v5006
    %vm5008 = vcmp.eq.s32.totalorder %v5003, 2
    %v5009 = vxor.u32 %v4999, 2147483648
    %v5010 = vsel %vm5008, %v5009, %v5000
    %v5011 = vsel %vm5004, %v5007, %v5010
    %v5012 = vsel %vm5001, nan, %v5011
    %v5013 = vand.u32 2147483647, %v4157
    %vm5014 = vcmp.le.f32.partialorder %v5013, 0.7853982
    %vm5015 = vcmp.lt.s32.totalorder %v4157, 0
    %v5016 = vand.u32 %v4157, 2139095040
    %v5017 = vshrl.u32 %v5016, 23
    %v5018 = vsub.s32 %v5017, 127
    %v5019 = vand.u32 2147483647, %v4157
    %v5020 = vand.u32 %v5019, 8388607
    %v5021 = vor.u32 %v5020, 8388608
    %v5022 = vsub.s32 0, %v5021
    %v5023 = vadd.s32 %v5018, 1
    %vm5024 = vcmp.gt.s32.totalorder %v5023, 0
    %v5025 = vsel %vm5024, %v5023, 0
    %v5026 = vshrl.u32 %v5025, 5
    %v5027 = vand.u32 %v5025, 31
    %v5028 = vsub.s32 32, %v5027
    %v5029 = vshrl.u32 683565275, %v5028
    %v5030 = vshll.u32 683565275, %v5027
    %v5031 = vshrl.u32 2475754826, %v5028
    %v5032 = vor.u32 %v5030, %v5031
    %v5033 = vshll.u32 2475754826, %v5027
    %v5034 = vshrl.u32 2131351028, %v5028
    %v5035 = vor.u32 %v5033, %v5034
    %v5036 = vshll.u32 2131351028, %v5027
    %v5037 = vshrl.u32 2102212464, %v5028
    %v5038 = vor.u32 %v5036, %v5037
    %v5039 = vshll.u32 2102212464, %v5027
    %v5040 = vshrl.u32 920167782, %v5028
    %v5041 = vor.u32 %v5039, %v5040
    %v5042 = vshll.u32 920167782, %v5027
    %v5043 = vshrl.u32 1326507024, %v5028
    %v5044 = vor.u32 %v5042, %v5043
    %vm5045 = vcmp.lt.s32.totalorder %v5026, 1
    %vm5046 = vcmp.lt.s32.totalorder %v5026, 2
    %vm5047 = vcmp.lt.s32.totalorder %v5026, 3
    %vm5048 = vcmp.lt.s32.totalorder %v5026, 4
    %v5049 = vsel %vm5045, %v5029, %v5032
    %v5050 = vsel %vm5048, %v5038, 2102212464
    %v5051 = vsel %vm5047, %v5035, %v5050
    %v5052 = vsel %vm5046, %v5049, %v5051
    %v5053 = vsel %vm5045, %v5032, %v5035
    %v5054 = vsel %vm5048, %v5041, 920167782
    %v5055 = vsel %vm5047, %v5038, %v5054
    %v5056 = vsel %vm5046, %v5053, %v5055
    %v5057 = vsel %vm5045, %v5035, %v5038
    %v5058 = vsel %vm5048, %v5044, 1326507024
    %v5059 = vsel %vm5047, %v5041, %v5058
    %v5060 = vsel %vm5046, %v5057, %v5059
    %v5061 = vshll.u32 %v5021, 8
    %v5062 = vmul.u32.u64.compose %v5061, %v5060
    %v5063 = vextract.low.u32 %v5062
    %v5064 = vextract.high.u32 %v5062
    %v5065 = vmul.u32.u64.compose %v5061, %v5056
    %v5066 = vextract.low.u32 %v5065
    %v5067 = vextract.high.u32 %v5065
    %v5068 = vmul.u32 %v5061, %v5052
    %v5069 = vadd.s32 %v5064, %v5066
    %vm5070 = vc.u32 %v5064, %v5066
    %v5071 = vadd.s32 %v5067, 1
    %v5072 = vsel %vm5070, %v5071, %v5067
    %v5073 = vadd.s32 %v5068, %v5072
    %v5074 = vadd.s32 %v5073, 536870912
    %v5075 = vshrl.u32 %v5074, 30
    %v5076 = vshll.u32 %v5075, 30
    %v5077 = vsub.s32 %v5073, %v5076
    %vm5078 = vcmp.lt.s32.totalorder %v5077, 0
    %v5079 = vsub.s32 0, %v5077
    %v5080 = vsel %vm5078, %v5079, %v5077
    %v5081 = vclz %v5080
    %v5082 = vsub.s32 %v5081, 2
    %vm5083 = vcmp.gt.s32.totalorder 0, %v5082
    %v5084 = vsel %vm5083, 0, %v5082
    %v5085 = vsub.s32 32, %v5084
    %v5086 = vshll.u32 %v5077, %v5084
    %v5087 = vshrl.u32 %v5069, %v5085
    %v5088 = vor.u32 %v5086, %v5087
    %v5089 = vsub.s32 4294967266, %v5084
    %v5090 = vadd.s32 %v5089, 127
    %v5091 = vshll.u32 %v5090, 23
    %v5092 = vor.u32 4788187, %v5091
    %v5093 = vand.u32 2147483647, %v5092
    %v5095 = vcvt.s32.f32 %v5088
    %v5096 = vmul.f32 %v5095, %v5093
    %v5097 = vxor.u32 %v5096, 2147483648
    %v5098 = vsel %vm5015, %v5097, %v5096
    %v5099 = vsub.s32 4, %v5075
    %v5100 = vsel %vm5015, %v5099, %v5075
    %v5101 = vsel %vm5014, %v4157, %v5098
    %v5102 = vsel %vm5014, 0, %v5100
    %v5103 = vcosq.f32.pop %v5101
    %v5104 = vsinq.f32.pop %v5101
    %vm5105 = vweird.f32 %v4157
    %v5106 = vadd.s32 %v5102, 3
    %v5107 = vand.u32 %v5106, 3
    %vm5108 = vcmp.lt.s32.totalorder %v5107, 2
    %vm5109 = vcmp.eq.s32.totalorder %v5107, 0
    %v5110 = vxor.u32 %v5104, 2147483648
    %v5111 = vsel %vm5109, %v5103, %v5110
    %vm5112 = vcmp.eq.s32.totalorder %v5107, 2
    %v5113 = vxor.u32 %v5103, 2147483648
    %v5114 = vsel %vm5112, %v5113, %v5104
    %v5115 = vsel %vm5108, %v5111, %v5114
    %v5116 = vsel %vm5105, nan, %v5115
    %v5117 = vand.u32 2147483647, %v4158
    %vm5118 = vcmp.le.f32.partialorder %v5117, 0.7853982
    %vm5119 = vcmp.lt.s32.totalorder %v4158, 0
    %v5120 = vand.u32 %v4158, 2139095040
    %v5121 = vshrl.u32 %v5120, 23
    %v5122 = vsub.s32 %v5121, 127
    %v5123 = vand.u32 2147483647, %v4158
    %v5124 = vand.u32 %v5123, 8388607
    %v5125 = vor.u32 %v5124, 8388608
    %v5126 = vsub.s32 0, %v5125
    %v5127 = vadd.s32 %v5122, 1
    %vm5128 = vcmp.gt.s32.totalorder %v5127, 0
    %v5129 = vsel %vm5128, %v5127, 0
    %v5130 = vshrl.u32 %v5129, 5
    %v5131 = vand.u32 %v5129, 31
    %v5132 = vsub.s32 32, %v5131
    %v5133 = vshrl.u32 683565275, %v5132
    %v5134 = vshll.u32 683565275, %v5131
    %v5135 = vshrl.u32 2475754826, %v5132
    %v5136 = vor.u32 %v5134, %v5135
    %v5137 = vshll.u32 2475754826, %v5131
    %v5138 = vshrl.u32 2131351028, %v5132
    %v5139 = vor.u32 %v5137, %v5138
    %v5140 = vshll.u32 2131351028, %v5131
    %v5141 = vshrl.u32 2102212464, %v5132
    %v5142 = vor.u32 %v5140, %v5141
    %v5143 = vshll.u32 2102212464, %v5131
    %v5144 = vshrl.u32 920167782, %v5132
    %v5145 = vor.u32 %v5143, %v5144
    %v5146 = vshll.u32 920167782, %v5131
    %v5147 = vshrl.u32 1326507024, %v5132
    %v5148 = vor.u32 %v5146, %v5147
    %vm5149 = vcmp.lt.s32.totalorder %v5130, 1
    %vm5150 = vcmp.lt.s32.totalorder %v5130, 2
    %vm5151 = vcmp.lt.s32.totalorder %v5130, 3
    %vm5152 = vcmp.lt.s32.totalorder %v5130, 4
    %v5153 = vsel %vm5149, %v5133, %v5136
    %v5154 = vsel %vm5152, %v5142, 2102212464
    %v5155 = vsel %vm5151, %v5139, %v5154
    %v5156 = vsel %vm5150, %v5153, %v5155
    %v5157 = vsel %vm5149, %v5136, %v5139
    %v5158 = vsel %vm5152, %v5145, 920167782
    %v5159 = vsel %vm5151, %v5142, %v5158
    %v5160 = vsel %vm5150, %v5157, %v5159
    %v5161 = vsel %vm5149, %v5139, %v5142
    %v5162 = vsel %vm5152, %v5148, 1326507024
    %v5163 = vsel %vm5151, %v5145, %v5162
    %v5164 = vsel %vm5150, %v5161, %v5163
    %v5165 = vshll.u32 %v5125, 8
    %v5166 = vmul.u32.u64.compose %v5165, %v5164
    %v5167 = vextract.low.u32 %v5166
    %v5168 = vextract.high.u32 %v5166
    %v5169 = vmul.u32.u64.compose %v5165, %v5160
    %v5170 = vextract.low.u32 %v5169
    %v5171 = vextract.high.u32 %v5169
    %v5172 = vmul.u32 %v5165, %v5156
    %v5173 = vadd.s32 %v5168, %v5170
    %vm5174 = vc.u32 %v5168, %v5170
    %v5175 = vadd.s32 %v5171, 1
    %v5176 = vsel %vm5174, %v5175, %v5171
    %v5177 = vadd.s32 %v5172, %v5176
    %v5178 = vadd.s32 %v5177, 536870912
    %v5179 = vshrl.u32 %v5178, 30
    %v5180 = vshll.u32 %v5179, 30
    %v5181 = vsub.s32 %v5177, %v5180
    %vm5182 = vcmp.lt.s32.totalorder %v5181, 0
    %v5183 = vsub.s32 0, %v5181
    %v5184 = vsel %vm5182, %v5183, %v5181
    %v5185 = vclz %v5184
    %v5186 = vsub.s32 %v5185, 2
    %vm5187 = vcmp.gt.s32.totalorder 0, %v5186
    %v5188 = vsel %vm5187, 0, %v5186
    %v5189 = vsub.s32 32, %v5188
    %v5190 = vshll.u32 %v5181, %v5188
    %v5191 = vshrl.u32 %v5173, %v5189
    %v5192 = vor.u32 %v5190, %v5191
    %v5193 = vsub.s32 4294967266, %v5188
    %v5194 = vadd.s32 %v5193, 127
    %v5195 = vshll.u32 %v5194, 23
    %v5196 = vor.u32 4788187, %v5195
    %v5197 = vand.u32 2147483647, %v5196
    %v5199 = vcvt.s32.f32 %v5192
    %v5200 = vmul.f32 %v5199, %v5197
    %v5201 = vxor.u32 %v5200, 2147483648
    %v5202 = vsel %vm5119, %v5201, %v5200
    %v5203 = vsub.s32 4, %v5179
    %v5204 = vsel %vm5119, %v5203, %v5179
    %v5205 = vsel %vm5118, %v4158, %v5202
    %v5206 = vsel %vm5118, 0, %v5204
    %v5207 = vcosq.f32.pop %v5205
    %v5208 = vsinq.f32.pop %v5205
    %vm5209 = vweird.f32 %v4158
    %v5210 = vadd.s32 %v5206, 3
    %v5211 = vand.u32 %v5210, 3
    %vm5212 = vcmp.lt.s32.totalorder %v5211, 2
    %vm5213 = vcmp.eq.s32.totalorder %v5211, 0
    %v5214 = vxor.u32 %v5208, 2147483648
    %v5215 = vsel %vm5213, %v5207, %v5214
    %vm5216 = vcmp.eq.s32.totalorder %v5211, 2
    %v5217 = vxor.u32 %v5207, 2147483648
    %v5218 = vsel %vm5216, %v5217, %v5208
    %v5219 = vsel %vm5212, %v5215, %v5218
    %v5220 = vsel %vm5209, nan, %v5219
    %v5221 = vand.u32 2147483647, %v4159
    %vm5222 = vcmp.le.f32.partialorder %v5221, 0.7853982
    %vm5223 = vcmp.lt.s32.totalorder %v4159, 0
    %v5224 = vand.u32 %v4159, 2139095040
    %v5225 = vshrl.u32 %v5224, 23
    %v5226 = vsub.s32 %v5225, 127
    %v5227 = vand.u32 2147483647, %v4159
    %v5228 = vand.u32 %v5227, 8388607
    %v5229 = vor.u32 %v5228, 8388608
    %v5230 = vsub.s32 0, %v5229
    %v5231 = vadd.s32 %v5226, 1
    %vm5232 = vcmp.gt.s32.totalorder %v5231, 0
    %v5233 = vsel %vm5232, %v5231, 0
    %v5234 = vshrl.u32 %v5233, 5
    %v5235 = vand.u32 %v5233, 31
    %v5236 = vsub.s32 32, %v5235
    %v5237 = vshrl.u32 683565275, %v5236
    %v5238 = vshll.u32 683565275, %v5235
    %v5239 = vshrl.u32 2475754826, %v5236
    %v5240 = vor.u32 %v5238, %v5239
    %v5241 = vshll.u32 2475754826, %v5235
    %v5242 = vshrl.u32 2131351028, %v5236
    %v5243 = vor.u32 %v5241, %v5242
    %v5244 = vshll.u32 2131351028, %v5235
    %v5245 = vshrl.u32 2102212464, %v5236
    %v5246 = vor.u32 %v5244, %v5245
    %v5247 = vshll.u32 2102212464, %v5235
    %v5248 = vshrl.u32 920167782, %v5236
    %v5249 = vor.u32 %v5247, %v5248
    %v5250 = vshll.u32 920167782, %v5235
    %v5251 = vshrl.u32 1326507024, %v5236
    %v5252 = vor.u32 %v5250, %v5251
    %vm5253 = vcmp.lt.s32.totalorder %v5234, 1
    %vm5254 = vcmp.lt.s32.totalorder %v5234, 2
    %vm5255 = vcmp.lt.s32.totalorder %v5234, 3
    %vm5256 = vcmp.lt.s32.totalorder %v5234, 4
    %v5257 = vsel %vm5253, %v5237, %v5240
    %v5258 = vsel %vm5256, %v5246, 2102212464
    %v5259 = vsel %vm5255, %v5243, %v5258
    %v5260 = vsel %vm5254, %v5257, %v5259
    %v5261 = vsel %vm5253, %v5240, %v5243
    %v5262 = vsel %vm5256, %v5249, 920167782
    %v5263 = vsel %vm5255, %v5246, %v5262
    %v5264 = vsel %vm5254, %v5261, %v5263
    %v5265 = vsel %vm5253, %v5243, %v5246
    %v5266 = vsel %vm5256, %v5252, 1326507024
    %v5267 = vsel %vm5255, %v5249, %v5266
    %v5268 = vsel %vm5254, %v5265, %v5267
    %v5269 = vshll.u32 %v5229, 8
    %v5270 = vmul.u32.u64.compose %v5269, %v5268
    %v5271 = vextract.low.u32 %v5270
    %v5272 = vextract.high.u32 %v5270
    %v5273 = vmul.u32.u64.compose %v5269, %v5264
    %v5274 = vextract.low.u32 %v5273
    %v5275 = vextract.high.u32 %v5273
    %v5276 = vmul.u32 %v5269, %v5260
    %v5277 = vadd.s32 %v5272, %v5274
    %vm5278 = vc.u32 %v5272, %v5274
    %v5279 = vadd.s32 %v5275, 1
    %v5280 = vsel %vm5278, %v5279, %v5275
    %v5281 = vadd.s32 %v5276, %v5280
    %v5282 = vadd.s32 %v5281, 536870912
    %v5283 = vshrl.u32 %v5282, 30
    %v5284 = vshll.u32 %v5283, 30
    %v5285 = vsub.s32 %v5281, %v5284
    %vm5286 = vcmp.lt.s32.totalorder %v5285, 0
    %v5287 = vsub.s32 0, %v5285
    %v5288 = vsel %vm5286, %v5287, %v5285
    %v5289 = vclz %v5288
    %v5290 = vsub.s32 %v5289, 2
    %vm5291 = vcmp.gt.s32.totalorder 0, %v5290
    %v5292 = vsel %vm5291, 0, %v5290
    %v5293 = vsub.s32 32, %v5292
    %v5294 = vshll.u32 %v5285, %v5292
    %v5295 = vshrl.u32 %v5277, %v5293
    %v5296 = vor.u32 %v5294, %v5295
    %v5297 = vsub.s32 4294967266, %v5292
    %v5298 = vadd.s32 %v5297, 127
    %v5299 = vshll.u32 %v5298, 23
    %v5300 = vor.u32 4788187, %v5299
    %v5301 = vand.u32 2147483647, %v5300
    %v5303 = vcvt.s32.f32 %v5296
    %v5304 = vmul.f32 %v5303, %v5301
    %v5305 = vxor.u32 %v5304, 2147483648
    %v5306 = vsel %vm5223, %v5305, %v5304
    %v5307 = vsub.s32 4, %v5283
    %v5308 = vsel %vm5223, %v5307, %v5283
    %v5309 = vsel %vm5222, %v4159, %v5306
    %v5310 = vsel %vm5222, 0, %v5308
    %v5311 = vcosq.f32.pop %v5309
    %v5312 = vsinq.f32.pop %v5309
    %vm5313 = vweird.f32 %v4159
    %v5314 = vadd.s32 %v5310, 3
    %v5315 = vand.u32 %v5314, 3
    %vm5316 = vcmp.lt.s32.totalorder %v5315, 2
    %vm5317 = vcmp.eq.s32.totalorder %v5315, 0
    %v5318 = vxor.u32 %v5312, 2147483648
    %v5319 = vsel %vm5317, %v5311, %v5318
    %vm5320 = vcmp.eq.s32.totalorder %v5315, 2
    %v5321 = vxor.u32 %v5311, 2147483648
    %v5322 = vsel %vm5320, %v5321, %v5312
    %v5323 = vsel %vm5316, %v5319, %v5322
    %v5324 = vsel %vm5313, nan, %v5323
    %v5325 = vand.u32 2147483647, %v4160
    %vm5326 = vcmp.le.f32.partialorder %v5325, 0.7853982
    %vm5327 = vcmp.lt.s32.totalorder %v4160, 0
    %v5328 = vand.u32 %v4160, 2139095040
    %v5329 = vshrl.u32 %v5328, 23
    %v5330 = vsub.s32 %v5329, 127
    %v5331 = vand.u32 2147483647, %v4160
    %v5332 = vand.u32 %v5331, 8388607
    %v5333 = vor.u32 %v5332, 8388608
    %v5334 = vsub.s32 0, %v5333
    %v5335 = vadd.s32 %v5330, 1
    %vm5336 = vcmp.gt.s32.totalorder %v5335, 0
    %v5337 = vsel %vm5336, %v5335, 0
    %v5338 = vshrl.u32 %v5337, 5
    %v5339 = vand.u32 %v5337, 31
    %v5340 = vsub.s32 32, %v5339
    %v5341 = vshrl.u32 683565275, %v5340
    %v5342 = vshll.u32 683565275, %v5339
    %v5343 = vshrl.u32 2475754826, %v5340
    %v5344 = vor.u32 %v5342, %v5343
    %v5345 = vshll.u32 2475754826, %v5339
    %v5346 = vshrl.u32 2131351028, %v5340
    %v5347 = vor.u32 %v5345, %v5346
    %v5348 = vshll.u32 2131351028, %v5339
    %v5349 = vshrl.u32 2102212464, %v5340
    %v5350 = vor.u32 %v5348, %v5349
    %v5351 = vshll.u32 2102212464, %v5339
    %v5352 = vshrl.u32 920167782, %v5340
    %v5353 = vor.u32 %v5351, %v5352
    %v5354 = vshll.u32 920167782, %v5339
    %v5355 = vshrl.u32 1326507024, %v5340
    %v5356 = vor.u32 %v5354, %v5355
    %vm5357 = vcmp.lt.s32.totalorder %v5338, 1
    %vm5358 = vcmp.lt.s32.totalorder %v5338, 2
    %vm5359 = vcmp.lt.s32.totalorder %v5338, 3
    %vm5360 = vcmp.lt.s32.totalorder %v5338, 4
    %v5361 = vsel %vm5357, %v5341, %v5344
    %v5362 = vsel %vm5360, %v5350, 2102212464
    %v5363 = vsel %vm5359, %v5347, %v5362
    %v5364 = vsel %vm5358, %v5361, %v5363
    %v5365 = vsel %vm5357, %v5344, %v5347
    %v5366 = vsel %vm5360, %v5353, 920167782
    %v5367 = vsel %vm5359, %v5350, %v5366
    %v5368 = vsel %vm5358, %v5365, %v5367
    %v5369 = vsel %vm5357, %v5347, %v5350
    %v5370 = vsel %vm5360, %v5356, 1326507024
    %v5371 = vsel %vm5359, %v5353, %v5370
    %v5372 = vsel %vm5358, %v5369, %v5371
    %v5373 = vshll.u32 %v5333, 8
    %v5374 = vmul.u32.u64.compose %v5373, %v5372
    %v5375 = vextract.low.u32 %v5374
    %v5376 = vextract.high.u32 %v5374
    %v5377 = vmul.u32.u64.compose %v5373, %v5368
    %v5378 = vextract.low.u32 %v5377
    %v5379 = vextract.high.u32 %v5377
    %v5380 = vmul.u32 %v5373, %v5364
    %v5381 = vadd.s32 %v5376, %v5378
    %vm5382 = vc.u32 %v5376, %v5378
    %v5383 = vadd.s32 %v5379, 1
    %v5384 = vsel %vm5382, %v5383, %v5379
    %v5385 = vadd.s32 %v5380, %v5384
    %v5386 = vadd.s32 %v5385, 536870912
    %v5387 = vshrl.u32 %v5386, 30
    %v5388 = vshll.u32 %v5387, 30
    %v5389 = vsub.s32 %v5385, %v5388
    %vm5390 = vcmp.lt.s32.totalorder %v5389, 0
    %v5391 = vsub.s32 0, %v5389
    %v5392 = vsel %vm5390, %v5391, %v5389
    %v5393 = vclz %v5392
    %v5394 = vsub.s32 %v5393, 2
    %vm5395 = vcmp.gt.s32.totalorder 0, %v5394
    %v5396 = vsel %vm5395, 0, %v5394
    %v5397 = vsub.s32 32, %v5396
    %v5398 = vshll.u32 %v5389, %v5396
    %v5399 = vshrl.u32 %v5381, %v5397
    %v5400 = vor.u32 %v5398, %v5399
    %v5401 = vsub.s32 4294967266, %v5396
    %v5402 = vadd.s32 %v5401, 127
    %v5403 = vshll.u32 %v5402, 23
    %v5404 = vor.u32 4788187, %v5403
    %v5405 = vand.u32 2147483647, %v5404
    %v5407 = vcvt.s32.f32 %v5400
    %v5408 = vmul.f32 %v5407, %v5405
    %v5409 = vxor.u32 %v5408, 2147483648
    %v5410 = vsel %vm5327, %v5409, %v5408
    %v5411 = vsub.s32 4, %v5387
    %v5412 = vsel %vm5327, %v5411, %v5387
    %v5413 = vsel %vm5326, %v4160, %v5410
    %v5414 = vsel %vm5326, 0, %v5412
    %v5415 = vcosq.f32.pop %v5413
    %v5416 = vsinq.f32.pop %v5413
    %vm5417 = vweird.f32 %v4160
    %v5418 = vadd.s32 %v5414, 3
    %v5419 = vand.u32 %v5418, 3
    %vm5420 = vcmp.lt.s32.totalorder %v5419, 2
    %vm5421 = vcmp.eq.s32.totalorder %v5419, 0
    %v5422 = vxor.u32 %v5416, 2147483648
    %v5423 = vsel %vm5421, %v5415, %v5422
    %vm5424 = vcmp.eq.s32.totalorder %v5419, 2
    %v5425 = vxor.u32 %v5415, 2147483648
    %v5426 = vsel %vm5424, %v5425, %v5416
    %v5427 = vsel %vm5420, %v5423, %v5426
    %v5428 = vsel %vm5417, nan, %v5427
    %v5429 = vand.u32 2147483647, %v4161
    %vm5430 = vcmp.le.f32.partialorder %v5429, 0.7853982
    %vm5431 = vcmp.lt.s32.totalorder %v4161, 0
    %v5432 = vand.u32 %v4161, 2139095040
    %v5433 = vshrl.u32 %v5432, 23
    %v5434 = vsub.s32 %v5433, 127
    %v5435 = vand.u32 2147483647, %v4161
    %v5436 = vand.u32 %v5435, 8388607
    %v5437 = vor.u32 %v5436, 8388608
    %v5438 = vsub.s32 0, %v5437
    %v5439 = vadd.s32 %v5434, 1
    %vm5440 = vcmp.gt.s32.totalorder %v5439, 0
    %v5441 = vsel %vm5440, %v5439, 0
    %v5442 = vshrl.u32 %v5441, 5
    %v5443 = vand.u32 %v5441, 31
    %v5444 = vsub.s32 32, %v5443
    %v5445 = vshrl.u32 683565275, %v5444
    %v5446 = vshll.u32 683565275, %v5443
    %v5447 = vshrl.u32 2475754826, %v5444
    %v5448 = vor.u32 %v5446, %v5447
    %v5449 = vshll.u32 2475754826, %v5443
    %v5450 = vshrl.u32 2131351028, %v5444
    %v5451 = vor.u32 %v5449, %v5450
    %v5452 = vshll.u32 2131351028, %v5443
    %v5453 = vshrl.u32 2102212464, %v5444
    %v5454 = vor.u32 %v5452, %v5453
    %v5455 = vshll.u32 2102212464, %v5443
    %v5456 = vshrl.u32 920167782, %v5444
    %v5457 = vor.u32 %v5455, %v5456
    %v5458 = vshll.u32 920167782, %v5443
    %v5459 = vshrl.u32 1326507024, %v5444
    %v5460 = vor.u32 %v5458, %v5459
    %vm5461 = vcmp.lt.s32.totalorder %v5442, 1
    %vm5462 = vcmp.lt.s32.totalorder %v5442, 2
    %vm5463 = vcmp.lt.s32.totalorder %v5442, 3
    %vm5464 = vcmp.lt.s32.totalorder %v5442, 4
    %v5465 = vsel %vm5461, %v5445, %v5448
    %v5466 = vsel %vm5464, %v5454, 2102212464
    %v5467 = vsel %vm5463, %v5451, %v5466
    %v5468 = vsel %vm5462, %v5465, %v5467
    %v5469 = vsel %vm5461, %v5448, %v5451
    %v5470 = vsel %vm5464, %v5457, 920167782
    %v5471 = vsel %vm5463, %v5454, %v5470
    %v5472 = vsel %vm5462, %v5469, %v5471
    %v5473 = vsel %vm5461, %v5451, %v5454
    %v5474 = vsel %vm5464, %v5460, 1326507024
    %v5475 = vsel %vm5463, %v5457, %v5474
    %v5476 = vsel %vm5462, %v5473, %v5475
    %v5477 = vshll.u32 %v5437, 8
    %v5478 = vmul.u32.u64.compose %v5477, %v5476
    %v5479 = vextract.low.u32 %v5478
    %v5480 = vextract.high.u32 %v5478
    %v5481 = vmul.u32.u64.compose %v5477, %v5472
    %v5482 = vextract.low.u32 %v5481
    %v5483 = vextract.high.u32 %v5481
    %v5484 = vmul.u32 %v5477, %v5468
    %v5485 = vadd.s32 %v5480, %v5482
    %vm5486 = vc.u32 %v5480, %v5482
    %v5487 = vadd.s32 %v5483, 1
    %v5488 = vsel %vm5486, %v5487, %v5483
    %v5489 = vadd.s32 %v5484, %v5488
    %v5490 = vadd.s32 %v5489, 536870912
    %v5491 = vshrl.u32 %v5490, 30
    %v5492 = vshll.u32 %v5491, 30
    %v5493 = vsub.s32 %v5489, %v5492
    %vm5494 = vcmp.lt.s32.totalorder %v5493, 0
    %v5495 = vsub.s32 0, %v5493
    %v5496 = vsel %vm5494, %v5495, %v5493
    %v5497 = vclz %v5496
    %v5498 = vsub.s32 %v5497, 2
    %vm5499 = vcmp.gt.s32.totalorder 0, %v5498
    %v5500 = vsel %vm5499, 0, %v5498
    %v5501 = vsub.s32 32, %v5500
    %v5502 = vshll.u32 %v5493, %v5500
    %v5503 = vshrl.u32 %v5485, %v5501
    %v5504 = vor.u32 %v5502, %v5503
    %v5505 = vsub.s32 4294967266, %v5500
    %v5506 = vadd.s32 %v5505, 127
    %v5507 = vshll.u32 %v5506, 23
    %v5508 = vor.u32 4788187, %v5507
    %v5509 = vand.u32 2147483647, %v5508
    %v5511 = vcvt.s32.f32 %v5504
    %v5512 = vmul.f32 %v5511, %v5509
    %v5513 = vxor.u32 %v5512, 2147483648
    %v5514 = vsel %vm5431, %v5513, %v5512
    %v5515 = vsub.s32 4, %v5491
    %v5516 = vsel %vm5431, %v5515, %v5491
    %v5517 = vsel %vm5430, %v4161, %v5514
    %v5518 = vsel %vm5430, 0, %v5516
    %v5519 = vcosq.f32.pop %v5517
    %v5520 = vsinq.f32.pop %v5517
    %vm5521 = vweird.f32 %v4161
    %v5522 = vadd.s32 %v5518, 3
    %v5523 = vand.u32 %v5522, 3
    %vm5524 = vcmp.lt.s32.totalorder %v5523, 2
    %vm5525 = vcmp.eq.s32.totalorder %v5523, 0
    %v5526 = vxor.u32 %v5520, 2147483648
    %v5527 = vsel %vm5525, %v5519, %v5526
    %vm5528 = vcmp.eq.s32.totalorder %v5523, 2
    %v5529 = vxor.u32 %v5519, 2147483648
    %v5530 = vsel %vm5528, %v5529, %v5520
    %v5531 = vsel %vm5524, %v5527, %v5530
    %v5532 = vsel %vm5521, nan, %v5531
    %v5533 = vand.u32 2147483647, %v4162
    %vm5534 = vcmp.le.f32.partialorder %v5533, 0.7853982
    %vm5535 = vcmp.lt.s32.totalorder %v4162, 0
    %v5536 = vand.u32 %v4162, 2139095040
    %v5537 = vshrl.u32 %v5536, 23
    %v5538 = vsub.s32 %v5537, 127
    %v5539 = vand.u32 2147483647, %v4162
    %v5540 = vand.u32 %v5539, 8388607
    %v5541 = vor.u32 %v5540, 8388608
    %v5542 = vsub.s32 0, %v5541
    %v5543 = vadd.s32 %v5538, 1
    %vm5544 = vcmp.gt.s32.totalorder %v5543, 0
    %v5545 = vsel %vm5544, %v5543, 0
    %v5546 = vshrl.u32 %v5545, 5
    %v5547 = vand.u32 %v5545, 31
    %v5548 = vsub.s32 32, %v5547
    %v5549 = vshrl.u32 683565275, %v5548
    %v5550 = vshll.u32 683565275, %v5547
    %v5551 = vshrl.u32 2475754826, %v5548
    %v5552 = vor.u32 %v5550, %v5551
    %v5553 = vshll.u32 2475754826, %v5547
    %v5554 = vshrl.u32 2131351028, %v5548
    %v5555 = vor.u32 %v5553, %v5554
    %v5556 = vshll.u32 2131351028, %v5547
    %v5557 = vshrl.u32 2102212464, %v5548
    %v5558 = vor.u32 %v5556, %v5557
    %v5559 = vshll.u32 2102212464, %v5547
    %v5560 = vshrl.u32 920167782, %v5548
    %v5561 = vor.u32 %v5559, %v5560
    %v5562 = vshll.u32 920167782, %v5547
    %v5563 = vshrl.u32 1326507024, %v5548
    %v5564 = vor.u32 %v5562, %v5563
    %vm5565 = vcmp.lt.s32.totalorder %v5546, 1
    %vm5566 = vcmp.lt.s32.totalorder %v5546, 2
    %vm5567 = vcmp.lt.s32.totalorder %v5546, 3
    %vm5568 = vcmp.lt.s32.totalorder %v5546, 4
    %v5569 = vsel %vm5565, %v5549, %v5552
    %v5570 = vsel %vm5568, %v5558, 2102212464
    %v5571 = vsel %vm5567, %v5555, %v5570
    %v5572 = vsel %vm5566, %v5569, %v5571
    %v5573 = vsel %vm5565, %v5552, %v5555
    %v5574 = vsel %vm5568, %v5561, 920167782
    %v5575 = vsel %vm5567, %v5558, %v5574
    %v5576 = vsel %vm5566, %v5573, %v5575
    %v5577 = vsel %vm5565, %v5555, %v5558
    %v5578 = vsel %vm5568, %v5564, 1326507024
    %v5579 = vsel %vm5567, %v5561, %v5578
    %v5580 = vsel %vm5566, %v5577, %v5579
    %v5581 = vshll.u32 %v5541, 8
    %v5582 = vmul.u32.u64.compose %v5581, %v5580
    %v5583 = vextract.low.u32 %v5582
    %v5584 = vextract.high.u32 %v5582
    %v5585 = vmul.u32.u64.compose %v5581, %v5576
    %v5586 = vextract.low.u32 %v5585
    %v5587 = vextract.high.u32 %v5585
    %v5588 = vmul.u32 %v5581, %v5572
    %v5589 = vadd.s32 %v5584, %v5586
    %vm5590 = vc.u32 %v5584, %v5586
    %v5591 = vadd.s32 %v5587, 1
    %v5592 = vsel %vm5590, %v5591, %v5587
    %v5593 = vadd.s32 %v5588, %v5592
    %v5594 = vadd.s32 %v5593, 536870912
    %v5595 = vshrl.u32 %v5594, 30
    %v5596 = vshll.u32 %v5595, 30
    %v5597 = vsub.s32 %v5593, %v5596
    %vm5598 = vcmp.lt.s32.totalorder %v5597, 0
    %v5599 = vsub.s32 0, %v5597
    %v5600 = vsel %vm5598, %v5599, %v5597
    %v5601 = vclz %v5600
    %v5602 = vsub.s32 %v5601, 2
    %vm5603 = vcmp.gt.s32.totalorder 0, %v5602
    %v5604 = vsel %vm5603, 0, %v5602
    %v5605 = vsub.s32 32, %v5604
    %v5606 = vshll.u32 %v5597, %v5604
    %v5607 = vshrl.u32 %v5589, %v5605
    %v5608 = vor.u32 %v5606, %v5607
    %v5609 = vsub.s32 4294967266, %v5604
    %v5610 = vadd.s32 %v5609, 127
    %v5611 = vshll.u32 %v5610, 23
    %v5612 = vor.u32 4788187, %v5611
    %v5613 = vand.u32 2147483647, %v5612
    %v5615 = vcvt.s32.f32 %v5608
    %v5616 = vmul.f32 %v5615, %v5613
    %v5617 = vxor.u32 %v5616, 2147483648
    %v5618 = vsel %vm5535, %v5617, %v5616
    %v5619 = vsub.s32 4, %v5595
    %v5620 = vsel %vm5535, %v5619, %v5595
    %v5621 = vsel %vm5534, %v4162, %v5618
    %v5622 = vsel %vm5534, 0, %v5620
    %v5623 = vcosq.f32.pop %v5621
    %v5624 = vsinq.f32.pop %v5621
    %vm5625 = vweird.f32 %v4162
    %v5626 = vadd.s32 %v5622, 3
    %v5627 = vand.u32 %v5626, 3
    %vm5628 = vcmp.lt.s32.totalorder %v5627, 2
    %vm5629 = vcmp.eq.s32.totalorder %v5627, 0
    %v5630 = vxor.u32 %v5624, 2147483648
    %v5631 = vsel %vm5629, %v5623, %v5630
    %vm5632 = vcmp.eq.s32.totalorder %v5627, 2
    %v5633 = vxor.u32 %v5623, 2147483648
    %v5634 = vsel %vm5632, %v5633, %v5624
    %v5635 = vsel %vm5628, %v5631, %v5634
    %v5636 = vsel %vm5625, nan, %v5635
    %v5637 = vand.u32 2147483647, %v4163
    %vm5638 = vcmp.le.f32.partialorder %v5637, 0.7853982
    %vm5639 = vcmp.lt.s32.totalorder %v4163, 0
    %v5640 = vand.u32 %v4163, 2139095040
    %v5641 = vshrl.u32 %v5640, 23
    %v5642 = vsub.s32 %v5641, 127
    %v5643 = vand.u32 2147483647, %v4163
    %v5644 = vand.u32 %v5643, 8388607
    %v5645 = vor.u32 %v5644, 8388608
    %v5646 = vsub.s32 0, %v5645
    %v5647 = vadd.s32 %v5642, 1
    %vm5648 = vcmp.gt.s32.totalorder %v5647, 0
    %v5649 = vsel %vm5648, %v5647, 0
    %v5650 = vshrl.u32 %v5649, 5
    %v5651 = vand.u32 %v5649, 31
    %v5652 = vsub.s32 32, %v5651
    %v5653 = vshrl.u32 683565275, %v5652
    %v5654 = vshll.u32 683565275, %v5651
    %v5655 = vshrl.u32 2475754826, %v5652
    %v5656 = vor.u32 %v5654, %v5655
    %v5657 = vshll.u32 2475754826, %v5651
    %v5658 = vshrl.u32 2131351028, %v5652
    %v5659 = vor.u32 %v5657, %v5658
    %v5660 = vshll.u32 2131351028, %v5651
    %v5661 = vshrl.u32 2102212464, %v5652
    %v5662 = vor.u32 %v5660, %v5661
    %v5663 = vshll.u32 2102212464, %v5651
    %v5664 = vshrl.u32 920167782, %v5652
    %v5665 = vor.u32 %v5663, %v5664
    %v5666 = vshll.u32 920167782, %v5651
    %v5667 = vshrl.u32 1326507024, %v5652
    %v5668 = vor.u32 %v5666, %v5667
    %vm5669 = vcmp.lt.s32.totalorder %v5650, 1
    %vm5670 = vcmp.lt.s32.totalorder %v5650, 2
    %vm5671 = vcmp.lt.s32.totalorder %v5650, 3
    %vm5672 = vcmp.lt.s32.totalorder %v5650, 4
    %v5673 = vsel %vm5669, %v5653, %v5656
    %v5674 = vsel %vm5672, %v5662, 2102212464
    %v5675 = vsel %vm5671, %v5659, %v5674
    %v5676 = vsel %vm5670, %v5673, %v5675
    %v5677 = vsel %vm5669, %v5656, %v5659
    %v5678 = vsel %vm5672, %v5665, 920167782
    %v5679 = vsel %vm5671, %v5662, %v5678
    %v5680 = vsel %vm5670, %v5677, %v5679
    %v5681 = vsel %vm5669, %v5659, %v5662
    %v5682 = vsel %vm5672, %v5668, 1326507024
    %v5683 = vsel %vm5671, %v5665, %v5682
    %v5684 = vsel %vm5670, %v5681, %v5683
    %v5685 = vshll.u32 %v5645, 8
    %v5686 = vmul.u32.u64.compose %v5685, %v5684
    %v5687 = vextract.low.u32 %v5686
    %v5688 = vextract.high.u32 %v5686
    %v5689 = vmul.u32.u64.compose %v5685, %v5680
    %v5690 = vextract.low.u32 %v5689
    %v5691 = vextract.high.u32 %v5689
    %v5692 = vmul.u32 %v5685, %v5676
    %v5693 = vadd.s32 %v5688, %v5690
    %vm5694 = vc.u32 %v5688, %v5690
    %v5695 = vadd.s32 %v5691, 1
    %v5696 = vsel %vm5694, %v5695, %v5691
    %v5697 = vadd.s32 %v5692, %v5696
    %v5698 = vadd.s32 %v5697, 536870912
    %v5699 = vshrl.u32 %v5698, 30
    %v5700 = vshll.u32 %v5699, 30
    %v5701 = vsub.s32 %v5697, %v5700
    %vm5702 = vcmp.lt.s32.totalorder %v5701, 0
    %v5703 = vsub.s32 0, %v5701
    %v5704 = vsel %vm5702, %v5703, %v5701
    %v5705 = vclz %v5704
    %v5706 = vsub.s32 %v5705, 2
    %vm5707 = vcmp.gt.s32.totalorder 0, %v5706
    %v5708 = vsel %vm5707, 0, %v5706
    %v5709 = vsub.s32 32, %v5708
    %v5710 = vshll.u32 %v5701, %v5708
    %v5711 = vshrl.u32 %v5693, %v5709
    %v5712 = vor.u32 %v5710, %v5711
    %v5713 = vsub.s32 4294967266, %v5708
    %v5714 = vadd.s32 %v5713, 127
    %v5715 = vshll.u32 %v5714, 23
    %v5716 = vor.u32 4788187, %v5715
    %v5717 = vand.u32 2147483647, %v5716
    %v5719 = vcvt.s32.f32 %v5712
    %v5720 = vmul.f32 %v5719, %v5717
    %v5721 = vxor.u32 %v5720, 2147483648
    %v5722 = vsel %vm5639, %v5721, %v5720
    %v5723 = vsub.s32 4, %v5699
    %v5724 = vsel %vm5639, %v5723, %v5699
    %v5725 = vsel %vm5638, %v4163, %v5722
    %v5726 = vsel %vm5638, 0, %v5724
    %v5727 = vcosq.f32.pop %v5725
    %v5728 = vsinq.f32.pop %v5725
    %vm5729 = vweird.f32 %v4163
    %v5730 = vadd.s32 %v5726, 3
    %v5731 = vand.u32 %v5730, 3
    %vm5732 = vcmp.lt.s32.totalorder %v5731, 2
    %vm5733 = vcmp.eq.s32.totalorder %v5731, 0
    %v5734 = vxor.u32 %v5728, 2147483648
    %v5735 = vsel %vm5733, %v5727, %v5734
    %vm5736 = vcmp.eq.s32.totalorder %v5731, 2
    %v5737 = vxor.u32 %v5727, 2147483648
    %v5738 = vsel %vm5736, %v5737, %v5728
    %v5739 = vsel %vm5732, %v5735, %v5738
    %v5740 = vsel %vm5729, nan, %v5739
    %v5741 = vand.u32 2147483647, %v4164
    %vm5742 = vcmp.le.f32.partialorder %v5741, 0.7853982
    %vm5743 = vcmp.lt.s32.totalorder %v4164, 0
    %v5744 = vand.u32 %v4164, 2139095040
    %v5745 = vshrl.u32 %v5744, 23
    %v5746 = vsub.s32 %v5745, 127
    %v5747 = vand.u32 2147483647, %v4164
    %v5748 = vand.u32 %v5747, 8388607
    %v5749 = vor.u32 %v5748, 8388608
    %v5750 = vsub.s32 0, %v5749
    %v5751 = vadd.s32 %v5746, 1
    %vm5752 = vcmp.gt.s32.totalorder %v5751, 0
    %v5753 = vsel %vm5752, %v5751, 0
    %v5754 = vshrl.u32 %v5753, 5
    %v5755 = vand.u32 %v5753, 31
    %v5756 = vsub.s32 32, %v5755
    %v5757 = vshrl.u32 683565275, %v5756
    %v5758 = vshll.u32 683565275, %v5755
    %v5759 = vshrl.u32 2475754826, %v5756
    %v5760 = vor.u32 %v5758, %v5759
    %v5761 = vshll.u32 2475754826, %v5755
    %v5762 = vshrl.u32 2131351028, %v5756
    %v5763 = vor.u32 %v5761, %v5762
    %v5764 = vshll.u32 2131351028, %v5755
    %v5765 = vshrl.u32 2102212464, %v5756
    %v5766 = vor.u32 %v5764, %v5765
    %v5767 = vshll.u32 2102212464, %v5755
    %v5768 = vshrl.u32 920167782, %v5756
    %v5769 = vor.u32 %v5767, %v5768
    %v5770 = vshll.u32 920167782, %v5755
    %v5771 = vshrl.u32 1326507024, %v5756
    %v5772 = vor.u32 %v5770, %v5771
    %vm5773 = vcmp.lt.s32.totalorder %v5754, 1
    %vm5774 = vcmp.lt.s32.totalorder %v5754, 2
    %vm5775 = vcmp.lt.s32.totalorder %v5754, 3
    %vm5776 = vcmp.lt.s32.totalorder %v5754, 4
    %v5777 = vsel %vm5773, %v5757, %v5760
    %v5778 = vsel %vm5776, %v5766, 2102212464
    %v5779 = vsel %vm5775, %v5763, %v5778
    %v5780 = vsel %vm5774, %v5777, %v5779
    %v5781 = vsel %vm5773, %v5760, %v5763
    %v5782 = vsel %vm5776, %v5769, 920167782
    %v5783 = vsel %vm5775, %v5766, %v5782
    %v5784 = vsel %vm5774, %v5781, %v5783
    %v5785 = vsel %vm5773, %v5763, %v5766
    %v5786 = vsel %vm5776, %v5772, 1326507024
    %v5787 = vsel %vm5775, %v5769, %v5786
    %v5788 = vsel %vm5774, %v5785, %v5787
    %v5789 = vshll.u32 %v5749, 8
    %v5790 = vmul.u32.u64.compose %v5789, %v5788
    %v5791 = vextract.low.u32 %v5790
    %v5792 = vextract.high.u32 %v5790
    %v5793 = vmul.u32.u64.compose %v5789, %v5784
    %v5794 = vextract.low.u32 %v5793
    %v5795 = vextract.high.u32 %v5793
    %v5796 = vmul.u32 %v5789, %v5780
    %v5797 = vadd.s32 %v5792, %v5794
    %vm5798 = vc.u32 %v5792, %v5794
    %v5799 = vadd.s32 %v5795, 1
    %v5800 = vsel %vm5798, %v5799, %v5795
    %v5801 = vadd.s32 %v5796, %v5800
    %v5802 = vadd.s32 %v5801, 536870912
    %v5803 = vshrl.u32 %v5802, 30
    %v5804 = vshll.u32 %v5803, 30
    %v5805 = vsub.s32 %v5801, %v5804
    %vm5806 = vcmp.lt.s32.totalorder %v5805, 0
    %v5807 = vsub.s32 0, %v5805
    %v5808 = vsel %vm5806, %v5807, %v5805
    %v5809 = vclz %v5808
    %v5810 = vsub.s32 %v5809, 2
    %vm5811 = vcmp.gt.s32.totalorder 0, %v5810
    %v5812 = vsel %vm5811, 0, %v5810
    %v5813 = vsub.s32 32, %v5812
    %v5814 = vshll.u32 %v5805, %v5812
    %v5815 = vshrl.u32 %v5797, %v5813
    %v5816 = vor.u32 %v5814, %v5815
    %v5817 = vsub.s32 4294967266, %v5812
    %v5818 = vadd.s32 %v5817, 127
    %v5819 = vshll.u32 %v5818, 23
    %v5820 = vor.u32 4788187, %v5819
    %v5821 = vand.u32 2147483647, %v5820
    %v5823 = vcvt.s32.f32 %v5816
    %v5824 = vmul.f32 %v5823, %v5821
    %v5825 = vxor.u32 %v5824, 2147483648
    %v5826 = vsel %vm5743, %v5825, %v5824
    %v5827 = vsub.s32 4, %v5803
    %v5828 = vsel %vm5743, %v5827, %v5803
    %v5829 = vsel %vm5742, %v4164, %v5826
    %v5830 = vsel %vm5742, 0, %v5828
    %v5831 = vcosq.f32.pop %v5829
    %v5832 = vsinq.f32.pop %v5829
    %vm5833 = vweird.f32 %v4164
    %v5834 = vadd.s32 %v5830, 3
    %v5835 = vand.u32 %v5834, 3
    %vm5836 = vcmp.lt.s32.totalorder %v5835, 2
    %vm5837 = vcmp.eq.s32.totalorder %v5835, 0
    %v5838 = vxor.u32 %v5832, 2147483648
    %v5839 = vsel %vm5837, %v5831, %v5838
    %vm5840 = vcmp.eq.s32.totalorder %v5835, 2
    %v5841 = vxor.u32 %v5831, 2147483648
    %v5842 = vsel %vm5840, %v5841, %v5832
    %v5843 = vsel %vm5836, %v5839, %v5842
    %v5844 = vsel %vm5833, nan, %v5843
    %v5845 = vand.u32 2147483647, %v4165
    %vm5846 = vcmp.le.f32.partialorder %v5845, 0.7853982
    %vm5847 = vcmp.lt.s32.totalorder %v4165, 0
    %v5848 = vand.u32 %v4165, 2139095040
    %v5849 = vshrl.u32 %v5848, 23
    %v5850 = vsub.s32 %v5849, 127
    %v5851 = vand.u32 2147483647, %v4165
    %v5852 = vand.u32 %v5851, 8388607
    %v5853 = vor.u32 %v5852, 8388608
    %v5854 = vsub.s32 0, %v5853
    %v5855 = vadd.s32 %v5850, 1
    %vm5856 = vcmp.gt.s32.totalorder %v5855, 0
    %v5857 = vsel %vm5856, %v5855, 0
    %v5858 = vshrl.u32 %v5857, 5
    %v5859 = vand.u32 %v5857, 31
    %v5860 = vsub.s32 32, %v5859
    %v5861 = vshrl.u32 683565275, %v5860
    %v5862 = vshll.u32 683565275, %v5859
    %v5863 = vshrl.u32 2475754826, %v5860
    %v5864 = vor.u32 %v5862, %v5863
    %v5865 = vshll.u32 2475754826, %v5859
    %v5866 = vshrl.u32 2131351028, %v5860
    %v5867 = vor.u32 %v5865, %v5866
    %v5868 = vshll.u32 2131351028, %v5859
    %v5869 = vshrl.u32 2102212464, %v5860
    %v5870 = vor.u32 %v5868, %v5869
    %v5871 = vshll.u32 2102212464, %v5859
    %v5872 = vshrl.u32 920167782, %v5860
    %v5873 = vor.u32 %v5871, %v5872
    %v5874 = vshll.u32 920167782, %v5859
    %v5875 = vshrl.u32 1326507024, %v5860
    %v5876 = vor.u32 %v5874, %v5875
    %vm5877 = vcmp.lt.s32.totalorder %v5858, 1
    %vm5878 = vcmp.lt.s32.totalorder %v5858, 2
    %vm5879 = vcmp.lt.s32.totalorder %v5858, 3
    %vm5880 = vcmp.lt.s32.totalorder %v5858, 4
    %v5881 = vsel %vm5877, %v5861, %v5864
    %v5882 = vsel %vm5880, %v5870, 2102212464
    %v5883 = vsel %vm5879, %v5867, %v5882
    %v5884 = vsel %vm5878, %v5881, %v5883
    %v5885 = vsel %vm5877, %v5864, %v5867
    %v5886 = vsel %vm5880, %v5873, 920167782
    %v5887 = vsel %vm5879, %v5870, %v5886
    %v5888 = vsel %vm5878, %v5885, %v5887
    %v5889 = vsel %vm5877, %v5867, %v5870
    %v5890 = vsel %vm5880, %v5876, 1326507024
    %v5891 = vsel %vm5879, %v5873, %v5890
    %v5892 = vsel %vm5878, %v5889, %v5891
    %v5893 = vshll.u32 %v5853, 8
    %v5894 = vmul.u32.u64.compose %v5893, %v5892
    %v5895 = vextract.low.u32 %v5894
    %v5896 = vextract.high.u32 %v5894
    %v5897 = vmul.u32.u64.compose %v5893, %v5888
    %v5898 = vextract.low.u32 %v5897
    %v5899 = vextract.high.u32 %v5897
    %v5900 = vmul.u32 %v5893, %v5884
    %v5901 = vadd.s32 %v5896, %v5898
    %vm5902 = vc.u32 %v5896, %v5898
    %v5903 = vadd.s32 %v5899, 1
    %v5904 = vsel %vm5902, %v5903, %v5899
    %v5905 = vadd.s32 %v5900, %v5904
    %v5906 = vadd.s32 %v5905, 536870912
    %v5907 = vshrl.u32 %v5906, 30
    %v5908 = vshll.u32 %v5907, 30
    %v5909 = vsub.s32 %v5905, %v5908
    %vm5910 = vcmp.lt.s32.totalorder %v5909, 0
    %v5911 = vsub.s32 0, %v5909
    %v5912 = vsel %vm5910, %v5911, %v5909
    %v5913 = vclz %v5912
    %v5914 = vsub.s32 %v5913, 2
    %vm5915 = vcmp.gt.s32.totalorder 0, %v5914
    %v5916 = vsel %vm5915, 0, %v5914
    %v5917 = vsub.s32 32, %v5916
    %v5918 = vshll.u32 %v5909, %v5916
    %v5919 = vshrl.u32 %v5901, %v5917
    %v5920 = vor.u32 %v5918, %v5919
    %v5921 = vsub.s32 4294967266, %v5916
    %v5922 = vadd.s32 %v5921, 127
    %v5923 = vshll.u32 %v5922, 23
    %v5924 = vor.u32 4788187, %v5923
    %v5925 = vand.u32 2147483647, %v5924
    %v5927 = vcvt.s32.f32 %v5920
    %v5928 = vmul.f32 %v5927, %v5925
    %v5929 = vxor.u32 %v5928, 2147483648
    %v5930 = vsel %vm5847, %v5929, %v5928
    %v5931 = vsub.s32 4, %v5907
    %v5932 = vsel %vm5847, %v5931, %v5907
    %v5933 = vsel %vm5846, %v4165, %v5930
    %v5934 = vsel %vm5846, 0, %v5932
    %v5935 = vcosq.f32.pop %v5933
    %v5936 = vsinq.f32.pop %v5933
    %vm5937 = vweird.f32 %v4165
    %v5938 = vadd.s32 %v5934, 3
    %v5939 = vand.u32 %v5938, 3
    %vm5940 = vcmp.lt.s32.totalorder %v5939, 2
    %vm5941 = vcmp.eq.s32.totalorder %v5939, 0
    %v5942 = vxor.u32 %v5936, 2147483648
    %v5943 = vsel %vm5941, %v5935, %v5942
    %vm5944 = vcmp.eq.s32.totalorder %v5939, 2
    %v5945 = vxor.u32 %v5935, 2147483648
    %v5946 = vsel %vm5944, %v5945, %v5936
    %v5947 = vsel %vm5940, %v5943, %v5946
    %v5948 = vsel %vm5937, nan, %v5947
    %v5949 = vand.u32 2147483647, %v4166
    %vm5950 = vcmp.le.f32.partialorder %v5949, 0.7853982
    %vm5951 = vcmp.lt.s32.totalorder %v4166, 0
    %v5952 = vand.u32 %v4166, 2139095040
    %v5953 = vshrl.u32 %v5952, 23
    %v5954 = vsub.s32 %v5953, 127
    %v5955 = vand.u32 2147483647, %v4166
    %v5956 = vand.u32 %v5955, 8388607
    %v5957 = vor.u32 %v5956, 8388608
    %v5958 = vsub.s32 0, %v5957
    %v5959 = vadd.s32 %v5954, 1
    %vm5960 = vcmp.gt.s32.totalorder %v5959, 0
    %v5961 = vsel %vm5960, %v5959, 0
    %v5962 = vshrl.u32 %v5961, 5
    %v5963 = vand.u32 %v5961, 31
    %v5964 = vsub.s32 32, %v5963
    %v5965 = vshrl.u32 683565275, %v5964
    %v5966 = vshll.u32 683565275, %v5963
    %v5967 = vshrl.u32 2475754826, %v5964
    %v5968 = vor.u32 %v5966, %v5967
    %v5969 = vshll.u32 2475754826, %v5963
    %v5970 = vshrl.u32 2131351028, %v5964
    %v5971 = vor.u32 %v5969, %v5970
    %v5972 = vshll.u32 2131351028, %v5963
    %v5973 = vshrl.u32 2102212464, %v5964
    %v5974 = vor.u32 %v5972, %v5973
    %v5975 = vshll.u32 2102212464, %v5963
    %v5976 = vshrl.u32 920167782, %v5964
    %v5977 = vor.u32 %v5975, %v5976
    %v5978 = vshll.u32 920167782, %v5963
    %v5979 = vshrl.u32 1326507024, %v5964
    %v5980 = vor.u32 %v5978, %v5979
    %vm5981 = vcmp.lt.s32.totalorder %v5962, 1
    %vm5982 = vcmp.lt.s32.totalorder %v5962, 2
    %vm5983 = vcmp.lt.s32.totalorder %v5962, 3
    %vm5984 = vcmp.lt.s32.totalorder %v5962, 4
    %v5985 = vsel %vm5981, %v5965, %v5968
    %v5986 = vsel %vm5984, %v5974, 2102212464
    %v5987 = vsel %vm5983, %v5971, %v5986
    %v5988 = vsel %vm5982, %v5985, %v5987
    %v5989 = vsel %vm5981, %v5968, %v5971
    %v5990 = vsel %vm5984, %v5977, 920167782
    %v5991 = vsel %vm5983, %v5974, %v5990
    %v5992 = vsel %vm5982, %v5989, %v5991
    %v5993 = vsel %vm5981, %v5971, %v5974
    %v5994 = vsel %vm5984, %v5980, 1326507024
    %v5995 = vsel %vm5983, %v5977, %v5994
    %v5996 = vsel %vm5982, %v5993, %v5995
    %v5997 = vshll.u32 %v5957, 8
    %v5998 = vmul.u32.u64.compose %v5997, %v5996
    %v5999 = vextract.low.u32 %v5998
    %v6000 = vextract.high.u32 %v5998
    %v6001 = vmul.u32.u64.compose %v5997, %v5992
    %v6002 = vextract.low.u32 %v6001
    %v6003 = vextract.high.u32 %v6001
    %v6004 = vmul.u32 %v5997, %v5988
    %v6005 = vadd.s32 %v6000, %v6002
    %vm6006 = vc.u32 %v6000, %v6002
    %v6007 = vadd.s32 %v6003, 1
    %v6008 = vsel %vm6006, %v6007, %v6003
    %v6009 = vadd.s32 %v6004, %v6008
    %v6010 = vadd.s32 %v6009, 536870912
    %v6011 = vshrl.u32 %v6010, 30
    %v6012 = vshll.u32 %v6011, 30
    %v6013 = vsub.s32 %v6009, %v6012
    %vm6014 = vcmp.lt.s32.totalorder %v6013, 0
    %v6015 = vsub.s32 0, %v6013
    %v6016 = vsel %vm6014, %v6015, %v6013
    %v6017 = vclz %v6016
    %v6018 = vsub.s32 %v6017, 2
    %vm6019 = vcmp.gt.s32.totalorder 0, %v6018
    %v6020 = vsel %vm6019, 0, %v6018
    %v6021 = vsub.s32 32, %v6020
    %v6022 = vshll.u32 %v6013, %v6020
    %v6023 = vshrl.u32 %v6005, %v6021
    %v6024 = vor.u32 %v6022, %v6023
    %v6025 = vsub.s32 4294967266, %v6020
    %v6026 = vadd.s32 %v6025, 127
    %v6027 = vshll.u32 %v6026, 23
    %v6028 = vor.u32 4788187, %v6027
    %v6029 = vand.u32 2147483647, %v6028
    %v6031 = vcvt.s32.f32 %v6024
    %v6032 = vmul.f32 %v6031, %v6029
    %v6033 = vxor.u32 %v6032, 2147483648
    %v6034 = vsel %vm5951, %v6033, %v6032
    %v6035 = vsub.s32 4, %v6011
    %v6036 = vsel %vm5951, %v6035, %v6011
    %v6037 = vsel %vm5950, %v4166, %v6034
    %v6038 = vsel %vm5950, 0, %v6036
    %v6039 = vcosq.f32.pop %v6037
    %v6040 = vsinq.f32.pop %v6037
    %vm6041 = vweird.f32 %v4166
    %v6042 = vadd.s32 %v6038, 3
    %v6043 = vand.u32 %v6042, 3
    %vm6044 = vcmp.lt.s32.totalorder %v6043, 2
    %vm6045 = vcmp.eq.s32.totalorder %v6043, 0
    %v6046 = vxor.u32 %v6040, 2147483648
    %v6047 = vsel %vm6045, %v6039, %v6046
    %vm6048 = vcmp.eq.s32.totalorder %v6043, 2
    %v6049 = vxor.u32 %v6039, 2147483648
    %v6050 = vsel %vm6048, %v6049, %v6040
    %v6051 = vsel %vm6044, %v6047, %v6050
    %v6052 = vsel %vm6041, nan, %v6051
    %v6053 = vand.u32 2147483647, %v4167
    %vm6054 = vcmp.le.f32.partialorder %v6053, 0.7853982
    %vm6055 = vcmp.lt.s32.totalorder %v4167, 0
    %v6056 = vand.u32 %v4167, 2139095040
    %v6057 = vshrl.u32 %v6056, 23
    %v6058 = vsub.s32 %v6057, 127
    %v6059 = vand.u32 2147483647, %v4167
    %v6060 = vand.u32 %v6059, 8388607
    %v6061 = vor.u32 %v6060, 8388608
    %v6062 = vsub.s32 0, %v6061
    %v6063 = vadd.s32 %v6058, 1
    %vm6064 = vcmp.gt.s32.totalorder %v6063, 0
    %v6065 = vsel %vm6064, %v6063, 0
    %v6066 = vshrl.u32 %v6065, 5
    %v6067 = vand.u32 %v6065, 31
    %v6068 = vsub.s32 32, %v6067
    %v6069 = vshrl.u32 683565275, %v6068
    %v6070 = vshll.u32 683565275, %v6067
    %v6071 = vshrl.u32 2475754826, %v6068
    %v6072 = vor.u32 %v6070, %v6071
    %v6073 = vshll.u32 2475754826, %v6067
    %v6074 = vshrl.u32 2131351028, %v6068
    %v6075 = vor.u32 %v6073, %v6074
    %v6076 = vshll.u32 2131351028, %v6067
    %v6077 = vshrl.u32 2102212464, %v6068
    %v6078 = vor.u32 %v6076, %v6077
    %v6079 = vshll.u32 2102212464, %v6067
    %v6080 = vshrl.u32 920167782, %v6068
    %v6081 = vor.u32 %v6079, %v6080
    %v6082 = vshll.u32 920167782, %v6067
    %v6083 = vshrl.u32 1326507024, %v6068
    %v6084 = vor.u32 %v6082, %v6083
    %vm6085 = vcmp.lt.s32.totalorder %v6066, 1
    %vm6086 = vcmp.lt.s32.totalorder %v6066, 2
    %vm6087 = vcmp.lt.s32.totalorder %v6066, 3
    %vm6088 = vcmp.lt.s32.totalorder %v6066, 4
    %v6089 = vsel %vm6085, %v6069, %v6072
    %v6090 = vsel %vm6088, %v6078, 2102212464
    %v6091 = vsel %vm6087, %v6075, %v6090
    %v6092 = vsel %vm6086, %v6089, %v6091
    %v6093 = vsel %vm6085, %v6072, %v6075
    %v6094 = vsel %vm6088, %v6081, 920167782
    %v6095 = vsel %vm6087, %v6078, %v6094
    %v6096 = vsel %vm6086, %v6093, %v6095
    %v6097 = vsel %vm6085, %v6075, %v6078
    %v6098 = vsel %vm6088, %v6084, 1326507024
    %v6099 = vsel %vm6087, %v6081, %v6098
    %v6100 = vsel %vm6086, %v6097, %v6099
    %v6101 = vshll.u32 %v6061, 8
    %v6102 = vmul.u32.u64.compose %v6101, %v6100
    %v6103 = vextract.low.u32 %v6102
    %v6104 = vextract.high.u32 %v6102
    %v6105 = vmul.u32.u64.compose %v6101, %v6096
    %v6106 = vextract.low.u32 %v6105
    %v6107 = vextract.high.u32 %v6105
    %v6108 = vmul.u32 %v6101, %v6092
    %v6109 = vadd.s32 %v6104, %v6106
    %vm6110 = vc.u32 %v6104, %v6106
    %v6111 = vadd.s32 %v6107, 1
    %v6112 = vsel %vm6110, %v6111, %v6107
    %v6113 = vadd.s32 %v6108, %v6112
    %v6114 = vadd.s32 %v6113, 536870912
    %v6115 = vshrl.u32 %v6114, 30
    %v6116 = vshll.u32 %v6115, 30
    %v6117 = vsub.s32 %v6113, %v6116
    %vm6118 = vcmp.lt.s32.totalorder %v6117, 0
    %v6119 = vsub.s32 0, %v6117
    %v6120 = vsel %vm6118, %v6119, %v6117
    %v6121 = vclz %v6120
    %v6122 = vsub.s32 %v6121, 2
    %vm6123 = vcmp.gt.s32.totalorder 0, %v6122
    %v6124 = vsel %vm6123, 0, %v6122
    %v6125 = vsub.s32 32, %v6124
    %v6126 = vshll.u32 %v6117, %v6124
    %v6127 = vshrl.u32 %v6109, %v6125
    %v6128 = vor.u32 %v6126, %v6127
    %v6129 = vsub.s32 4294967266, %v6124
    %v6130 = vadd.s32 %v6129, 127
    %v6131 = vshll.u32 %v6130, 23
    %v6132 = vor.u32 4788187, %v6131
    %v6133 = vand.u32 2147483647, %v6132
    %v6135 = vcvt.s32.f32 %v6128
    %v6136 = vmul.f32 %v6135, %v6133
    %v6137 = vxor.u32 %v6136, 2147483648
    %v6138 = vsel %vm6055, %v6137, %v6136
    %v6139 = vsub.s32 4, %v6115
    %v6140 = vsel %vm6055, %v6139, %v6115
    %v6141 = vsel %vm6054, %v4167, %v6138
    %v6142 = vsel %vm6054, 0, %v6140
    %v6143 = vcosq.f32.pop %v6141
    %v6144 = vsinq.f32.pop %v6141
    %vm6145 = vweird.f32 %v4167
    %v6146 = vadd.s32 %v6142, 3
    %v6147 = vand.u32 %v6146, 3
    %vm6148 = vcmp.lt.s32.totalorder %v6147, 2
    %vm6149 = vcmp.eq.s32.totalorder %v6147, 0
    %v6150 = vxor.u32 %v6144, 2147483648
    %v6151 = vsel %vm6149, %v6143, %v6150
    %vm6152 = vcmp.eq.s32.totalorder %v6147, 2
    %v6153 = vxor.u32 %v6143, 2147483648
    %v6154 = vsel %vm6152, %v6153, %v6144
    %v6155 = vsel %vm6148, %v6151, %v6154
    %v6156 = vsel %vm6145, nan, %v6155
    %v6157 = vand.u32 2147483647, %v4168
    %vm6158 = vcmp.le.f32.partialorder %v6157, 0.7853982
    %vm6159 = vcmp.lt.s32.totalorder %v4168, 0
    %v6160 = vand.u32 %v4168, 2139095040
    %v6161 = vshrl.u32 %v6160, 23
    %v6162 = vsub.s32 %v6161, 127
    %v6163 = vand.u32 2147483647, %v4168
    %v6164 = vand.u32 %v6163, 8388607
    %v6165 = vor.u32 %v6164, 8388608
    %v6166 = vsub.s32 0, %v6165
    %v6167 = vadd.s32 %v6162, 1
    %vm6168 = vcmp.gt.s32.totalorder %v6167, 0
    %v6169 = vsel %vm6168, %v6167, 0
    %v6170 = vshrl.u32 %v6169, 5
    %v6171 = vand.u32 %v6169, 31
    %v6172 = vsub.s32 32, %v6171
    %v6173 = vshrl.u32 683565275, %v6172
    %v6174 = vshll.u32 683565275, %v6171
    %v6175 = vshrl.u32 2475754826, %v6172
    %v6176 = vor.u32 %v6174, %v6175
    %v6177 = vshll.u32 2475754826, %v6171
    %v6178 = vshrl.u32 2131351028, %v6172
    %v6179 = vor.u32 %v6177, %v6178
    %v6180 = vshll.u32 2131351028, %v6171
    %v6181 = vshrl.u32 2102212464, %v6172
    %v6182 = vor.u32 %v6180, %v6181
    %v6183 = vshll.u32 2102212464, %v6171
    %v6184 = vshrl.u32 920167782, %v6172
    %v6185 = vor.u32 %v6183, %v6184
    %v6186 = vshll.u32 920167782, %v6171
    %v6187 = vshrl.u32 1326507024, %v6172
    %v6188 = vor.u32 %v6186, %v6187
    %vm6189 = vcmp.lt.s32.totalorder %v6170, 1
    %vm6190 = vcmp.lt.s32.totalorder %v6170, 2
    %vm6191 = vcmp.lt.s32.totalorder %v6170, 3
    %vm6192 = vcmp.lt.s32.totalorder %v6170, 4
    %v6193 = vsel %vm6189, %v6173, %v6176
    %v6194 = vsel %vm6192, %v6182, 2102212464
    %v6195 = vsel %vm6191, %v6179, %v6194
    %v6196 = vsel %vm6190, %v6193, %v6195
    %v6197 = vsel %vm6189, %v6176, %v6179
    %v6198 = vsel %vm6192, %v6185, 920167782
    %v6199 = vsel %vm6191, %v6182, %v6198
    %v6200 = vsel %vm6190, %v6197, %v6199
    %v6201 = vsel %vm6189, %v6179, %v6182
    %v6202 = vsel %vm6192, %v6188, 1326507024
    %v6203 = vsel %vm6191, %v6185, %v6202
    %v6204 = vsel %vm6190, %v6201, %v6203
    %v6205 = vshll.u32 %v6165, 8
    %v6206 = vmul.u32.u64.compose %v6205, %v6204
    %v6207 = vextract.low.u32 %v6206
    %v6208 = vextract.high.u32 %v6206
    %v6209 = vmul.u32.u64.compose %v6205, %v6200
    %v6210 = vextract.low.u32 %v6209
    %v6211 = vextract.high.u32 %v6209
    %v6212 = vmul.u32 %v6205, %v6196
    %v6213 = vadd.s32 %v6208, %v6210
    %vm6214 = vc.u32 %v6208, %v6210
    %v6215 = vadd.s32 %v6211, 1
    %v6216 = vsel %vm6214, %v6215, %v6211
    %v6217 = vadd.s32 %v6212, %v6216
    %v6218 = vadd.s32 %v6217, 536870912
    %v6219 = vshrl.u32 %v6218, 30
    %v6220 = vshll.u32 %v6219, 30
    %v6221 = vsub.s32 %v6217, %v6220
    %vm6222 = vcmp.lt.s32.totalorder %v6221, 0
    %v6223 = vsub.s32 0, %v6221
    %v6224 = vsel %vm6222, %v6223, %v6221
    %v6225 = vclz %v6224
    %v6226 = vsub.s32 %v6225, 2
    %vm6227 = vcmp.gt.s32.totalorder 0, %v6226
    %v6228 = vsel %vm6227, 0, %v6226
    %v6229 = vsub.s32 32, %v6228
    %v6230 = vshll.u32 %v6221, %v6228
    %v6231 = vshrl.u32 %v6213, %v6229
    %v6232 = vor.u32 %v6230, %v6231
    %v6233 = vsub.s32 4294967266, %v6228
    %v6234 = vadd.s32 %v6233, 127
    %v6235 = vshll.u32 %v6234, 23
    %v6236 = vor.u32 4788187, %v6235
    %v6237 = vand.u32 2147483647, %v6236
    %v6239 = vcvt.s32.f32 %v6232
    %v6240 = vmul.f32 %v6239, %v6237
    %v6241 = vxor.u32 %v6240, 2147483648
    %v6242 = vsel %vm6159, %v6241, %v6240
    %v6243 = vsub.s32 4, %v6219
    %v6244 = vsel %vm6159, %v6243, %v6219
    %v6245 = vsel %vm6158, %v4168, %v6242
    %v6246 = vsel %vm6158, 0, %v6244
    %v6247 = vcosq.f32.pop %v6245
    %v6248 = vsinq.f32.pop %v6245
    %vm6249 = vweird.f32 %v4168
    %v6250 = vadd.s32 %v6246, 3
    %v6251 = vand.u32 %v6250, 3
    %vm6252 = vcmp.lt.s32.totalorder %v6251, 2
    %vm6253 = vcmp.eq.s32.totalorder %v6251, 0
    %v6254 = vxor.u32 %v6248, 2147483648
    %v6255 = vsel %vm6253, %v6247, %v6254
    %vm6256 = vcmp.eq.s32.totalorder %v6251, 2
    %v6257 = vxor.u32 %v6247, 2147483648
    %v6258 = vsel %vm6256, %v6257, %v6248
    %v6259 = vsel %vm6252, %v6255, %v6258
    %v6260 = vsel %vm6249, nan, %v6259
    %v6261 = vand.u32 2147483647, %v4169
    %vm6262 = vcmp.le.f32.partialorder %v6261, 0.7853982
    %vm6263 = vcmp.lt.s32.totalorder %v4169, 0
    %v6264 = vand.u32 %v4169, 2139095040
    %v6265 = vshrl.u32 %v6264, 23
    %v6266 = vsub.s32 %v6265, 127
    %v6267 = vand.u32 2147483647, %v4169
    %v6268 = vand.u32 %v6267, 8388607
    %v6269 = vor.u32 %v6268, 8388608
    %v6270 = vsub.s32 0, %v6269
    %v6271 = vadd.s32 %v6266, 1
    %vm6272 = vcmp.gt.s32.totalorder %v6271, 0
    %v6273 = vsel %vm6272, %v6271, 0
    %v6274 = vshrl.u32 %v6273, 5
    %v6275 = vand.u32 %v6273, 31
    %v6276 = vsub.s32 32, %v6275
    %v6277 = vshrl.u32 683565275, %v6276
    %v6278 = vshll.u32 683565275, %v6275
    %v6279 = vshrl.u32 2475754826, %v6276
    %v6280 = vor.u32 %v6278, %v6279
    %v6281 = vshll.u32 2475754826, %v6275
    %v6282 = vshrl.u32 2131351028, %v6276
    %v6283 = vor.u32 %v6281, %v6282
    %v6284 = vshll.u32 2131351028, %v6275
    %v6285 = vshrl.u32 2102212464, %v6276
    %v6286 = vor.u32 %v6284, %v6285
    %v6287 = vshll.u32 2102212464, %v6275
    %v6288 = vshrl.u32 920167782, %v6276
    %v6289 = vor.u32 %v6287, %v6288
    %v6290 = vshll.u32 920167782, %v6275
    %v6291 = vshrl.u32 1326507024, %v6276
    %v6292 = vor.u32 %v6290, %v6291
    %vm6293 = vcmp.lt.s32.totalorder %v6274, 1
    %vm6294 = vcmp.lt.s32.totalorder %v6274, 2
    %vm6295 = vcmp.lt.s32.totalorder %v6274, 3
    %vm6296 = vcmp.lt.s32.totalorder %v6274, 4
    %v6297 = vsel %vm6293, %v6277, %v6280
    %v6298 = vsel %vm6296, %v6286, 2102212464
    %v6299 = vsel %vm6295, %v6283, %v6298
    %v6300 = vsel %vm6294, %v6297, %v6299
    %v6301 = vsel %vm6293, %v6280, %v6283
    %v6302 = vsel %vm6296, %v6289, 920167782
    %v6303 = vsel %vm6295, %v6286, %v6302
    %v6304 = vsel %vm6294, %v6301, %v6303
    %v6305 = vsel %vm6293, %v6283, %v6286
    %v6306 = vsel %vm6296, %v6292, 1326507024
    %v6307 = vsel %vm6295, %v6289, %v6306
    %v6308 = vsel %vm6294, %v6305, %v6307
    %v6309 = vshll.u32 %v6269, 8
    %v6310 = vmul.u32.u64.compose %v6309, %v6308
    %v6311 = vextract.low.u32 %v6310
    %v6312 = vextract.high.u32 %v6310
    %v6313 = vmul.u32.u64.compose %v6309, %v6304
    %v6314 = vextract.low.u32 %v6313
    %v6315 = vextract.high.u32 %v6313
    %v6316 = vmul.u32 %v6309, %v6300
    %v6317 = vadd.s32 %v6312, %v6314
    %vm6318 = vc.u32 %v6312, %v6314
    %v6319 = vadd.s32 %v6315, 1
    %v6320 = vsel %vm6318, %v6319, %v6315
    %v6321 = vadd.s32 %v6316, %v6320
    %v6322 = vadd.s32 %v6321, 536870912
    %v6323 = vshrl.u32 %v6322, 30
    %v6324 = vshll.u32 %v6323, 30
    %v6325 = vsub.s32 %v6321, %v6324
    %vm6326 = vcmp.lt.s32.totalorder %v6325, 0
    %v6327 = vsub.s32 0, %v6325
    %v6328 = vsel %vm6326, %v6327, %v6325
    %v6329 = vclz %v6328
    %v6330 = vsub.s32 %v6329, 2
    %vm6331 = vcmp.gt.s32.totalorder 0, %v6330
    %v6332 = vsel %vm6331, 0, %v6330
    %v6333 = vsub.s32 32, %v6332
    %v6334 = vshll.u32 %v6325, %v6332
    %v6335 = vshrl.u32 %v6317, %v6333
    %v6336 = vor.u32 %v6334, %v6335
    %v6337 = vsub.s32 4294967266, %v6332
    %v6338 = vadd.s32 %v6337, 127
    %v6339 = vshll.u32 %v6338, 23
    %v6340 = vor.u32 4788187, %v6339
    %v6341 = vand.u32 2147483647, %v6340
    %v6343 = vcvt.s32.f32 %v6336
    %v6344 = vmul.f32 %v6343, %v6341
    %v6345 = vxor.u32 %v6344, 2147483648
    %v6346 = vsel %vm6263, %v6345, %v6344
    %v6347 = vsub.s32 4, %v6323
    %v6348 = vsel %vm6263, %v6347, %v6323
    %v6349 = vsel %vm6262, %v4169, %v6346
    %v6350 = vsel %vm6262, 0, %v6348
    %v6351 = vcosq.f32.pop %v6349
    %v6352 = vsinq.f32.pop %v6349
    %vm6353 = vweird.f32 %v4169
    %v6354 = vadd.s32 %v6350, 3
    %v6355 = vand.u32 %v6354, 3
    %vm6356 = vcmp.lt.s32.totalorder %v6355, 2
    %vm6357 = vcmp.eq.s32.totalorder %v6355, 0
    %v6358 = vxor.u32 %v6352, 2147483648
    %v6359 = vsel %vm6357, %v6351, %v6358
    %vm6360 = vcmp.eq.s32.totalorder %v6355, 2
    %v6361 = vxor.u32 %v6351, 2147483648
    %v6362 = vsel %vm6360, %v6361, %v6352
    %v6363 = vsel %vm6356, %v6359, %v6362
    %v6364 = vsel %vm6353, nan, %v6363
    %v6365 = vand.u32 2147483647, %v4170
    %vm6366 = vcmp.le.f32.partialorder %v6365, 0.7853982
    %vm6367 = vcmp.lt.s32.totalorder %v4170, 0
    %v6368 = vand.u32 %v4170, 2139095040
    %v6369 = vshrl.u32 %v6368, 23
    %v6370 = vsub.s32 %v6369, 127
    %v6371 = vand.u32 2147483647, %v4170
    %v6372 = vand.u32 %v6371, 8388607
    %v6373 = vor.u32 %v6372, 8388608
    %v6374 = vsub.s32 0, %v6373
    %v6375 = vadd.s32 %v6370, 1
    %vm6376 = vcmp.gt.s32.totalorder %v6375, 0
    %v6377 = vsel %vm6376, %v6375, 0
    %v6378 = vshrl.u32 %v6377, 5
    %v6379 = vand.u32 %v6377, 31
    %v6380 = vsub.s32 32, %v6379
    %v6381 = vshrl.u32 683565275, %v6380
    %v6382 = vshll.u32 683565275, %v6379
    %v6383 = vshrl.u32 2475754826, %v6380
    %v6384 = vor.u32 %v6382, %v6383
    %v6385 = vshll.u32 2475754826, %v6379
    %v6386 = vshrl.u32 2131351028, %v6380
    %v6387 = vor.u32 %v6385, %v6386
    %v6388 = vshll.u32 2131351028, %v6379
    %v6389 = vshrl.u32 2102212464, %v6380
    %v6390 = vor.u32 %v6388, %v6389
    %v6391 = vshll.u32 2102212464, %v6379
    %v6392 = vshrl.u32 920167782, %v6380
    %v6393 = vor.u32 %v6391, %v6392
    %v6394 = vshll.u32 920167782, %v6379
    %v6395 = vshrl.u32 1326507024, %v6380
    %v6396 = vor.u32 %v6394, %v6395
    %vm6397 = vcmp.lt.s32.totalorder %v6378, 1
    %vm6398 = vcmp.lt.s32.totalorder %v6378, 2
    %vm6399 = vcmp.lt.s32.totalorder %v6378, 3
    %vm6400 = vcmp.lt.s32.totalorder %v6378, 4
    %v6401 = vsel %vm6397, %v6381, %v6384
    %v6402 = vsel %vm6400, %v6390, 2102212464
    %v6403 = vsel %vm6399, %v6387, %v6402
    %v6404 = vsel %vm6398, %v6401, %v6403
    %v6405 = vsel %vm6397, %v6384, %v6387
    %v6406 = vsel %vm6400, %v6393, 920167782
    %v6407 = vsel %vm6399, %v6390, %v6406
    %v6408 = vsel %vm6398, %v6405, %v6407
    %v6409 = vsel %vm6397, %v6387, %v6390
    %v6410 = vsel %vm6400, %v6396, 1326507024
    %v6411 = vsel %vm6399, %v6393, %v6410
    %v6412 = vsel %vm6398, %v6409, %v6411
    %v6413 = vshll.u32 %v6373, 8
    %v6414 = vmul.u32.u64.compose %v6413, %v6412
    %v6415 = vextract.low.u32 %v6414
    %v6416 = vextract.high.u32 %v6414
    %v6417 = vmul.u32.u64.compose %v6413, %v6408
    %v6418 = vextract.low.u32 %v6417
    %v6419 = vextract.high.u32 %v6417
    %v6420 = vmul.u32 %v6413, %v6404
    %v6421 = vadd.s32 %v6416, %v6418
    %vm6422 = vc.u32 %v6416, %v6418
    %v6423 = vadd.s32 %v6419, 1
    %v6424 = vsel %vm6422, %v6423, %v6419
    %v6425 = vadd.s32 %v6420, %v6424
    %v6426 = vadd.s32 %v6425, 536870912
    %v6427 = vshrl.u32 %v6426, 30
    %v6428 = vshll.u32 %v6427, 30
    %v6429 = vsub.s32 %v6425, %v6428
    %vm6430 = vcmp.lt.s32.totalorder %v6429, 0
    %v6431 = vsub.s32 0, %v6429
    %v6432 = vsel %vm6430, %v6431, %v6429
    %v6433 = vclz %v6432
    %v6434 = vsub.s32 %v6433, 2
    %vm6435 = vcmp.gt.s32.totalorder 0, %v6434
    %v6436 = vsel %vm6435, 0, %v6434
    %v6437 = vsub.s32 32, %v6436
    %v6438 = vshll.u32 %v6429, %v6436
    %v6439 = vshrl.u32 %v6421, %v6437
    %v6440 = vor.u32 %v6438, %v6439
    %v6441 = vsub.s32 4294967266, %v6436
    %v6442 = vadd.s32 %v6441, 127
    %v6443 = vshll.u32 %v6442, 23
    %v6444 = vor.u32 4788187, %v6443
    %v6445 = vand.u32 2147483647, %v6444
    %v6447 = vcvt.s32.f32 %v6440
    %v6448 = vmul.f32 %v6447, %v6445
    %v6449 = vxor.u32 %v6448, 2147483648
    %v6450 = vsel %vm6367, %v6449, %v6448
    %v6451 = vsub.s32 4, %v6427
    %v6452 = vsel %vm6367, %v6451, %v6427
    %v6453 = vsel %vm6366, %v4170, %v6450
    %v6454 = vsel %vm6366, 0, %v6452
    %v6455 = vcosq.f32.pop %v6453
    %v6456 = vsinq.f32.pop %v6453
    %vm6457 = vweird.f32 %v4170
    %v6458 = vadd.s32 %v6454, 3
    %v6459 = vand.u32 %v6458, 3
    %vm6460 = vcmp.lt.s32.totalorder %v6459, 2
    %vm6461 = vcmp.eq.s32.totalorder %v6459, 0
    %v6462 = vxor.u32 %v6456, 2147483648
    %v6463 = vsel %vm6461, %v6455, %v6462
    %vm6464 = vcmp.eq.s32.totalorder %v6459, 2
    %v6465 = vxor.u32 %v6455, 2147483648
    %v6466 = vsel %vm6464, %v6465, %v6456
    %v6467 = vsel %vm6460, %v6463, %v6466
    %v6468 = vsel %vm6457, nan, %v6467
    %v6469 = vand.u32 2147483647, %v4171
    %vm6470 = vcmp.le.f32.partialorder %v6469, 0.7853982
    %vm6471 = vcmp.lt.s32.totalorder %v4171, 0
    %v6472 = vand.u32 %v4171, 2139095040
    %v6473 = vshrl.u32 %v6472, 23
    %v6474 = vsub.s32 %v6473, 127
    %v6475 = vand.u32 2147483647, %v4171
    %v6476 = vand.u32 %v6475, 8388607
    %v6477 = vor.u32 %v6476, 8388608
    %v6478 = vsub.s32 0, %v6477
    %v6479 = vadd.s32 %v6474, 1
    %vm6480 = vcmp.gt.s32.totalorder %v6479, 0
    %v6481 = vsel %vm6480, %v6479, 0
    %v6482 = vshrl.u32 %v6481, 5
    %v6483 = vand.u32 %v6481, 31
    %v6484 = vsub.s32 32, %v6483
    %v6485 = vshrl.u32 683565275, %v6484
    %v6486 = vshll.u32 683565275, %v6483
    %v6487 = vshrl.u32 2475754826, %v6484
    %v6488 = vor.u32 %v6486, %v6487
    %v6489 = vshll.u32 2475754826, %v6483
    %v6490 = vshrl.u32 2131351028, %v6484
    %v6491 = vor.u32 %v6489, %v6490
    %v6492 = vshll.u32 2131351028, %v6483
    %v6493 = vshrl.u32 2102212464, %v6484
    %v6494 = vor.u32 %v6492, %v6493
    %v6495 = vshll.u32 2102212464, %v6483
    %v6496 = vshrl.u32 920167782, %v6484
    %v6497 = vor.u32 %v6495, %v6496
    %v6498 = vshll.u32 920167782, %v6483
    %v6499 = vshrl.u32 1326507024, %v6484
    %v6500 = vor.u32 %v6498, %v6499
    %vm6501 = vcmp.lt.s32.totalorder %v6482, 1
    %vm6502 = vcmp.lt.s32.totalorder %v6482, 2
    %vm6503 = vcmp.lt.s32.totalorder %v6482, 3
    %vm6504 = vcmp.lt.s32.totalorder %v6482, 4
    %v6505 = vsel %vm6501, %v6485, %v6488
    %v6506 = vsel %vm6504, %v6494, 2102212464
    %v6507 = vsel %vm6503, %v6491, %v6506
    %v6508 = vsel %vm6502, %v6505, %v6507
    %v6509 = vsel %vm6501, %v6488, %v6491
    %v6510 = vsel %vm6504, %v6497, 920167782
    %v6511 = vsel %vm6503, %v6494, %v6510
    %v6512 = vsel %vm6502, %v6509, %v6511
    %v6513 = vsel %vm6501, %v6491, %v6494
    %v6514 = vsel %vm6504, %v6500, 1326507024
    %v6515 = vsel %vm6503, %v6497, %v6514
    %v6516 = vsel %vm6502, %v6513, %v6515
    %v6517 = vshll.u32 %v6477, 8
    %v6518 = vmul.u32.u64.compose %v6517, %v6516
    %v6519 = vextract.low.u32 %v6518
    %v6520 = vextract.high.u32 %v6518
    %v6521 = vmul.u32.u64.compose %v6517, %v6512
    %v6522 = vextract.low.u32 %v6521
    %v6523 = vextract.high.u32 %v6521
    %v6524 = vmul.u32 %v6517, %v6508
    %v6525 = vadd.s32 %v6520, %v6522
    %vm6526 = vc.u32 %v6520, %v6522
    %v6527 = vadd.s32 %v6523, 1
    %v6528 = vsel %vm6526, %v6527, %v6523
    %v6529 = vadd.s32 %v6524, %v6528
    %v6530 = vadd.s32 %v6529, 536870912
    %v6531 = vshrl.u32 %v6530, 30
    %v6532 = vshll.u32 %v6531, 30
    %v6533 = vsub.s32 %v6529, %v6532
    %vm6534 = vcmp.lt.s32.totalorder %v6533, 0
    %v6535 = vsub.s32 0, %v6533
    %v6536 = vsel %vm6534, %v6535, %v6533
    %v6537 = vclz %v6536
    %v6538 = vsub.s32 %v6537, 2
    %vm6539 = vcmp.gt.s32.totalorder 0, %v6538
    %v6540 = vsel %vm6539, 0, %v6538
    %v6541 = vsub.s32 32, %v6540
    %v6542 = vshll.u32 %v6533, %v6540
    %v6543 = vshrl.u32 %v6525, %v6541
    %v6544 = vor.u32 %v6542, %v6543
    %v6545 = vsub.s32 4294967266, %v6540
    %v6546 = vadd.s32 %v6545, 127
    %v6547 = vshll.u32 %v6546, 23
    %v6548 = vor.u32 4788187, %v6547
    %v6549 = vand.u32 2147483647, %v6548
    %v6551 = vcvt.s32.f32 %v6544
    %v6552 = vmul.f32 %v6551, %v6549
    %v6553 = vxor.u32 %v6552, 2147483648
    %v6554 = vsel %vm6471, %v6553, %v6552
    %v6555 = vsub.s32 4, %v6531
    %v6556 = vsel %vm6471, %v6555, %v6531
    %v6557 = vsel %vm6470, %v4171, %v6554
    %v6558 = vsel %vm6470, 0, %v6556
    %v6559 = vcosq.f32.pop %v6557
    %v6560 = vsinq.f32.pop %v6557
    %vm6561 = vweird.f32 %v4171
    %v6562 = vadd.s32 %v6558, 3
    %v6563 = vand.u32 %v6562, 3
    %vm6564 = vcmp.lt.s32.totalorder %v6563, 2
    %vm6565 = vcmp.eq.s32.totalorder %v6563, 0
    %v6566 = vxor.u32 %v6560, 2147483648
    %v6567 = vsel %vm6565, %v6559, %v6566
    %vm6568 = vcmp.eq.s32.totalorder %v6563, 2
    %v6569 = vxor.u32 %v6559, 2147483648
    %v6570 = vsel %vm6568, %v6569, %v6560
    %v6571 = vsel %vm6564, %v6567, %v6570
    %v6572 = vsel %vm6561, nan, %v6571
    %v6573 = vand.u32 2147483647, %v4172
    %vm6574 = vcmp.le.f32.partialorder %v6573, 0.7853982
    %vm6575 = vcmp.lt.s32.totalorder %v4172, 0
    %v6576 = vand.u32 %v4172, 2139095040
    %v6577 = vshrl.u32 %v6576, 23
    %v6578 = vsub.s32 %v6577, 127
    %v6579 = vand.u32 2147483647, %v4172
    %v6580 = vand.u32 %v6579, 8388607
    %v6581 = vor.u32 %v6580, 8388608
    %v6582 = vsub.s32 0, %v6581
    %v6583 = vadd.s32 %v6578, 1
    %vm6584 = vcmp.gt.s32.totalorder %v6583, 0
    %v6585 = vsel %vm6584, %v6583, 0
    %v6586 = vshrl.u32 %v6585, 5
    %v6587 = vand.u32 %v6585, 31
    %v6588 = vsub.s32 32, %v6587
    %v6589 = vshrl.u32 683565275, %v6588
    %v6590 = vshll.u32 683565275, %v6587
    %v6591 = vshrl.u32 2475754826, %v6588
    %v6592 = vor.u32 %v6590, %v6591
    %v6593 = vshll.u32 2475754826, %v6587
    %v6594 = vshrl.u32 2131351028, %v6588
    %v6595 = vor.u32 %v6593, %v6594
    %v6596 = vshll.u32 2131351028, %v6587
    %v6597 = vshrl.u32 2102212464, %v6588
    %v6598 = vor.u32 %v6596, %v6597
    %v6599 = vshll.u32 2102212464, %v6587
    %v6600 = vshrl.u32 920167782, %v6588
    %v6601 = vor.u32 %v6599, %v6600
    %v6602 = vshll.u32 920167782, %v6587
    %v6603 = vshrl.u32 1326507024, %v6588
    %v6604 = vor.u32 %v6602, %v6603
    %vm6605 = vcmp.lt.s32.totalorder %v6586, 1
    %vm6606 = vcmp.lt.s32.totalorder %v6586, 2
    %vm6607 = vcmp.lt.s32.totalorder %v6586, 3
    %vm6608 = vcmp.lt.s32.totalorder %v6586, 4
    %v6609 = vsel %vm6605, %v6589, %v6592
    %v6610 = vsel %vm6608, %v6598, 2102212464
    %v6611 = vsel %vm6607, %v6595, %v6610
    %v6612 = vsel %vm6606, %v6609, %v6611
    %v6613 = vsel %vm6605, %v6592, %v6595
    %v6614 = vsel %vm6608, %v6601, 920167782
    %v6615 = vsel %vm6607, %v6598, %v6614
    %v6616 = vsel %vm6606, %v6613, %v6615
    %v6617 = vsel %vm6605, %v6595, %v6598
    %v6618 = vsel %vm6608, %v6604, 1326507024
    %v6619 = vsel %vm6607, %v6601, %v6618
    %v6620 = vsel %vm6606, %v6617, %v6619
    %v6621 = vshll.u32 %v6581, 8
    %v6622 = vmul.u32.u64.compose %v6621, %v6620
    %v6623 = vextract.low.u32 %v6622
    %v6624 = vextract.high.u32 %v6622
    %v6625 = vmul.u32.u64.compose %v6621, %v6616
    %v6626 = vextract.low.u32 %v6625
    %v6627 = vextract.high.u32 %v6625
    %v6628 = vmul.u32 %v6621, %v6612
    %v6629 = vadd.s32 %v6624, %v6626
    %vm6630 = vc.u32 %v6624, %v6626
    %v6631 = vadd.s32 %v6627, 1
    %v6632 = vsel %vm6630, %v6631, %v6627
    %v6633 = vadd.s32 %v6628, %v6632
    %v6634 = vadd.s32 %v6633, 536870912
    %v6635 = vshrl.u32 %v6634, 30
    %v6636 = vshll.u32 %v6635, 30
    %v6637 = vsub.s32 %v6633, %v6636
    %vm6638 = vcmp.lt.s32.totalorder %v6637, 0
    %v6639 = vsub.s32 0, %v6637
    %v6640 = vsel %vm6638, %v6639, %v6637
    %v6641 = vclz %v6640
    %v6642 = vsub.s32 %v6641, 2
    %vm6643 = vcmp.gt.s32.totalorder 0, %v6642
    %v6644 = vsel %vm6643, 0, %v6642
    %v6645 = vsub.s32 32, %v6644
    %v6646 = vshll.u32 %v6637, %v6644
    %v6647 = vshrl.u32 %v6629, %v6645
    %v6648 = vor.u32 %v6646, %v6647
    %v6649 = vsub.s32 4294967266, %v6644
    %v6650 = vadd.s32 %v6649, 127
    %v6651 = vshll.u32 %v6650, 23
    %v6652 = vor.u32 4788187, %v6651
    %v6653 = vand.u32 2147483647, %v6652
    %v6655 = vcvt.s32.f32 %v6648
    %v6656 = vmul.f32 %v6655, %v6653
    %v6657 = vxor.u32 %v6656, 2147483648
    %v6658 = vsel %vm6575, %v6657, %v6656
    %v6659 = vsub.s32 4, %v6635
    %v6660 = vsel %vm6575, %v6659, %v6635
    %v6661 = vsel %vm6574, %v4172, %v6658
    %v6662 = vsel %vm6574, 0, %v6660
    %v6663 = vcosq.f32.pop %v6661
    %v6664 = vsinq.f32.pop %v6661
    %vm6665 = vweird.f32 %v4172
    %v6666 = vadd.s32 %v6662, 3
    %v6667 = vand.u32 %v6666, 3
    %vm6668 = vcmp.lt.s32.totalorder %v6667, 2
    %vm6669 = vcmp.eq.s32.totalorder %v6667, 0
    %v6670 = vxor.u32 %v6664, 2147483648
    %v6671 = vsel %vm6669, %v6663, %v6670
    %vm6672 = vcmp.eq.s32.totalorder %v6667, 2
    %v6673 = vxor.u32 %v6663, 2147483648
    %v6674 = vsel %vm6672, %v6673, %v6664
    %v6675 = vsel %vm6668, %v6671, %v6674
    %v6676 = vsel %vm6665, nan, %v6675
    %v6677 = vand.u32 2147483647, %v4173
    %vm6678 = vcmp.le.f32.partialorder %v6677, 0.7853982
    %vm6679 = vcmp.lt.s32.totalorder %v4173, 0
    %v6680 = vand.u32 %v4173, 2139095040
    %v6681 = vshrl.u32 %v6680, 23
    %v6682 = vsub.s32 %v6681, 127
    %v6683 = vand.u32 2147483647, %v4173
    %v6684 = vand.u32 %v6683, 8388607
    %v6685 = vor.u32 %v6684, 8388608
    %v6686 = vsub.s32 0, %v6685
    %v6687 = vadd.s32 %v6682, 1
    %vm6688 = vcmp.gt.s32.totalorder %v6687, 0
    %v6689 = vsel %vm6688, %v6687, 0
    %v6690 = vshrl.u32 %v6689, 5
    %v6691 = vand.u32 %v6689, 31
    %v6692 = vsub.s32 32, %v6691
    %v6693 = vshrl.u32 683565275, %v6692
    %v6694 = vshll.u32 683565275, %v6691
    %v6695 = vshrl.u32 2475754826, %v6692
    %v6696 = vor.u32 %v6694, %v6695
    %v6697 = vshll.u32 2475754826, %v6691
    %v6698 = vshrl.u32 2131351028, %v6692
    %v6699 = vor.u32 %v6697, %v6698
    %v6700 = vshll.u32 2131351028, %v6691
    %v6701 = vshrl.u32 2102212464, %v6692
    %v6702 = vor.u32 %v6700, %v6701
    %v6703 = vshll.u32 2102212464, %v6691
    %v6704 = vshrl.u32 920167782, %v6692
    %v6705 = vor.u32 %v6703, %v6704
    %v6706 = vshll.u32 920167782, %v6691
    %v6707 = vshrl.u32 1326507024, %v6692
    %v6708 = vor.u32 %v6706, %v6707
    %vm6709 = vcmp.lt.s32.totalorder %v6690, 1
    %vm6710 = vcmp.lt.s32.totalorder %v6690, 2
    %vm6711 = vcmp.lt.s32.totalorder %v6690, 3
    %vm6712 = vcmp.lt.s32.totalorder %v6690, 4
    %v6713 = vsel %vm6709, %v6693, %v6696
    %v6714 = vsel %vm6712, %v6702, 2102212464
    %v6715 = vsel %vm6711, %v6699, %v6714
    %v6716 = vsel %vm6710, %v6713, %v6715
    %v6717 = vsel %vm6709, %v6696, %v6699
    %v6718 = vsel %vm6712, %v6705, 920167782
    %v6719 = vsel %vm6711, %v6702, %v6718
    %v6720 = vsel %vm6710, %v6717, %v6719
    %v6721 = vsel %vm6709, %v6699, %v6702
    %v6722 = vsel %vm6712, %v6708, 1326507024
    %v6723 = vsel %vm6711, %v6705, %v6722
    %v6724 = vsel %vm6710, %v6721, %v6723
    %v6725 = vshll.u32 %v6685, 8
    %v6726 = vmul.u32.u64.compose %v6725, %v6724
    %v6727 = vextract.low.u32 %v6726
    %v6728 = vextract.high.u32 %v6726
    %v6729 = vmul.u32.u64.compose %v6725, %v6720
    %v6730 = vextract.low.u32 %v6729
    %v6731 = vextract.high.u32 %v6729
    %v6732 = vmul.u32 %v6725, %v6716
    %v6733 = vadd.s32 %v6728, %v6730
    %vm6734 = vc.u32 %v6728, %v6730
    %v6735 = vadd.s32 %v6731, 1
    %v6736 = vsel %vm6734, %v6735, %v6731
    %v6737 = vadd.s32 %v6732, %v6736
    %v6738 = vadd.s32 %v6737, 536870912
    %v6739 = vshrl.u32 %v6738, 30
    %v6740 = vshll.u32 %v6739, 30
    %v6741 = vsub.s32 %v6737, %v6740
    %vm6742 = vcmp.lt.s32.totalorder %v6741, 0
    %v6743 = vsub.s32 0, %v6741
    %v6744 = vsel %vm6742, %v6743, %v6741
    %v6745 = vclz %v6744
    %v6746 = vsub.s32 %v6745, 2
    %vm6747 = vcmp.gt.s32.totalorder 0, %v6746
    %v6748 = vsel %vm6747, 0, %v6746
    %v6749 = vsub.s32 32, %v6748
    %v6750 = vshll.u32 %v6741, %v6748
    %v6751 = vshrl.u32 %v6733, %v6749
    %v6752 = vor.u32 %v6750, %v6751
    %v6753 = vsub.s32 4294967266, %v6748
    %v6754 = vadd.s32 %v6753, 127
    %v6755 = vshll.u32 %v6754, 23
    %v6756 = vor.u32 4788187, %v6755
    %v6757 = vand.u32 2147483647, %v6756
    %v6759 = vcvt.s32.f32 %v6752
    %v6760 = vmul.f32 %v6759, %v6757
    %v6761 = vxor.u32 %v6760, 2147483648
    %v6762 = vsel %vm6679, %v6761, %v6760
    %v6763 = vsub.s32 4, %v6739
    %v6764 = vsel %vm6679, %v6763, %v6739
    %v6765 = vsel %vm6678, %v4173, %v6762
    %v6766 = vsel %vm6678, 0, %v6764
    %v6767 = vcosq.f32.pop %v6765
    %v6768 = vsinq.f32.pop %v6765
    %vm6769 = vweird.f32 %v4173
    %v6770 = vadd.s32 %v6766, 3
    %v6771 = vand.u32 %v6770, 3
    %vm6772 = vcmp.lt.s32.totalorder %v6771, 2
    %vm6773 = vcmp.eq.s32.totalorder %v6771, 0
    %v6774 = vxor.u32 %v6768, 2147483648
    %v6775 = vsel %vm6773, %v6767, %v6774
    %vm6776 = vcmp.eq.s32.totalorder %v6771, 2
    %v6777 = vxor.u32 %v6767, 2147483648
    %v6778 = vsel %vm6776, %v6777, %v6768
    %v6779 = vsel %vm6772, %v6775, %v6778
    %v6780 = vsel %vm6769, nan, %v6779
    %v6781 = vand.u32 2147483647, %v4174
    %vm6782 = vcmp.le.f32.partialorder %v6781, 0.7853982
    %vm6783 = vcmp.lt.s32.totalorder %v4174, 0
    %v6784 = vand.u32 %v4174, 2139095040
    %v6785 = vshrl.u32 %v6784, 23
    %v6786 = vsub.s32 %v6785, 127
    %v6787 = vand.u32 2147483647, %v4174
    %v6788 = vand.u32 %v6787, 8388607
    %v6789 = vor.u32 %v6788, 8388608
    %v6790 = vsub.s32 0, %v6789
    %v6791 = vadd.s32 %v6786, 1
    %vm6792 = vcmp.gt.s32.totalorder %v6791, 0
    %v6793 = vsel %vm6792, %v6791, 0
    %v6794 = vshrl.u32 %v6793, 5
    %v6795 = vand.u32 %v6793, 31
    %v6796 = vsub.s32 32, %v6795
    %v6797 = vshrl.u32 683565275, %v6796
    %v6798 = vshll.u32 683565275, %v6795
    %v6799 = vshrl.u32 2475754826, %v6796
    %v6800 = vor.u32 %v6798, %v6799
    %v6801 = vshll.u32 2475754826, %v6795
    %v6802 = vshrl.u32 2131351028, %v6796
    %v6803 = vor.u32 %v6801, %v6802
    %v6804 = vshll.u32 2131351028, %v6795
    %v6805 = vshrl.u32 2102212464, %v6796
    %v6806 = vor.u32 %v6804, %v6805
    %v6807 = vshll.u32 2102212464, %v6795
    %v6808 = vshrl.u32 920167782, %v6796
    %v6809 = vor.u32 %v6807, %v6808
    %v6810 = vshll.u32 920167782, %v6795
    %v6811 = vshrl.u32 1326507024, %v6796
    %v6812 = vor.u32 %v6810, %v6811
    %vm6813 = vcmp.lt.s32.totalorder %v6794, 1
    %vm6814 = vcmp.lt.s32.totalorder %v6794, 2
    %vm6815 = vcmp.lt.s32.totalorder %v6794, 3
    %vm6816 = vcmp.lt.s32.totalorder %v6794, 4
    %v6817 = vsel %vm6813, %v6797, %v6800
    %v6818 = vsel %vm6816, %v6806, 2102212464
    %v6819 = vsel %vm6815, %v6803, %v6818
    %v6820 = vsel %vm6814, %v6817, %v6819
    %v6821 = vsel %vm6813, %v6800, %v6803
    %v6822 = vsel %vm6816, %v6809, 920167782
    %v6823 = vsel %vm6815, %v6806, %v6822
    %v6824 = vsel %vm6814, %v6821, %v6823
    %v6825 = vsel %vm6813, %v6803, %v6806
    %v6826 = vsel %vm6816, %v6812, 1326507024
    %v6827 = vsel %vm6815, %v6809, %v6826
    %v6828 = vsel %vm6814, %v6825, %v6827
    %v6829 = vshll.u32 %v6789, 8
    %v6830 = vmul.u32.u64.compose %v6829, %v6828
    %v6831 = vextract.low.u32 %v6830
    %v6832 = vextract.high.u32 %v6830
    %v6833 = vmul.u32.u64.compose %v6829, %v6824
    %v6834 = vextract.low.u32 %v6833
    %v6835 = vextract.high.u32 %v6833
    %v6836 = vmul.u32 %v6829, %v6820
    %v6837 = vadd.s32 %v6832, %v6834
    %vm6838 = vc.u32 %v6832, %v6834
    %v6839 = vadd.s32 %v6835, 1
    %v6840 = vsel %vm6838, %v6839, %v6835
    %v6841 = vadd.s32 %v6836, %v6840
    %v6842 = vadd.s32 %v6841, 536870912
    %v6843 = vshrl.u32 %v6842, 30
    %v6844 = vshll.u32 %v6843, 30
    %v6845 = vsub.s32 %v6841, %v6844
    %vm6846 = vcmp.lt.s32.totalorder %v6845, 0
    %v6847 = vsub.s32 0, %v6845
    %v6848 = vsel %vm6846, %v6847, %v6845
    %v6849 = vclz %v6848
    %v6850 = vsub.s32 %v6849, 2
    %vm6851 = vcmp.gt.s32.totalorder 0, %v6850
    %v6852 = vsel %vm6851, 0, %v6850
    %v6853 = vsub.s32 32, %v6852
    %v6854 = vshll.u32 %v6845, %v6852
    %v6855 = vshrl.u32 %v6837, %v6853
    %v6856 = vor.u32 %v6854, %v6855
    %v6857 = vsub.s32 4294967266, %v6852
    %v6858 = vadd.s32 %v6857, 127
    %v6859 = vshll.u32 %v6858, 23
    %v6860 = vor.u32 4788187, %v6859
    %v6861 = vand.u32 2147483647, %v6860
    %v6863 = vcvt.s32.f32 %v6856
    %v6864 = vmul.f32 %v6863, %v6861
    %v6865 = vxor.u32 %v6864, 2147483648
    %v6866 = vsel %vm6783, %v6865, %v6864
    %v6867 = vsub.s32 4, %v6843
    %v6868 = vsel %vm6783, %v6867, %v6843
    %v6869 = vsel %vm6782, %v4174, %v6866
    %v6870 = vsel %vm6782, 0, %v6868
    %v6871 = vcosq.f32.pop %v6869
    %v6872 = vsinq.f32.pop %v6869
    %vm6873 = vweird.f32 %v4174
    %v6874 = vadd.s32 %v6870, 3
    %v6875 = vand.u32 %v6874, 3
    %vm6876 = vcmp.lt.s32.totalorder %v6875, 2
    %vm6877 = vcmp.eq.s32.totalorder %v6875, 0
    %v6878 = vxor.u32 %v6872, 2147483648
    %v6879 = vsel %vm6877, %v6871, %v6878
    %vm6880 = vcmp.eq.s32.totalorder %v6875, 2
    %v6881 = vxor.u32 %v6871, 2147483648
    %v6882 = vsel %vm6880, %v6881, %v6872
    %v6883 = vsel %vm6876, %v6879, %v6882
    %v6884 = vsel %vm6873, nan, %v6883
    %v6885 = vand.u32 2147483647, %v4175
    %vm6886 = vcmp.le.f32.partialorder %v6885, 0.7853982
    %vm6887 = vcmp.lt.s32.totalorder %v4175, 0
    %v6888 = vand.u32 %v4175, 2139095040
    %v6889 = vshrl.u32 %v6888, 23
    %v6890 = vsub.s32 %v6889, 127
    %v6891 = vand.u32 2147483647, %v4175
    %v6892 = vand.u32 %v6891, 8388607
    %v6893 = vor.u32 %v6892, 8388608
    %v6894 = vsub.s32 0, %v6893
    %v6895 = vadd.s32 %v6890, 1
    %vm6896 = vcmp.gt.s32.totalorder %v6895, 0
    %v6897 = vsel %vm6896, %v6895, 0
    %v6898 = vshrl.u32 %v6897, 5
    %v6899 = vand.u32 %v6897, 31
    %v6900 = vsub.s32 32, %v6899
    %v6901 = vshrl.u32 683565275, %v6900
    %v6902 = vshll.u32 683565275, %v6899
    %v6903 = vshrl.u32 2475754826, %v6900
    %v6904 = vor.u32 %v6902, %v6903
    %v6905 = vshll.u32 2475754826, %v6899
    %v6906 = vshrl.u32 2131351028, %v6900
    %v6907 = vor.u32 %v6905, %v6906
    %v6908 = vshll.u32 2131351028, %v6899
    %v6909 = vshrl.u32 2102212464, %v6900
    %v6910 = vor.u32 %v6908, %v6909
    %v6911 = vshll.u32 2102212464, %v6899
    %v6912 = vshrl.u32 920167782, %v6900
    %v6913 = vor.u32 %v6911, %v6912
    %v6914 = vshll.u32 920167782, %v6899
    %v6915 = vshrl.u32 1326507024, %v6900
    %v6916 = vor.u32 %v6914, %v6915
    %vm6917 = vcmp.lt.s32.totalorder %v6898, 1
    %vm6918 = vcmp.lt.s32.totalorder %v6898, 2
    %vm6919 = vcmp.lt.s32.totalorder %v6898, 3
    %vm6920 = vcmp.lt.s32.totalorder %v6898, 4
    %v6921 = vsel %vm6917, %v6901, %v6904
    %v6922 = vsel %vm6920, %v6910, 2102212464
    %v6923 = vsel %vm6919, %v6907, %v6922
    %v6924 = vsel %vm6918, %v6921, %v6923
    %v6925 = vsel %vm6917, %v6904, %v6907
    %v6926 = vsel %vm6920, %v6913, 920167782
    %v6927 = vsel %vm6919, %v6910, %v6926
    %v6928 = vsel %vm6918, %v6925, %v6927
    %v6929 = vsel %vm6917, %v6907, %v6910
    %v6930 = vsel %vm6920, %v6916, 1326507024
    %v6931 = vsel %vm6919, %v6913, %v6930
    %v6932 = vsel %vm6918, %v6929, %v6931
    %v6933 = vshll.u32 %v6893, 8
    %v6934 = vmul.u32.u64.compose %v6933, %v6932
    %v6935 = vextract.low.u32 %v6934
    %v6936 = vextract.high.u32 %v6934
    %v6937 = vmul.u32.u64.compose %v6933, %v6928
    %v6938 = vextract.low.u32 %v6937
    %v6939 = vextract.high.u32 %v6937
    %v6940 = vmul.u32 %v6933, %v6924
    %v6941 = vadd.s32 %v6936, %v6938
    %vm6942 = vc.u32 %v6936, %v6938
    %v6943 = vadd.s32 %v6939, 1
    %v6944 = vsel %vm6942, %v6943, %v6939
    %v6945 = vadd.s32 %v6940, %v6944
    %v6946 = vadd.s32 %v6945, 536870912
    %v6947 = vshrl.u32 %v6946, 30
    %v6948 = vshll.u32 %v6947, 30
    %v6949 = vsub.s32 %v6945, %v6948
    %vm6950 = vcmp.lt.s32.totalorder %v6949, 0
    %v6951 = vsub.s32 0, %v6949
    %v6952 = vsel %vm6950, %v6951, %v6949
    %v6953 = vclz %v6952
    %v6954 = vsub.s32 %v6953, 2
    %vm6955 = vcmp.gt.s32.totalorder 0, %v6954
    %v6956 = vsel %vm6955, 0, %v6954
    %v6957 = vsub.s32 32, %v6956
    %v6958 = vshll.u32 %v6949, %v6956
    %v6959 = vshrl.u32 %v6941, %v6957
    %v6960 = vor.u32 %v6958, %v6959
    %v6961 = vsub.s32 4294967266, %v6956
    %v6962 = vadd.s32 %v6961, 127
    %v6963 = vshll.u32 %v6962, 23
    %v6964 = vor.u32 4788187, %v6963
    %v6965 = vand.u32 2147483647, %v6964
    %v6967 = vcvt.s32.f32 %v6960
    %v6968 = vmul.f32 %v6967, %v6965
    %v6969 = vxor.u32 %v6968, 2147483648
    %v6970 = vsel %vm6887, %v6969, %v6968
    %v6971 = vsub.s32 4, %v6947
    %v6972 = vsel %vm6887, %v6971, %v6947
    %v6973 = vsel %vm6886, %v4175, %v6970
    %v6974 = vsel %vm6886, 0, %v6972
    %v6975 = vcosq.f32.pop %v6973
    %v6976 = vsinq.f32.pop %v6973
    %vm6977 = vweird.f32 %v4175
    %v6978 = vadd.s32 %v6974, 3
    %v6979 = vand.u32 %v6978, 3
    %vm6980 = vcmp.lt.s32.totalorder %v6979, 2
    %vm6981 = vcmp.eq.s32.totalorder %v6979, 0
    %v6982 = vxor.u32 %v6976, 2147483648
    %v6983 = vsel %vm6981, %v6975, %v6982
    %vm6984 = vcmp.eq.s32.totalorder %v6979, 2
    %v6985 = vxor.u32 %v6975, 2147483648
    %v6986 = vsel %vm6984, %v6985, %v6976
    %v6987 = vsel %vm6980, %v6983, %v6986
    %v6988 = vsel %vm6977, nan, %v6987
    %v6989 = vand.u32 2147483647, %v4176
    %vm6990 = vcmp.le.f32.partialorder %v6989, 0.7853982
    %vm6991 = vcmp.lt.s32.totalorder %v4176, 0
    %v6992 = vand.u32 %v4176, 2139095040
    %v6993 = vshrl.u32 %v6992, 23
    %v6994 = vsub.s32 %v6993, 127
    %v6995 = vand.u32 2147483647, %v4176
    %v6996 = vand.u32 %v6995, 8388607
    %v6997 = vor.u32 %v6996, 8388608
    %v6998 = vsub.s32 0, %v6997
    %v6999 = vadd.s32 %v6994, 1
    %vm7000 = vcmp.gt.s32.totalorder %v6999, 0
    %v7001 = vsel %vm7000, %v6999, 0
    %v7002 = vshrl.u32 %v7001, 5
    %v7003 = vand.u32 %v7001, 31
    %v7004 = vsub.s32 32, %v7003
    %v7005 = vshrl.u32 683565275, %v7004
    %v7006 = vshll.u32 683565275, %v7003
    %v7007 = vshrl.u32 2475754826, %v7004
    %v7008 = vor.u32 %v7006, %v7007
    %v7009 = vshll.u32 2475754826, %v7003
    %v7010 = vshrl.u32 2131351028, %v7004
    %v7011 = vor.u32 %v7009, %v7010
    %v7012 = vshll.u32 2131351028, %v7003
    %v7013 = vshrl.u32 2102212464, %v7004
    %v7014 = vor.u32 %v7012, %v7013
    %v7015 = vshll.u32 2102212464, %v7003
    %v7016 = vshrl.u32 920167782, %v7004
    %v7017 = vor.u32 %v7015, %v7016
    %v7018 = vshll.u32 920167782, %v7003
    %v7019 = vshrl.u32 1326507024, %v7004
    %v7020 = vor.u32 %v7018, %v7019
    %vm7021 = vcmp.lt.s32.totalorder %v7002, 1
    %vm7022 = vcmp.lt.s32.totalorder %v7002, 2
    %vm7023 = vcmp.lt.s32.totalorder %v7002, 3
    %vm7024 = vcmp.lt.s32.totalorder %v7002, 4
    %v7025 = vsel %vm7021, %v7005, %v7008
    %v7026 = vsel %vm7024, %v7014, 2102212464
    %v7027 = vsel %vm7023, %v7011, %v7026
    %v7028 = vsel %vm7022, %v7025, %v7027
    %v7029 = vsel %vm7021, %v7008, %v7011
    %v7030 = vsel %vm7024, %v7017, 920167782
    %v7031 = vsel %vm7023, %v7014, %v7030
    %v7032 = vsel %vm7022, %v7029, %v7031
    %v7033 = vsel %vm7021, %v7011, %v7014
    %v7034 = vsel %vm7024, %v7020, 1326507024
    %v7035 = vsel %vm7023, %v7017, %v7034
    %v7036 = vsel %vm7022, %v7033, %v7035
    %v7037 = vshll.u32 %v6997, 8
    %v7038 = vmul.u32.u64.compose %v7037, %v7036
    %v7039 = vextract.low.u32 %v7038
    %v7040 = vextract.high.u32 %v7038
    %v7041 = vmul.u32.u64.compose %v7037, %v7032
    %v7042 = vextract.low.u32 %v7041
    %v7043 = vextract.high.u32 %v7041
    %v7044 = vmul.u32 %v7037, %v7028
    %v7045 = vadd.s32 %v7040, %v7042
    %vm7046 = vc.u32 %v7040, %v7042
    %v7047 = vadd.s32 %v7043, 1
    %v7048 = vsel %vm7046, %v7047, %v7043
    %v7049 = vadd.s32 %v7044, %v7048
    %v7050 = vadd.s32 %v7049, 536870912
    %v7051 = vshrl.u32 %v7050, 30
    %v7052 = vshll.u32 %v7051, 30
    %v7053 = vsub.s32 %v7049, %v7052
    %vm7054 = vcmp.lt.s32.totalorder %v7053, 0
    %v7055 = vsub.s32 0, %v7053
    %v7056 = vsel %vm7054, %v7055, %v7053
    %v7057 = vclz %v7056
    %v7058 = vsub.s32 %v7057, 2
    %vm7059 = vcmp.gt.s32.totalorder 0, %v7058
    %v7060 = vsel %vm7059, 0, %v7058
    %v7061 = vsub.s32 32, %v7060
    %v7062 = vshll.u32 %v7053, %v7060
    %v7063 = vshrl.u32 %v7045, %v7061
    %v7064 = vor.u32 %v7062, %v7063
    %v7065 = vsub.s32 4294967266, %v7060
    %v7066 = vadd.s32 %v7065, 127
    %v7067 = vshll.u32 %v7066, 23
    %v7068 = vor.u32 4788187, %v7067
    %v7069 = vand.u32 2147483647, %v7068
    %v7071 = vcvt.s32.f32 %v7064
    %v7072 = vmul.f32 %v7071, %v7069
    %v7073 = vxor.u32 %v7072, 2147483648
    %v7074 = vsel %vm6991, %v7073, %v7072
    %v7075 = vsub.s32 4, %v7051
    %v7076 = vsel %vm6991, %v7075, %v7051
    %v7077 = vsel %vm6990, %v4176, %v7074
    %v7078 = vsel %vm6990, 0, %v7076
    %v7079 = vcosq.f32.pop %v7077
    %v7080 = vsinq.f32.pop %v7077
    %vm7081 = vweird.f32 %v4176
    %v7082 = vadd.s32 %v7078, 3
    %v7083 = vand.u32 %v7082, 3
    %vm7084 = vcmp.lt.s32.totalorder %v7083, 2
    %vm7085 = vcmp.eq.s32.totalorder %v7083, 0
    %v7086 = vxor.u32 %v7080, 2147483648
    %v7087 = vsel %vm7085, %v7079, %v7086
    %vm7088 = vcmp.eq.s32.totalorder %v7083, 2
    %v7089 = vxor.u32 %v7079, 2147483648
    %v7090 = vsel %vm7088, %v7089, %v7080
    %v7091 = vsel %vm7084, %v7087, %v7090
    %v7092 = vsel %vm7081, nan, %v7091
    %v7093 = vand.u32 2147483647, %v4177
    %vm7094 = vcmp.le.f32.partialorder %v7093, 0.7853982
    %vm7095 = vcmp.lt.s32.totalorder %v4177, 0
    %v7096 = vand.u32 %v4177, 2139095040
    %v7097 = vshrl.u32 %v7096, 23
    %v7098 = vsub.s32 %v7097, 127
    %v7099 = vand.u32 2147483647, %v4177
    %v7100 = vand.u32 %v7099, 8388607
    %v7101 = vor.u32 %v7100, 8388608
    %v7102 = vsub.s32 0, %v7101
    %v7103 = vadd.s32 %v7098, 1
    %vm7104 = vcmp.gt.s32.totalorder %v7103, 0
    %v7105 = vsel %vm7104, %v7103, 0
    %v7106 = vshrl.u32 %v7105, 5
    %v7107 = vand.u32 %v7105, 31
    %v7108 = vsub.s32 32, %v7107
    %v7109 = vshrl.u32 683565275, %v7108
    %v7110 = vshll.u32 683565275, %v7107
    %v7111 = vshrl.u32 2475754826, %v7108
    %v7112 = vor.u32 %v7110, %v7111
    %v7113 = vshll.u32 2475754826, %v7107
    %v7114 = vshrl.u32 2131351028, %v7108
    %v7115 = vor.u32 %v7113, %v7114
    %v7116 = vshll.u32 2131351028, %v7107
    %v7117 = vshrl.u32 2102212464, %v7108
    %v7118 = vor.u32 %v7116, %v7117
    %v7119 = vshll.u32 2102212464, %v7107
    %v7120 = vshrl.u32 920167782, %v7108
    %v7121 = vor.u32 %v7119, %v7120
    %v7122 = vshll.u32 920167782, %v7107
    %v7123 = vshrl.u32 1326507024, %v7108
    %v7124 = vor.u32 %v7122, %v7123
    %vm7125 = vcmp.lt.s32.totalorder %v7106, 1
    %vm7126 = vcmp.lt.s32.totalorder %v7106, 2
    %vm7127 = vcmp.lt.s32.totalorder %v7106, 3
    %vm7128 = vcmp.lt.s32.totalorder %v7106, 4
    %v7129 = vsel %vm7125, %v7109, %v7112
    %v7130 = vsel %vm7128, %v7118, 2102212464
    %v7131 = vsel %vm7127, %v7115, %v7130
    %v7132 = vsel %vm7126, %v7129, %v7131
    %v7133 = vsel %vm7125, %v7112, %v7115
    %v7134 = vsel %vm7128, %v7121, 920167782
    %v7135 = vsel %vm7127, %v7118, %v7134
    %v7136 = vsel %vm7126, %v7133, %v7135
    %v7137 = vsel %vm7125, %v7115, %v7118
    %v7138 = vsel %vm7128, %v7124, 1326507024
    %v7139 = vsel %vm7127, %v7121, %v7138
    %v7140 = vsel %vm7126, %v7137, %v7139
    %v7141 = vshll.u32 %v7101, 8
    %v7142 = vmul.u32.u64.compose %v7141, %v7140
    %v7143 = vextract.low.u32 %v7142
    %v7144 = vextract.high.u32 %v7142
    %v7145 = vmul.u32.u64.compose %v7141, %v7136
    %v7146 = vextract.low.u32 %v7145
    %v7147 = vextract.high.u32 %v7145
    %v7148 = vmul.u32 %v7141, %v7132
    %v7149 = vadd.s32 %v7144, %v7146
    %vm7150 = vc.u32 %v7144, %v7146
    %v7151 = vadd.s32 %v7147, 1
    %v7152 = vsel %vm7150, %v7151, %v7147
    %v7153 = vadd.s32 %v7148, %v7152
    %v7154 = vadd.s32 %v7153, 536870912
    %v7155 = vshrl.u32 %v7154, 30
    %v7156 = vshll.u32 %v7155, 30
    %v7157 = vsub.s32 %v7153, %v7156
    %vm7158 = vcmp.lt.s32.totalorder %v7157, 0
    %v7159 = vsub.s32 0, %v7157
    %v7160 = vsel %vm7158, %v7159, %v7157
    %v7161 = vclz %v7160
    %v7162 = vsub.s32 %v7161, 2
    %vm7163 = vcmp.gt.s32.totalorder 0, %v7162
    %v7164 = vsel %vm7163, 0, %v7162
    %v7165 = vsub.s32 32, %v7164
    %v7166 = vshll.u32 %v7157, %v7164
    %v7167 = vshrl.u32 %v7149, %v7165
    %v7168 = vor.u32 %v7166, %v7167
    %v7169 = vsub.s32 4294967266, %v7164
    %v7170 = vadd.s32 %v7169, 127
    %v7171 = vshll.u32 %v7170, 23
    %v7172 = vor.u32 4788187, %v7171
    %v7173 = vand.u32 2147483647, %v7172
    %v7175 = vcvt.s32.f32 %v7168
    %v7176 = vmul.f32 %v7175, %v7173
    %v7177 = vxor.u32 %v7176, 2147483648
    %v7178 = vsel %vm7095, %v7177, %v7176
    %v7179 = vsub.s32 4, %v7155
    %v7180 = vsel %vm7095, %v7179, %v7155
    %v7181 = vsel %vm7094, %v4177, %v7178
    %v7182 = vsel %vm7094, 0, %v7180
    %v7183 = vcosq.f32.pop %v7181
    %v7184 = vsinq.f32.pop %v7181
    %vm7185 = vweird.f32 %v4177
    %v7186 = vadd.s32 %v7182, 3
    %v7187 = vand.u32 %v7186, 3
    %vm7188 = vcmp.lt.s32.totalorder %v7187, 2
    %vm7189 = vcmp.eq.s32.totalorder %v7187, 0
    %v7190 = vxor.u32 %v7184, 2147483648
    %v7191 = vsel %vm7189, %v7183, %v7190
    %vm7192 = vcmp.eq.s32.totalorder %v7187, 2
    %v7193 = vxor.u32 %v7183, 2147483648
    %v7194 = vsel %vm7192, %v7193, %v7184
    %v7195 = vsel %vm7188, %v7191, %v7194
    %v7196 = vsel %vm7185, nan, %v7195
    %v7197 = vand.u32 2147483647, %v4178
    %vm7198 = vcmp.le.f32.partialorder %v7197, 0.7853982
    %vm7199 = vcmp.lt.s32.totalorder %v4178, 0
    %v7200 = vand.u32 %v4178, 2139095040
    %v7201 = vshrl.u32 %v7200, 23
    %v7202 = vsub.s32 %v7201, 127
    %v7203 = vand.u32 2147483647, %v4178
    %v7204 = vand.u32 %v7203, 8388607
    %v7205 = vor.u32 %v7204, 8388608
    %v7206 = vsub.s32 0, %v7205
    %v7207 = vadd.s32 %v7202, 1
    %vm7208 = vcmp.gt.s32.totalorder %v7207, 0
    %v7209 = vsel %vm7208, %v7207, 0
    %v7210 = vshrl.u32 %v7209, 5
    %v7211 = vand.u32 %v7209, 31
    %v7212 = vsub.s32 32, %v7211
    %v7213 = vshrl.u32 683565275, %v7212
    %v7214 = vshll.u32 683565275, %v7211
    %v7215 = vshrl.u32 2475754826, %v7212
    %v7216 = vor.u32 %v7214, %v7215
    %v7217 = vshll.u32 2475754826, %v7211
    %v7218 = vshrl.u32 2131351028, %v7212
    %v7219 = vor.u32 %v7217, %v7218
    %v7220 = vshll.u32 2131351028, %v7211
    %v7221 = vshrl.u32 2102212464, %v7212
    %v7222 = vor.u32 %v7220, %v7221
    %v7223 = vshll.u32 2102212464, %v7211
    %v7224 = vshrl.u32 920167782, %v7212
    %v7225 = vor.u32 %v7223, %v7224
    %v7226 = vshll.u32 920167782, %v7211
    %v7227 = vshrl.u32 1326507024, %v7212
    %v7228 = vor.u32 %v7226, %v7227
    %vm7229 = vcmp.lt.s32.totalorder %v7210, 1
    %vm7230 = vcmp.lt.s32.totalorder %v7210, 2
    %vm7231 = vcmp.lt.s32.totalorder %v7210, 3
    %vm7232 = vcmp.lt.s32.totalorder %v7210, 4
    %v7233 = vsel %vm7229, %v7213, %v7216
    %v7234 = vsel %vm7232, %v7222, 2102212464
    %v7235 = vsel %vm7231, %v7219, %v7234
    %v7236 = vsel %vm7230, %v7233, %v7235
    %v7237 = vsel %vm7229, %v7216, %v7219
    %v7238 = vsel %vm7232, %v7225, 920167782
    %v7239 = vsel %vm7231, %v7222, %v7238
    %v7240 = vsel %vm7230, %v7237, %v7239
    %v7241 = vsel %vm7229, %v7219, %v7222
    %v7242 = vsel %vm7232, %v7228, 1326507024
    %v7243 = vsel %vm7231, %v7225, %v7242
    %v7244 = vsel %vm7230, %v7241, %v7243
    %v7245 = vshll.u32 %v7205, 8
    %v7246 = vmul.u32.u64.compose %v7245, %v7244
    %v7247 = vextract.low.u32 %v7246
    %v7248 = vextract.high.u32 %v7246
    %v7249 = vmul.u32.u64.compose %v7245, %v7240
    %v7250 = vextract.low.u32 %v7249
    %v7251 = vextract.high.u32 %v7249
    %v7252 = vmul.u32 %v7245, %v7236
    %v7253 = vadd.s32 %v7248, %v7250
    %vm7254 = vc.u32 %v7248, %v7250
    %v7255 = vadd.s32 %v7251, 1
    %v7256 = vsel %vm7254, %v7255, %v7251
    %v7257 = vadd.s32 %v7252, %v7256
    %v7258 = vadd.s32 %v7257, 536870912
    %v7259 = vshrl.u32 %v7258, 30
    %v7260 = vshll.u32 %v7259, 30
    %v7261 = vsub.s32 %v7257, %v7260
    %vm7262 = vcmp.lt.s32.totalorder %v7261, 0
    %v7263 = vsub.s32 0, %v7261
    %v7264 = vsel %vm7262, %v7263, %v7261
    %v7265 = vclz %v7264
    %v7266 = vsub.s32 %v7265, 2
    %vm7267 = vcmp.gt.s32.totalorder 0, %v7266
    %v7268 = vsel %vm7267, 0, %v7266
    %v7269 = vsub.s32 32, %v7268
    %v7270 = vshll.u32 %v7261, %v7268
    %v7271 = vshrl.u32 %v7253, %v7269
    %v7272 = vor.u32 %v7270, %v7271
    %v7273 = vsub.s32 4294967266, %v7268
    %v7274 = vadd.s32 %v7273, 127
    %v7275 = vshll.u32 %v7274, 23
    %v7276 = vor.u32 4788187, %v7275
    %v7277 = vand.u32 2147483647, %v7276
    %v7279 = vcvt.s32.f32 %v7272
    %v7280 = vmul.f32 %v7279, %v7277
    %v7281 = vxor.u32 %v7280, 2147483648
    %v7282 = vsel %vm7199, %v7281, %v7280
    %v7283 = vsub.s32 4, %v7259
    %v7284 = vsel %vm7199, %v7283, %v7259
    %v7285 = vsel %vm7198, %v4178, %v7282
    %v7286 = vsel %vm7198, 0, %v7284
    %v7287 = vcosq.f32.pop %v7285
    %v7288 = vsinq.f32.pop %v7285
    %vm7289 = vweird.f32 %v4178
    %v7290 = vadd.s32 %v7286, 3
    %v7291 = vand.u32 %v7290, 3
    %vm7292 = vcmp.lt.s32.totalorder %v7291, 2
    %vm7293 = vcmp.eq.s32.totalorder %v7291, 0
    %v7294 = vxor.u32 %v7288, 2147483648
    %v7295 = vsel %vm7293, %v7287, %v7294
    %vm7296 = vcmp.eq.s32.totalorder %v7291, 2
    %v7297 = vxor.u32 %v7287, 2147483648
    %v7298 = vsel %vm7296, %v7297, %v7288
    %v7299 = vsel %vm7292, %v7295, %v7298
    %v7300 = vsel %vm7289, nan, %v7299
    %v7301 = vand.u32 2147483647, %v4179
    %vm7302 = vcmp.le.f32.partialorder %v7301, 0.7853982
    %vm7303 = vcmp.lt.s32.totalorder %v4179, 0
    %v7304 = vand.u32 %v4179, 2139095040
    %v7305 = vshrl.u32 %v7304, 23
    %v7306 = vsub.s32 %v7305, 127
    %v7307 = vand.u32 2147483647, %v4179
    %v7308 = vand.u32 %v7307, 8388607
    %v7309 = vor.u32 %v7308, 8388608
    %v7310 = vsub.s32 0, %v7309
    %v7311 = vadd.s32 %v7306, 1
    %vm7312 = vcmp.gt.s32.totalorder %v7311, 0
    %v7313 = vsel %vm7312, %v7311, 0
    %v7314 = vshrl.u32 %v7313, 5
    %v7315 = vand.u32 %v7313, 31
    %v7316 = vsub.s32 32, %v7315
    %v7317 = vshrl.u32 683565275, %v7316
    %v7318 = vshll.u32 683565275, %v7315
    %v7319 = vshrl.u32 2475754826, %v7316
    %v7320 = vor.u32 %v7318, %v7319
    %v7321 = vshll.u32 2475754826, %v7315
    %v7322 = vshrl.u32 2131351028, %v7316
    %v7323 = vor.u32 %v7321, %v7322
    %v7324 = vshll.u32 2131351028, %v7315
    %v7325 = vshrl.u32 2102212464, %v7316
    %v7326 = vor.u32 %v7324, %v7325
    %v7327 = vshll.u32 2102212464, %v7315
    %v7328 = vshrl.u32 920167782, %v7316
    %v7329 = vor.u32 %v7327, %v7328
    %v7330 = vshll.u32 920167782, %v7315
    %v7331 = vshrl.u32 1326507024, %v7316
    %v7332 = vor.u32 %v7330, %v7331
    %vm7333 = vcmp.lt.s32.totalorder %v7314, 1
    %vm7334 = vcmp.lt.s32.totalorder %v7314, 2
    %vm7335 = vcmp.lt.s32.totalorder %v7314, 3
    %vm7336 = vcmp.lt.s32.totalorder %v7314, 4
    %v7337 = vsel %vm7333, %v7317, %v7320
    %v7338 = vsel %vm7336, %v7326, 2102212464
    %v7339 = vsel %vm7335, %v7323, %v7338
    %v7340 = vsel %vm7334, %v7337, %v7339
    %v7341 = vsel %vm7333, %v7320, %v7323
    %v7342 = vsel %vm7336, %v7329, 920167782
    %v7343 = vsel %vm7335, %v7326, %v7342
    %v7344 = vsel %vm7334, %v7341, %v7343
    %v7345 = vsel %vm7333, %v7323, %v7326
    %v7346 = vsel %vm7336, %v7332, 1326507024
    %v7347 = vsel %vm7335, %v7329, %v7346
    %v7348 = vsel %vm7334, %v7345, %v7347
    %v7349 = vshll.u32 %v7309, 8
    %v7350 = vmul.u32.u64.compose %v7349, %v7348
    %v7351 = vextract.low.u32 %v7350
    %v7352 = vextract.high.u32 %v7350
    %v7353 = vmul.u32.u64.compose %v7349, %v7344
    %v7354 = vextract.low.u32 %v7353
    %v7355 = vextract.high.u32 %v7353
    %v7356 = vmul.u32 %v7349, %v7340
    %v7357 = vadd.s32 %v7352, %v7354
    %vm7358 = vc.u32 %v7352, %v7354
    %v7359 = vadd.s32 %v7355, 1
    %v7360 = vsel %vm7358, %v7359, %v7355
    %v7361 = vadd.s32 %v7356, %v7360
    %v7362 = vadd.s32 %v7361, 536870912
    %v7363 = vshrl.u32 %v7362, 30
    %v7364 = vshll.u32 %v7363, 30
    %v7365 = vsub.s32 %v7361, %v7364
    %vm7366 = vcmp.lt.s32.totalorder %v7365, 0
    %v7367 = vsub.s32 0, %v7365
    %v7368 = vsel %vm7366, %v7367, %v7365
    %v7369 = vclz %v7368
    %v7370 = vsub.s32 %v7369, 2
    %vm7371 = vcmp.gt.s32.totalorder 0, %v7370
    %v7372 = vsel %vm7371, 0, %v7370
    %v7373 = vsub.s32 32, %v7372
    %v7374 = vshll.u32 %v7365, %v7372
    %v7375 = vshrl.u32 %v7357, %v7373
    %v7376 = vor.u32 %v7374, %v7375
    %v7377 = vsub.s32 4294967266, %v7372
    %v7378 = vadd.s32 %v7377, 127
    %v7379 = vshll.u32 %v7378, 23
    %v7380 = vor.u32 4788187, %v7379
    %v7381 = vand.u32 2147483647, %v7380
    %v7383 = vcvt.s32.f32 %v7376
    %v7384 = vmul.f32 %v7383, %v7381
    %v7385 = vxor.u32 %v7384, 2147483648
    %v7386 = vsel %vm7303, %v7385, %v7384
    %v7387 = vsub.s32 4, %v7363
    %v7388 = vsel %vm7303, %v7387, %v7363
    %v7389 = vsel %vm7302, %v4179, %v7386
    %v7390 = vsel %vm7302, 0, %v7388
    %v7391 = vcosq.f32.pop %v7389
    %v7392 = vsinq.f32.pop %v7389
    %vm7393 = vweird.f32 %v4179
    %v7394 = vadd.s32 %v7390, 3
    %v7395 = vand.u32 %v7394, 3
    %vm7396 = vcmp.lt.s32.totalorder %v7395, 2
    %vm7397 = vcmp.eq.s32.totalorder %v7395, 0
    %v7398 = vxor.u32 %v7392, 2147483648
    %v7399 = vsel %vm7397, %v7391, %v7398
    %vm7400 = vcmp.eq.s32.totalorder %v7395, 2
    %v7401 = vxor.u32 %v7391, 2147483648
    %v7402 = vsel %vm7400, %v7401, %v7392
    %v7403 = vsel %vm7396, %v7399, %v7402
    %v7404 = vsel %vm7393, nan, %v7403
    %v7405 = vand.u32 2147483647, %v4180
    %vm7406 = vcmp.le.f32.partialorder %v7405, 0.7853982
    %vm7407 = vcmp.lt.s32.totalorder %v4180, 0
    %v7408 = vand.u32 %v4180, 2139095040
    %v7409 = vshrl.u32 %v7408, 23
    %v7410 = vsub.s32 %v7409, 127
    %v7411 = vand.u32 2147483647, %v4180
    %v7412 = vand.u32 %v7411, 8388607
    %v7413 = vor.u32 %v7412, 8388608
    %v7414 = vsub.s32 0, %v7413
    %v7415 = vadd.s32 %v7410, 1
    %vm7416 = vcmp.gt.s32.totalorder %v7415, 0
    %v7417 = vsel %vm7416, %v7415, 0
    %v7418 = vshrl.u32 %v7417, 5
    %v7419 = vand.u32 %v7417, 31
    %v7420 = vsub.s32 32, %v7419
    %v7421 = vshrl.u32 683565275, %v7420
    %v7422 = vshll.u32 683565275, %v7419
    %v7423 = vshrl.u32 2475754826, %v7420
    %v7424 = vor.u32 %v7422, %v7423
    %v7425 = vshll.u32 2475754826, %v7419
    %v7426 = vshrl.u32 2131351028, %v7420
    %v7427 = vor.u32 %v7425, %v7426
    %v7428 = vshll.u32 2131351028, %v7419
    %v7429 = vshrl.u32 2102212464, %v7420
    %v7430 = vor.u32 %v7428, %v7429
    %v7431 = vshll.u32 2102212464, %v7419
    %v7432 = vshrl.u32 920167782, %v7420
    %v7433 = vor.u32 %v7431, %v7432
    %v7434 = vshll.u32 920167782, %v7419
    %v7435 = vshrl.u32 1326507024, %v7420
    %v7436 = vor.u32 %v7434, %v7435
    %vm7437 = vcmp.lt.s32.totalorder %v7418, 1
    %vm7438 = vcmp.lt.s32.totalorder %v7418, 2
    %vm7439 = vcmp.lt.s32.totalorder %v7418, 3
    %vm7440 = vcmp.lt.s32.totalorder %v7418, 4
    %v7441 = vsel %vm7437, %v7421, %v7424
    %v7442 = vsel %vm7440, %v7430, 2102212464
    %v7443 = vsel %vm7439, %v7427, %v7442
    %v7444 = vsel %vm7438, %v7441, %v7443
    %v7445 = vsel %vm7437, %v7424, %v7427
    %v7446 = vsel %vm7440, %v7433, 920167782
    %v7447 = vsel %vm7439, %v7430, %v7446
    %v7448 = vsel %vm7438, %v7445, %v7447
    %v7449 = vsel %vm7437, %v7427, %v7430
    %v7450 = vsel %vm7440, %v7436, 1326507024
    %v7451 = vsel %vm7439, %v7433, %v7450
    %v7452 = vsel %vm7438, %v7449, %v7451
    %v7453 = vshll.u32 %v7413, 8
    %v7454 = vmul.u32.u64.compose %v7453, %v7452
    %v7455 = vextract.low.u32 %v7454
    %v7456 = vextract.high.u32 %v7454
    %v7457 = vmul.u32.u64.compose %v7453, %v7448
    %v7458 = vextract.low.u32 %v7457
    %v7459 = vextract.high.u32 %v7457
    %v7460 = vmul.u32 %v7453, %v7444
    %v7461 = vadd.s32 %v7456, %v7458
    %vm7462 = vc.u32 %v7456, %v7458
    %v7463 = vadd.s32 %v7459, 1
    %v7464 = vsel %vm7462, %v7463, %v7459
    %v7465 = vadd.s32 %v7460, %v7464
    %v7466 = vadd.s32 %v7465, 536870912
    %v7467 = vshrl.u32 %v7466, 30
    %v7468 = vshll.u32 %v7467, 30
    %v7469 = vsub.s32 %v7465, %v7468
    %vm7470 = vcmp.lt.s32.totalorder %v7469, 0
    %v7471 = vsub.s32 0, %v7469
    %v7472 = vsel %vm7470, %v7471, %v7469
    %v7473 = vclz %v7472
    %v7474 = vsub.s32 %v7473, 2
    %vm7475 = vcmp.gt.s32.totalorder 0, %v7474
    %v7476 = vsel %vm7475, 0, %v7474
    %v7477 = vsub.s32 32, %v7476
    %v7478 = vshll.u32 %v7469, %v7476
    %v7479 = vshrl.u32 %v7461, %v7477
    %v7480 = vor.u32 %v7478, %v7479
    %v7481 = vsub.s32 4294967266, %v7476
    %v7482 = vadd.s32 %v7481, 127
    %v7483 = vshll.u32 %v7482, 23
    %v7484 = vor.u32 4788187, %v7483
    %v7485 = vand.u32 2147483647, %v7484
    %v7487 = vcvt.s32.f32 %v7480
    %v7488 = vmul.f32 %v7487, %v7485
    %v7489 = vxor.u32 %v7488, 2147483648
    %v7490 = vsel %vm7407, %v7489, %v7488
    %v7491 = vsub.s32 4, %v7467
    %v7492 = vsel %vm7407, %v7491, %v7467
    %v7493 = vsel %vm7406, %v4180, %v7490
    %v7494 = vsel %vm7406, 0, %v7492
    %v7495 = vcosq.f32.pop %v7493
    %v7496 = vsinq.f32.pop %v7493
    %vm7497 = vweird.f32 %v4180
    %v7498 = vadd.s32 %v7494, 3
    %v7499 = vand.u32 %v7498, 3
    %vm7500 = vcmp.lt.s32.totalorder %v7499, 2
    %vm7501 = vcmp.eq.s32.totalorder %v7499, 0
    %v7502 = vxor.u32 %v7496, 2147483648
    %v7503 = vsel %vm7501, %v7495, %v7502
    %vm7504 = vcmp.eq.s32.totalorder %v7499, 2
    %v7505 = vxor.u32 %v7495, 2147483648
    %v7506 = vsel %vm7504, %v7505, %v7496
    %v7507 = vsel %vm7500, %v7503, %v7506
    %v7508 = vsel %vm7497, nan, %v7507
    %7509 = vst [vmem:[#allocation5 + $0x80] sm:$0xff] %v4284
    %7510 = vst [vmem:[#allocation5 + $0x88] sm:$0xff] %v4388
    %7511 = vst [vmem:[#allocation5 + $0x90] sm:$0xff] %v4492
    %7512 = vst [vmem:[#allocation5 + $0x98] sm:$0xff] %v4596
    %7513 = vst [vmem:[#allocation5 + $0xa0] sm:$0xff] %v4700
    %7514 = vst [vmem:[#allocation5 + $0xa8] sm:$0xff] %v4804
    %7515 = vst [vmem:[#allocation5 + $0xb0] sm:$0xff] %v4908
    %7516 = vst [vmem:[#allocation5 + $0xb8] sm:$0xff] %v5012
    %7517 = vst [vmem:[#allocation5 + $0xc0] sm:$0xff] %v5116
    %7518 = vst [vmem:[#allocation5 + $0xc8] sm:$0xff] %v5220
    %7519 = vst [vmem:[#allocation5 + $0xd0] sm:$0xff] %v5324
    %7520 = vst [vmem:[#allocation5 + $0xd8] sm:$0xff] %v5428
    %7521 = vst [vmem:[#allocation5 + $0xe0] sm:$0xff] %v5532
    %7522 = vst [vmem:[#allocation5 + $0xe8] sm:$0xff] %v5636
    %7523 = vst [vmem:[#allocation5 + $0xf0] sm:$0xff] %v5740
    %7524 = vst [vmem:[#allocation5 + $0xf8] sm:$0xff] %v5844
    %7525 = vst [vmem:[#allocation5 + $0x180] sm:$0xff] %v5948
    %7526 = vst [vmem:[#allocation5 + $0x188] sm:$0xff] %v6052
    %7527 = vst [vmem:[#allocation5 + $0x190] sm:$0xff] %v6156
    %7528 = vst [vmem:[#allocation5 + $0x198] sm:$0xff] %v6260
    %7529 = vst [vmem:[#allocation5 + $0x1a0] sm:$0xff] %v6364
    %7530 = vst [vmem:[#allocation5 + $0x1a8] sm:$0xff] %v6468
    %7531 = vst [vmem:[#allocation5 + $0x1b0] sm:$0xff] %v6572
    %7532 = vst [vmem:[#allocation5 + $0x1b8] sm:$0xff] %v6676
    %7533 = vst [vmem:[#allocation5 + $0x1c0] sm:$0xff] %v6780
    %7534 = vst [vmem:[#allocation5 + $0x1c8] sm:$0xff] %v6884
    %7535 = vst [vmem:[#allocation5 + $0x1d0] sm:$0xff] %v6988
    %7536 = vst [vmem:[#allocation5 + $0x1d8] sm:$0xff] %v7092
    %7537 = vst [vmem:[#allocation5 + $0x1e0] sm:$0xff] %v7196
    %7538 = vst [vmem:[#allocation5 + $0x1e8] sm:$0xff] %v7300
    %7539 = vst [vmem:[#allocation5 + $0x1f0] sm:$0xff] %v7404
    %7540 = vst [vmem:[#allocation5 + $0x1f8] sm:$0xff] %v7508
    // Predicated region
    $region22: #{tpu_custom_call.1} parent=1 // pred_check
      _
    $region23: #{tpu_custom_call.1} parent=1 // pred_check_branch
      %7542 = sbr.rel (0) target = $region25
    $region24: #{tpu_custom_call.1} parent=1 // pred_region
      %s7544 = ssub.s32 8192, 8192
      %7545 = vsyncadd [#allocation4], %s7544
      %s7546 = sshll.u32 [#allocation5], 4
      %s7547 = int_to_ptr.vmem [resolvable:$true] %s7546
      %7552 = dma.vmem_to_hbm [thread:$0]  %s7547, 8192, %s4, [#allocation4], 256, 256, 16
    $region25: #{tpu_custom_call.1} parent=1 // pred_fallthru
      _
    // Predicated region
    $region26: #{tpu_custom_call.1} parent=1 // pred_check
      _
    $region27: #{tpu_custom_call.1} parent=1 // pred_check_branch
      %7554 = sbr.rel (0) target = $region29
    $region28: #{tpu_custom_call.1} parent=1 // pred_region
      %7555 = dma.done [#allocation4], 8192
    $region29: #{tpu_custom_call.1} parent=1 // pred_fallthru
      _
    %7556 = vsyncpa [#allocation3], 1
    %7557 = vsyncpa [#allocation4], 1

</llo_original>
